<compile_context>
chip_gen: v5e
topology: v5e:2x2
jax: 0.10.0
libtpu: 0.0.40
codegen_flags: <defaults>
</compile_context>

<pallas_src>
import functools

import jax
import jax.numpy as jnp
from jax.experimental import pallas as pl
from jax.experimental.pallas import tpu as pltpu

# Model dims from the PyTorch module (CFG.EMBED_DIM etc.)
D_IN, D_H1, D_H2, D_H3, D_OUT = 1280, 1024, 512, 256, 1


def _xavier_uniform(key, fan_in, fan_out, dtype=jnp.float32):
    """Matches torch.nn.init.xavier_uniform_ (gain=1)."""
    bound = (6.0 / (fan_in + fan_out)) ** 0.5
    return jax.random.uniform(key, (fan_in, fan_out), dtype=dtype,
                              minval=-bound, maxval=bound)


def mlp_kernel(x_ref, w1_ref, b1_ref, w2_ref, b2_ref,
               w3_ref, b3_ref, w4_ref, b4_ref, o_ref):
    x = x_ref[...]  # (tile_b, 1280) bf16 (wrapper guarantees dtype)
    # fc1 + relu (bf16 MXU operands, f32 accumulate; bias/ReLU stay f32 for v5e VPU)
    h = jnp.dot(x, w1_ref[...], preferred_element_type=jnp.float32) + b1_ref[...]
    h = jnp.maximum(h, 0.0)
    # fc2 + relu
    h = jnp.dot(h.astype(jnp.bfloat16), w2_ref[...],
                preferred_element_type=jnp.float32) + b2_ref[...]
    h = jnp.maximum(h, 0.0)
    # dropout(0.1): identity in eval/inference mode
    # fc3 + relu
    h = jnp.dot(h.astype(jnp.bfloat16), w3_ref[...],
                preferred_element_type=jnp.float32) + b3_ref[...]
    h = jnp.maximum(h, 0.0)
    # dropout(0.1): identity in eval/inference mode
    # Output layer (N=1): emit a lane-dense (1, tile_b) row directly,
    #   row[j] = sum_k h[j, k] * w4[k]  ==  (w4 @ h.T)[0, j]
    # so the store is a full-width vst instead of a width-1 masked store.
    row = jnp.dot(w4_ref[...], h.T, preferred_element_type=jnp.float32)  # (1, tile_b)
    o_ref[...] = row + b4_ref[...]  # b4 is (1, 1); broadcasts along lanes


@jax.jit
def mlp_forward(x, params):
    w1, b1, w2, b2, w3, b3, w4, b4 = params
    B = x.shape[0]

    # Adaptive tile selection (B is static under jit).
    if B >= 1024:
        tile_b = 512          # big-batch: halve step count / grid overhead (v6e)
    elif B >= 512:
        tile_b = 256
    elif B >= 256:
        tile_b = 128          # >= 2 parallel steps -> both v7x TensorCores busy
    else:
        tile_b = max(16, -(-B // 16) * 16)  # single tile, no 8x padding waste
    num_tiles = -(-B // tile_b)

    x = x.astype(jnp.bfloat16)            # cheap DMA/VMEM path unconditionally
    if B < tile_b:                        # only in the small single-tile branch
        x = jnp.pad(x, ((0, tile_b - B), (0, 0)))
    # For B >= tile_b the ragged last block (if any) is masked by Pallas; padded rows
    # only flow through row-wise ops and are sliced off below.

    def resident(shape):
        # Whole-weight blocks with constant index maps: DMA'd once, reused every step.
        return pl.BlockSpec(shape, lambda i: (0, 0))

    grid_spec = pltpu.PrefetchScalarGridSpec(
        num_scalar_prefetch=0,
        grid=(num_tiles,),
        in_specs=[
            pl.BlockSpec((tile_b, D_IN), lambda i: (i, 0)),
            resident((D_IN, D_H1)), resident((1, D_H1)),
            resident((D_H1, D_H2)), resident((1, D_H2)),
            resident((D_H2, D_H3)), resident((1, D_H3)),
            resident((1, D_H3)),    resident((1, D_OUT)),
        ],
        # Lane-dense output row per grid step.
        out_specs=pl.BlockSpec((1, tile_b), lambda i: (0, i)),
    )

    out = pl.pallas_call(
        mlp_kernel,
        out_shape=jax.ShapeDtypeStruct((1, num_tiles * tile_b), jnp.float32),
        grid_spec=grid_spec,
        compiler_params=pltpu.CompilerParams(
            # Batch tiles are independent -> megacore sharding on v7x when >= 2 steps.
            dimension_semantics=("parallel",),
            # Worst case (tile_b=512): ~7.5 MiB double-buffered bf16 weights
            # + ~2.5 MiB x tiles + ~3.5 MiB f32 intermediates -> 24 MiB is ample
            # and safely under v7x's 64 MiB physical VMEM.
            vmem_limit_bytes=24 * 1024 * 1024,
        ),
    )(x, w1, b1, w2, b2, w3, b3, w4, b4)

    # (1, num_tiles*tile_b) row -> (B, 1); ragged / padded rows are dropped here.
    return out[0, :B].reshape(B, 1)


def mlp_reference(x, params):
    """Pure-JAX reference mirroring the kernel's mixed-precision math."""
    w1, b1, w2, b2, w3, b3, w4, b4 = params
    h = x.astype(jnp.bfloat16)
    h = jnp.maximum(jnp.dot(h, w1, preferred_element_type=jnp.float32) + b1, 0.0)
    h = jnp.maximum(jnp.dot(h.astype(jnp.bfloat16), w2,
                            preferred_element_type=jnp.float32) + b2, 0.0)
    h = jnp.maximum(jnp.dot(h.astype(jnp.bfloat16), w3,
                            preferred_element_type=jnp.float32) + b3, 0.0)
    return jnp.dot(h, w4.T, preferred_element_type=jnp.float32) + b4


def init_params(key):
    k1, k2, k3, k4 = jax.random.split(key, 4)
    # Xavier-uniform init (f32), stored bf16 for the big layers (f32 accumulate in-kernel).
    w1 = _xavier_uniform(k1, D_IN, D_H1).astype(jnp.bfloat16)
    w2 = _xavier_uniform(k2, D_H1, D_H2).astype(jnp.bfloat16)
    w3 = _xavier_uniform(k3, D_H2, D_H3).astype(jnp.bfloat16)
    # Output layer kept f32 as a (1, 256) lane-resident row.
    w4 = _xavier_uniform(k4, D_H3, D_OUT).reshape(1, D_H3)
    # nn.init.constant_(bias, 0); kept 2-D (1, N) f32 for clean lane broadcasting.
    b1 = jnp.zeros((1, D_H1), jnp.float32)
    b2 = jnp.zeros((1, D_H2), jnp.float32)
    b3 = jnp.zeros((1, D_H3), jnp.float32)
    b4 = jnp.zeros((1, D_OUT), jnp.float32)
    return (w1, b1, w2, b2, w3, b3, w4, b4)


if __name__ == "__main__":
    key = jax.random.PRNGKey(0)
    k_params, k_x1, k_x2 = jax.random.split(key, 3)
    params = init_params(k_params)

    # CFG.BATCH_SIZE batch: exercises the small-batch single-tile path (tile_b = 32).
    x_small = jax.random.normal(k_x1, (32, D_IN), dtype=jnp.float32)
    out_small = mlp_forward(x_small, params)
    jax.block_until_ready(out_small)
    ref_small = mlp_reference(x_small, params)
    assert out_small.shape == (32, D_OUT)
    assert jnp.allclose(out_small, ref_small, atol=2e-2, rtol=2e-2)

    # Multi-tile path: 3 parallel grid steps of 128 rows with a ragged last block
    # (exercises megacore sharding + lane-dense multi-block output + boundary masking).
    x_big = jax.random.normal(k_x2, (272, D_IN), dtype=jnp.float32)
    out_big = mlp_forward(x_big, params)
    jax.block_until_ready(out_big)
    ref_big = mlp_reference(x_big, params)
    assert out_big.shape == (272, D_OUT)
    assert jnp.allclose(out_big, ref_big, atol=2e-2, rtol=2e-2)

    print("KERNEL_OK")
</pallas_src>

<mosaic_0001>
module attributes {stable_mosaic.version = 11 : i64} {
  func.func @mlp_kernel(%arg0: i32, %arg1: memref<32x1280xbf16, #tpu.memory_space<vmem>>, %arg2: memref<1280x1024xbf16, #tpu.memory_space<vmem>>, %arg3: memref<1x1024xf32, #tpu.memory_space<vmem>>, %arg4: memref<1024x512xbf16, #tpu.memory_space<vmem>>, %arg5: memref<1x512xf32, #tpu.memory_space<vmem>>, %arg6: memref<512x256xbf16, #tpu.memory_space<vmem>>, %arg7: memref<1x256xf32, #tpu.memory_space<vmem>>, %arg8: memref<1x256xf32, #tpu.memory_space<vmem>>, %arg9: memref<1x1xf32, #tpu.memory_space<vmem>>, %arg10: memref<1x32xf32, #tpu.memory_space<vmem>>) attributes {dimension_semantics = [#tpu.dimension_semantics<parallel>], iteration_bounds = array<i64: 1>, scalar_prefetch = 0 : i64, scratch_operands = 0 : i64, tpu.core_type = #tpu.core_type<tc>, window_params = [{transform_indices = @transform_0, window_bounds = array<i64: 32, 1280>}, {pipeline_mode = #tpu.pipeline_mode<synchronous>, transform_indices = @transform_1, window_bounds = array<i64: 1280, 1024>}, {pipeline_mode = #tpu.pipeline_mode<synchronous>, transform_indices = @transform_2, window_bounds = array<i64: 1, 1024>}, {pipeline_mode = #tpu.pipeline_mode<synchronous>, transform_indices = @transform_3, window_bounds = array<i64: 1024, 512>}, {pipeline_mode = #tpu.pipeline_mode<synchronous>, transform_indices = @transform_4, window_bounds = array<i64: 1, 512>}, {pipeline_mode = #tpu.pipeline_mode<synchronous>, transform_indices = @transform_5, window_bounds = array<i64: 512, 256>}, {pipeline_mode = #tpu.pipeline_mode<synchronous>, transform_indices = @transform_6, window_bounds = array<i64: 1, 256>}, {pipeline_mode = #tpu.pipeline_mode<synchronous>, transform_indices = @transform_7, window_bounds = array<i64: 1, 256>}, {pipeline_mode = #tpu.pipeline_mode<synchronous>, transform_indices = @transform_8, window_bounds = array<i64: 1, 1>}, {transform_indices = @transform_9, window_bounds = array<i64: 1, 32>}]} {
    %c0 = arith.constant 0 : index
    %c0_0 = arith.constant 0 : index
    %0 = vector.load %arg1[%c0, %c0_0] : memref<32x1280xbf16, #tpu.memory_space<vmem>>, vector<32x1280xbf16>
    %c0_1 = arith.constant 0 : index
    %c0_2 = arith.constant 0 : index
    %1 = vector.load %arg2[%c0_1, %c0_2] : memref<1280x1024xbf16, #tpu.memory_space<vmem>>, vector<1280x1024xbf16>
    %cst = arith.constant dense<0.000000e+00> : vector<32x1024xf32>
    %2 = tpu.matmul %0, %1, %cst {dimension_numbers = #tpu.dot_dimension_numbers<[1], [0], [0], [1], [0, 0, 1, 1], [], []>} : vector<32x1280xbf16>, vector<1280x1024xbf16>, vector<32x1024xf32> -> vector<32x1024xf32>
    %c0_3 = arith.constant 0 : index
    %c0_4 = arith.constant 0 : index
    %3 = vector.load %arg3[%c0_3, %c0_4] : memref<1x1024xf32, #tpu.memory_space<vmem>>, vector<1x1024xf32>
    %4 = vector.broadcast %3 : vector<1x1024xf32> to vector<32x1024xf32>
    %5 = arith.addf %2, %4 : vector<32x1024xf32>
    %cst_5 = arith.constant 0.000000e+00 : f32
    %6 = vector.broadcast %cst_5 : f32 to vector<32x1024xf32>
    %7 = arith.maximumf %5, %6 : vector<32x1024xf32>
    %8 = arith.truncf %7 : vector<32x1024xf32> to vector<32x1024xbf16>
    %c0_6 = arith.constant 0 : index
    %c0_7 = arith.constant 0 : index
    %9 = vector.load %arg4[%c0_6, %c0_7] : memref<1024x512xbf16, #tpu.memory_space<vmem>>, vector<1024x512xbf16>
    %cst_8 = arith.constant dense<0.000000e+00> : vector<32x512xf32>
    %10 = tpu.matmul %8, %9, %cst_8 {dimension_numbers = #tpu.dot_dimension_numbers<[1], [0], [0], [1], [0, 0, 1, 1], [], []>} : vector<32x1024xbf16>, vector<1024x512xbf16>, vector<32x512xf32> -> vector<32x512xf32>
    %c0_9 = arith.constant 0 : index
    %c0_10 = arith.constant 0 : index
    %11 = vector.load %arg5[%c0_9, %c0_10] : memref<1x512xf32, #tpu.memory_space<vmem>>, vector<1x512xf32>
    %12 = vector.broadcast %11 : vector<1x512xf32> to vector<32x512xf32>
    %13 = arith.addf %10, %12 : vector<32x512xf32>
    %cst_11 = arith.constant 0.000000e+00 : f32
    %14 = vector.broadcast %cst_11 : f32 to vector<32x512xf32>
    %15 = arith.maximumf %13, %14 : vector<32x512xf32>
    %16 = arith.truncf %15 : vector<32x512xf32> to vector<32x512xbf16>
    %c0_12 = arith.constant 0 : index
    %c0_13 = arith.constant 0 : index
    %17 = vector.load %arg6[%c0_12, %c0_13] : memref<512x256xbf16, #tpu.memory_space<vmem>>, vector<512x256xbf16>
    %cst_14 = arith.constant dense<0.000000e+00> : vector<32x256xf32>
    %18 = tpu.matmul %16, %17, %cst_14 {dimension_numbers = #tpu.dot_dimension_numbers<[1], [0], [0], [1], [0, 0, 1, 1], [], []>} : vector<32x512xbf16>, vector<512x256xbf16>, vector<32x256xf32> -> vector<32x256xf32>
    %c0_15 = arith.constant 0 : index
    %c0_16 = arith.constant 0 : index
    %19 = vector.load %arg7[%c0_15, %c0_16] : memref<1x256xf32, #tpu.memory_space<vmem>>, vector<1x256xf32>
    %20 = vector.broadcast %19 : vector<1x256xf32> to vector<32x256xf32>
    %21 = arith.addf %18, %20 : vector<32x256xf32>
    %cst_17 = arith.constant 0.000000e+00 : f32
    %22 = vector.broadcast %cst_17 : f32 to vector<32x256xf32>
    %23 = arith.maximumf %21, %22 : vector<32x256xf32>
    %c0_18 = arith.constant 0 : index
    %c0_19 = arith.constant 0 : index
    %24 = vector.load %arg8[%c0_18, %c0_19] : memref<1x256xf32, #tpu.memory_space<vmem>>, vector<1x256xf32>
    %25 = tpu.transpose %23, [1, 0] : vector<32x256xf32> -> vector<256x32xf32>
    %cst_20 = arith.constant dense<0.000000e+00> : vector<1x32xf32>
    %26 = tpu.matmul %24, %25, %cst_20 {dimension_numbers = #tpu.dot_dimension_numbers<[1], [0], [0], [1], [0, 0, 1, 1], [], []>} : vector<1x256xf32>, vector<256x32xf32>, vector<1x32xf32> -> vector<1x32xf32>
    %c0_21 = arith.constant 0 : index
    %c0_22 = arith.constant 0 : index
    %27 = vector.load %arg9[%c0_21, %c0_22] : memref<1x1xf32, #tpu.memory_space<vmem>>, vector<1x1xf32>
    %28 = vector.broadcast %27 : vector<1x1xf32> to vector<1x32xf32>
    %29 = arith.addf %26, %28 : vector<1x32xf32>
    %c0_23 = arith.constant 0 : index
    %c0_24 = arith.constant 0 : index
    %30 = vector.load %arg10[%c0_23, %c0_24] : memref<1x32xf32, #tpu.memory_space<vmem>>, vector<1x32xf32>
    tpu.vector_store %arg10[%c0_23, %c0_24], %29 {strides = array<i32>} : memref<1x32xf32, #tpu.memory_space<vmem>>, vector<1x32xf32>,
    return
  }
  func.func @transform_0(%arg0: i32) -> (i32, i32) {
    %c0_i32 = arith.constant 0 : i32
    %c0_i32_0 = arith.constant 0 : i32
    return %arg0, %c0_i32 : i32, i32
  }
  func.func @transform_1(%arg0: i32) -> (i32, i32) {
    %c0_i32 = arith.constant 0 : i32
    %c0_i32_0 = arith.constant 0 : i32
    %c0_i32_1 = arith.constant 0 : i32
    return %c0_i32, %c0_i32_0 : i32, i32
  }
  func.func @transform_2(%arg0: i32) -> (i32, i32) {
    %c0_i32 = arith.constant 0 : i32
    %c0_i32_0 = arith.constant 0 : i32
    %c0_i32_1 = arith.constant 0 : i32
    return %c0_i32, %c0_i32_0 : i32, i32
  }
  func.func @transform_3(%arg0: i32) -> (i32, i32) {
    %c0_i32 = arith.constant 0 : i32
    %c0_i32_0 = arith.constant 0 : i32
    %c0_i32_1 = arith.constant 0 : i32
    return %c0_i32, %c0_i32_0 : i32, i32
  }
  func.func @transform_4(%arg0: i32) -> (i32, i32) {
    %c0_i32 = arith.constant 0 : i32
    %c0_i32_0 = arith.constant 0 : i32
    %c0_i32_1 = arith.constant 0 : i32
    return %c0_i32, %c0_i32_0 : i32, i32
  }
  func.func @transform_5(%arg0: i32) -> (i32, i32) {
    %c0_i32 = arith.constant 0 : i32
    %c0_i32_0 = arith.constant 0 : i32
    %c0_i32_1 = arith.constant 0 : i32
    return %c0_i32, %c0_i32_0 : i32, i32
  }
  func.func @transform_6(%arg0: i32) -> (i32, i32) {
    %c0_i32 = arith.constant 0 : i32
    %c0_i32_0 = arith.constant 0 : i32
    %c0_i32_1 = arith.constant 0 : i32
    return %c0_i32, %c0_i32_0 : i32, i32
  }
  func.func @transform_7(%arg0: i32) -> (i32, i32) {
    %c0_i32 = arith.constant 0 : i32
    %c0_i32_0 = arith.constant 0 : i32
    %c0_i32_1 = arith.constant 0 : i32
    return %c0_i32, %c0_i32_0 : i32, i32
  }
  func.func @transform_8(%arg0: i32) -> (i32, i32) {
    %c0_i32 = arith.constant 0 : i32
    %c0_i32_0 = arith.constant 0 : i32
    %c0_i32_1 = arith.constant 0 : i32
    return %c0_i32, %c0_i32_0 : i32, i32
  }
  func.func @transform_9(%arg0: i32) -> (i32, i32) {
    %c0_i32 = arith.constant 0 : i32
    %c0_i32_0 = arith.constant 0 : i32
    return %c0_i32, %arg0 : i32, i32
  }
}

</mosaic_0001>

<llo_original>
// kernel: mlp_forward.1
$region0: #{mlp_forward.1}
  #allocation0 [shape = 'u32[]', space=smem, size = 0x4, offset = 0x4, fixed_abs, tag = 'smem constant byte address 0x4 - core index']
  #allocation1 [shape = 'u32[72,128]{1,0:T(1,128)}', space=vmem, size = 0x9000, scoped, tag = 'internal scratch']
  #allocation2 [shape = 'f32[1,1]{1,0:T(1,128)S(1)}', space=vmem, size = 0x200, scoped, tag = 'scoped memory for mlp_forward.1']
  %s0 = inlined_call_operand.vmem [shape: bf16[32,1280], index: 0, kind: input, shape index: {}]
  %s1 = inlined_call_operand.hbm [shape: bf16[1280,1024], index: 1, kind: input, shape index: {}]
  %s2 = inlined_call_operand.hbm [shape: f32[1,1024], index: 2, kind: input, shape index: {}]
  %s3 = inlined_call_operand.hbm [shape: bf16[1024,512], index: 3, kind: input, shape index: {}]
  %s4 = inlined_call_operand.hbm [shape: f32[1,512], index: 4, kind: input, shape index: {}]
  %s5 = inlined_call_operand.hbm [shape: bf16[512,256], index: 5, kind: input, shape index: {}]
  %s6 = inlined_call_operand.hbm [shape: f32[1,256], index: 6, kind: input, shape index: {}]
  %s7 = inlined_call_operand.hbm [shape: f32[1,256], index: 7, kind: input, shape index: {}]
  %s8 = inlined_call_operand.<no memory space> [shape: f32[1,1], index: 8, kind: input, shape index: {}]
  %s9 = inlined_call_operand.hbm [shape: f32[1,32], index: 9, kind: output, shape index: {}]
  %s10 = sld [smem:[#allocation0]]
  $region74: #{mlp_forward.1} parent=0
    _
  %s12 = ssub.s32 1, %s10
  %s13 = scalar_select 0, %s12, %s10
  %v14 = vstv %s8
  %15 = vst [vmem:[#allocation2] sm:$0x1] %v14
  $region1: #{mlp_forward.1} parent=0
    #allocation3 [shape = 'u8[2621440]{0}', space=vmem, size = 0x280000, scoped, tag = 'input window, operand 1, single buffered']
    #allocation4 [shape = 's32[1]{0}', space=sflag, size = 0x4, scoped, tag = 'scoped memory for mlp_forward.1']
    #allocation5 [shape = 's32[1]{0}', space=sflag, size = 0x4, scoped, tag = 'scoped memory for mlp_forward.1']
    #allocation6 [shape = 'u8[4096]{0}', space=vmem, size = 0x1000, scoped, tag = 'input window, operand 2, single buffered']
    #allocation7 [shape = 's32[1]{0}', space=sflag, size = 0x4, scoped, tag = 'scoped memory for mlp_forward.1']
    #allocation8 [shape = 'u8[1048576]{0}', space=vmem, size = 0x100000, scoped, tag = 'input window, operand 3, single buffered']
    #allocation9 [shape = 'u8[2048]{0}', space=vmem, size = 0x800, scoped, tag = 'input window, operand 4, single buffered']
    #allocation10 [shape = 's32[1]{0}', space=sflag, size = 0x4, scoped, tag = 'scoped memory for mlp_forward.1']
    #allocation11 [shape = 'u8[262144]{0}', space=vmem, size = 0x40000, scoped, tag = 'input window, operand 5, single buffered']
    #allocation12 [shape = 'u8[1024]{0}', space=vmem, size = 0x400, scoped, tag = 'input window, operand 6, single buffered']
    #allocation13 [shape = 's32[1]{0}', space=sflag, size = 0x4, scoped, tag = 'scoped memory for mlp_forward.1']
    #allocation14 [shape = 'u8[1024]{0}', space=vmem, size = 0x400, scoped, tag = 'input window, operand 7, single buffered']
    #allocation15 [shape = 'u8[512]{0}', space=vmem, size = 0x400, scoped, tag = 'output window, operand 0, single buffered']
    %16 = vsyncpa [#allocation4], 0
    %17 = vsyncpa [#allocation7], 0
    %18 = vsyncpa [#allocation10], 0
    %19 = vsyncpa [#allocation13], 0
    %20 = vsyncpa [#allocation5], 0
    // Predicated region
    $region2: #{mlp_forward.1} parent=1 // pred_check
      _
    $region3: #{mlp_forward.1} parent=1 // pred_check_branch
      %22 = sbr.rel (0) target = $region5
    $region4: #{mlp_forward.1} parent=1 // pred_region
      _
    $region5: #{mlp_forward.1} parent=1 // pred_fallthru
      _
    // Predicated region
    $region6: #{mlp_forward.1} parent=1 // pred_check
      _
    $region7: #{mlp_forward.1} parent=1 // pred_check_branch
      %24 = sbr.rel (0) target = $region9
    $region8: #{mlp_forward.1} parent=1 // pred_region
      %26 = vsyncadd [#allocation4], 0
      %s27 = sshll.u32 %s1, 4
      %s28 = int_to_ptr.hbm [resolvable:$true] %s27
      %s29 = sshll.u32 [#allocation3], 4
      %s30 = int_to_ptr.vmem [resolvable:$true] %s29
      %35 = dma.hbm_to_vmem [thread:$0]  %s28, 81920, %s30, [#allocation4], 512, 512, 32
    $region9: #{mlp_forward.1} parent=1 // pred_fallthru
      _
    // Predicated region
    $region10: #{mlp_forward.1} parent=1 // pred_check
      _
    $region11: #{mlp_forward.1} parent=1 // pred_check_branch
      %37 = sbr.rel (0) target = $region13
    $region12: #{mlp_forward.1} parent=1 // pred_region
      %39 = vsyncadd [#allocation7], 0
      %s41 = sshll.u32 %s2, 4
      %s42 = int_to_ptr.hbm [resolvable:$true] %s41
      %s43 = sshll.u32 [#allocation6], 4
      %s44 = int_to_ptr.vmem [resolvable:$true] %s43
      %46 = dma.hbm_to_vmem [thread:$0]  %s42, 128, %s44, [#allocation7]
    $region13: #{mlp_forward.1} parent=1 // pred_fallthru
      _
    // Predicated region
    $region14: #{mlp_forward.1} parent=1 // pred_check
      _
    $region15: #{mlp_forward.1} parent=1 // pred_check_branch
      %48 = sbr.rel (0) target = $region17
    $region16: #{mlp_forward.1} parent=1 // pred_region
      %50 = vsyncadd [#allocation7], 0
      %s51 = sshll.u32 %s3, 4
      %s52 = int_to_ptr.hbm [resolvable:$true] %s51
      %s53 = sshll.u32 [#allocation8], 4
      %s54 = int_to_ptr.vmem [resolvable:$true] %s53
      %59 = dma.hbm_to_vmem [thread:$0]  %s52, 32768, %s54, [#allocation7], 256, 256, 16
    $region17: #{mlp_forward.1} parent=1 // pred_fallthru
      _
    // Predicated region
    $region18: #{mlp_forward.1} parent=1 // pred_check
      _
    $region19: #{mlp_forward.1} parent=1 // pred_check_branch
      %61 = sbr.rel (0) target = $region21
    $region20: #{mlp_forward.1} parent=1 // pred_region
      %63 = vsyncadd [#allocation10], 0
      %s65 = sshll.u32 %s4, 4
      %s66 = int_to_ptr.hbm [resolvable:$true] %s65
      %s67 = sshll.u32 [#allocation9], 4
      %s68 = int_to_ptr.vmem [resolvable:$true] %s67
      %70 = dma.hbm_to_vmem [thread:$0]  %s66, 64, %s68, [#allocation10]
    $region21: #{mlp_forward.1} parent=1 // pred_fallthru
      _
    // Predicated region
    $region22: #{mlp_forward.1} parent=1 // pred_check
      _
    $region23: #{mlp_forward.1} parent=1 // pred_check_branch
      %72 = sbr.rel (0) target = $region25
    $region24: #{mlp_forward.1} parent=1 // pred_region
      %74 = vsyncadd [#allocation10], 0
      %s75 = sshll.u32 %s5, 4
      %s76 = int_to_ptr.hbm [resolvable:$true] %s75
      %s77 = sshll.u32 [#allocation11], 4
      %s78 = int_to_ptr.vmem [resolvable:$true] %s77
      %83 = dma.hbm_to_vmem [thread:$0]  %s76, 8192, %s78, [#allocation10], 128, 128, 8
    $region25: #{mlp_forward.1} parent=1 // pred_fallthru
      _
    // Predicated region
    $region26: #{mlp_forward.1} parent=1 // pred_check
      _
    $region27: #{mlp_forward.1} parent=1 // pred_check_branch
      %85 = sbr.rel (0) target = $region29
    $region28: #{mlp_forward.1} parent=1 // pred_region
      %87 = vsyncadd [#allocation13], 0
      %s89 = sshll.u32 %s6, 4
      %s90 = int_to_ptr.hbm [resolvable:$true] %s89
      %s91 = sshll.u32 [#allocation12], 4
      %s92 = int_to_ptr.vmem [resolvable:$true] %s91
      %94 = dma.hbm_to_vmem [thread:$0]  %s90, 32, %s92, [#allocation13]
    $region29: #{mlp_forward.1} parent=1 // pred_fallthru
      _
    // Predicated region
    $region30: #{mlp_forward.1} parent=1 // pred_check
      _
    $region31: #{mlp_forward.1} parent=1 // pred_check_branch
      %96 = sbr.rel (0) target = $region33
    $region32: #{mlp_forward.1} parent=1 // pred_region
      %98 = vsyncadd [#allocation13], 0
      %s100 = sshll.u32 %s7, 4
      %s101 = int_to_ptr.hbm [resolvable:$true] %s100
      %s102 = sshll.u32 [#allocation14], 4
      %s103 = int_to_ptr.vmem [resolvable:$true] %s102
      %105 = dma.hbm_to_vmem [thread:$0]  %s101, 32, %s103, [#allocation13]
    $region33: #{mlp_forward.1} parent=1 // pred_fallthru
      _
    // Predicated region
    $region34: #{mlp_forward.1} parent=1 // pred_check
      _
    $region35: #{mlp_forward.1} parent=1 // pred_check_branch
      %107 = sbr.rel (0) target = $region37
    $region36: #{mlp_forward.1} parent=1 // pred_region
      _
    $region37: #{mlp_forward.1} parent=1 // pred_fallthru
      _
    // Predicated region
    $region38: #{mlp_forward.1} parent=1 // pred_check
      _
    $region39: #{mlp_forward.1} parent=1 // pred_check_branch
      %109 = sbr.rel (0) target = $region41
    $region40: #{mlp_forward.1} parent=1 // pred_region
      %111 = dma.done [#allocation4], 81920
    $region41: #{mlp_forward.1} parent=1 // pred_fallthru
      _
    // Predicated region
    $region42: #{mlp_forward.1} parent=1 // pred_check
      _
    $region43: #{mlp_forward.1} parent=1 // pred_check_branch
      %113 = sbr.rel (0) target = $region45
    $region44: #{mlp_forward.1} parent=1 // pred_region
      %115 = dma.done [#allocation7], 128
    $region45: #{mlp_forward.1} parent=1 // pred_fallthru
      _
    // Predicated region
    $region46: #{mlp_forward.1} parent=1 // pred_check
      _
    $region47: #{mlp_forward.1} parent=1 // pred_check_branch
      %117 = sbr.rel (0) target = $region49
    $region48: #{mlp_forward.1} parent=1 // pred_region
      %119 = dma.done [#allocation7], 32768
    $region49: #{mlp_forward.1} parent=1 // pred_fallthru
      _
    // Predicated region
    $region50: #{mlp_forward.1} parent=1 // pred_check
      _
    $region51: #{mlp_forward.1} parent=1 // pred_check_branch
      %121 = sbr.rel (0) target = $region53
    $region52: #{mlp_forward.1} parent=1 // pred_region
      %123 = dma.done [#allocation10], 64
    $region53: #{mlp_forward.1} parent=1 // pred_fallthru
      _
    // Predicated region
    $region54: #{mlp_forward.1} parent=1 // pred_check
      _
    $region55: #{mlp_forward.1} parent=1 // pred_check_branch
      %125 = sbr.rel (0) target = $region57
    $region56: #{mlp_forward.1} parent=1 // pred_region
      %127 = dma.done [#allocation10], 8192
    $region57: #{mlp_forward.1} parent=1 // pred_fallthru
      _
    // Predicated region
    $region58: #{mlp_forward.1} parent=1 // pred_check
      _
    $region59: #{mlp_forward.1} parent=1 // pred_check_branch
      %129 = sbr.rel (0) target = $region61
    $region60: #{mlp_forward.1} parent=1 // pred_region
      %131 = dma.done [#allocation13], 32
    $region61: #{mlp_forward.1} parent=1 // pred_fallthru
      _
    // Predicated region
    $region62: #{mlp_forward.1} parent=1 // pred_check
      _
    $region63: #{mlp_forward.1} parent=1 // pred_check_branch
      %133 = sbr.rel (0) target = $region65
    $region64: #{mlp_forward.1} parent=1 // pred_region
      %135 = dma.done [#allocation13], 32
    $region65: #{mlp_forward.1} parent=1 // pred_fallthru
      _
    %v136 = vld [vmem:[%s0] sm:$0xff]
    %v137 = vld [vmem:[%s0 + $0x8] sm:$0xff]
    %v138 = vld [vmem:[%s0 + $0x10] sm:$0xff]
    %v139 = vld [vmem:[%s0 + $0x18] sm:$0xff]
    %v140 = vld [vmem:[%s0 + $0x20] sm:$0xff]
    %v141 = vld [vmem:[%s0 + $0x28] sm:$0xff]
    %v142 = vld [vmem:[%s0 + $0x30] sm:$0xff]
    %v143 = vld [vmem:[%s0 + $0x38] sm:$0xff]
    %v144 = vld [vmem:[%s0 + $0x40] sm:$0xff]
    %v145 = vld [vmem:[%s0 + $0x48] sm:$0xff]
    %v146 = vld [vmem:[%s0 + $0x50] sm:$0xff]
    %v147 = vld [vmem:[%s0 + $0x58] sm:$0xff]
    %v148 = vld [vmem:[%s0 + $0x60] sm:$0xff]
    %v149 = vld [vmem:[%s0 + $0x68] sm:$0xff]
    %v150 = vld [vmem:[%s0 + $0x70] sm:$0xff]
    %v151 = vld [vmem:[%s0 + $0x78] sm:$0xff]
    %v152 = vld [vmem:[%s0 + $0x80] sm:$0xff]
    %v153 = vld [vmem:[%s0 + $0x88] sm:$0xff]
    %v154 = vld [vmem:[%s0 + $0x90] sm:$0xff]
    %v155 = vld [vmem:[%s0 + $0x98] sm:$0xff]
    %v156 = vld [vmem:[#allocation3] sm:$0xff]
    %v157 = vld [vmem:[#allocation3 + $0x8] sm:$0xff]
    %v158 = vld [vmem:[#allocation3 + $0x10] sm:$0xff]
    %v159 = vld [vmem:[#allocation3 + $0x18] sm:$0xff]
    %v160 = vld [vmem:[#allocation3 + $0x20] sm:$0xff]
    %v161 = vld [vmem:[#allocation3 + $0x28] sm:$0xff]
    %v162 = vld [vmem:[#allocation3 + $0x30] sm:$0xff]
    %v163 = vld [vmem:[#allocation3 + $0x38] sm:$0xff]
    %v164 = vld [vmem:[#allocation3 + $0x40] sm:$0xff]
    %v165 = vld [vmem:[#allocation3 + $0x48] sm:$0xff]
    %v166 = vld [vmem:[#allocation3 + $0x50] sm:$0xff]
    %v167 = vld [vmem:[#allocation3 + $0x58] sm:$0xff]
    %v168 = vld [vmem:[#allocation3 + $0x60] sm:$0xff]
    %v169 = vld [vmem:[#allocation3 + $0x68] sm:$0xff]
    %v170 = vld [vmem:[#allocation3 + $0x70] sm:$0xff]
    %v171 = vld [vmem:[#allocation3 + $0x78] sm:$0xff]
    %v172 = vld [vmem:[#allocation3 + $0x80] sm:$0xff]
    %v173 = vld [vmem:[#allocation3 + $0x88] sm:$0xff]
    %v174 = vld [vmem:[#allocation3 + $0x90] sm:$0xff]
    %v175 = vld [vmem:[#allocation3 + $0x98] sm:$0xff]
    %v176 = vld [vmem:[#allocation3 + $0xa0] sm:$0xff]
    %v177 = vld [vmem:[#allocation3 + $0xa8] sm:$0xff]
    %v178 = vld [vmem:[#allocation3 + $0xb0] sm:$0xff]
    %v179 = vld [vmem:[#allocation3 + $0xb8] sm:$0xff]
    %v180 = vld [vmem:[#allocation3 + $0xc0] sm:$0xff]
    %v181 = vld [vmem:[#allocation3 + $0xc8] sm:$0xff]
    %v182 = vld [vmem:[#allocation3 + $0xd0] sm:$0xff]
    %v183 = vld [vmem:[#allocation3 + $0xd8] sm:$0xff]
    %v184 = vld [vmem:[#allocation3 + $0xe0] sm:$0xff]
    %v185 = vld [vmem:[#allocation3 + $0xe8] sm:$0xff]
    %v186 = vld [vmem:[#allocation3 + $0xf0] sm:$0xff]
    %v187 = vld [vmem:[#allocation3 + $0xf8] sm:$0xff]
    %v188 = vld [vmem:[#allocation3 + $0x100] sm:$0xff]
    %v189 = vld [vmem:[#allocation3 + $0x108] sm:$0xff]
    %v190 = vld [vmem:[#allocation3 + $0x110] sm:$0xff]
    %v191 = vld [vmem:[#allocation3 + $0x118] sm:$0xff]
    %v192 = vld [vmem:[#allocation3 + $0x120] sm:$0xff]
    %v193 = vld [vmem:[#allocation3 + $0x128] sm:$0xff]
    %v194 = vld [vmem:[#allocation3 + $0x130] sm:$0xff]
    %v195 = vld [vmem:[#allocation3 + $0x138] sm:$0xff]
    %v196 = vld [vmem:[#allocation3 + $0x140] sm:$0xff]
    %v197 = vld [vmem:[#allocation3 + $0x148] sm:$0xff]
    %v198 = vld [vmem:[#allocation3 + $0x150] sm:$0xff]
    %v199 = vld [vmem:[#allocation3 + $0x158] sm:$0xff]
    %v200 = vld [vmem:[#allocation3 + $0x160] sm:$0xff]
    %v201 = vld [vmem:[#allocation3 + $0x168] sm:$0xff]
    %v202 = vld [vmem:[#allocation3 + $0x170] sm:$0xff]
    %v203 = vld [vmem:[#allocation3 + $0x178] sm:$0xff]
    %v204 = vld [vmem:[#allocation3 + $0x180] sm:$0xff]
    %v205 = vld [vmem:[#allocation3 + $0x188] sm:$0xff]
    %v206 = vld [vmem:[#allocation3 + $0x190] sm:$0xff]
    %v207 = vld [vmem:[#allocation3 + $0x198] sm:$0xff]
    %v208 = vld [vmem:[#allocation3 + $0x1a0] sm:$0xff]
    %v209 = vld [vmem:[#allocation3 + $0x1a8] sm:$0xff]
    %v210 = vld [vmem:[#allocation3 + $0x1b0] sm:$0xff]
    %v211 = vld [vmem:[#allocation3 + $0x1b8] sm:$0xff]
    %v212 = vld [vmem:[#allocation3 + $0x1c0] sm:$0xff]
    %v213 = vld [vmem:[#allocation3 + $0x1c8] sm:$0xff]
    %v214 = vld [vmem:[#allocation3 + $0x1d0] sm:$0xff]
    %v215 = vld [vmem:[#allocation3 + $0x1d8] sm:$0xff]
    %v216 = vld [vmem:[#allocation3 + $0x1e0] sm:$0xff]
    %v217 = vld [vmem:[#allocation3 + $0x1e8] sm:$0xff]
    %v218 = vld [vmem:[#allocation3 + $0x1f0] sm:$0xff]
    %v219 = vld [vmem:[#allocation3 + $0x1f8] sm:$0xff]
    %v220 = vld [vmem:[#allocation3 + $0x200] sm:$0xff]
    %v221 = vld [vmem:[#allocation3 + $0x208] sm:$0xff]
    %v222 = vld [vmem:[#allocation3 + $0x210] sm:$0xff]
    %v223 = vld [vmem:[#allocation3 + $0x218] sm:$0xff]
    %v224 = vld [vmem:[#allocation3 + $0x220] sm:$0xff]
    %v225 = vld [vmem:[#allocation3 + $0x228] sm:$0xff]
    %v226 = vld [vmem:[#allocation3 + $0x230] sm:$0xff]
    %v227 = vld [vmem:[#allocation3 + $0x238] sm:$0xff]
    %v228 = vld [vmem:[#allocation3 + $0x240] sm:$0xff]
    %v229 = vld [vmem:[#allocation3 + $0x248] sm:$0xff]
    %v230 = vld [vmem:[#allocation3 + $0x250] sm:$0xff]
    %v231 = vld [vmem:[#allocation3 + $0x258] sm:$0xff]
    %v232 = vld [vmem:[#allocation3 + $0x260] sm:$0xff]
    %v233 = vld [vmem:[#allocation3 + $0x268] sm:$0xff]
    %v234 = vld [vmem:[#allocation3 + $0x270] sm:$0xff]
    %v235 = vld [vmem:[#allocation3 + $0x278] sm:$0xff]
    %v236 = vld [vmem:[#allocation3 + $0x280] sm:$0xff]
    %v237 = vld [vmem:[#allocation3 + $0x288] sm:$0xff]
    %v238 = vld [vmem:[#allocation3 + $0x290] sm:$0xff]
    %v239 = vld [vmem:[#allocation3 + $0x298] sm:$0xff]
    %v240 = vld [vmem:[#allocation3 + $0x2a0] sm:$0xff]
    %v241 = vld [vmem:[#allocation3 + $0x2a8] sm:$0xff]
    %v242 = vld [vmem:[#allocation3 + $0x2b0] sm:$0xff]
    %v243 = vld [vmem:[#allocation3 + $0x2b8] sm:$0xff]
    %v244 = vld [vmem:[#allocation3 + $0x2c0] sm:$0xff]
    %v245 = vld [vmem:[#allocation3 + $0x2c8] sm:$0xff]
    %v246 = vld [vmem:[#allocation3 + $0x2d0] sm:$0xff]
    %v247 = vld [vmem:[#allocation3 + $0x2d8] sm:$0xff]
    %v248 = vld [vmem:[#allocation3 + $0x2e0] sm:$0xff]
    %v249 = vld [vmem:[#allocation3 + $0x2e8] sm:$0xff]
    %v250 = vld [vmem:[#allocation3 + $0x2f0] sm:$0xff]
    %v251 = vld [vmem:[#allocation3 + $0x2f8] sm:$0xff]
    %v252 = vld [vmem:[#allocation3 + $0x300] sm:$0xff]
    %v253 = vld [vmem:[#allocation3 + $0x308] sm:$0xff]
    %v254 = vld [vmem:[#allocation3 + $0x310] sm:$0xff]
    %v255 = vld [vmem:[#allocation3 + $0x318] sm:$0xff]
    %v256 = vld [vmem:[#allocation3 + $0x320] sm:$0xff]
    %v257 = vld [vmem:[#allocation3 + $0x328] sm:$0xff]
    %v258 = vld [vmem:[#allocation3 + $0x330] sm:$0xff]
    %v259 = vld [vmem:[#allocation3 + $0x338] sm:$0xff]
    %v260 = vld [vmem:[#allocation3 + $0x340] sm:$0xff]
    %v261 = vld [vmem:[#allocation3 + $0x348] sm:$0xff]
    %v262 = vld [vmem:[#allocation3 + $0x350] sm:$0xff]
    %v263 = vld [vmem:[#allocation3 + $0x358] sm:$0xff]
    %v264 = vld [vmem:[#allocation3 + $0x360] sm:$0xff]
    %v265 = vld [vmem:[#allocation3 + $0x368] sm:$0xff]
    %v266 = vld [vmem:[#allocation3 + $0x370] sm:$0xff]
    %v267 = vld [vmem:[#allocation3 + $0x378] sm:$0xff]
    %v268 = vld [vmem:[#allocation3 + $0x380] sm:$0xff]
    %v269 = vld [vmem:[#allocation3 + $0x388] sm:$0xff]
    %v270 = vld [vmem:[#allocation3 + $0x390] sm:$0xff]
    %v271 = vld [vmem:[#allocation3 + $0x398] sm:$0xff]
    %v272 = vld [vmem:[#allocation3 + $0x3a0] sm:$0xff]
    %v273 = vld [vmem:[#allocation3 + $0x3a8] sm:$0xff]
    %v274 = vld [vmem:[#allocation3 + $0x3b0] sm:$0xff]
    %v275 = vld [vmem:[#allocation3 + $0x3b8] sm:$0xff]
    %v276 = vld [vmem:[#allocation3 + $0x3c0] sm:$0xff]
    %v277 = vld [vmem:[#allocation3 + $0x3c8] sm:$0xff]
    %v278 = vld [vmem:[#allocation3 + $0x3d0] sm:$0xff]
    %v279 = vld [vmem:[#allocation3 + $0x3d8] sm:$0xff]
    %v280 = vld [vmem:[#allocation3 + $0x3e0] sm:$0xff]
    %v281 = vld [vmem:[#allocation3 + $0x3e8] sm:$0xff]
    %v282 = vld [vmem:[#allocation3 + $0x3f0] sm:$0xff]
    %v283 = vld [vmem:[#allocation3 + $0x3f8] sm:$0xff]
    %v284 = vld [vmem:[#allocation3 + $0x400] sm:$0xff]
    %v285 = vld [vmem:[#allocation3 + $0x408] sm:$0xff]
    %v286 = vld [vmem:[#allocation3 + $0x410] sm:$0xff]
    %v287 = vld [vmem:[#allocation3 + $0x418] sm:$0xff]
    %v288 = vld [vmem:[#allocation3 + $0x420] sm:$0xff]
    %v289 = vld [vmem:[#allocation3 + $0x428] sm:$0xff]
    %v290 = vld [vmem:[#allocation3 + $0x430] sm:$0xff]
    %v291 = vld [vmem:[#allocation3 + $0x438] sm:$0xff]
    %v292 = vld [vmem:[#allocation3 + $0x440] sm:$0xff]
    %v293 = vld [vmem:[#allocation3 + $0x448] sm:$0xff]
    %v294 = vld [vmem:[#allocation3 + $0x450] sm:$0xff]
    %v295 = vld [vmem:[#allocation3 + $0x458] sm:$0xff]
    %v296 = vld [vmem:[#allocation3 + $0x460] sm:$0xff]
    %v297 = vld [vmem:[#allocation3 + $0x468] sm:$0xff]
    %v298 = vld [vmem:[#allocation3 + $0x470] sm:$0xff]
    %v299 = vld [vmem:[#allocation3 + $0x478] sm:$0xff]
    %v300 = vld [vmem:[#allocation3 + $0x480] sm:$0xff]
    %v301 = vld [vmem:[#allocation3 + $0x488] sm:$0xff]
    %v302 = vld [vmem:[#allocation3 + $0x490] sm:$0xff]
    %v303 = vld [vmem:[#allocation3 + $0x498] sm:$0xff]
    %v304 = vld [vmem:[#allocation3 + $0x4a0] sm:$0xff]
    %v305 = vld [vmem:[#allocation3 + $0x4a8] sm:$0xff]
    %v306 = vld [vmem:[#allocation3 + $0x4b0] sm:$0xff]
    %v307 = vld [vmem:[#allocation3 + $0x4b8] sm:$0xff]
    %v308 = vld [vmem:[#allocation3 + $0x4c0] sm:$0xff]
    %v309 = vld [vmem:[#allocation3 + $0x4c8] sm:$0xff]
    %v310 = vld [vmem:[#allocation3 + $0x4d0] sm:$0xff]
    %v311 = vld [vmem:[#allocation3 + $0x4d8] sm:$0xff]
    %v312 = vld [vmem:[#allocation3 + $0x4e0] sm:$0xff]
    %v313 = vld [vmem:[#allocation3 + $0x4e8] sm:$0xff]
    %v314 = vld [vmem:[#allocation3 + $0x4f0] sm:$0xff]
    %v315 = vld [vmem:[#allocation3 + $0x4f8] sm:$0xff]
    %v316 = vld [vmem:[#allocation3 + $0x500] sm:$0xff]
    %v317 = vld [vmem:[#allocation3 + $0x508] sm:$0xff]
    %v318 = vld [vmem:[#allocation3 + $0x510] sm:$0xff]
    %v319 = vld [vmem:[#allocation3 + $0x518] sm:$0xff]
    %v320 = vld [vmem:[#allocation3 + $0x520] sm:$0xff]
    %v321 = vld [vmem:[#allocation3 + $0x528] sm:$0xff]
    %v322 = vld [vmem:[#allocation3 + $0x530] sm:$0xff]
    %v323 = vld [vmem:[#allocation3 + $0x538] sm:$0xff]
    %v324 = vld [vmem:[#allocation3 + $0x540] sm:$0xff]
    %v325 = vld [vmem:[#allocation3 + $0x548] sm:$0xff]
    %v326 = vld [vmem:[#allocation3 + $0x550] sm:$0xff]
    %v327 = vld [vmem:[#allocation3 + $0x558] sm:$0xff]
    %v328 = vld [vmem:[#allocation3 + $0x560] sm:$0xff]
    %v329 = vld [vmem:[#allocation3 + $0x568] sm:$0xff]
    %v330 = vld [vmem:[#allocation3 + $0x570] sm:$0xff]
    %v331 = vld [vmem:[#allocation3 + $0x578] sm:$0xff]
    %v332 = vld [vmem:[#allocation3 + $0x580] sm:$0xff]
    %v333 = vld [vmem:[#allocation3 + $0x588] sm:$0xff]
    %v334 = vld [vmem:[#allocation3 + $0x590] sm:$0xff]
    %v335 = vld [vmem:[#allocation3 + $0x598] sm:$0xff]
    %v336 = vld [vmem:[#allocation3 + $0x5a0] sm:$0xff]
    %v337 = vld [vmem:[#allocation3 + $0x5a8] sm:$0xff]
    %v338 = vld [vmem:[#allocation3 + $0x5b0] sm:$0xff]
    %v339 = vld [vmem:[#allocation3 + $0x5b8] sm:$0xff]
    %v340 = vld [vmem:[#allocation3 + $0x5c0] sm:$0xff]
    %v341 = vld [vmem:[#allocation3 + $0x5c8] sm:$0xff]
    %v342 = vld [vmem:[#allocation3 + $0x5d0] sm:$0xff]
    %v343 = vld [vmem:[#allocation3 + $0x5d8] sm:$0xff]
    %v344 = vld [vmem:[#allocation3 + $0x5e0] sm:$0xff]
    %v345 = vld [vmem:[#allocation3 + $0x5e8] sm:$0xff]
    %v346 = vld [vmem:[#allocation3 + $0x5f0] sm:$0xff]
    %v347 = vld [vmem:[#allocation3 + $0x5f8] sm:$0xff]
    %v348 = vld [vmem:[#allocation3 + $0x600] sm:$0xff]
    %v349 = vld [vmem:[#allocation3 + $0x608] sm:$0xff]
    %v350 = vld [vmem:[#allocation3 + $0x610] sm:$0xff]
    %v351 = vld [vmem:[#allocation3 + $0x618] sm:$0xff]
    %v352 = vld [vmem:[#allocation3 + $0x620] sm:$0xff]
    %v353 = vld [vmem:[#allocation3 + $0x628] sm:$0xff]
    %v354 = vld [vmem:[#allocation3 + $0x630] sm:$0xff]
    %v355 = vld [vmem:[#allocation3 + $0x638] sm:$0xff]
    %v356 = vld [vmem:[#allocation3 + $0x640] sm:$0xff]
    %v357 = vld [vmem:[#allocation3 + $0x648] sm:$0xff]
    %v358 = vld [vmem:[#allocation3 + $0x650] sm:$0xff]
    %v359 = vld [vmem:[#allocation3 + $0x658] sm:$0xff]
    %v360 = vld [vmem:[#allocation3 + $0x660] sm:$0xff]
    %v361 = vld [vmem:[#allocation3 + $0x668] sm:$0xff]
    %v362 = vld [vmem:[#allocation3 + $0x670] sm:$0xff]
    %v363 = vld [vmem:[#allocation3 + $0x678] sm:$0xff]
    %v364 = vld [vmem:[#allocation3 + $0x680] sm:$0xff]
    %v365 = vld [vmem:[#allocation3 + $0x688] sm:$0xff]
    %v366 = vld [vmem:[#allocation3 + $0x690] sm:$0xff]
    %v367 = vld [vmem:[#allocation3 + $0x698] sm:$0xff]
    %v368 = vld [vmem:[#allocation3 + $0x6a0] sm:$0xff]
    %v369 = vld [vmem:[#allocation3 + $0x6a8] sm:$0xff]
    %v370 = vld [vmem:[#allocation3 + $0x6b0] sm:$0xff]
    %v371 = vld [vmem:[#allocation3 + $0x6b8] sm:$0xff]
    %v372 = vld [vmem:[#allocation3 + $0x6c0] sm:$0xff]
    %v373 = vld [vmem:[#allocation3 + $0x6c8] sm:$0xff]
    %v374 = vld [vmem:[#allocation3 + $0x6d0] sm:$0xff]
    %v375 = vld [vmem:[#allocation3 + $0x6d8] sm:$0xff]
    %v376 = vld [vmem:[#allocation3 + $0x6e0] sm:$0xff]
    %v377 = vld [vmem:[#allocation3 + $0x6e8] sm:$0xff]
    %v378 = vld [vmem:[#allocation3 + $0x6f0] sm:$0xff]
    %v379 = vld [vmem:[#allocation3 + $0x6f8] sm:$0xff]
    %v380 = vld [vmem:[#allocation3 + $0x700] sm:$0xff]
    %v381 = vld [vmem:[#allocation3 + $0x708] sm:$0xff]
    %v382 = vld [vmem:[#allocation3 + $0x710] sm:$0xff]
    %v383 = vld [vmem:[#allocation3 + $0x718] sm:$0xff]
    %v384 = vld [vmem:[#allocation3 + $0x720] sm:$0xff]
    %v385 = vld [vmem:[#allocation3 + $0x728] sm:$0xff]
    %v386 = vld [vmem:[#allocation3 + $0x730] sm:$0xff]
    %v387 = vld [vmem:[#allocation3 + $0x738] sm:$0xff]
    %v388 = vld [vmem:[#allocation3 + $0x740] sm:$0xff]
    %v389 = vld [vmem:[#allocation3 + $0x748] sm:$0xff]
    %v390 = vld [vmem:[#allocation3 + $0x750] sm:$0xff]
    %v391 = vld [vmem:[#allocation3 + $0x758] sm:$0xff]
    %v392 = vld [vmem:[#allocation3 + $0x760] sm:$0xff]
    %v393 = vld [vmem:[#allocation3 + $0x768] sm:$0xff]
    %v394 = vld [vmem:[#allocation3 + $0x770] sm:$0xff]
    %v395 = vld [vmem:[#allocation3 + $0x778] sm:$0xff]
    %v396 = vld [vmem:[#allocation3 + $0x780] sm:$0xff]
    %v397 = vld [vmem:[#allocation3 + $0x788] sm:$0xff]
    %v398 = vld [vmem:[#allocation3 + $0x790] sm:$0xff]
    %v399 = vld [vmem:[#allocation3 + $0x798] sm:$0xff]
    %v400 = vld [vmem:[#allocation3 + $0x7a0] sm:$0xff]
    %v401 = vld [vmem:[#allocation3 + $0x7a8] sm:$0xff]
    %v402 = vld [vmem:[#allocation3 + $0x7b0] sm:$0xff]
    %v403 = vld [vmem:[#allocation3 + $0x7b8] sm:$0xff]
    %v404 = vld [vmem:[#allocation3 + $0x7c0] sm:$0xff]
    %v405 = vld [vmem:[#allocation3 + $0x7c8] sm:$0xff]
    %v406 = vld [vmem:[#allocation3 + $0x7d0] sm:$0xff]
    %v407 = vld [vmem:[#allocation3 + $0x7d8] sm:$0xff]
    %v408 = vld [vmem:[#allocation3 + $0x7e0] sm:$0xff]
    %v409 = vld [vmem:[#allocation3 + $0x7e8] sm:$0xff]
    %v410 = vld [vmem:[#allocation3 + $0x7f0] sm:$0xff]
    %v411 = vld [vmem:[#allocation3 + $0x7f8] sm:$0xff]
    %v412 = vld [vmem:[#allocation3 + $0x800] sm:$0xff]
    %v413 = vld [vmem:[#allocation3 + $0x808] sm:$0xff]
    %v414 = vld [vmem:[#allocation3 + $0x810] sm:$0xff]
    %v415 = vld [vmem:[#allocation3 + $0x818] sm:$0xff]
    %v416 = vld [vmem:[#allocation3 + $0x820] sm:$0xff]
    %v417 = vld [vmem:[#allocation3 + $0x828] sm:$0xff]
    %v418 = vld [vmem:[#allocation3 + $0x830] sm:$0xff]
    %v419 = vld [vmem:[#allocation3 + $0x838] sm:$0xff]
    %v420 = vld [vmem:[#allocation3 + $0x840] sm:$0xff]
    %v421 = vld [vmem:[#allocation3 + $0x848] sm:$0xff]
    %v422 = vld [vmem:[#allocation3 + $0x850] sm:$0xff]
    %v423 = vld [vmem:[#allocation3 + $0x858] sm:$0xff]
    %v424 = vld [vmem:[#allocation3 + $0x860] sm:$0xff]
    %v425 = vld [vmem:[#allocation3 + $0x868] sm:$0xff]
    %v426 = vld [vmem:[#allocation3 + $0x870] sm:$0xff]
    %v427 = vld [vmem:[#allocation3 + $0x878] sm:$0xff]
    %v428 = vld [vmem:[#allocation3 + $0x880] sm:$0xff]
    %v429 = vld [vmem:[#allocation3 + $0x888] sm:$0xff]
    %v430 = vld [vmem:[#allocation3 + $0x890] sm:$0xff]
    %v431 = vld [vmem:[#allocation3 + $0x898] sm:$0xff]
    %v432 = vld [vmem:[#allocation3 + $0x8a0] sm:$0xff]
    %v433 = vld [vmem:[#allocation3 + $0x8a8] sm:$0xff]
    %v434 = vld [vmem:[#allocation3 + $0x8b0] sm:$0xff]
    %v435 = vld [vmem:[#allocation3 + $0x8b8] sm:$0xff]
    %v436 = vld [vmem:[#allocation3 + $0x8c0] sm:$0xff]
    %v437 = vld [vmem:[#allocation3 + $0x8c8] sm:$0xff]
    %v438 = vld [vmem:[#allocation3 + $0x8d0] sm:$0xff]
    %v439 = vld [vmem:[#allocation3 + $0x8d8] sm:$0xff]
    %v440 = vld [vmem:[#allocation3 + $0x8e0] sm:$0xff]
    %v441 = vld [vmem:[#allocation3 + $0x8e8] sm:$0xff]
    %v442 = vld [vmem:[#allocation3 + $0x8f0] sm:$0xff]
    %v443 = vld [vmem:[#allocation3 + $0x8f8] sm:$0xff]
    %v444 = vld [vmem:[#allocation3 + $0x900] sm:$0xff]
    %v445 = vld [vmem:[#allocation3 + $0x908] sm:$0xff]
    %v446 = vld [vmem:[#allocation3 + $0x910] sm:$0xff]
    %v447 = vld [vmem:[#allocation3 + $0x918] sm:$0xff]
    %v448 = vld [vmem:[#allocation3 + $0x920] sm:$0xff]
    %v449 = vld [vmem:[#allocation3 + $0x928] sm:$0xff]
    %v450 = vld [vmem:[#allocation3 + $0x930] sm:$0xff]
    %v451 = vld [vmem:[#allocation3 + $0x938] sm:$0xff]
    %v452 = vld [vmem:[#allocation3 + $0x940] sm:$0xff]
    %v453 = vld [vmem:[#allocation3 + $0x948] sm:$0xff]
    %v454 = vld [vmem:[#allocation3 + $0x950] sm:$0xff]
    %v455 = vld [vmem:[#allocation3 + $0x958] sm:$0xff]
    %v456 = vld [vmem:[#allocation3 + $0x960] sm:$0xff]
    %v457 = vld [vmem:[#allocation3 + $0x968] sm:$0xff]
    %v458 = vld [vmem:[#allocation3 + $0x970] sm:$0xff]
    %v459 = vld [vmem:[#allocation3 + $0x978] sm:$0xff]
    %v460 = vld [vmem:[#allocation3 + $0x980] sm:$0xff]
    %v461 = vld [vmem:[#allocation3 + $0x988] sm:$0xff]
    %v462 = vld [vmem:[#allocation3 + $0x990] sm:$0xff]
    %v463 = vld [vmem:[#allocation3 + $0x998] sm:$0xff]
    %v464 = vld [vmem:[#allocation3 + $0x9a0] sm:$0xff]
    %v465 = vld [vmem:[#allocation3 + $0x9a8] sm:$0xff]
    %v466 = vld [vmem:[#allocation3 + $0x9b0] sm:$0xff]
    %v467 = vld [vmem:[#allocation3 + $0x9b8] sm:$0xff]
    %v468 = vld [vmem:[#allocation3 + $0x9c0] sm:$0xff]
    %v469 = vld [vmem:[#allocation3 + $0x9c8] sm:$0xff]
    %v470 = vld [vmem:[#allocation3 + $0x9d0] sm:$0xff]
    %v471 = vld [vmem:[#allocation3 + $0x9d8] sm:$0xff]
    %v472 = vld [vmem:[#allocation3 + $0x9e0] sm:$0xff]
    %v473 = vld [vmem:[#allocation3 + $0x9e8] sm:$0xff]
    %v474 = vld [vmem:[#allocation3 + $0x9f0] sm:$0xff]
    %v475 = vld [vmem:[#allocation3 + $0x9f8] sm:$0xff]
    %v476 = vld [vmem:[#allocation3 + $0xa00] sm:$0xff]
    %v477 = vld [vmem:[#allocation3 + $0xa08] sm:$0xff]
    %v478 = vld [vmem:[#allocation3 + $0xa10] sm:$0xff]
    %v479 = vld [vmem:[#allocation3 + $0xa18] sm:$0xff]
    %v480 = vld [vmem:[#allocation3 + $0xa20] sm:$0xff]
    %v481 = vld [vmem:[#allocation3 + $0xa28] sm:$0xff]
    %v482 = vld [vmem:[#allocation3 + $0xa30] sm:$0xff]
    %v483 = vld [vmem:[#allocation3 + $0xa38] sm:$0xff]
    %v484 = vld [vmem:[#allocation3 + $0xa40] sm:$0xff]
    %v485 = vld [vmem:[#allocation3 + $0xa48] sm:$0xff]
    %v486 = vld [vmem:[#allocation3 + $0xa50] sm:$0xff]
    %v487 = vld [vmem:[#allocation3 + $0xa58] sm:$0xff]
    %v488 = vld [vmem:[#allocation3 + $0xa60] sm:$0xff]
    %v489 = vld [vmem:[#allocation3 + $0xa68] sm:$0xff]
    %v490 = vld [vmem:[#allocation3 + $0xa70] sm:$0xff]
    %v491 = vld [vmem:[#allocation3 + $0xa78] sm:$0xff]
    %v492 = vld [vmem:[#allocation3 + $0xa80] sm:$0xff]
    %v493 = vld [vmem:[#allocation3 + $0xa88] sm:$0xff]
    %v494 = vld [vmem:[#allocation3 + $0xa90] sm:$0xff]
    %v495 = vld [vmem:[#allocation3 + $0xa98] sm:$0xff]
    %v496 = vld [vmem:[#allocation3 + $0xaa0] sm:$0xff]
    %v497 = vld [vmem:[#allocation3 + $0xaa8] sm:$0xff]
    %v498 = vld [vmem:[#allocation3 + $0xab0] sm:$0xff]
    %v499 = vld [vmem:[#allocation3 + $0xab8] sm:$0xff]
    %v500 = vld [vmem:[#allocation3 + $0xac0] sm:$0xff]
    %v501 = vld [vmem:[#allocation3 + $0xac8] sm:$0xff]
    %v502 = vld [vmem:[#allocation3 + $0xad0] sm:$0xff]
    %v503 = vld [vmem:[#allocation3 + $0xad8] sm:$0xff]
    %v504 = vld [vmem:[#allocation3 + $0xae0] sm:$0xff]
    %v505 = vld [vmem:[#allocation3 + $0xae8] sm:$0xff]
    %v506 = vld [vmem:[#allocation3 + $0xaf0] sm:$0xff]
    %v507 = vld [vmem:[#allocation3 + $0xaf8] sm:$0xff]
    %v508 = vld [vmem:[#allocation3 + $0xb00] sm:$0xff]
    %v509 = vld [vmem:[#allocation3 + $0xb08] sm:$0xff]
    %v510 = vld [vmem:[#allocation3 + $0xb10] sm:$0xff]
    %v511 = vld [vmem:[#allocation3 + $0xb18] sm:$0xff]
    %v512 = vld [vmem:[#allocation3 + $0xb20] sm:$0xff]
    %v513 = vld [vmem:[#allocation3 + $0xb28] sm:$0xff]
    %v514 = vld [vmem:[#allocation3 + $0xb30] sm:$0xff]
    %v515 = vld [vmem:[#allocation3 + $0xb38] sm:$0xff]
    %v516 = vld [vmem:[#allocation3 + $0xb40] sm:$0xff]
    %v517 = vld [vmem:[#allocation3 + $0xb48] sm:$0xff]
    %v518 = vld [vmem:[#allocation3 + $0xb50] sm:$0xff]
    %v519 = vld [vmem:[#allocation3 + $0xb58] sm:$0xff]
    %v520 = vld [vmem:[#allocation3 + $0xb60] sm:$0xff]
    %v521 = vld [vmem:[#allocation3 + $0xb68] sm:$0xff]
    %v522 = vld [vmem:[#allocation3 + $0xb70] sm:$0xff]
    %v523 = vld [vmem:[#allocation3 + $0xb78] sm:$0xff]
    %v524 = vld [vmem:[#allocation3 + $0xb80] sm:$0xff]
    %v525 = vld [vmem:[#allocation3 + $0xb88] sm:$0xff]
    %v526 = vld [vmem:[#allocation3 + $0xb90] sm:$0xff]
    %v527 = vld [vmem:[#allocation3 + $0xb98] sm:$0xff]
    %v528 = vld [vmem:[#allocation3 + $0xba0] sm:$0xff]
    %v529 = vld [vmem:[#allocation3 + $0xba8] sm:$0xff]
    %v530 = vld [vmem:[#allocation3 + $0xbb0] sm:$0xff]
    %v531 = vld [vmem:[#allocation3 + $0xbb8] sm:$0xff]
    %v532 = vld [vmem:[#allocation3 + $0xbc0] sm:$0xff]
    %v533 = vld [vmem:[#allocation3 + $0xbc8] sm:$0xff]
    %v534 = vld [vmem:[#allocation3 + $0xbd0] sm:$0xff]
    %v535 = vld [vmem:[#allocation3 + $0xbd8] sm:$0xff]
    %v536 = vld [vmem:[#allocation3 + $0xbe0] sm:$0xff]
    %v537 = vld [vmem:[#allocation3 + $0xbe8] sm:$0xff]
    %v538 = vld [vmem:[#allocation3 + $0xbf0] sm:$0xff]
    %v539 = vld [vmem:[#allocation3 + $0xbf8] sm:$0xff]
    %v540 = vld [vmem:[#allocation3 + $0xc00] sm:$0xff]
    %v541 = vld [vmem:[#allocation3 + $0xc08] sm:$0xff]
    %v542 = vld [vmem:[#allocation3 + $0xc10] sm:$0xff]
    %v543 = vld [vmem:[#allocation3 + $0xc18] sm:$0xff]
    %v544 = vld [vmem:[#allocation3 + $0xc20] sm:$0xff]
    %v545 = vld [vmem:[#allocation3 + $0xc28] sm:$0xff]
    %v546 = vld [vmem:[#allocation3 + $0xc30] sm:$0xff]
    %v547 = vld [vmem:[#allocation3 + $0xc38] sm:$0xff]
    %v548 = vld [vmem:[#allocation3 + $0xc40] sm:$0xff]
    %v549 = vld [vmem:[#allocation3 + $0xc48] sm:$0xff]
    %v550 = vld [vmem:[#allocation3 + $0xc50] sm:$0xff]
    %v551 = vld [vmem:[#allocation3 + $0xc58] sm:$0xff]
    %v552 = vld [vmem:[#allocation3 + $0xc60] sm:$0xff]
    %v553 = vld [vmem:[#allocation3 + $0xc68] sm:$0xff]
    %v554 = vld [vmem:[#allocation3 + $0xc70] sm:$0xff]
    %v555 = vld [vmem:[#allocation3 + $0xc78] sm:$0xff]
    %v556 = vld [vmem:[#allocation3 + $0xc80] sm:$0xff]
    %v557 = vld [vmem:[#allocation3 + $0xc88] sm:$0xff]
    %v558 = vld [vmem:[#allocation3 + $0xc90] sm:$0xff]
    %v559 = vld [vmem:[#allocation3 + $0xc98] sm:$0xff]
    %v560 = vld [vmem:[#allocation3 + $0xca0] sm:$0xff]
    %v561 = vld [vmem:[#allocation3 + $0xca8] sm:$0xff]
    %v562 = vld [vmem:[#allocation3 + $0xcb0] sm:$0xff]
    %v563 = vld [vmem:[#allocation3 + $0xcb8] sm:$0xff]
    %v564 = vld [vmem:[#allocation3 + $0xcc0] sm:$0xff]
    %v565 = vld [vmem:[#allocation3 + $0xcc8] sm:$0xff]
    %v566 = vld [vmem:[#allocation3 + $0xcd0] sm:$0xff]
    %v567 = vld [vmem:[#allocation3 + $0xcd8] sm:$0xff]
    %v568 = vld [vmem:[#allocation3 + $0xce0] sm:$0xff]
    %v569 = vld [vmem:[#allocation3 + $0xce8] sm:$0xff]
    %v570 = vld [vmem:[#allocation3 + $0xcf0] sm:$0xff]
    %v571 = vld [vmem:[#allocation3 + $0xcf8] sm:$0xff]
    %v572 = vld [vmem:[#allocation3 + $0xd00] sm:$0xff]
    %v573 = vld [vmem:[#allocation3 + $0xd08] sm:$0xff]
    %v574 = vld [vmem:[#allocation3 + $0xd10] sm:$0xff]
    %v575 = vld [vmem:[#allocation3 + $0xd18] sm:$0xff]
    %v576 = vld [vmem:[#allocation3 + $0xd20] sm:$0xff]
    %v577 = vld [vmem:[#allocation3 + $0xd28] sm:$0xff]
    %v578 = vld [vmem:[#allocation3 + $0xd30] sm:$0xff]
    %v579 = vld [vmem:[#allocation3 + $0xd38] sm:$0xff]
    %v580 = vld [vmem:[#allocation3 + $0xd40] sm:$0xff]
    %v581 = vld [vmem:[#allocation3 + $0xd48] sm:$0xff]
    %v582 = vld [vmem:[#allocation3 + $0xd50] sm:$0xff]
    %v583 = vld [vmem:[#allocation3 + $0xd58] sm:$0xff]
    %v584 = vld [vmem:[#allocation3 + $0xd60] sm:$0xff]
    %v585 = vld [vmem:[#allocation3 + $0xd68] sm:$0xff]
    %v586 = vld [vmem:[#allocation3 + $0xd70] sm:$0xff]
    %v587 = vld [vmem:[#allocation3 + $0xd78] sm:$0xff]
    %v588 = vld [vmem:[#allocation3 + $0xd80] sm:$0xff]
    %v589 = vld [vmem:[#allocation3 + $0xd88] sm:$0xff]
    %v590 = vld [vmem:[#allocation3 + $0xd90] sm:$0xff]
    %v591 = vld [vmem:[#allocation3 + $0xd98] sm:$0xff]
    %v592 = vld [vmem:[#allocation3 + $0xda0] sm:$0xff]
    %v593 = vld [vmem:[#allocation3 + $0xda8] sm:$0xff]
    %v594 = vld [vmem:[#allocation3 + $0xdb0] sm:$0xff]
    %v595 = vld [vmem:[#allocation3 + $0xdb8] sm:$0xff]
    %v596 = vld [vmem:[#allocation3 + $0xdc0] sm:$0xff]
    %v597 = vld [vmem:[#allocation3 + $0xdc8] sm:$0xff]
    %v598 = vld [vmem:[#allocation3 + $0xdd0] sm:$0xff]
    %v599 = vld [vmem:[#allocation3 + $0xdd8] sm:$0xff]
    %v600 = vld [vmem:[#allocation3 + $0xde0] sm:$0xff]
    %v601 = vld [vmem:[#allocation3 + $0xde8] sm:$0xff]
    %v602 = vld [vmem:[#allocation3 + $0xdf0] sm:$0xff]
    %v603 = vld [vmem:[#allocation3 + $0xdf8] sm:$0xff]
    %v604 = vld [vmem:[#allocation3 + $0xe00] sm:$0xff]
    %v605 = vld [vmem:[#allocation3 + $0xe08] sm:$0xff]
    %v606 = vld [vmem:[#allocation3 + $0xe10] sm:$0xff]
    %v607 = vld [vmem:[#allocation3 + $0xe18] sm:$0xff]
    %v608 = vld [vmem:[#allocation3 + $0xe20] sm:$0xff]
    %v609 = vld [vmem:[#allocation3 + $0xe28] sm:$0xff]
    %v610 = vld [vmem:[#allocation3 + $0xe30] sm:$0xff]
    %v611 = vld [vmem:[#allocation3 + $0xe38] sm:$0xff]
    %v612 = vld [vmem:[#allocation3 + $0xe40] sm:$0xff]
    %v613 = vld [vmem:[#allocation3 + $0xe48] sm:$0xff]
    %v614 = vld [vmem:[#allocation3 + $0xe50] sm:$0xff]
    %v615 = vld [vmem:[#allocation3 + $0xe58] sm:$0xff]
    %v616 = vld [vmem:[#allocation3 + $0xe60] sm:$0xff]
    %v617 = vld [vmem:[#allocation3 + $0xe68] sm:$0xff]
    %v618 = vld [vmem:[#allocation3 + $0xe70] sm:$0xff]
    %v619 = vld [vmem:[#allocation3 + $0xe78] sm:$0xff]
    %v620 = vld [vmem:[#allocation3 + $0xe80] sm:$0xff]
    %v621 = vld [vmem:[#allocation3 + $0xe88] sm:$0xff]
    %v622 = vld [vmem:[#allocation3 + $0xe90] sm:$0xff]
    %v623 = vld [vmem:[#allocation3 + $0xe98] sm:$0xff]
    %v624 = vld [vmem:[#allocation3 + $0xea0] sm:$0xff]
    %v625 = vld [vmem:[#allocation3 + $0xea8] sm:$0xff]
    %v626 = vld [vmem:[#allocation3 + $0xeb0] sm:$0xff]
    %v627 = vld [vmem:[#allocation3 + $0xeb8] sm:$0xff]
    %v628 = vld [vmem:[#allocation3 + $0xec0] sm:$0xff]
    %v629 = vld [vmem:[#allocation3 + $0xec8] sm:$0xff]
    %v630 = vld [vmem:[#allocation3 + $0xed0] sm:$0xff]
    %v631 = vld [vmem:[#allocation3 + $0xed8] sm:$0xff]
    %v632 = vld [vmem:[#allocation3 + $0xee0] sm:$0xff]
    %v633 = vld [vmem:[#allocation3 + $0xee8] sm:$0xff]
    %v634 = vld [vmem:[#allocation3 + $0xef0] sm:$0xff]
    %v635 = vld [vmem:[#allocation3 + $0xef8] sm:$0xff]
    %v636 = vld [vmem:[#allocation3 + $0xf00] sm:$0xff]
    %v637 = vld [vmem:[#allocation3 + $0xf08] sm:$0xff]
    %v638 = vld [vmem:[#allocation3 + $0xf10] sm:$0xff]
    %v639 = vld [vmem:[#allocation3 + $0xf18] sm:$0xff]
    %v640 = vld [vmem:[#allocation3 + $0xf20] sm:$0xff]
    %v641 = vld [vmem:[#allocation3 + $0xf28] sm:$0xff]
    %v642 = vld [vmem:[#allocation3 + $0xf30] sm:$0xff]
    %v643 = vld [vmem:[#allocation3 + $0xf38] sm:$0xff]
    %v644 = vld [vmem:[#allocation3 + $0xf40] sm:$0xff]
    %v645 = vld [vmem:[#allocation3 + $0xf48] sm:$0xff]
    %v646 = vld [vmem:[#allocation3 + $0xf50] sm:$0xff]
    %v647 = vld [vmem:[#allocation3 + $0xf58] sm:$0xff]
    %v648 = vld [vmem:[#allocation3 + $0xf60] sm:$0xff]
    %v649 = vld [vmem:[#allocation3 + $0xf68] sm:$0xff]
    %v650 = vld [vmem:[#allocation3 + $0xf70] sm:$0xff]
    %v651 = vld [vmem:[#allocation3 + $0xf78] sm:$0xff]
    %v652 = vld [vmem:[#allocation3 + $0xf80] sm:$0xff]
    %v653 = vld [vmem:[#allocation3 + $0xf88] sm:$0xff]
    %v654 = vld [vmem:[#allocation3 + $0xf90] sm:$0xff]
    %v655 = vld [vmem:[#allocation3 + $0xf98] sm:$0xff]
    %v656 = vld [vmem:[#allocation3 + $0xfa0] sm:$0xff]
    %v657 = vld [vmem:[#allocation3 + $0xfa8] sm:$0xff]
    %v658 = vld [vmem:[#allocation3 + $0xfb0] sm:$0xff]
    %v659 = vld [vmem:[#allocation3 + $0xfb8] sm:$0xff]
    %v660 = vld [vmem:[#allocation3 + $0xfc0] sm:$0xff]
    %v661 = vld [vmem:[#allocation3 + $0xfc8] sm:$0xff]
    %v662 = vld [vmem:[#allocation3 + $0xfd0] sm:$0xff]
    %v663 = vld [vmem:[#allocation3 + $0xfd8] sm:$0xff]
    %v664 = vld [vmem:[#allocation3 + $0xfe0] sm:$0xff]
    %v665 = vld [vmem:[#allocation3 + $0xfe8] sm:$0xff]
    %v666 = vld [vmem:[#allocation3 + $0xff0] sm:$0xff]
    %v667 = vld [vmem:[#allocation3 + $0xff8] sm:$0xff]
    %v668 = vld [vmem:[#allocation3 + $0x1000] sm:$0xff]
    %v669 = vld [vmem:[#allocation3 + $0x1008] sm:$0xff]
    %v670 = vld [vmem:[#allocation3 + $0x1010] sm:$0xff]
    %v671 = vld [vmem:[#allocation3 + $0x1018] sm:$0xff]
    %v672 = vld [vmem:[#allocation3 + $0x1020] sm:$0xff]
    %v673 = vld [vmem:[#allocation3 + $0x1028] sm:$0xff]
    %v674 = vld [vmem:[#allocation3 + $0x1030] sm:$0xff]
    %v675 = vld [vmem:[#allocation3 + $0x1038] sm:$0xff]
    %v676 = vld [vmem:[#allocation3 + $0x1040] sm:$0xff]
    %v677 = vld [vmem:[#allocation3 + $0x1048] sm:$0xff]
    %v678 = vld [vmem:[#allocation3 + $0x1050] sm:$0xff]
    %v679 = vld [vmem:[#allocation3 + $0x1058] sm:$0xff]
    %v680 = vld [vmem:[#allocation3 + $0x1060] sm:$0xff]
    %v681 = vld [vmem:[#allocation3 + $0x1068] sm:$0xff]
    %v682 = vld [vmem:[#allocation3 + $0x1070] sm:$0xff]
    %v683 = vld [vmem:[#allocation3 + $0x1078] sm:$0xff]
    %v684 = vld [vmem:[#allocation3 + $0x1080] sm:$0xff]
    %v685 = vld [vmem:[#allocation3 + $0x1088] sm:$0xff]
    %v686 = vld [vmem:[#allocation3 + $0x1090] sm:$0xff]
    %v687 = vld [vmem:[#allocation3 + $0x1098] sm:$0xff]
    %v688 = vld [vmem:[#allocation3 + $0x10a0] sm:$0xff]
    %v689 = vld [vmem:[#allocation3 + $0x10a8] sm:$0xff]
    %v690 = vld [vmem:[#allocation3 + $0x10b0] sm:$0xff]
    %v691 = vld [vmem:[#allocation3 + $0x10b8] sm:$0xff]
    %v692 = vld [vmem:[#allocation3 + $0x10c0] sm:$0xff]
    %v693 = vld [vmem:[#allocation3 + $0x10c8] sm:$0xff]
    %v694 = vld [vmem:[#allocation3 + $0x10d0] sm:$0xff]
    %v695 = vld [vmem:[#allocation3 + $0x10d8] sm:$0xff]
    %v696 = vld [vmem:[#allocation3 + $0x10e0] sm:$0xff]
    %v697 = vld [vmem:[#allocation3 + $0x10e8] sm:$0xff]
    %v698 = vld [vmem:[#allocation3 + $0x10f0] sm:$0xff]
    %v699 = vld [vmem:[#allocation3 + $0x10f8] sm:$0xff]
    %v700 = vld [vmem:[#allocation3 + $0x1100] sm:$0xff]
    %v701 = vld [vmem:[#allocation3 + $0x1108] sm:$0xff]
    %v702 = vld [vmem:[#allocation3 + $0x1110] sm:$0xff]
    %v703 = vld [vmem:[#allocation3 + $0x1118] sm:$0xff]
    %v704 = vld [vmem:[#allocation3 + $0x1120] sm:$0xff]
    %v705 = vld [vmem:[#allocation3 + $0x1128] sm:$0xff]
    %v706 = vld [vmem:[#allocation3 + $0x1130] sm:$0xff]
    %v707 = vld [vmem:[#allocation3 + $0x1138] sm:$0xff]
    %v708 = vld [vmem:[#allocation3 + $0x1140] sm:$0xff]
    %v709 = vld [vmem:[#allocation3 + $0x1148] sm:$0xff]
    %v710 = vld [vmem:[#allocation3 + $0x1150] sm:$0xff]
    %v711 = vld [vmem:[#allocation3 + $0x1158] sm:$0xff]
    %v712 = vld [vmem:[#allocation3 + $0x1160] sm:$0xff]
    %v713 = vld [vmem:[#allocation3 + $0x1168] sm:$0xff]
    %v714 = vld [vmem:[#allocation3 + $0x1170] sm:$0xff]
    %v715 = vld [vmem:[#allocation3 + $0x1178] sm:$0xff]
    %v716 = vld [vmem:[#allocation3 + $0x1180] sm:$0xff]
    %v717 = vld [vmem:[#allocation3 + $0x1188] sm:$0xff]
    %v718 = vld [vmem:[#allocation3 + $0x1190] sm:$0xff]
    %v719 = vld [vmem:[#allocation3 + $0x1198] sm:$0xff]
    %v720 = vld [vmem:[#allocation3 + $0x11a0] sm:$0xff]
    %v721 = vld [vmem:[#allocation3 + $0x11a8] sm:$0xff]
    %v722 = vld [vmem:[#allocation3 + $0x11b0] sm:$0xff]
    %v723 = vld [vmem:[#allocation3 + $0x11b8] sm:$0xff]
    %v724 = vld [vmem:[#allocation3 + $0x11c0] sm:$0xff]
    %v725 = vld [vmem:[#allocation3 + $0x11c8] sm:$0xff]
    %v726 = vld [vmem:[#allocation3 + $0x11d0] sm:$0xff]
    %v727 = vld [vmem:[#allocation3 + $0x11d8] sm:$0xff]
    %v728 = vld [vmem:[#allocation3 + $0x11e0] sm:$0xff]
    %v729 = vld [vmem:[#allocation3 + $0x11e8] sm:$0xff]
    %v730 = vld [vmem:[#allocation3 + $0x11f0] sm:$0xff]
    %v731 = vld [vmem:[#allocation3 + $0x11f8] sm:$0xff]
    %v732 = vld [vmem:[#allocation3 + $0x1200] sm:$0xff]
    %v733 = vld [vmem:[#allocation3 + $0x1208] sm:$0xff]
    %v734 = vld [vmem:[#allocation3 + $0x1210] sm:$0xff]
    %v735 = vld [vmem:[#allocation3 + $0x1218] sm:$0xff]
    %v736 = vld [vmem:[#allocation3 + $0x1220] sm:$0xff]
    %v737 = vld [vmem:[#allocation3 + $0x1228] sm:$0xff]
    %v738 = vld [vmem:[#allocation3 + $0x1230] sm:$0xff]
    %v739 = vld [vmem:[#allocation3 + $0x1238] sm:$0xff]
    %v740 = vld [vmem:[#allocation3 + $0x1240] sm:$0xff]
    %v741 = vld [vmem:[#allocation3 + $0x1248] sm:$0xff]
    %v742 = vld [vmem:[#allocation3 + $0x1250] sm:$0xff]
    %v743 = vld [vmem:[#allocation3 + $0x1258] sm:$0xff]
    %v744 = vld [vmem:[#allocation3 + $0x1260] sm:$0xff]
    %v745 = vld [vmem:[#allocation3 + $0x1268] sm:$0xff]
    %v746 = vld [vmem:[#allocation3 + $0x1270] sm:$0xff]
    %v747 = vld [vmem:[#allocation3 + $0x1278] sm:$0xff]
    %v748 = vld [vmem:[#allocation3 + $0x1280] sm:$0xff]
    %v749 = vld [vmem:[#allocation3 + $0x1288] sm:$0xff]
    %v750 = vld [vmem:[#allocation3 + $0x1290] sm:$0xff]
    %v751 = vld [vmem:[#allocation3 + $0x1298] sm:$0xff]
    %v752 = vld [vmem:[#allocation3 + $0x12a0] sm:$0xff]
    %v753 = vld [vmem:[#allocation3 + $0x12a8] sm:$0xff]
    %v754 = vld [vmem:[#allocation3 + $0x12b0] sm:$0xff]
    %v755 = vld [vmem:[#allocation3 + $0x12b8] sm:$0xff]
    %v756 = vld [vmem:[#allocation3 + $0x12c0] sm:$0xff]
    %v757 = vld [vmem:[#allocation3 + $0x12c8] sm:$0xff]
    %v758 = vld [vmem:[#allocation3 + $0x12d0] sm:$0xff]
    %v759 = vld [vmem:[#allocation3 + $0x12d8] sm:$0xff]
    %v760 = vld [vmem:[#allocation3 + $0x12e0] sm:$0xff]
    %v761 = vld [vmem:[#allocation3 + $0x12e8] sm:$0xff]
    %v762 = vld [vmem:[#allocation3 + $0x12f0] sm:$0xff]
    %v763 = vld [vmem:[#allocation3 + $0x12f8] sm:$0xff]
    %v764 = vld [vmem:[#allocation3 + $0x1300] sm:$0xff]
    %v765 = vld [vmem:[#allocation3 + $0x1308] sm:$0xff]
    %v766 = vld [vmem:[#allocation3 + $0x1310] sm:$0xff]
    %v767 = vld [vmem:[#allocation3 + $0x1318] sm:$0xff]
    %v768 = vld [vmem:[#allocation3 + $0x1320] sm:$0xff]
    %v769 = vld [vmem:[#allocation3 + $0x1328] sm:$0xff]
    %v770 = vld [vmem:[#allocation3 + $0x1330] sm:$0xff]
    %v771 = vld [vmem:[#allocation3 + $0x1338] sm:$0xff]
    %v772 = vld [vmem:[#allocation3 + $0x1340] sm:$0xff]
    %v773 = vld [vmem:[#allocation3 + $0x1348] sm:$0xff]
    %v774 = vld [vmem:[#allocation3 + $0x1350] sm:$0xff]
    %v775 = vld [vmem:[#allocation3 + $0x1358] sm:$0xff]
    %v776 = vld [vmem:[#allocation3 + $0x1360] sm:$0xff]
    %v777 = vld [vmem:[#allocation3 + $0x1368] sm:$0xff]
    %v778 = vld [vmem:[#allocation3 + $0x1370] sm:$0xff]
    %v779 = vld [vmem:[#allocation3 + $0x1378] sm:$0xff]
    %v780 = vld [vmem:[#allocation3 + $0x1380] sm:$0xff]
    %v781 = vld [vmem:[#allocation3 + $0x1388] sm:$0xff]
    %v782 = vld [vmem:[#allocation3 + $0x1390] sm:$0xff]
    %v783 = vld [vmem:[#allocation3 + $0x1398] sm:$0xff]
    %v784 = vld [vmem:[#allocation3 + $0x13a0] sm:$0xff]
    %v785 = vld [vmem:[#allocation3 + $0x13a8] sm:$0xff]
    %v786 = vld [vmem:[#allocation3 + $0x13b0] sm:$0xff]
    %v787 = vld [vmem:[#allocation3 + $0x13b8] sm:$0xff]
    %v788 = vld [vmem:[#allocation3 + $0x13c0] sm:$0xff]
    %v789 = vld [vmem:[#allocation3 + $0x13c8] sm:$0xff]
    %v790 = vld [vmem:[#allocation3 + $0x13d0] sm:$0xff]
    %v791 = vld [vmem:[#allocation3 + $0x13d8] sm:$0xff]
    %v792 = vld [vmem:[#allocation3 + $0x13e0] sm:$0xff]
    %v793 = vld [vmem:[#allocation3 + $0x13e8] sm:$0xff]
    %v794 = vld [vmem:[#allocation3 + $0x13f0] sm:$0xff]
    %v795 = vld [vmem:[#allocation3 + $0x13f8] sm:$0xff]
    %v796 = vld [vmem:[#allocation6] sm:$0xff]
    %v798 = vperm.slane %v796, 0
    %v799 = vperm.slane %v796, 1
    %v800 = vperm.slane %v796, 2
    %v801 = vperm.slane %v796, 3
    %v802 = vperm.slane %v796, 4
    %v803 = vperm.slane %v796, 5
    %v804 = vperm.slane %v796, 6
    %v805 = vperm.slane %v796, 7
    %v834 = vunpack.c.l.b16 %v136
    %v835 = vunpack.c.h.b16 %v136
    %v836 = vunpack.c.l.b16 %v137
    %v837 = vunpack.c.h.b16 %v137
    %v838 = vunpack.c.l.b16 %v138
    %v839 = vunpack.c.h.b16 %v138
    %v840 = vunpack.c.l.b16 %v139
    %v841 = vunpack.c.h.b16 %v139
    %v842 = vunpack.c.l.b16 %v140
    %v843 = vunpack.c.h.b16 %v140
    %v844 = vunpack.c.l.b16 %v141
    %v845 = vunpack.c.h.b16 %v141
    %v846 = vunpack.c.l.b16 %v142
    %v847 = vunpack.c.h.b16 %v142
    %v848 = vunpack.c.l.b16 %v143
    %v849 = vunpack.c.h.b16 %v143
    %v850 = vunpack.c.l.b16 %v144
    %v851 = vunpack.c.h.b16 %v144
    %v852 = vunpack.c.l.b16 %v145
    %v853 = vunpack.c.h.b16 %v145
    %v854 = vunpack.c.l.b16 %v146
    %v855 = vunpack.c.h.b16 %v146
    %v856 = vunpack.c.l.b16 %v147
    %v857 = vunpack.c.h.b16 %v147
    %v858 = vunpack.c.l.b16 %v148
    %v859 = vunpack.c.h.b16 %v148
    %v860 = vunpack.c.l.b16 %v149
    %v861 = vunpack.c.h.b16 %v149
    %v862 = vunpack.c.l.b16 %v150
    %v863 = vunpack.c.h.b16 %v150
    %v864 = vunpack.c.l.b16 %v151
    %v865 = vunpack.c.h.b16 %v151
    %v866 = vunpack.c.l.b16 %v152
    %v867 = vunpack.c.h.b16 %v152
    %v868 = vunpack.c.l.b16 %v153
    %v869 = vunpack.c.h.b16 %v153
    %v870 = vunpack.c.l.b16 %v154
    %v871 = vunpack.c.h.b16 %v154
    %v872 = vunpack.c.l.b16 %v155
    %v873 = vunpack.c.h.b16 %v155
    %v874 = vpack.c.b16 %v844, %v834
    %v875 = vpack.c.b16 %v845, %v835
    %v876 = vpack.c.b16 %v846, %v836
    %v877 = vpack.c.b16 %v847, %v837
    %v878 = vpack.c.b16 %v848, %v838
    %v879 = vpack.c.b16 %v849, %v839
    %v880 = vpack.c.b16 %v850, %v840
    %v881 = vpack.c.b16 %v851, %v841
    %v882 = vpack.c.b16 %v852, %v842
    %v883 = vpack.c.b16 %v853, %v843
    %v884 = vpack.c.b16 %v864, %v854
    %v885 = vpack.c.b16 %v865, %v855
    %v886 = vpack.c.b16 %v866, %v856
    %v887 = vpack.c.b16 %v867, %v857
    %v888 = vpack.c.b16 %v868, %v858
    %v889 = vpack.c.b16 %v869, %v859
    %v890 = vpack.c.b16 %v870, %v860
    %v891 = vpack.c.b16 %v871, %v861
    %v892 = vpack.c.b16 %v872, %v862
    %v893 = vpack.c.b16 %v873, %v863
    %v1554 = vunpack.c.l.b16 %v156
    %v1555 = vunpack.c.h.b16 %v156
    %v1556 = vunpack.c.l.b16 %v157
    %v1557 = vunpack.c.h.b16 %v157
    %v1558 = vunpack.c.l.b16 %v158
    %v1559 = vunpack.c.h.b16 %v158
    %v1560 = vunpack.c.l.b16 %v159
    %v1561 = vunpack.c.h.b16 %v159
    %v1562 = vunpack.c.l.b16 %v160
    %v1563 = vunpack.c.h.b16 %v160
    %v1564 = vunpack.c.l.b16 %v161
    %v1565 = vunpack.c.h.b16 %v161
    %v1566 = vunpack.c.l.b16 %v162
    %v1567 = vunpack.c.h.b16 %v162
    %v1568 = vunpack.c.l.b16 %v163
    %v1569 = vunpack.c.h.b16 %v163
    %v1570 = vunpack.c.l.b16 %v164
    %v1571 = vunpack.c.h.b16 %v164
    %v1572 = vunpack.c.l.b16 %v165
    %v1573 = vunpack.c.h.b16 %v165
    %v1574 = vunpack.c.l.b16 %v166
    %v1575 = vunpack.c.h.b16 %v166
    %v1576 = vunpack.c.l.b16 %v167
    %v1577 = vunpack.c.h.b16 %v167
    %v1578 = vunpack.c.l.b16 %v168
    %v1579 = vunpack.c.h.b16 %v168
    %v1580 = vunpack.c.l.b16 %v169
    %v1581 = vunpack.c.h.b16 %v169
    %v1582 = vunpack.c.l.b16 %v170
    %v1583 = vunpack.c.h.b16 %v170
    %v1584 = vunpack.c.l.b16 %v171
    %v1585 = vunpack.c.h.b16 %v171
    %v1586 = vunpack.c.l.b16 %v172
    %v1587 = vunpack.c.h.b16 %v172
    %v1588 = vunpack.c.l.b16 %v173
    %v1589 = vunpack.c.h.b16 %v173
    %v1590 = vunpack.c.l.b16 %v174
    %v1591 = vunpack.c.h.b16 %v174
    %v1592 = vunpack.c.l.b16 %v175
    %v1593 = vunpack.c.h.b16 %v175
    %v1594 = vunpack.c.l.b16 %v176
    %v1595 = vunpack.c.h.b16 %v176
    %v1596 = vunpack.c.l.b16 %v177
    %v1597 = vunpack.c.h.b16 %v177
    %v1598 = vunpack.c.l.b16 %v178
    %v1599 = vunpack.c.h.b16 %v178
    %v1600 = vunpack.c.l.b16 %v179
    %v1601 = vunpack.c.h.b16 %v179
    %v1602 = vunpack.c.l.b16 %v180
    %v1603 = vunpack.c.h.b16 %v180
    %v1604 = vunpack.c.l.b16 %v181
    %v1605 = vunpack.c.h.b16 %v181
    %v1606 = vunpack.c.l.b16 %v182
    %v1607 = vunpack.c.h.b16 %v182
    %v1608 = vunpack.c.l.b16 %v183
    %v1609 = vunpack.c.h.b16 %v183
    %v1610 = vunpack.c.l.b16 %v184
    %v1611 = vunpack.c.h.b16 %v184
    %v1612 = vunpack.c.l.b16 %v185
    %v1613 = vunpack.c.h.b16 %v185
    %v1614 = vunpack.c.l.b16 %v186
    %v1615 = vunpack.c.h.b16 %v186
    %v1616 = vunpack.c.l.b16 %v187
    %v1617 = vunpack.c.h.b16 %v187
    %v1618 = vunpack.c.l.b16 %v188
    %v1619 = vunpack.c.h.b16 %v188
    %v1620 = vunpack.c.l.b16 %v189
    %v1621 = vunpack.c.h.b16 %v189
    %v1622 = vunpack.c.l.b16 %v190
    %v1623 = vunpack.c.h.b16 %v190
    %v1624 = vunpack.c.l.b16 %v191
    %v1625 = vunpack.c.h.b16 %v191
    %v1626 = vunpack.c.l.b16 %v192
    %v1627 = vunpack.c.h.b16 %v192
    %v1628 = vunpack.c.l.b16 %v193
    %v1629 = vunpack.c.h.b16 %v193
    %v1630 = vunpack.c.l.b16 %v194
    %v1631 = vunpack.c.h.b16 %v194
    %v1632 = vunpack.c.l.b16 %v195
    %v1633 = vunpack.c.h.b16 %v195
    %v1634 = vunpack.c.l.b16 %v196
    %v1635 = vunpack.c.h.b16 %v196
    %v1636 = vunpack.c.l.b16 %v197
    %v1637 = vunpack.c.h.b16 %v197
    %v1638 = vunpack.c.l.b16 %v198
    %v1639 = vunpack.c.h.b16 %v198
    %v1640 = vunpack.c.l.b16 %v199
    %v1641 = vunpack.c.h.b16 %v199
    %v1642 = vunpack.c.l.b16 %v200
    %v1643 = vunpack.c.h.b16 %v200
    %v1644 = vunpack.c.l.b16 %v201
    %v1645 = vunpack.c.h.b16 %v201
    %v1646 = vunpack.c.l.b16 %v202
    %v1647 = vunpack.c.h.b16 %v202
    %v1648 = vunpack.c.l.b16 %v203
    %v1649 = vunpack.c.h.b16 %v203
    %v1650 = vunpack.c.l.b16 %v204
    %v1651 = vunpack.c.h.b16 %v204
    %v1652 = vunpack.c.l.b16 %v205
    %v1653 = vunpack.c.h.b16 %v205
    %v1654 = vunpack.c.l.b16 %v206
    %v1655 = vunpack.c.h.b16 %v206
    %v1656 = vunpack.c.l.b16 %v207
    %v1657 = vunpack.c.h.b16 %v207
    %v1658 = vunpack.c.l.b16 %v208
    %v1659 = vunpack.c.h.b16 %v208
    %v1660 = vunpack.c.l.b16 %v209
    %v1661 = vunpack.c.h.b16 %v209
    %v1662 = vunpack.c.l.b16 %v210
    %v1663 = vunpack.c.h.b16 %v210
    %v1664 = vunpack.c.l.b16 %v211
    %v1665 = vunpack.c.h.b16 %v211
    %v1666 = vunpack.c.l.b16 %v212
    %v1667 = vunpack.c.h.b16 %v212
    %v1668 = vunpack.c.l.b16 %v213
    %v1669 = vunpack.c.h.b16 %v213
    %v1670 = vunpack.c.l.b16 %v214
    %v1671 = vunpack.c.h.b16 %v214
    %v1672 = vunpack.c.l.b16 %v215
    %v1673 = vunpack.c.h.b16 %v215
    %v1674 = vunpack.c.l.b16 %v216
    %v1675 = vunpack.c.h.b16 %v216
    %v1676 = vunpack.c.l.b16 %v217
    %v1677 = vunpack.c.h.b16 %v217
    %v1678 = vunpack.c.l.b16 %v218
    %v1679 = vunpack.c.h.b16 %v218
    %v1680 = vunpack.c.l.b16 %v219
    %v1681 = vunpack.c.h.b16 %v219
    %v1682 = vunpack.c.l.b16 %v220
    %v1683 = vunpack.c.h.b16 %v220
    %v1684 = vunpack.c.l.b16 %v221
    %v1685 = vunpack.c.h.b16 %v221
    %v1686 = vunpack.c.l.b16 %v222
    %v1687 = vunpack.c.h.b16 %v222
    %v1688 = vunpack.c.l.b16 %v223
    %v1689 = vunpack.c.h.b16 %v223
    %v1690 = vunpack.c.l.b16 %v224
    %v1691 = vunpack.c.h.b16 %v224
    %v1692 = vunpack.c.l.b16 %v225
    %v1693 = vunpack.c.h.b16 %v225
    %v1694 = vunpack.c.l.b16 %v226
    %v1695 = vunpack.c.h.b16 %v226
    %v1696 = vunpack.c.l.b16 %v227
    %v1697 = vunpack.c.h.b16 %v227
    %v1698 = vunpack.c.l.b16 %v228
    %v1699 = vunpack.c.h.b16 %v228
    %v1700 = vunpack.c.l.b16 %v229
    %v1701 = vunpack.c.h.b16 %v229
    %v1702 = vunpack.c.l.b16 %v230
    %v1703 = vunpack.c.h.b16 %v230
    %v1704 = vunpack.c.l.b16 %v231
    %v1705 = vunpack.c.h.b16 %v231
    %v1706 = vunpack.c.l.b16 %v232
    %v1707 = vunpack.c.h.b16 %v232
    %v1708 = vunpack.c.l.b16 %v233
    %v1709 = vunpack.c.h.b16 %v233
    %v1710 = vunpack.c.l.b16 %v234
    %v1711 = vunpack.c.h.b16 %v234
    %v1712 = vunpack.c.l.b16 %v235
    %v1713 = vunpack.c.h.b16 %v235
    %v1714 = vunpack.c.l.b16 %v236
    %v1715 = vunpack.c.h.b16 %v236
    %v1716 = vunpack.c.l.b16 %v237
    %v1717 = vunpack.c.h.b16 %v237
    %v1718 = vunpack.c.l.b16 %v238
    %v1719 = vunpack.c.h.b16 %v238
    %v1720 = vunpack.c.l.b16 %v239
    %v1721 = vunpack.c.h.b16 %v239
    %v1722 = vunpack.c.l.b16 %v240
    %v1723 = vunpack.c.h.b16 %v240
    %v1724 = vunpack.c.l.b16 %v241
    %v1725 = vunpack.c.h.b16 %v241
    %v1726 = vunpack.c.l.b16 %v242
    %v1727 = vunpack.c.h.b16 %v242
    %v1728 = vunpack.c.l.b16 %v243
    %v1729 = vunpack.c.h.b16 %v243
    %v1730 = vunpack.c.l.b16 %v244
    %v1731 = vunpack.c.h.b16 %v244
    %v1732 = vunpack.c.l.b16 %v245
    %v1733 = vunpack.c.h.b16 %v245
    %v1734 = vunpack.c.l.b16 %v246
    %v1735 = vunpack.c.h.b16 %v246
    %v1736 = vunpack.c.l.b16 %v247
    %v1737 = vunpack.c.h.b16 %v247
    %v1738 = vunpack.c.l.b16 %v248
    %v1739 = vunpack.c.h.b16 %v248
    %v1740 = vunpack.c.l.b16 %v249
    %v1741 = vunpack.c.h.b16 %v249
    %v1742 = vunpack.c.l.b16 %v250
    %v1743 = vunpack.c.h.b16 %v250
    %v1744 = vunpack.c.l.b16 %v251
    %v1745 = vunpack.c.h.b16 %v251
    %v1746 = vunpack.c.l.b16 %v252
    %v1747 = vunpack.c.h.b16 %v252
    %v1748 = vunpack.c.l.b16 %v253
    %v1749 = vunpack.c.h.b16 %v253
    %v1750 = vunpack.c.l.b16 %v254
    %v1751 = vunpack.c.h.b16 %v254
    %v1752 = vunpack.c.l.b16 %v255
    %v1753 = vunpack.c.h.b16 %v255
    %v1754 = vunpack.c.l.b16 %v256
    %v1755 = vunpack.c.h.b16 %v256
    %v1756 = vunpack.c.l.b16 %v257
    %v1757 = vunpack.c.h.b16 %v257
    %v1758 = vunpack.c.l.b16 %v258
    %v1759 = vunpack.c.h.b16 %v258
    %v1760 = vunpack.c.l.b16 %v259
    %v1761 = vunpack.c.h.b16 %v259
    %v1762 = vunpack.c.l.b16 %v260
    %v1763 = vunpack.c.h.b16 %v260
    %v1764 = vunpack.c.l.b16 %v261
    %v1765 = vunpack.c.h.b16 %v261
    %v1766 = vunpack.c.l.b16 %v262
    %v1767 = vunpack.c.h.b16 %v262
    %v1768 = vunpack.c.l.b16 %v263
    %v1769 = vunpack.c.h.b16 %v263
    %v1770 = vunpack.c.l.b16 %v264
    %v1771 = vunpack.c.h.b16 %v264
    %v1772 = vunpack.c.l.b16 %v265
    %v1773 = vunpack.c.h.b16 %v265
    %v1774 = vunpack.c.l.b16 %v266
    %v1775 = vunpack.c.h.b16 %v266
    %v1776 = vunpack.c.l.b16 %v267
    %v1777 = vunpack.c.h.b16 %v267
    %v1778 = vunpack.c.l.b16 %v268
    %v1779 = vunpack.c.h.b16 %v268
    %v1780 = vunpack.c.l.b16 %v269
    %v1781 = vunpack.c.h.b16 %v269
    %v1782 = vunpack.c.l.b16 %v270
    %v1783 = vunpack.c.h.b16 %v270
    %v1784 = vunpack.c.l.b16 %v271
    %v1785 = vunpack.c.h.b16 %v271
    %v1786 = vunpack.c.l.b16 %v272
    %v1787 = vunpack.c.h.b16 %v272
    %v1788 = vunpack.c.l.b16 %v273
    %v1789 = vunpack.c.h.b16 %v273
    %v1790 = vunpack.c.l.b16 %v274
    %v1791 = vunpack.c.h.b16 %v274
    %v1792 = vunpack.c.l.b16 %v275
    %v1793 = vunpack.c.h.b16 %v275
    %v1794 = vunpack.c.l.b16 %v276
    %v1795 = vunpack.c.h.b16 %v276
    %v1796 = vunpack.c.l.b16 %v277
    %v1797 = vunpack.c.h.b16 %v277
    %v1798 = vunpack.c.l.b16 %v278
    %v1799 = vunpack.c.h.b16 %v278
    %v1800 = vunpack.c.l.b16 %v279
    %v1801 = vunpack.c.h.b16 %v279
    %v1802 = vunpack.c.l.b16 %v280
    %v1803 = vunpack.c.h.b16 %v280
    %v1804 = vunpack.c.l.b16 %v281
    %v1805 = vunpack.c.h.b16 %v281
    %v1806 = vunpack.c.l.b16 %v282
    %v1807 = vunpack.c.h.b16 %v282
    %v1808 = vunpack.c.l.b16 %v283
    %v1809 = vunpack.c.h.b16 %v283
    %v1810 = vunpack.c.l.b16 %v284
    %v1811 = vunpack.c.h.b16 %v284
    %v1812 = vunpack.c.l.b16 %v285
    %v1813 = vunpack.c.h.b16 %v285
    %v1814 = vunpack.c.l.b16 %v286
    %v1815 = vunpack.c.h.b16 %v286
    %v1816 = vunpack.c.l.b16 %v287
    %v1817 = vunpack.c.h.b16 %v287
    %v1818 = vunpack.c.l.b16 %v288
    %v1819 = vunpack.c.h.b16 %v288
    %v1820 = vunpack.c.l.b16 %v289
    %v1821 = vunpack.c.h.b16 %v289
    %v1822 = vunpack.c.l.b16 %v290
    %v1823 = vunpack.c.h.b16 %v290
    %v1824 = vunpack.c.l.b16 %v291
    %v1825 = vunpack.c.h.b16 %v291
    %v1826 = vunpack.c.l.b16 %v292
    %v1827 = vunpack.c.h.b16 %v292
    %v1828 = vunpack.c.l.b16 %v293
    %v1829 = vunpack.c.h.b16 %v293
    %v1830 = vunpack.c.l.b16 %v294
    %v1831 = vunpack.c.h.b16 %v294
    %v1832 = vunpack.c.l.b16 %v295
    %v1833 = vunpack.c.h.b16 %v295
    %v1834 = vunpack.c.l.b16 %v296
    %v1835 = vunpack.c.h.b16 %v296
    %v1836 = vunpack.c.l.b16 %v297
    %v1837 = vunpack.c.h.b16 %v297
    %v1838 = vunpack.c.l.b16 %v298
    %v1839 = vunpack.c.h.b16 %v298
    %v1840 = vunpack.c.l.b16 %v299
    %v1841 = vunpack.c.h.b16 %v299
    %v1842 = vunpack.c.l.b16 %v300
    %v1843 = vunpack.c.h.b16 %v300
    %v1844 = vunpack.c.l.b16 %v301
    %v1845 = vunpack.c.h.b16 %v301
    %v1846 = vunpack.c.l.b16 %v302
    %v1847 = vunpack.c.h.b16 %v302
    %v1848 = vunpack.c.l.b16 %v303
    %v1849 = vunpack.c.h.b16 %v303
    %v1850 = vunpack.c.l.b16 %v304
    %v1851 = vunpack.c.h.b16 %v304
    %v1852 = vunpack.c.l.b16 %v305
    %v1853 = vunpack.c.h.b16 %v305
    %v1854 = vunpack.c.l.b16 %v306
    %v1855 = vunpack.c.h.b16 %v306
    %v1856 = vunpack.c.l.b16 %v307
    %v1857 = vunpack.c.h.b16 %v307
    %v1858 = vunpack.c.l.b16 %v308
    %v1859 = vunpack.c.h.b16 %v308
    %v1860 = vunpack.c.l.b16 %v309
    %v1861 = vunpack.c.h.b16 %v309
    %v1862 = vunpack.c.l.b16 %v310
    %v1863 = vunpack.c.h.b16 %v310
    %v1864 = vunpack.c.l.b16 %v311
    %v1865 = vunpack.c.h.b16 %v311
    %v1866 = vunpack.c.l.b16 %v312
    %v1867 = vunpack.c.h.b16 %v312
    %v1868 = vunpack.c.l.b16 %v313
    %v1869 = vunpack.c.h.b16 %v313
    %v1870 = vunpack.c.l.b16 %v314
    %v1871 = vunpack.c.h.b16 %v314
    %v1872 = vunpack.c.l.b16 %v315
    %v1873 = vunpack.c.h.b16 %v315
    %v1874 = vunpack.c.l.b16 %v316
    %v1875 = vunpack.c.h.b16 %v316
    %v1876 = vunpack.c.l.b16 %v317
    %v1877 = vunpack.c.h.b16 %v317
    %v1878 = vunpack.c.l.b16 %v318
    %v1879 = vunpack.c.h.b16 %v318
    %v1880 = vunpack.c.l.b16 %v319
    %v1881 = vunpack.c.h.b16 %v319
    %v1882 = vunpack.c.l.b16 %v320
    %v1883 = vunpack.c.h.b16 %v320
    %v1884 = vunpack.c.l.b16 %v321
    %v1885 = vunpack.c.h.b16 %v321
    %v1886 = vunpack.c.l.b16 %v322
    %v1887 = vunpack.c.h.b16 %v322
    %v1888 = vunpack.c.l.b16 %v323
    %v1889 = vunpack.c.h.b16 %v323
    %v1890 = vunpack.c.l.b16 %v324
    %v1891 = vunpack.c.h.b16 %v324
    %v1892 = vunpack.c.l.b16 %v325
    %v1893 = vunpack.c.h.b16 %v325
    %v1894 = vunpack.c.l.b16 %v326
    %v1895 = vunpack.c.h.b16 %v326
    %v1896 = vunpack.c.l.b16 %v327
    %v1897 = vunpack.c.h.b16 %v327
    %v1898 = vunpack.c.l.b16 %v328
    %v1899 = vunpack.c.h.b16 %v328
    %v1900 = vunpack.c.l.b16 %v329
    %v1901 = vunpack.c.h.b16 %v329
    %v1902 = vunpack.c.l.b16 %v330
    %v1903 = vunpack.c.h.b16 %v330
    %v1904 = vunpack.c.l.b16 %v331
    %v1905 = vunpack.c.h.b16 %v331
    %v1906 = vunpack.c.l.b16 %v332
    %v1907 = vunpack.c.h.b16 %v332
    %v1908 = vunpack.c.l.b16 %v333
    %v1909 = vunpack.c.h.b16 %v333
    %v1910 = vunpack.c.l.b16 %v334
    %v1911 = vunpack.c.h.b16 %v334
    %v1912 = vunpack.c.l.b16 %v335
    %v1913 = vunpack.c.h.b16 %v335
    %v1914 = vunpack.c.l.b16 %v336
    %v1915 = vunpack.c.h.b16 %v336
    %v1916 = vunpack.c.l.b16 %v337
    %v1917 = vunpack.c.h.b16 %v337
    %v1918 = vunpack.c.l.b16 %v338
    %v1919 = vunpack.c.h.b16 %v338
    %v1920 = vunpack.c.l.b16 %v339
    %v1921 = vunpack.c.h.b16 %v339
    %v1922 = vunpack.c.l.b16 %v340
    %v1923 = vunpack.c.h.b16 %v340
    %v1924 = vunpack.c.l.b16 %v341
    %v1925 = vunpack.c.h.b16 %v341
    %v1926 = vunpack.c.l.b16 %v342
    %v1927 = vunpack.c.h.b16 %v342
    %v1928 = vunpack.c.l.b16 %v343
    %v1929 = vunpack.c.h.b16 %v343
    %v1930 = vunpack.c.l.b16 %v344
    %v1931 = vunpack.c.h.b16 %v344
    %v1932 = vunpack.c.l.b16 %v345
    %v1933 = vunpack.c.h.b16 %v345
    %v1934 = vunpack.c.l.b16 %v346
    %v1935 = vunpack.c.h.b16 %v346
    %v1936 = vunpack.c.l.b16 %v347
    %v1937 = vunpack.c.h.b16 %v347
    %v1938 = vunpack.c.l.b16 %v348
    %v1939 = vunpack.c.h.b16 %v348
    %v1940 = vunpack.c.l.b16 %v349
    %v1941 = vunpack.c.h.b16 %v349
    %v1942 = vunpack.c.l.b16 %v350
    %v1943 = vunpack.c.h.b16 %v350
    %v1944 = vunpack.c.l.b16 %v351
    %v1945 = vunpack.c.h.b16 %v351
    %v1946 = vunpack.c.l.b16 %v352
    %v1947 = vunpack.c.h.b16 %v352
    %v1948 = vunpack.c.l.b16 %v353
    %v1949 = vunpack.c.h.b16 %v353
    %v1950 = vunpack.c.l.b16 %v354
    %v1951 = vunpack.c.h.b16 %v354
    %v1952 = vunpack.c.l.b16 %v355
    %v1953 = vunpack.c.h.b16 %v355
    %v1954 = vunpack.c.l.b16 %v356
    %v1955 = vunpack.c.h.b16 %v356
    %v1956 = vunpack.c.l.b16 %v357
    %v1957 = vunpack.c.h.b16 %v357
    %v1958 = vunpack.c.l.b16 %v358
    %v1959 = vunpack.c.h.b16 %v358
    %v1960 = vunpack.c.l.b16 %v359
    %v1961 = vunpack.c.h.b16 %v359
    %v1962 = vunpack.c.l.b16 %v360
    %v1963 = vunpack.c.h.b16 %v360
    %v1964 = vunpack.c.l.b16 %v361
    %v1965 = vunpack.c.h.b16 %v361
    %v1966 = vunpack.c.l.b16 %v362
    %v1967 = vunpack.c.h.b16 %v362
    %v1968 = vunpack.c.l.b16 %v363
    %v1969 = vunpack.c.h.b16 %v363
    %v1970 = vunpack.c.l.b16 %v364
    %v1971 = vunpack.c.h.b16 %v364
    %v1972 = vunpack.c.l.b16 %v365
    %v1973 = vunpack.c.h.b16 %v365
    %v1974 = vunpack.c.l.b16 %v366
    %v1975 = vunpack.c.h.b16 %v366
    %v1976 = vunpack.c.l.b16 %v367
    %v1977 = vunpack.c.h.b16 %v367
    %v1978 = vunpack.c.l.b16 %v368
    %v1979 = vunpack.c.h.b16 %v368
    %v1980 = vunpack.c.l.b16 %v369
    %v1981 = vunpack.c.h.b16 %v369
    %v1982 = vunpack.c.l.b16 %v370
    %v1983 = vunpack.c.h.b16 %v370
    %v1984 = vunpack.c.l.b16 %v371
    %v1985 = vunpack.c.h.b16 %v371
    %v1986 = vunpack.c.l.b16 %v372
    %v1987 = vunpack.c.h.b16 %v372
    %v1988 = vunpack.c.l.b16 %v373
    %v1989 = vunpack.c.h.b16 %v373
    %v1990 = vunpack.c.l.b16 %v374
    %v1991 = vunpack.c.h.b16 %v374
    %v1992 = vunpack.c.l.b16 %v375
    %v1993 = vunpack.c.h.b16 %v375
    %v1994 = vunpack.c.l.b16 %v376
    %v1995 = vunpack.c.h.b16 %v376
    %v1996 = vunpack.c.l.b16 %v377
    %v1997 = vunpack.c.h.b16 %v377
    %v1998 = vunpack.c.l.b16 %v378
    %v1999 = vunpack.c.h.b16 %v378
    %v2000 = vunpack.c.l.b16 %v379
    %v2001 = vunpack.c.h.b16 %v379
    %v2002 = vunpack.c.l.b16 %v380
    %v2003 = vunpack.c.h.b16 %v380
    %v2004 = vunpack.c.l.b16 %v381
    %v2005 = vunpack.c.h.b16 %v381
    %v2006 = vunpack.c.l.b16 %v382
    %v2007 = vunpack.c.h.b16 %v382
    %v2008 = vunpack.c.l.b16 %v383
    %v2009 = vunpack.c.h.b16 %v383
    %v2010 = vunpack.c.l.b16 %v384
    %v2011 = vunpack.c.h.b16 %v384
    %v2012 = vunpack.c.l.b16 %v385
    %v2013 = vunpack.c.h.b16 %v385
    %v2014 = vunpack.c.l.b16 %v386
    %v2015 = vunpack.c.h.b16 %v386
    %v2016 = vunpack.c.l.b16 %v387
    %v2017 = vunpack.c.h.b16 %v387
    %v2018 = vunpack.c.l.b16 %v388
    %v2019 = vunpack.c.h.b16 %v388
    %v2020 = vunpack.c.l.b16 %v389
    %v2021 = vunpack.c.h.b16 %v389
    %v2022 = vunpack.c.l.b16 %v390
    %v2023 = vunpack.c.h.b16 %v390
    %v2024 = vunpack.c.l.b16 %v391
    %v2025 = vunpack.c.h.b16 %v391
    %v2026 = vunpack.c.l.b16 %v392
    %v2027 = vunpack.c.h.b16 %v392
    %v2028 = vunpack.c.l.b16 %v393
    %v2029 = vunpack.c.h.b16 %v393
    %v2030 = vunpack.c.l.b16 %v394
    %v2031 = vunpack.c.h.b16 %v394
    %v2032 = vunpack.c.l.b16 %v395
    %v2033 = vunpack.c.h.b16 %v395
    %v2034 = vunpack.c.l.b16 %v396
    %v2035 = vunpack.c.h.b16 %v396
    %v2036 = vunpack.c.l.b16 %v397
    %v2037 = vunpack.c.h.b16 %v397
    %v2038 = vunpack.c.l.b16 %v398
    %v2039 = vunpack.c.h.b16 %v398
    %v2040 = vunpack.c.l.b16 %v399
    %v2041 = vunpack.c.h.b16 %v399
    %v2042 = vunpack.c.l.b16 %v400
    %v2043 = vunpack.c.h.b16 %v400
    %v2044 = vunpack.c.l.b16 %v401
    %v2045 = vunpack.c.h.b16 %v401
    %v2046 = vunpack.c.l.b16 %v402
    %v2047 = vunpack.c.h.b16 %v402
    %v2048 = vunpack.c.l.b16 %v403
    %v2049 = vunpack.c.h.b16 %v403
    %v2050 = vunpack.c.l.b16 %v404
    %v2051 = vunpack.c.h.b16 %v404
    %v2052 = vunpack.c.l.b16 %v405
    %v2053 = vunpack.c.h.b16 %v405
    %v2054 = vunpack.c.l.b16 %v406
    %v2055 = vunpack.c.h.b16 %v406
    %v2056 = vunpack.c.l.b16 %v407
    %v2057 = vunpack.c.h.b16 %v407
    %v2058 = vunpack.c.l.b16 %v408
    %v2059 = vunpack.c.h.b16 %v408
    %v2060 = vunpack.c.l.b16 %v409
    %v2061 = vunpack.c.h.b16 %v409
    %v2062 = vunpack.c.l.b16 %v410
    %v2063 = vunpack.c.h.b16 %v410
    %v2064 = vunpack.c.l.b16 %v411
    %v2065 = vunpack.c.h.b16 %v411
    %v2066 = vunpack.c.l.b16 %v412
    %v2067 = vunpack.c.h.b16 %v412
    %v2068 = vunpack.c.l.b16 %v413
    %v2069 = vunpack.c.h.b16 %v413
    %v2070 = vunpack.c.l.b16 %v414
    %v2071 = vunpack.c.h.b16 %v414
    %v2072 = vunpack.c.l.b16 %v415
    %v2073 = vunpack.c.h.b16 %v415
    %v2074 = vunpack.c.l.b16 %v416
    %v2075 = vunpack.c.h.b16 %v416
    %v2076 = vunpack.c.l.b16 %v417
    %v2077 = vunpack.c.h.b16 %v417
    %v2078 = vunpack.c.l.b16 %v418
    %v2079 = vunpack.c.h.b16 %v418
    %v2080 = vunpack.c.l.b16 %v419
    %v2081 = vunpack.c.h.b16 %v419
    %v2082 = vunpack.c.l.b16 %v420
    %v2083 = vunpack.c.h.b16 %v420
    %v2084 = vunpack.c.l.b16 %v421
    %v2085 = vunpack.c.h.b16 %v421
    %v2086 = vunpack.c.l.b16 %v422
    %v2087 = vunpack.c.h.b16 %v422
    %v2088 = vunpack.c.l.b16 %v423
    %v2089 = vunpack.c.h.b16 %v423
    %v2090 = vunpack.c.l.b16 %v424
    %v2091 = vunpack.c.h.b16 %v424
    %v2092 = vunpack.c.l.b16 %v425
    %v2093 = vunpack.c.h.b16 %v425
    %v2094 = vunpack.c.l.b16 %v426
    %v2095 = vunpack.c.h.b16 %v426
    %v2096 = vunpack.c.l.b16 %v427
    %v2097 = vunpack.c.h.b16 %v427
    %v2098 = vunpack.c.l.b16 %v428
    %v2099 = vunpack.c.h.b16 %v428
    %v2100 = vunpack.c.l.b16 %v429
    %v2101 = vunpack.c.h.b16 %v429
    %v2102 = vunpack.c.l.b16 %v430
    %v2103 = vunpack.c.h.b16 %v430
    %v2104 = vunpack.c.l.b16 %v431
    %v2105 = vunpack.c.h.b16 %v431
    %v2106 = vunpack.c.l.b16 %v432
    %v2107 = vunpack.c.h.b16 %v432
    %v2108 = vunpack.c.l.b16 %v433
    %v2109 = vunpack.c.h.b16 %v433
    %v2110 = vunpack.c.l.b16 %v434
    %v2111 = vunpack.c.h.b16 %v434
    %v2112 = vunpack.c.l.b16 %v435
    %v2113 = vunpack.c.h.b16 %v435
    %v2114 = vunpack.c.l.b16 %v436
    %v2115 = vunpack.c.h.b16 %v436
    %v2116 = vunpack.c.l.b16 %v437
    %v2117 = vunpack.c.h.b16 %v437
    %v2118 = vunpack.c.l.b16 %v438
    %v2119 = vunpack.c.h.b16 %v438
    %v2120 = vunpack.c.l.b16 %v439
    %v2121 = vunpack.c.h.b16 %v439
    %v2122 = vunpack.c.l.b16 %v440
    %v2123 = vunpack.c.h.b16 %v440
    %v2124 = vunpack.c.l.b16 %v441
    %v2125 = vunpack.c.h.b16 %v441
    %v2126 = vunpack.c.l.b16 %v442
    %v2127 = vunpack.c.h.b16 %v442
    %v2128 = vunpack.c.l.b16 %v443
    %v2129 = vunpack.c.h.b16 %v443
    %v2130 = vunpack.c.l.b16 %v444
    %v2131 = vunpack.c.h.b16 %v444
    %v2132 = vunpack.c.l.b16 %v445
    %v2133 = vunpack.c.h.b16 %v445
    %v2134 = vunpack.c.l.b16 %v446
    %v2135 = vunpack.c.h.b16 %v446
    %v2136 = vunpack.c.l.b16 %v447
    %v2137 = vunpack.c.h.b16 %v447
    %v2138 = vunpack.c.l.b16 %v448
    %v2139 = vunpack.c.h.b16 %v448
    %v2140 = vunpack.c.l.b16 %v449
    %v2141 = vunpack.c.h.b16 %v449
    %v2142 = vunpack.c.l.b16 %v450
    %v2143 = vunpack.c.h.b16 %v450
    %v2144 = vunpack.c.l.b16 %v451
    %v2145 = vunpack.c.h.b16 %v451
    %v2146 = vunpack.c.l.b16 %v452
    %v2147 = vunpack.c.h.b16 %v452
    %v2148 = vunpack.c.l.b16 %v453
    %v2149 = vunpack.c.h.b16 %v453
    %v2150 = vunpack.c.l.b16 %v454
    %v2151 = vunpack.c.h.b16 %v454
    %v2152 = vunpack.c.l.b16 %v455
    %v2153 = vunpack.c.h.b16 %v455
    %v2154 = vunpack.c.l.b16 %v456
    %v2155 = vunpack.c.h.b16 %v456
    %v2156 = vunpack.c.l.b16 %v457
    %v2157 = vunpack.c.h.b16 %v457
    %v2158 = vunpack.c.l.b16 %v458
    %v2159 = vunpack.c.h.b16 %v458
    %v2160 = vunpack.c.l.b16 %v459
    %v2161 = vunpack.c.h.b16 %v459
    %v2162 = vunpack.c.l.b16 %v460
    %v2163 = vunpack.c.h.b16 %v460
    %v2164 = vunpack.c.l.b16 %v461
    %v2165 = vunpack.c.h.b16 %v461
    %v2166 = vunpack.c.l.b16 %v462
    %v2167 = vunpack.c.h.b16 %v462
    %v2168 = vunpack.c.l.b16 %v463
    %v2169 = vunpack.c.h.b16 %v463
    %v2170 = vunpack.c.l.b16 %v464
    %v2171 = vunpack.c.h.b16 %v464
    %v2172 = vunpack.c.l.b16 %v465
    %v2173 = vunpack.c.h.b16 %v465
    %v2174 = vunpack.c.l.b16 %v466
    %v2175 = vunpack.c.h.b16 %v466
    %v2176 = vunpack.c.l.b16 %v467
    %v2177 = vunpack.c.h.b16 %v467
    %v2178 = vunpack.c.l.b16 %v468
    %v2179 = vunpack.c.h.b16 %v468
    %v2180 = vunpack.c.l.b16 %v469
    %v2181 = vunpack.c.h.b16 %v469
    %v2182 = vunpack.c.l.b16 %v470
    %v2183 = vunpack.c.h.b16 %v470
    %v2184 = vunpack.c.l.b16 %v471
    %v2185 = vunpack.c.h.b16 %v471
    %v2186 = vunpack.c.l.b16 %v472
    %v2187 = vunpack.c.h.b16 %v472
    %v2188 = vunpack.c.l.b16 %v473
    %v2189 = vunpack.c.h.b16 %v473
    %v2190 = vunpack.c.l.b16 %v474
    %v2191 = vunpack.c.h.b16 %v474
    %v2192 = vunpack.c.l.b16 %v475
    %v2193 = vunpack.c.h.b16 %v475
    %v2194 = vunpack.c.l.b16 %v476
    %v2195 = vunpack.c.h.b16 %v476
    %v2196 = vunpack.c.l.b16 %v477
    %v2197 = vunpack.c.h.b16 %v477
    %v2198 = vunpack.c.l.b16 %v478
    %v2199 = vunpack.c.h.b16 %v478
    %v2200 = vunpack.c.l.b16 %v479
    %v2201 = vunpack.c.h.b16 %v479
    %v2202 = vunpack.c.l.b16 %v480
    %v2203 = vunpack.c.h.b16 %v480
    %v2204 = vunpack.c.l.b16 %v481
    %v2205 = vunpack.c.h.b16 %v481
    %v2206 = vunpack.c.l.b16 %v482
    %v2207 = vunpack.c.h.b16 %v482
    %v2208 = vunpack.c.l.b16 %v483
    %v2209 = vunpack.c.h.b16 %v483
    %v2210 = vunpack.c.l.b16 %v484
    %v2211 = vunpack.c.h.b16 %v484
    %v2212 = vunpack.c.l.b16 %v485
    %v2213 = vunpack.c.h.b16 %v485
    %v2214 = vunpack.c.l.b16 %v486
    %v2215 = vunpack.c.h.b16 %v486
    %v2216 = vunpack.c.l.b16 %v487
    %v2217 = vunpack.c.h.b16 %v487
    %v2218 = vunpack.c.l.b16 %v488
    %v2219 = vunpack.c.h.b16 %v488
    %v2220 = vunpack.c.l.b16 %v489
    %v2221 = vunpack.c.h.b16 %v489
    %v2222 = vunpack.c.l.b16 %v490
    %v2223 = vunpack.c.h.b16 %v490
    %v2224 = vunpack.c.l.b16 %v491
    %v2225 = vunpack.c.h.b16 %v491
    %v2226 = vunpack.c.l.b16 %v492
    %v2227 = vunpack.c.h.b16 %v492
    %v2228 = vunpack.c.l.b16 %v493
    %v2229 = vunpack.c.h.b16 %v493
    %v2230 = vunpack.c.l.b16 %v494
    %v2231 = vunpack.c.h.b16 %v494
    %v2232 = vunpack.c.l.b16 %v495
    %v2233 = vunpack.c.h.b16 %v495
    %v2234 = vunpack.c.l.b16 %v496
    %v2235 = vunpack.c.h.b16 %v496
    %v2236 = vunpack.c.l.b16 %v497
    %v2237 = vunpack.c.h.b16 %v497
    %v2238 = vunpack.c.l.b16 %v498
    %v2239 = vunpack.c.h.b16 %v498
    %v2240 = vunpack.c.l.b16 %v499
    %v2241 = vunpack.c.h.b16 %v499
    %v2242 = vunpack.c.l.b16 %v500
    %v2243 = vunpack.c.h.b16 %v500
    %v2244 = vunpack.c.l.b16 %v501
    %v2245 = vunpack.c.h.b16 %v501
    %v2246 = vunpack.c.l.b16 %v502
    %v2247 = vunpack.c.h.b16 %v502
    %v2248 = vunpack.c.l.b16 %v503
    %v2249 = vunpack.c.h.b16 %v503
    %v2250 = vunpack.c.l.b16 %v504
    %v2251 = vunpack.c.h.b16 %v504
    %v2252 = vunpack.c.l.b16 %v505
    %v2253 = vunpack.c.h.b16 %v505
    %v2254 = vunpack.c.l.b16 %v506
    %v2255 = vunpack.c.h.b16 %v506
    %v2256 = vunpack.c.l.b16 %v507
    %v2257 = vunpack.c.h.b16 %v507
    %v2258 = vunpack.c.l.b16 %v508
    %v2259 = vunpack.c.h.b16 %v508
    %v2260 = vunpack.c.l.b16 %v509
    %v2261 = vunpack.c.h.b16 %v509
    %v2262 = vunpack.c.l.b16 %v510
    %v2263 = vunpack.c.h.b16 %v510
    %v2264 = vunpack.c.l.b16 %v511
    %v2265 = vunpack.c.h.b16 %v511
    %v2266 = vunpack.c.l.b16 %v512
    %v2267 = vunpack.c.h.b16 %v512
    %v2268 = vunpack.c.l.b16 %v513
    %v2269 = vunpack.c.h.b16 %v513
    %v2270 = vunpack.c.l.b16 %v514
    %v2271 = vunpack.c.h.b16 %v514
    %v2272 = vunpack.c.l.b16 %v515
    %v2273 = vunpack.c.h.b16 %v515
    %v2274 = vunpack.c.l.b16 %v516
    %v2275 = vunpack.c.h.b16 %v516
    %v2276 = vunpack.c.l.b16 %v517
    %v2277 = vunpack.c.h.b16 %v517
    %v2278 = vunpack.c.l.b16 %v518
    %v2279 = vunpack.c.h.b16 %v518
    %v2280 = vunpack.c.l.b16 %v519
    %v2281 = vunpack.c.h.b16 %v519
    %v2282 = vunpack.c.l.b16 %v520
    %v2283 = vunpack.c.h.b16 %v520
    %v2284 = vunpack.c.l.b16 %v521
    %v2285 = vunpack.c.h.b16 %v521
    %v2286 = vunpack.c.l.b16 %v522
    %v2287 = vunpack.c.h.b16 %v522
    %v2288 = vunpack.c.l.b16 %v523
    %v2289 = vunpack.c.h.b16 %v523
    %v2290 = vunpack.c.l.b16 %v524
    %v2291 = vunpack.c.h.b16 %v524
    %v2292 = vunpack.c.l.b16 %v525
    %v2293 = vunpack.c.h.b16 %v525
    %v2294 = vunpack.c.l.b16 %v526
    %v2295 = vunpack.c.h.b16 %v526
    %v2296 = vunpack.c.l.b16 %v527
    %v2297 = vunpack.c.h.b16 %v527
    %v2298 = vunpack.c.l.b16 %v528
    %v2299 = vunpack.c.h.b16 %v528
    %v2300 = vunpack.c.l.b16 %v529
    %v2301 = vunpack.c.h.b16 %v529
    %v2302 = vunpack.c.l.b16 %v530
    %v2303 = vunpack.c.h.b16 %v530
    %v2304 = vunpack.c.l.b16 %v531
    %v2305 = vunpack.c.h.b16 %v531
    %v2306 = vunpack.c.l.b16 %v532
    %v2307 = vunpack.c.h.b16 %v532
    %v2308 = vunpack.c.l.b16 %v533
    %v2309 = vunpack.c.h.b16 %v533
    %v2310 = vunpack.c.l.b16 %v534
    %v2311 = vunpack.c.h.b16 %v534
    %v2312 = vunpack.c.l.b16 %v535
    %v2313 = vunpack.c.h.b16 %v535
    %v2314 = vunpack.c.l.b16 %v536
    %v2315 = vunpack.c.h.b16 %v536
    %v2316 = vunpack.c.l.b16 %v537
    %v2317 = vunpack.c.h.b16 %v537
    %v2318 = vunpack.c.l.b16 %v538
    %v2319 = vunpack.c.h.b16 %v538
    %v2320 = vunpack.c.l.b16 %v539
    %v2321 = vunpack.c.h.b16 %v539
    %v2322 = vunpack.c.l.b16 %v540
    %v2323 = vunpack.c.h.b16 %v540
    %v2324 = vunpack.c.l.b16 %v541
    %v2325 = vunpack.c.h.b16 %v541
    %v2326 = vunpack.c.l.b16 %v542
    %v2327 = vunpack.c.h.b16 %v542
    %v2328 = vunpack.c.l.b16 %v543
    %v2329 = vunpack.c.h.b16 %v543
    %v2330 = vunpack.c.l.b16 %v544
    %v2331 = vunpack.c.h.b16 %v544
    %v2332 = vunpack.c.l.b16 %v545
    %v2333 = vunpack.c.h.b16 %v545
    %v2334 = vunpack.c.l.b16 %v546
    %v2335 = vunpack.c.h.b16 %v546
    %v2336 = vunpack.c.l.b16 %v547
    %v2337 = vunpack.c.h.b16 %v547
    %v2338 = vunpack.c.l.b16 %v548
    %v2339 = vunpack.c.h.b16 %v548
    %v2340 = vunpack.c.l.b16 %v549
    %v2341 = vunpack.c.h.b16 %v549
    %v2342 = vunpack.c.l.b16 %v550
    %v2343 = vunpack.c.h.b16 %v550
    %v2344 = vunpack.c.l.b16 %v551
    %v2345 = vunpack.c.h.b16 %v551
    %v2346 = vunpack.c.l.b16 %v552
    %v2347 = vunpack.c.h.b16 %v552
    %v2348 = vunpack.c.l.b16 %v553
    %v2349 = vunpack.c.h.b16 %v553
    %v2350 = vunpack.c.l.b16 %v554
    %v2351 = vunpack.c.h.b16 %v554
    %v2352 = vunpack.c.l.b16 %v555
    %v2353 = vunpack.c.h.b16 %v555
    %v2354 = vunpack.c.l.b16 %v556
    %v2355 = vunpack.c.h.b16 %v556
    %v2356 = vunpack.c.l.b16 %v557
    %v2357 = vunpack.c.h.b16 %v557
    %v2358 = vunpack.c.l.b16 %v558
    %v2359 = vunpack.c.h.b16 %v558
    %v2360 = vunpack.c.l.b16 %v559
    %v2361 = vunpack.c.h.b16 %v559
    %v2362 = vunpack.c.l.b16 %v560
    %v2363 = vunpack.c.h.b16 %v560
    %v2364 = vunpack.c.l.b16 %v561
    %v2365 = vunpack.c.h.b16 %v561
    %v2366 = vunpack.c.l.b16 %v562
    %v2367 = vunpack.c.h.b16 %v562
    %v2368 = vunpack.c.l.b16 %v563
    %v2369 = vunpack.c.h.b16 %v563
    %v2370 = vunpack.c.l.b16 %v564
    %v2371 = vunpack.c.h.b16 %v564
    %v2372 = vunpack.c.l.b16 %v565
    %v2373 = vunpack.c.h.b16 %v565
    %v2374 = vunpack.c.l.b16 %v566
    %v2375 = vunpack.c.h.b16 %v566
    %v2376 = vunpack.c.l.b16 %v567
    %v2377 = vunpack.c.h.b16 %v567
    %v2378 = vunpack.c.l.b16 %v568
    %v2379 = vunpack.c.h.b16 %v568
    %v2380 = vunpack.c.l.b16 %v569
    %v2381 = vunpack.c.h.b16 %v569
    %v2382 = vunpack.c.l.b16 %v570
    %v2383 = vunpack.c.h.b16 %v570
    %v2384 = vunpack.c.l.b16 %v571
    %v2385 = vunpack.c.h.b16 %v571
    %v2386 = vunpack.c.l.b16 %v572
    %v2387 = vunpack.c.h.b16 %v572
    %v2388 = vunpack.c.l.b16 %v573
    %v2389 = vunpack.c.h.b16 %v573
    %v2390 = vunpack.c.l.b16 %v574
    %v2391 = vunpack.c.h.b16 %v574
    %v2392 = vunpack.c.l.b16 %v575
    %v2393 = vunpack.c.h.b16 %v575
    %v2394 = vunpack.c.l.b16 %v576
    %v2395 = vunpack.c.h.b16 %v576
    %v2396 = vunpack.c.l.b16 %v577
    %v2397 = vunpack.c.h.b16 %v577
    %v2398 = vunpack.c.l.b16 %v578
    %v2399 = vunpack.c.h.b16 %v578
    %v2400 = vunpack.c.l.b16 %v579
    %v2401 = vunpack.c.h.b16 %v579
    %v2402 = vunpack.c.l.b16 %v580
    %v2403 = vunpack.c.h.b16 %v580
    %v2404 = vunpack.c.l.b16 %v581
    %v2405 = vunpack.c.h.b16 %v581
    %v2406 = vunpack.c.l.b16 %v582
    %v2407 = vunpack.c.h.b16 %v582
    %v2408 = vunpack.c.l.b16 %v583
    %v2409 = vunpack.c.h.b16 %v583
    %v2410 = vunpack.c.l.b16 %v584
    %v2411 = vunpack.c.h.b16 %v584
    %v2412 = vunpack.c.l.b16 %v585
    %v2413 = vunpack.c.h.b16 %v585
    %v2414 = vunpack.c.l.b16 %v586
    %v2415 = vunpack.c.h.b16 %v586
    %v2416 = vunpack.c.l.b16 %v587
    %v2417 = vunpack.c.h.b16 %v587
    %v2418 = vunpack.c.l.b16 %v588
    %v2419 = vunpack.c.h.b16 %v588
    %v2420 = vunpack.c.l.b16 %v589
    %v2421 = vunpack.c.h.b16 %v589
    %v2422 = vunpack.c.l.b16 %v590
    %v2423 = vunpack.c.h.b16 %v590
    %v2424 = vunpack.c.l.b16 %v591
    %v2425 = vunpack.c.h.b16 %v591
    %v2426 = vunpack.c.l.b16 %v592
    %v2427 = vunpack.c.h.b16 %v592
    %v2428 = vunpack.c.l.b16 %v593
    %v2429 = vunpack.c.h.b16 %v593
    %v2430 = vunpack.c.l.b16 %v594
    %v2431 = vunpack.c.h.b16 %v594
    %v2432 = vunpack.c.l.b16 %v595
    %v2433 = vunpack.c.h.b16 %v595
    %v2434 = vunpack.c.l.b16 %v596
    %v2435 = vunpack.c.h.b16 %v596
    %v2436 = vunpack.c.l.b16 %v597
    %v2437 = vunpack.c.h.b16 %v597
    %v2438 = vunpack.c.l.b16 %v598
    %v2439 = vunpack.c.h.b16 %v598
    %v2440 = vunpack.c.l.b16 %v599
    %v2441 = vunpack.c.h.b16 %v599
    %v2442 = vunpack.c.l.b16 %v600
    %v2443 = vunpack.c.h.b16 %v600
    %v2444 = vunpack.c.l.b16 %v601
    %v2445 = vunpack.c.h.b16 %v601
    %v2446 = vunpack.c.l.b16 %v602
    %v2447 = vunpack.c.h.b16 %v602
    %v2448 = vunpack.c.l.b16 %v603
    %v2449 = vunpack.c.h.b16 %v603
    %v2450 = vunpack.c.l.b16 %v604
    %v2451 = vunpack.c.h.b16 %v604
    %v2452 = vunpack.c.l.b16 %v605
    %v2453 = vunpack.c.h.b16 %v605
    %v2454 = vunpack.c.l.b16 %v606
    %v2455 = vunpack.c.h.b16 %v606
    %v2456 = vunpack.c.l.b16 %v607
    %v2457 = vunpack.c.h.b16 %v607
    %v2458 = vunpack.c.l.b16 %v608
    %v2459 = vunpack.c.h.b16 %v608
    %v2460 = vunpack.c.l.b16 %v609
    %v2461 = vunpack.c.h.b16 %v609
    %v2462 = vunpack.c.l.b16 %v610
    %v2463 = vunpack.c.h.b16 %v610
    %v2464 = vunpack.c.l.b16 %v611
    %v2465 = vunpack.c.h.b16 %v611
    %v2466 = vunpack.c.l.b16 %v612
    %v2467 = vunpack.c.h.b16 %v612
    %v2468 = vunpack.c.l.b16 %v613
    %v2469 = vunpack.c.h.b16 %v613
    %v2470 = vunpack.c.l.b16 %v614
    %v2471 = vunpack.c.h.b16 %v614
    %v2472 = vunpack.c.l.b16 %v615
    %v2473 = vunpack.c.h.b16 %v615
    %v2474 = vunpack.c.l.b16 %v616
    %v2475 = vunpack.c.h.b16 %v616
    %v2476 = vunpack.c.l.b16 %v617
    %v2477 = vunpack.c.h.b16 %v617
    %v2478 = vunpack.c.l.b16 %v618
    %v2479 = vunpack.c.h.b16 %v618
    %v2480 = vunpack.c.l.b16 %v619
    %v2481 = vunpack.c.h.b16 %v619
    %v2482 = vunpack.c.l.b16 %v620
    %v2483 = vunpack.c.h.b16 %v620
    %v2484 = vunpack.c.l.b16 %v621
    %v2485 = vunpack.c.h.b16 %v621
    %v2486 = vunpack.c.l.b16 %v622
    %v2487 = vunpack.c.h.b16 %v622
    %v2488 = vunpack.c.l.b16 %v623
    %v2489 = vunpack.c.h.b16 %v623
    %v2490 = vunpack.c.l.b16 %v624
    %v2491 = vunpack.c.h.b16 %v624
    %v2492 = vunpack.c.l.b16 %v625
    %v2493 = vunpack.c.h.b16 %v625
    %v2494 = vunpack.c.l.b16 %v626
    %v2495 = vunpack.c.h.b16 %v626
    %v2496 = vunpack.c.l.b16 %v627
    %v2497 = vunpack.c.h.b16 %v627
    %v2498 = vunpack.c.l.b16 %v628
    %v2499 = vunpack.c.h.b16 %v628
    %v2500 = vunpack.c.l.b16 %v629
    %v2501 = vunpack.c.h.b16 %v629
    %v2502 = vunpack.c.l.b16 %v630
    %v2503 = vunpack.c.h.b16 %v630
    %v2504 = vunpack.c.l.b16 %v631
    %v2505 = vunpack.c.h.b16 %v631
    %v2506 = vunpack.c.l.b16 %v632
    %v2507 = vunpack.c.h.b16 %v632
    %v2508 = vunpack.c.l.b16 %v633
    %v2509 = vunpack.c.h.b16 %v633
    %v2510 = vunpack.c.l.b16 %v634
    %v2511 = vunpack.c.h.b16 %v634
    %v2512 = vunpack.c.l.b16 %v635
    %v2513 = vunpack.c.h.b16 %v635
    %v2514 = vunpack.c.l.b16 %v636
    %v2515 = vunpack.c.h.b16 %v636
    %v2516 = vunpack.c.l.b16 %v637
    %v2517 = vunpack.c.h.b16 %v637
    %v2518 = vunpack.c.l.b16 %v638
    %v2519 = vunpack.c.h.b16 %v638
    %v2520 = vunpack.c.l.b16 %v639
    %v2521 = vunpack.c.h.b16 %v639
    %v2522 = vunpack.c.l.b16 %v640
    %v2523 = vunpack.c.h.b16 %v640
    %v2524 = vunpack.c.l.b16 %v641
    %v2525 = vunpack.c.h.b16 %v641
    %v2526 = vunpack.c.l.b16 %v642
    %v2527 = vunpack.c.h.b16 %v642
    %v2528 = vunpack.c.l.b16 %v643
    %v2529 = vunpack.c.h.b16 %v643
    %v2530 = vunpack.c.l.b16 %v644
    %v2531 = vunpack.c.h.b16 %v644
    %v2532 = vunpack.c.l.b16 %v645
    %v2533 = vunpack.c.h.b16 %v645
    %v2534 = vunpack.c.l.b16 %v646
    %v2535 = vunpack.c.h.b16 %v646
    %v2536 = vunpack.c.l.b16 %v647
    %v2537 = vunpack.c.h.b16 %v647
    %v2538 = vunpack.c.l.b16 %v648
    %v2539 = vunpack.c.h.b16 %v648
    %v2540 = vunpack.c.l.b16 %v649
    %v2541 = vunpack.c.h.b16 %v649
    %v2542 = vunpack.c.l.b16 %v650
    %v2543 = vunpack.c.h.b16 %v650
    %v2544 = vunpack.c.l.b16 %v651
    %v2545 = vunpack.c.h.b16 %v651
    %v2546 = vunpack.c.l.b16 %v652
    %v2547 = vunpack.c.h.b16 %v652
    %v2548 = vunpack.c.l.b16 %v653
    %v2549 = vunpack.c.h.b16 %v653
    %v2550 = vunpack.c.l.b16 %v654
    %v2551 = vunpack.c.h.b16 %v654
    %v2552 = vunpack.c.l.b16 %v655
    %v2553 = vunpack.c.h.b16 %v655
    %v2554 = vunpack.c.l.b16 %v656
    %v2555 = vunpack.c.h.b16 %v656
    %v2556 = vunpack.c.l.b16 %v657
    %v2557 = vunpack.c.h.b16 %v657
    %v2558 = vunpack.c.l.b16 %v658
    %v2559 = vunpack.c.h.b16 %v658
    %v2560 = vunpack.c.l.b16 %v659
    %v2561 = vunpack.c.h.b16 %v659
    %v2562 = vunpack.c.l.b16 %v660
    %v2563 = vunpack.c.h.b16 %v660
    %v2564 = vunpack.c.l.b16 %v661
    %v2565 = vunpack.c.h.b16 %v661
    %v2566 = vunpack.c.l.b16 %v662
    %v2567 = vunpack.c.h.b16 %v662
    %v2568 = vunpack.c.l.b16 %v663
    %v2569 = vunpack.c.h.b16 %v663
    %v2570 = vunpack.c.l.b16 %v664
    %v2571 = vunpack.c.h.b16 %v664
    %v2572 = vunpack.c.l.b16 %v665
    %v2573 = vunpack.c.h.b16 %v665
    %v2574 = vunpack.c.l.b16 %v666
    %v2575 = vunpack.c.h.b16 %v666
    %v2576 = vunpack.c.l.b16 %v667
    %v2577 = vunpack.c.h.b16 %v667
    %v2578 = vunpack.c.l.b16 %v668
    %v2579 = vunpack.c.h.b16 %v668
    %v2580 = vunpack.c.l.b16 %v669
    %v2581 = vunpack.c.h.b16 %v669
    %v2582 = vunpack.c.l.b16 %v670
    %v2583 = vunpack.c.h.b16 %v670
    %v2584 = vunpack.c.l.b16 %v671
    %v2585 = vunpack.c.h.b16 %v671
    %v2586 = vunpack.c.l.b16 %v672
    %v2587 = vunpack.c.h.b16 %v672
    %v2588 = vunpack.c.l.b16 %v673
    %v2589 = vunpack.c.h.b16 %v673
    %v2590 = vunpack.c.l.b16 %v674
    %v2591 = vunpack.c.h.b16 %v674
    %v2592 = vunpack.c.l.b16 %v675
    %v2593 = vunpack.c.h.b16 %v675
    %v2594 = vunpack.c.l.b16 %v676
    %v2595 = vunpack.c.h.b16 %v676
    %v2596 = vunpack.c.l.b16 %v677
    %v2597 = vunpack.c.h.b16 %v677
    %v2598 = vunpack.c.l.b16 %v678
    %v2599 = vunpack.c.h.b16 %v678
    %v2600 = vunpack.c.l.b16 %v679
    %v2601 = vunpack.c.h.b16 %v679
    %v2602 = vunpack.c.l.b16 %v680
    %v2603 = vunpack.c.h.b16 %v680
    %v2604 = vunpack.c.l.b16 %v681
    %v2605 = vunpack.c.h.b16 %v681
    %v2606 = vunpack.c.l.b16 %v682
    %v2607 = vunpack.c.h.b16 %v682
    %v2608 = vunpack.c.l.b16 %v683
    %v2609 = vunpack.c.h.b16 %v683
    %v2610 = vunpack.c.l.b16 %v684
    %v2611 = vunpack.c.h.b16 %v684
    %v2612 = vunpack.c.l.b16 %v685
    %v2613 = vunpack.c.h.b16 %v685
    %v2614 = vunpack.c.l.b16 %v686
    %v2615 = vunpack.c.h.b16 %v686
    %v2616 = vunpack.c.l.b16 %v687
    %v2617 = vunpack.c.h.b16 %v687
    %v2618 = vunpack.c.l.b16 %v688
    %v2619 = vunpack.c.h.b16 %v688
    %v2620 = vunpack.c.l.b16 %v689
    %v2621 = vunpack.c.h.b16 %v689
    %v2622 = vunpack.c.l.b16 %v690
    %v2623 = vunpack.c.h.b16 %v690
    %v2624 = vunpack.c.l.b16 %v691
    %v2625 = vunpack.c.h.b16 %v691
    %v2626 = vunpack.c.l.b16 %v692
    %v2627 = vunpack.c.h.b16 %v692
    %v2628 = vunpack.c.l.b16 %v693
    %v2629 = vunpack.c.h.b16 %v693
    %v2630 = vunpack.c.l.b16 %v694
    %v2631 = vunpack.c.h.b16 %v694
    %v2632 = vunpack.c.l.b16 %v695
    %v2633 = vunpack.c.h.b16 %v695
    %v2634 = vunpack.c.l.b16 %v696
    %v2635 = vunpack.c.h.b16 %v696
    %v2636 = vunpack.c.l.b16 %v697
    %v2637 = vunpack.c.h.b16 %v697
    %v2638 = vunpack.c.l.b16 %v698
    %v2639 = vunpack.c.h.b16 %v698
    %v2640 = vunpack.c.l.b16 %v699
    %v2641 = vunpack.c.h.b16 %v699
    %v2642 = vunpack.c.l.b16 %v700
    %v2643 = vunpack.c.h.b16 %v700
    %v2644 = vunpack.c.l.b16 %v701
    %v2645 = vunpack.c.h.b16 %v701
    %v2646 = vunpack.c.l.b16 %v702
    %v2647 = vunpack.c.h.b16 %v702
    %v2648 = vunpack.c.l.b16 %v703
    %v2649 = vunpack.c.h.b16 %v703
    %v2650 = vunpack.c.l.b16 %v704
    %v2651 = vunpack.c.h.b16 %v704
    %v2652 = vunpack.c.l.b16 %v705
    %v2653 = vunpack.c.h.b16 %v705
    %v2654 = vunpack.c.l.b16 %v706
    %v2655 = vunpack.c.h.b16 %v706
    %v2656 = vunpack.c.l.b16 %v707
    %v2657 = vunpack.c.h.b16 %v707
    %v2658 = vunpack.c.l.b16 %v708
    %v2659 = vunpack.c.h.b16 %v708
    %v2660 = vunpack.c.l.b16 %v709
    %v2661 = vunpack.c.h.b16 %v709
    %v2662 = vunpack.c.l.b16 %v710
    %v2663 = vunpack.c.h.b16 %v710
    %v2664 = vunpack.c.l.b16 %v711
    %v2665 = vunpack.c.h.b16 %v711
    %v2666 = vunpack.c.l.b16 %v712
    %v2667 = vunpack.c.h.b16 %v712
    %v2668 = vunpack.c.l.b16 %v713
    %v2669 = vunpack.c.h.b16 %v713
    %v2670 = vunpack.c.l.b16 %v714
    %v2671 = vunpack.c.h.b16 %v714
    %v2672 = vunpack.c.l.b16 %v715
    %v2673 = vunpack.c.h.b16 %v715
    %v2674 = vunpack.c.l.b16 %v716
    %v2675 = vunpack.c.h.b16 %v716
    %v2676 = vunpack.c.l.b16 %v717
    %v2677 = vunpack.c.h.b16 %v717
    %v2678 = vunpack.c.l.b16 %v718
    %v2679 = vunpack.c.h.b16 %v718
    %v2680 = vunpack.c.l.b16 %v719
    %v2681 = vunpack.c.h.b16 %v719
    %v2682 = vunpack.c.l.b16 %v720
    %v2683 = vunpack.c.h.b16 %v720
    %v2684 = vunpack.c.l.b16 %v721
    %v2685 = vunpack.c.h.b16 %v721
    %v2686 = vunpack.c.l.b16 %v722
    %v2687 = vunpack.c.h.b16 %v722
    %v2688 = vunpack.c.l.b16 %v723
    %v2689 = vunpack.c.h.b16 %v723
    %v2690 = vunpack.c.l.b16 %v724
    %v2691 = vunpack.c.h.b16 %v724
    %v2692 = vunpack.c.l.b16 %v725
    %v2693 = vunpack.c.h.b16 %v725
    %v2694 = vunpack.c.l.b16 %v726
    %v2695 = vunpack.c.h.b16 %v726
    %v2696 = vunpack.c.l.b16 %v727
    %v2697 = vunpack.c.h.b16 %v727
    %v2698 = vunpack.c.l.b16 %v728
    %v2699 = vunpack.c.h.b16 %v728
    %v2700 = vunpack.c.l.b16 %v729
    %v2701 = vunpack.c.h.b16 %v729
    %v2702 = vunpack.c.l.b16 %v730
    %v2703 = vunpack.c.h.b16 %v730
    %v2704 = vunpack.c.l.b16 %v731
    %v2705 = vunpack.c.h.b16 %v731
    %v2706 = vunpack.c.l.b16 %v732
    %v2707 = vunpack.c.h.b16 %v732
    %v2708 = vunpack.c.l.b16 %v733
    %v2709 = vunpack.c.h.b16 %v733
    %v2710 = vunpack.c.l.b16 %v734
    %v2711 = vunpack.c.h.b16 %v734
    %v2712 = vunpack.c.l.b16 %v735
    %v2713 = vunpack.c.h.b16 %v735
    %v2714 = vunpack.c.l.b16 %v736
    %v2715 = vunpack.c.h.b16 %v736
    %v2716 = vunpack.c.l.b16 %v737
    %v2717 = vunpack.c.h.b16 %v737
    %v2718 = vunpack.c.l.b16 %v738
    %v2719 = vunpack.c.h.b16 %v738
    %v2720 = vunpack.c.l.b16 %v739
    %v2721 = vunpack.c.h.b16 %v739
    %v2722 = vunpack.c.l.b16 %v740
    %v2723 = vunpack.c.h.b16 %v740
    %v2724 = vunpack.c.l.b16 %v741
    %v2725 = vunpack.c.h.b16 %v741
    %v2726 = vunpack.c.l.b16 %v742
    %v2727 = vunpack.c.h.b16 %v742
    %v2728 = vunpack.c.l.b16 %v743
    %v2729 = vunpack.c.h.b16 %v743
    %v2730 = vunpack.c.l.b16 %v744
    %v2731 = vunpack.c.h.b16 %v744
    %v2732 = vunpack.c.l.b16 %v745
    %v2733 = vunpack.c.h.b16 %v745
    %v2734 = vunpack.c.l.b16 %v746
    %v2735 = vunpack.c.h.b16 %v746
    %v2736 = vunpack.c.l.b16 %v747
    %v2737 = vunpack.c.h.b16 %v747
    %v2738 = vunpack.c.l.b16 %v748
    %v2739 = vunpack.c.h.b16 %v748
    %v2740 = vunpack.c.l.b16 %v749
    %v2741 = vunpack.c.h.b16 %v749
    %v2742 = vunpack.c.l.b16 %v750
    %v2743 = vunpack.c.h.b16 %v750
    %v2744 = vunpack.c.l.b16 %v751
    %v2745 = vunpack.c.h.b16 %v751
    %v2746 = vunpack.c.l.b16 %v752
    %v2747 = vunpack.c.h.b16 %v752
    %v2748 = vunpack.c.l.b16 %v753
    %v2749 = vunpack.c.h.b16 %v753
    %v2750 = vunpack.c.l.b16 %v754
    %v2751 = vunpack.c.h.b16 %v754
    %v2752 = vunpack.c.l.b16 %v755
    %v2753 = vunpack.c.h.b16 %v755
    %v2754 = vunpack.c.l.b16 %v756
    %v2755 = vunpack.c.h.b16 %v756
    %v2756 = vunpack.c.l.b16 %v757
    %v2757 = vunpack.c.h.b16 %v757
    %v2758 = vunpack.c.l.b16 %v758
    %v2759 = vunpack.c.h.b16 %v758
    %v2760 = vunpack.c.l.b16 %v759
    %v2761 = vunpack.c.h.b16 %v759
    %v2762 = vunpack.c.l.b16 %v760
    %v2763 = vunpack.c.h.b16 %v760
    %v2764 = vunpack.c.l.b16 %v761
    %v2765 = vunpack.c.h.b16 %v761
    %v2766 = vunpack.c.l.b16 %v762
    %v2767 = vunpack.c.h.b16 %v762
    %v2768 = vunpack.c.l.b16 %v763
    %v2769 = vunpack.c.h.b16 %v763
    %v2770 = vunpack.c.l.b16 %v764
    %v2771 = vunpack.c.h.b16 %v764
    %v2772 = vunpack.c.l.b16 %v765
    %v2773 = vunpack.c.h.b16 %v765
    %v2774 = vunpack.c.l.b16 %v766
    %v2775 = vunpack.c.h.b16 %v766
    %v2776 = vunpack.c.l.b16 %v767
    %v2777 = vunpack.c.h.b16 %v767
    %v2778 = vunpack.c.l.b16 %v768
    %v2779 = vunpack.c.h.b16 %v768
    %v2780 = vunpack.c.l.b16 %v769
    %v2781 = vunpack.c.h.b16 %v769
    %v2782 = vunpack.c.l.b16 %v770
    %v2783 = vunpack.c.h.b16 %v770
    %v2784 = vunpack.c.l.b16 %v771
    %v2785 = vunpack.c.h.b16 %v771
    %v2786 = vunpack.c.l.b16 %v772
    %v2787 = vunpack.c.h.b16 %v772
    %v2788 = vunpack.c.l.b16 %v773
    %v2789 = vunpack.c.h.b16 %v773
    %v2790 = vunpack.c.l.b16 %v774
    %v2791 = vunpack.c.h.b16 %v774
    %v2792 = vunpack.c.l.b16 %v775
    %v2793 = vunpack.c.h.b16 %v775
    %v2794 = vunpack.c.l.b16 %v776
    %v2795 = vunpack.c.h.b16 %v776
    %v2796 = vunpack.c.l.b16 %v777
    %v2797 = vunpack.c.h.b16 %v777
    %v2798 = vunpack.c.l.b16 %v778
    %v2799 = vunpack.c.h.b16 %v778
    %v2800 = vunpack.c.l.b16 %v779
    %v2801 = vunpack.c.h.b16 %v779
    %v2802 = vunpack.c.l.b16 %v780
    %v2803 = vunpack.c.h.b16 %v780
    %v2804 = vunpack.c.l.b16 %v781
    %v2805 = vunpack.c.h.b16 %v781
    %v2806 = vunpack.c.l.b16 %v782
    %v2807 = vunpack.c.h.b16 %v782
    %v2808 = vunpack.c.l.b16 %v783
    %v2809 = vunpack.c.h.b16 %v783
    %v2810 = vunpack.c.l.b16 %v784
    %v2811 = vunpack.c.h.b16 %v784
    %v2812 = vunpack.c.l.b16 %v785
    %v2813 = vunpack.c.h.b16 %v785
    %v2814 = vunpack.c.l.b16 %v786
    %v2815 = vunpack.c.h.b16 %v786
    %v2816 = vunpack.c.l.b16 %v787
    %v2817 = vunpack.c.h.b16 %v787
    %v2818 = vunpack.c.l.b16 %v788
    %v2819 = vunpack.c.h.b16 %v788
    %v2820 = vunpack.c.l.b16 %v789
    %v2821 = vunpack.c.h.b16 %v789
    %v2822 = vunpack.c.l.b16 %v790
    %v2823 = vunpack.c.h.b16 %v790
    %v2824 = vunpack.c.l.b16 %v791
    %v2825 = vunpack.c.h.b16 %v791
    %v2826 = vunpack.c.l.b16 %v792
    %v2827 = vunpack.c.h.b16 %v792
    %v2828 = vunpack.c.l.b16 %v793
    %v2829 = vunpack.c.h.b16 %v793
    %v2830 = vunpack.c.l.b16 %v794
    %v2831 = vunpack.c.h.b16 %v794
    %v2832 = vunpack.c.l.b16 %v795
    %v2833 = vunpack.c.h.b16 %v795
    %v2834 = vpack.c.b16 %v1562, %v1554
    %v2835 = vpack.c.b16 %v1563, %v1555
    %v2836 = vpack.c.b16 %v1564, %v1556
    %v2837 = vpack.c.b16 %v1565, %v1557
    %v2838 = vpack.c.b16 %v1566, %v1558
    %v2839 = vpack.c.b16 %v1567, %v1559
    %v2840 = vpack.c.b16 %v1568, %v1560
    %v2841 = vpack.c.b16 %v1569, %v1561
    %v2842 = vpack.c.b16 %v1578, %v1570
    %v2843 = vpack.c.b16 %v1579, %v1571
    %v2844 = vpack.c.b16 %v1580, %v1572
    %v2845 = vpack.c.b16 %v1581, %v1573
    %v2846 = vpack.c.b16 %v1582, %v1574
    %v2847 = vpack.c.b16 %v1583, %v1575
    %v2848 = vpack.c.b16 %v1584, %v1576
    %v2849 = vpack.c.b16 %v1585, %v1577
    %v2850 = vpack.c.b16 %v1594, %v1586
    %v2851 = vpack.c.b16 %v1595, %v1587
    %v2852 = vpack.c.b16 %v1596, %v1588
    %v2853 = vpack.c.b16 %v1597, %v1589
    %v2854 = vpack.c.b16 %v1598, %v1590
    %v2855 = vpack.c.b16 %v1599, %v1591
    %v2856 = vpack.c.b16 %v1600, %v1592
    %v2857 = vpack.c.b16 %v1601, %v1593
    %v2858 = vpack.c.b16 %v1610, %v1602
    %v2859 = vpack.c.b16 %v1611, %v1603
    %v2860 = vpack.c.b16 %v1612, %v1604
    %v2861 = vpack.c.b16 %v1613, %v1605
    %v2862 = vpack.c.b16 %v1614, %v1606
    %v2863 = vpack.c.b16 %v1615, %v1607
    %v2864 = vpack.c.b16 %v1616, %v1608
    %v2865 = vpack.c.b16 %v1617, %v1609
    %v2866 = vpack.c.b16 %v1626, %v1618
    %v2867 = vpack.c.b16 %v1627, %v1619
    %v2868 = vpack.c.b16 %v1628, %v1620
    %v2869 = vpack.c.b16 %v1629, %v1621
    %v2870 = vpack.c.b16 %v1630, %v1622
    %v2871 = vpack.c.b16 %v1631, %v1623
    %v2872 = vpack.c.b16 %v1632, %v1624
    %v2873 = vpack.c.b16 %v1633, %v1625
    %v2874 = vpack.c.b16 %v1642, %v1634
    %v2875 = vpack.c.b16 %v1643, %v1635
    %v2876 = vpack.c.b16 %v1644, %v1636
    %v2877 = vpack.c.b16 %v1645, %v1637
    %v2878 = vpack.c.b16 %v1646, %v1638
    %v2879 = vpack.c.b16 %v1647, %v1639
    %v2880 = vpack.c.b16 %v1648, %v1640
    %v2881 = vpack.c.b16 %v1649, %v1641
    %v2882 = vpack.c.b16 %v1658, %v1650
    %v2883 = vpack.c.b16 %v1659, %v1651
    %v2884 = vpack.c.b16 %v1660, %v1652
    %v2885 = vpack.c.b16 %v1661, %v1653
    %v2886 = vpack.c.b16 %v1662, %v1654
    %v2887 = vpack.c.b16 %v1663, %v1655
    %v2888 = vpack.c.b16 %v1664, %v1656
    %v2889 = vpack.c.b16 %v1665, %v1657
    %v2890 = vpack.c.b16 %v1674, %v1666
    %v2891 = vpack.c.b16 %v1675, %v1667
    %v2892 = vpack.c.b16 %v1676, %v1668
    %v2893 = vpack.c.b16 %v1677, %v1669
    %v2894 = vpack.c.b16 %v1678, %v1670
    %v2895 = vpack.c.b16 %v1679, %v1671
    %v2896 = vpack.c.b16 %v1680, %v1672
    %v2897 = vpack.c.b16 %v1681, %v1673
    %v2898 = vpack.c.b16 %v1690, %v1682
    %v2899 = vpack.c.b16 %v1691, %v1683
    %v2900 = vpack.c.b16 %v1692, %v1684
    %v2901 = vpack.c.b16 %v1693, %v1685
    %v2902 = vpack.c.b16 %v1694, %v1686
    %v2903 = vpack.c.b16 %v1695, %v1687
    %v2904 = vpack.c.b16 %v1696, %v1688
    %v2905 = vpack.c.b16 %v1697, %v1689
    %v2906 = vpack.c.b16 %v1706, %v1698
    %v2907 = vpack.c.b16 %v1707, %v1699
    %v2908 = vpack.c.b16 %v1708, %v1700
    %v2909 = vpack.c.b16 %v1709, %v1701
    %v2910 = vpack.c.b16 %v1710, %v1702
    %v2911 = vpack.c.b16 %v1711, %v1703
    %v2912 = vpack.c.b16 %v1712, %v1704
    %v2913 = vpack.c.b16 %v1713, %v1705
    %v2914 = vpack.c.b16 %v1722, %v1714
    %v2915 = vpack.c.b16 %v1723, %v1715
    %v2916 = vpack.c.b16 %v1724, %v1716
    %v2917 = vpack.c.b16 %v1725, %v1717
    %v2918 = vpack.c.b16 %v1726, %v1718
    %v2919 = vpack.c.b16 %v1727, %v1719
    %v2920 = vpack.c.b16 %v1728, %v1720
    %v2921 = vpack.c.b16 %v1729, %v1721
    %v2922 = vpack.c.b16 %v1738, %v1730
    %v2923 = vpack.c.b16 %v1739, %v1731
    %v2924 = vpack.c.b16 %v1740, %v1732
    %v2925 = vpack.c.b16 %v1741, %v1733
    %v2926 = vpack.c.b16 %v1742, %v1734
    %v2927 = vpack.c.b16 %v1743, %v1735
    %v2928 = vpack.c.b16 %v1744, %v1736
    %v2929 = vpack.c.b16 %v1745, %v1737
    %v2930 = vpack.c.b16 %v1754, %v1746
    %v2931 = vpack.c.b16 %v1755, %v1747
    %v2932 = vpack.c.b16 %v1756, %v1748
    %v2933 = vpack.c.b16 %v1757, %v1749
    %v2934 = vpack.c.b16 %v1758, %v1750
    %v2935 = vpack.c.b16 %v1759, %v1751
    %v2936 = vpack.c.b16 %v1760, %v1752
    %v2937 = vpack.c.b16 %v1761, %v1753
    %v2938 = vpack.c.b16 %v1770, %v1762
    %v2939 = vpack.c.b16 %v1771, %v1763
    %v2940 = vpack.c.b16 %v1772, %v1764
    %v2941 = vpack.c.b16 %v1773, %v1765
    %v2942 = vpack.c.b16 %v1774, %v1766
    %v2943 = vpack.c.b16 %v1775, %v1767
    %v2944 = vpack.c.b16 %v1776, %v1768
    %v2945 = vpack.c.b16 %v1777, %v1769
    %v2946 = vpack.c.b16 %v1786, %v1778
    %v2947 = vpack.c.b16 %v1787, %v1779
    %v2948 = vpack.c.b16 %v1788, %v1780
    %v2949 = vpack.c.b16 %v1789, %v1781
    %v2950 = vpack.c.b16 %v1790, %v1782
    %v2951 = vpack.c.b16 %v1791, %v1783
    %v2952 = vpack.c.b16 %v1792, %v1784
    %v2953 = vpack.c.b16 %v1793, %v1785
    %v2954 = vpack.c.b16 %v1802, %v1794
    %v2955 = vpack.c.b16 %v1803, %v1795
    %v2956 = vpack.c.b16 %v1804, %v1796
    %v2957 = vpack.c.b16 %v1805, %v1797
    %v2958 = vpack.c.b16 %v1806, %v1798
    %v2959 = vpack.c.b16 %v1807, %v1799
    %v2960 = vpack.c.b16 %v1808, %v1800
    %v2961 = vpack.c.b16 %v1809, %v1801
    %v2962 = vpack.c.b16 %v1818, %v1810
    %v2963 = vpack.c.b16 %v1819, %v1811
    %v2964 = vpack.c.b16 %v1820, %v1812
    %v2965 = vpack.c.b16 %v1821, %v1813
    %v2966 = vpack.c.b16 %v1822, %v1814
    %v2967 = vpack.c.b16 %v1823, %v1815
    %v2968 = vpack.c.b16 %v1824, %v1816
    %v2969 = vpack.c.b16 %v1825, %v1817
    %v2970 = vpack.c.b16 %v1834, %v1826
    %v2971 = vpack.c.b16 %v1835, %v1827
    %v2972 = vpack.c.b16 %v1836, %v1828
    %v2973 = vpack.c.b16 %v1837, %v1829
    %v2974 = vpack.c.b16 %v1838, %v1830
    %v2975 = vpack.c.b16 %v1839, %v1831
    %v2976 = vpack.c.b16 %v1840, %v1832
    %v2977 = vpack.c.b16 %v1841, %v1833
    %v2978 = vpack.c.b16 %v1850, %v1842
    %v2979 = vpack.c.b16 %v1851, %v1843
    %v2980 = vpack.c.b16 %v1852, %v1844
    %v2981 = vpack.c.b16 %v1853, %v1845
    %v2982 = vpack.c.b16 %v1854, %v1846
    %v2983 = vpack.c.b16 %v1855, %v1847
    %v2984 = vpack.c.b16 %v1856, %v1848
    %v2985 = vpack.c.b16 %v1857, %v1849
    %v2986 = vpack.c.b16 %v1866, %v1858
    %v2987 = vpack.c.b16 %v1867, %v1859
    %v2988 = vpack.c.b16 %v1868, %v1860
    %v2989 = vpack.c.b16 %v1869, %v1861
    %v2990 = vpack.c.b16 %v1870, %v1862
    %v2991 = vpack.c.b16 %v1871, %v1863
    %v2992 = vpack.c.b16 %v1872, %v1864
    %v2993 = vpack.c.b16 %v1873, %v1865
    %v2994 = vpack.c.b16 %v1882, %v1874
    %v2995 = vpack.c.b16 %v1883, %v1875
    %v2996 = vpack.c.b16 %v1884, %v1876
    %v2997 = vpack.c.b16 %v1885, %v1877
    %v2998 = vpack.c.b16 %v1886, %v1878
    %v2999 = vpack.c.b16 %v1887, %v1879
    %v3000 = vpack.c.b16 %v1888, %v1880
    %v3001 = vpack.c.b16 %v1889, %v1881
    %v3002 = vpack.c.b16 %v1898, %v1890
    %v3003 = vpack.c.b16 %v1899, %v1891
    %v3004 = vpack.c.b16 %v1900, %v1892
    %v3005 = vpack.c.b16 %v1901, %v1893
    %v3006 = vpack.c.b16 %v1902, %v1894
    %v3007 = vpack.c.b16 %v1903, %v1895
    %v3008 = vpack.c.b16 %v1904, %v1896
    %v3009 = vpack.c.b16 %v1905, %v1897
    %v3010 = vpack.c.b16 %v1914, %v1906
    %v3011 = vpack.c.b16 %v1915, %v1907
    %v3012 = vpack.c.b16 %v1916, %v1908
    %v3013 = vpack.c.b16 %v1917, %v1909
    %v3014 = vpack.c.b16 %v1918, %v1910
    %v3015 = vpack.c.b16 %v1919, %v1911
    %v3016 = vpack.c.b16 %v1920, %v1912
    %v3017 = vpack.c.b16 %v1921, %v1913
    %v3018 = vpack.c.b16 %v1930, %v1922
    %v3019 = vpack.c.b16 %v1931, %v1923
    %v3020 = vpack.c.b16 %v1932, %v1924
    %v3021 = vpack.c.b16 %v1933, %v1925
    %v3022 = vpack.c.b16 %v1934, %v1926
    %v3023 = vpack.c.b16 %v1935, %v1927
    %v3024 = vpack.c.b16 %v1936, %v1928
    %v3025 = vpack.c.b16 %v1937, %v1929
    %v3026 = vpack.c.b16 %v1946, %v1938
    %v3027 = vpack.c.b16 %v1947, %v1939
    %v3028 = vpack.c.b16 %v1948, %v1940
    %v3029 = vpack.c.b16 %v1949, %v1941
    %v3030 = vpack.c.b16 %v1950, %v1942
    %v3031 = vpack.c.b16 %v1951, %v1943
    %v3032 = vpack.c.b16 %v1952, %v1944
    %v3033 = vpack.c.b16 %v1953, %v1945
    %v3034 = vpack.c.b16 %v1962, %v1954
    %v3035 = vpack.c.b16 %v1963, %v1955
    %v3036 = vpack.c.b16 %v1964, %v1956
    %v3037 = vpack.c.b16 %v1965, %v1957
    %v3038 = vpack.c.b16 %v1966, %v1958
    %v3039 = vpack.c.b16 %v1967, %v1959
    %v3040 = vpack.c.b16 %v1968, %v1960
    %v3041 = vpack.c.b16 %v1969, %v1961
    %v3042 = vpack.c.b16 %v1978, %v1970
    %v3043 = vpack.c.b16 %v1979, %v1971
    %v3044 = vpack.c.b16 %v1980, %v1972
    %v3045 = vpack.c.b16 %v1981, %v1973
    %v3046 = vpack.c.b16 %v1982, %v1974
    %v3047 = vpack.c.b16 %v1983, %v1975
    %v3048 = vpack.c.b16 %v1984, %v1976
    %v3049 = vpack.c.b16 %v1985, %v1977
    %v3050 = vpack.c.b16 %v1994, %v1986
    %v3051 = vpack.c.b16 %v1995, %v1987
    %v3052 = vpack.c.b16 %v1996, %v1988
    %v3053 = vpack.c.b16 %v1997, %v1989
    %v3054 = vpack.c.b16 %v1998, %v1990
    %v3055 = vpack.c.b16 %v1999, %v1991
    %v3056 = vpack.c.b16 %v2000, %v1992
    %v3057 = vpack.c.b16 %v2001, %v1993
    %v3058 = vpack.c.b16 %v2010, %v2002
    %v3059 = vpack.c.b16 %v2011, %v2003
    %v3060 = vpack.c.b16 %v2012, %v2004
    %v3061 = vpack.c.b16 %v2013, %v2005
    %v3062 = vpack.c.b16 %v2014, %v2006
    %v3063 = vpack.c.b16 %v2015, %v2007
    %v3064 = vpack.c.b16 %v2016, %v2008
    %v3065 = vpack.c.b16 %v2017, %v2009
    %v3066 = vpack.c.b16 %v2026, %v2018
    %v3067 = vpack.c.b16 %v2027, %v2019
    %v3068 = vpack.c.b16 %v2028, %v2020
    %v3069 = vpack.c.b16 %v2029, %v2021
    %v3070 = vpack.c.b16 %v2030, %v2022
    %v3071 = vpack.c.b16 %v2031, %v2023
    %v3072 = vpack.c.b16 %v2032, %v2024
    %v3073 = vpack.c.b16 %v2033, %v2025
    %v3074 = vpack.c.b16 %v2042, %v2034
    %v3075 = vpack.c.b16 %v2043, %v2035
    %v3076 = vpack.c.b16 %v2044, %v2036
    %v3077 = vpack.c.b16 %v2045, %v2037
    %v3078 = vpack.c.b16 %v2046, %v2038
    %v3079 = vpack.c.b16 %v2047, %v2039
    %v3080 = vpack.c.b16 %v2048, %v2040
    %v3081 = vpack.c.b16 %v2049, %v2041
    %v3082 = vpack.c.b16 %v2058, %v2050
    %v3083 = vpack.c.b16 %v2059, %v2051
    %v3084 = vpack.c.b16 %v2060, %v2052
    %v3085 = vpack.c.b16 %v2061, %v2053
    %v3086 = vpack.c.b16 %v2062, %v2054
    %v3087 = vpack.c.b16 %v2063, %v2055
    %v3088 = vpack.c.b16 %v2064, %v2056
    %v3089 = vpack.c.b16 %v2065, %v2057
    %v3090 = vpack.c.b16 %v2074, %v2066
    %v3091 = vpack.c.b16 %v2075, %v2067
    %v3092 = vpack.c.b16 %v2076, %v2068
    %v3093 = vpack.c.b16 %v2077, %v2069
    %v3094 = vpack.c.b16 %v2078, %v2070
    %v3095 = vpack.c.b16 %v2079, %v2071
    %v3096 = vpack.c.b16 %v2080, %v2072
    %v3097 = vpack.c.b16 %v2081, %v2073
    %v3098 = vpack.c.b16 %v2090, %v2082
    %v3099 = vpack.c.b16 %v2091, %v2083
    %v3100 = vpack.c.b16 %v2092, %v2084
    %v3101 = vpack.c.b16 %v2093, %v2085
    %v3102 = vpack.c.b16 %v2094, %v2086
    %v3103 = vpack.c.b16 %v2095, %v2087
    %v3104 = vpack.c.b16 %v2096, %v2088
    %v3105 = vpack.c.b16 %v2097, %v2089
    %v3106 = vpack.c.b16 %v2106, %v2098
    %v3107 = vpack.c.b16 %v2107, %v2099
    %v3108 = vpack.c.b16 %v2108, %v2100
    %v3109 = vpack.c.b16 %v2109, %v2101
    %v3110 = vpack.c.b16 %v2110, %v2102
    %v3111 = vpack.c.b16 %v2111, %v2103
    %v3112 = vpack.c.b16 %v2112, %v2104
    %v3113 = vpack.c.b16 %v2113, %v2105
    %v3114 = vpack.c.b16 %v2122, %v2114
    %v3115 = vpack.c.b16 %v2123, %v2115
    %v3116 = vpack.c.b16 %v2124, %v2116
    %v3117 = vpack.c.b16 %v2125, %v2117
    %v3118 = vpack.c.b16 %v2126, %v2118
    %v3119 = vpack.c.b16 %v2127, %v2119
    %v3120 = vpack.c.b16 %v2128, %v2120
    %v3121 = vpack.c.b16 %v2129, %v2121
    %v3122 = vpack.c.b16 %v2138, %v2130
    %v3123 = vpack.c.b16 %v2139, %v2131
    %v3124 = vpack.c.b16 %v2140, %v2132
    %v3125 = vpack.c.b16 %v2141, %v2133
    %v3126 = vpack.c.b16 %v2142, %v2134
    %v3127 = vpack.c.b16 %v2143, %v2135
    %v3128 = vpack.c.b16 %v2144, %v2136
    %v3129 = vpack.c.b16 %v2145, %v2137
    %v3130 = vpack.c.b16 %v2154, %v2146
    %v3131 = vpack.c.b16 %v2155, %v2147
    %v3132 = vpack.c.b16 %v2156, %v2148
    %v3133 = vpack.c.b16 %v2157, %v2149
    %v3134 = vpack.c.b16 %v2158, %v2150
    %v3135 = vpack.c.b16 %v2159, %v2151
    %v3136 = vpack.c.b16 %v2160, %v2152
    %v3137 = vpack.c.b16 %v2161, %v2153
    %v3138 = vpack.c.b16 %v2170, %v2162
    %v3139 = vpack.c.b16 %v2171, %v2163
    %v3140 = vpack.c.b16 %v2172, %v2164
    %v3141 = vpack.c.b16 %v2173, %v2165
    %v3142 = vpack.c.b16 %v2174, %v2166
    %v3143 = vpack.c.b16 %v2175, %v2167
    %v3144 = vpack.c.b16 %v2176, %v2168
    %v3145 = vpack.c.b16 %v2177, %v2169
    %v3146 = vpack.c.b16 %v2186, %v2178
    %v3147 = vpack.c.b16 %v2187, %v2179
    %v3148 = vpack.c.b16 %v2188, %v2180
    %v3149 = vpack.c.b16 %v2189, %v2181
    %v3150 = vpack.c.b16 %v2190, %v2182
    %v3151 = vpack.c.b16 %v2191, %v2183
    %v3152 = vpack.c.b16 %v2192, %v2184
    %v3153 = vpack.c.b16 %v2193, %v2185
    %v3154 = vpack.c.b16 %v2202, %v2194
    %v3155 = vpack.c.b16 %v2203, %v2195
    %v3156 = vpack.c.b16 %v2204, %v2196
    %v3157 = vpack.c.b16 %v2205, %v2197
    %v3158 = vpack.c.b16 %v2206, %v2198
    %v3159 = vpack.c.b16 %v2207, %v2199
    %v3160 = vpack.c.b16 %v2208, %v2200
    %v3161 = vpack.c.b16 %v2209, %v2201
    %v3162 = vpack.c.b16 %v2218, %v2210
    %v3163 = vpack.c.b16 %v2219, %v2211
    %v3164 = vpack.c.b16 %v2220, %v2212
    %v3165 = vpack.c.b16 %v2221, %v2213
    %v3166 = vpack.c.b16 %v2222, %v2214
    %v3167 = vpack.c.b16 %v2223, %v2215
    %v3168 = vpack.c.b16 %v2224, %v2216
    %v3169 = vpack.c.b16 %v2225, %v2217
    %v3170 = vpack.c.b16 %v2234, %v2226
    %v3171 = vpack.c.b16 %v2235, %v2227
    %v3172 = vpack.c.b16 %v2236, %v2228
    %v3173 = vpack.c.b16 %v2237, %v2229
    %v3174 = vpack.c.b16 %v2238, %v2230
    %v3175 = vpack.c.b16 %v2239, %v2231
    %v3176 = vpack.c.b16 %v2240, %v2232
    %v3177 = vpack.c.b16 %v2241, %v2233
    %v3178 = vpack.c.b16 %v2250, %v2242
    %v3179 = vpack.c.b16 %v2251, %v2243
    %v3180 = vpack.c.b16 %v2252, %v2244
    %v3181 = vpack.c.b16 %v2253, %v2245
    %v3182 = vpack.c.b16 %v2254, %v2246
    %v3183 = vpack.c.b16 %v2255, %v2247
    %v3184 = vpack.c.b16 %v2256, %v2248
    %v3185 = vpack.c.b16 %v2257, %v2249
    %v3186 = vpack.c.b16 %v2266, %v2258
    %v3187 = vpack.c.b16 %v2267, %v2259
    %v3188 = vpack.c.b16 %v2268, %v2260
    %v3189 = vpack.c.b16 %v2269, %v2261
    %v3190 = vpack.c.b16 %v2270, %v2262
    %v3191 = vpack.c.b16 %v2271, %v2263
    %v3192 = vpack.c.b16 %v2272, %v2264
    %v3193 = vpack.c.b16 %v2273, %v2265
    %v3194 = vpack.c.b16 %v2282, %v2274
    %v3195 = vpack.c.b16 %v2283, %v2275
    %v3196 = vpack.c.b16 %v2284, %v2276
    %v3197 = vpack.c.b16 %v2285, %v2277
    %v3198 = vpack.c.b16 %v2286, %v2278
    %v3199 = vpack.c.b16 %v2287, %v2279
    %v3200 = vpack.c.b16 %v2288, %v2280
    %v3201 = vpack.c.b16 %v2289, %v2281
    %v3202 = vpack.c.b16 %v2298, %v2290
    %v3203 = vpack.c.b16 %v2299, %v2291
    %v3204 = vpack.c.b16 %v2300, %v2292
    %v3205 = vpack.c.b16 %v2301, %v2293
    %v3206 = vpack.c.b16 %v2302, %v2294
    %v3207 = vpack.c.b16 %v2303, %v2295
    %v3208 = vpack.c.b16 %v2304, %v2296
    %v3209 = vpack.c.b16 %v2305, %v2297
    %v3210 = vpack.c.b16 %v2314, %v2306
    %v3211 = vpack.c.b16 %v2315, %v2307
    %v3212 = vpack.c.b16 %v2316, %v2308
    %v3213 = vpack.c.b16 %v2317, %v2309
    %v3214 = vpack.c.b16 %v2318, %v2310
    %v3215 = vpack.c.b16 %v2319, %v2311
    %v3216 = vpack.c.b16 %v2320, %v2312
    %v3217 = vpack.c.b16 %v2321, %v2313
    %v3218 = vpack.c.b16 %v2330, %v2322
    %v3219 = vpack.c.b16 %v2331, %v2323
    %v3220 = vpack.c.b16 %v2332, %v2324
    %v3221 = vpack.c.b16 %v2333, %v2325
    %v3222 = vpack.c.b16 %v2334, %v2326
    %v3223 = vpack.c.b16 %v2335, %v2327
    %v3224 = vpack.c.b16 %v2336, %v2328
    %v3225 = vpack.c.b16 %v2337, %v2329
    %v3226 = vpack.c.b16 %v2346, %v2338
    %v3227 = vpack.c.b16 %v2347, %v2339
    %v3228 = vpack.c.b16 %v2348, %v2340
    %v3229 = vpack.c.b16 %v2349, %v2341
    %v3230 = vpack.c.b16 %v2350, %v2342
    %v3231 = vpack.c.b16 %v2351, %v2343
    %v3232 = vpack.c.b16 %v2352, %v2344
    %v3233 = vpack.c.b16 %v2353, %v2345
    %v3234 = vpack.c.b16 %v2362, %v2354
    %v3235 = vpack.c.b16 %v2363, %v2355
    %v3236 = vpack.c.b16 %v2364, %v2356
    %v3237 = vpack.c.b16 %v2365, %v2357
    %v3238 = vpack.c.b16 %v2366, %v2358
    %v3239 = vpack.c.b16 %v2367, %v2359
    %v3240 = vpack.c.b16 %v2368, %v2360
    %v3241 = vpack.c.b16 %v2369, %v2361
    %v3242 = vpack.c.b16 %v2378, %v2370
    %v3243 = vpack.c.b16 %v2379, %v2371
    %v3244 = vpack.c.b16 %v2380, %v2372
    %v3245 = vpack.c.b16 %v2381, %v2373
    %v3246 = vpack.c.b16 %v2382, %v2374
    %v3247 = vpack.c.b16 %v2383, %v2375
    %v3248 = vpack.c.b16 %v2384, %v2376
    %v3249 = vpack.c.b16 %v2385, %v2377
    %v3250 = vpack.c.b16 %v2394, %v2386
    %v3251 = vpack.c.b16 %v2395, %v2387
    %v3252 = vpack.c.b16 %v2396, %v2388
    %v3253 = vpack.c.b16 %v2397, %v2389
    %v3254 = vpack.c.b16 %v2398, %v2390
    %v3255 = vpack.c.b16 %v2399, %v2391
    %v3256 = vpack.c.b16 %v2400, %v2392
    %v3257 = vpack.c.b16 %v2401, %v2393
    %v3258 = vpack.c.b16 %v2410, %v2402
    %v3259 = vpack.c.b16 %v2411, %v2403
    %v3260 = vpack.c.b16 %v2412, %v2404
    %v3261 = vpack.c.b16 %v2413, %v2405
    %v3262 = vpack.c.b16 %v2414, %v2406
    %v3263 = vpack.c.b16 %v2415, %v2407
    %v3264 = vpack.c.b16 %v2416, %v2408
    %v3265 = vpack.c.b16 %v2417, %v2409
    %v3266 = vpack.c.b16 %v2426, %v2418
    %v3267 = vpack.c.b16 %v2427, %v2419
    %v3268 = vpack.c.b16 %v2428, %v2420
    %v3269 = vpack.c.b16 %v2429, %v2421
    %v3270 = vpack.c.b16 %v2430, %v2422
    %v3271 = vpack.c.b16 %v2431, %v2423
    %v3272 = vpack.c.b16 %v2432, %v2424
    %v3273 = vpack.c.b16 %v2433, %v2425
    %v3274 = vpack.c.b16 %v2442, %v2434
    %v3275 = vpack.c.b16 %v2443, %v2435
    %v3276 = vpack.c.b16 %v2444, %v2436
    %v3277 = vpack.c.b16 %v2445, %v2437
    %v3278 = vpack.c.b16 %v2446, %v2438
    %v3279 = vpack.c.b16 %v2447, %v2439
    %v3280 = vpack.c.b16 %v2448, %v2440
    %v3281 = vpack.c.b16 %v2449, %v2441
    %v3282 = vpack.c.b16 %v2458, %v2450
    %v3283 = vpack.c.b16 %v2459, %v2451
    %v3284 = vpack.c.b16 %v2460, %v2452
    %v3285 = vpack.c.b16 %v2461, %v2453
    %v3286 = vpack.c.b16 %v2462, %v2454
    %v3287 = vpack.c.b16 %v2463, %v2455
    %v3288 = vpack.c.b16 %v2464, %v2456
    %v3289 = vpack.c.b16 %v2465, %v2457
    %v3290 = vpack.c.b16 %v2474, %v2466
    %v3291 = vpack.c.b16 %v2475, %v2467
    %v3292 = vpack.c.b16 %v2476, %v2468
    %v3293 = vpack.c.b16 %v2477, %v2469
    %v3294 = vpack.c.b16 %v2478, %v2470
    %v3295 = vpack.c.b16 %v2479, %v2471
    %v3296 = vpack.c.b16 %v2480, %v2472
    %v3297 = vpack.c.b16 %v2481, %v2473
    %v3298 = vpack.c.b16 %v2490, %v2482
    %v3299 = vpack.c.b16 %v2491, %v2483
    %v3300 = vpack.c.b16 %v2492, %v2484
    %v3301 = vpack.c.b16 %v2493, %v2485
    %v3302 = vpack.c.b16 %v2494, %v2486
    %v3303 = vpack.c.b16 %v2495, %v2487
    %v3304 = vpack.c.b16 %v2496, %v2488
    %v3305 = vpack.c.b16 %v2497, %v2489
    %v3306 = vpack.c.b16 %v2506, %v2498
    %v3307 = vpack.c.b16 %v2507, %v2499
    %v3308 = vpack.c.b16 %v2508, %v2500
    %v3309 = vpack.c.b16 %v2509, %v2501
    %v3310 = vpack.c.b16 %v2510, %v2502
    %v3311 = vpack.c.b16 %v2511, %v2503
    %v3312 = vpack.c.b16 %v2512, %v2504
    %v3313 = vpack.c.b16 %v2513, %v2505
    %v3314 = vpack.c.b16 %v2522, %v2514
    %v3315 = vpack.c.b16 %v2523, %v2515
    %v3316 = vpack.c.b16 %v2524, %v2516
    %v3317 = vpack.c.b16 %v2525, %v2517
    %v3318 = vpack.c.b16 %v2526, %v2518
    %v3319 = vpack.c.b16 %v2527, %v2519
    %v3320 = vpack.c.b16 %v2528, %v2520
    %v3321 = vpack.c.b16 %v2529, %v2521
    %v3322 = vpack.c.b16 %v2538, %v2530
    %v3323 = vpack.c.b16 %v2539, %v2531
    %v3324 = vpack.c.b16 %v2540, %v2532
    %v3325 = vpack.c.b16 %v2541, %v2533
    %v3326 = vpack.c.b16 %v2542, %v2534
    %v3327 = vpack.c.b16 %v2543, %v2535
    %v3328 = vpack.c.b16 %v2544, %v2536
    %v3329 = vpack.c.b16 %v2545, %v2537
    %v3330 = vpack.c.b16 %v2554, %v2546
    %v3331 = vpack.c.b16 %v2555, %v2547
    %v3332 = vpack.c.b16 %v2556, %v2548
    %v3333 = vpack.c.b16 %v2557, %v2549
    %v3334 = vpack.c.b16 %v2558, %v2550
    %v3335 = vpack.c.b16 %v2559, %v2551
    %v3336 = vpack.c.b16 %v2560, %v2552
    %v3337 = vpack.c.b16 %v2561, %v2553
    %v3338 = vpack.c.b16 %v2570, %v2562
    %v3339 = vpack.c.b16 %v2571, %v2563
    %v3340 = vpack.c.b16 %v2572, %v2564
    %v3341 = vpack.c.b16 %v2573, %v2565
    %v3342 = vpack.c.b16 %v2574, %v2566
    %v3343 = vpack.c.b16 %v2575, %v2567
    %v3344 = vpack.c.b16 %v2576, %v2568
    %v3345 = vpack.c.b16 %v2577, %v2569
    %v3346 = vpack.c.b16 %v2586, %v2578
    %v3347 = vpack.c.b16 %v2587, %v2579
    %v3348 = vpack.c.b16 %v2588, %v2580
    %v3349 = vpack.c.b16 %v2589, %v2581
    %v3350 = vpack.c.b16 %v2590, %v2582
    %v3351 = vpack.c.b16 %v2591, %v2583
    %v3352 = vpack.c.b16 %v2592, %v2584
    %v3353 = vpack.c.b16 %v2593, %v2585
    %v3354 = vpack.c.b16 %v2602, %v2594
    %v3355 = vpack.c.b16 %v2603, %v2595
    %v3356 = vpack.c.b16 %v2604, %v2596
    %v3357 = vpack.c.b16 %v2605, %v2597
    %v3358 = vpack.c.b16 %v2606, %v2598
    %v3359 = vpack.c.b16 %v2607, %v2599
    %v3360 = vpack.c.b16 %v2608, %v2600
    %v3361 = vpack.c.b16 %v2609, %v2601
    %v3362 = vpack.c.b16 %v2618, %v2610
    %v3363 = vpack.c.b16 %v2619, %v2611
    %v3364 = vpack.c.b16 %v2620, %v2612
    %v3365 = vpack.c.b16 %v2621, %v2613
    %v3366 = vpack.c.b16 %v2622, %v2614
    %v3367 = vpack.c.b16 %v2623, %v2615
    %v3368 = vpack.c.b16 %v2624, %v2616
    %v3369 = vpack.c.b16 %v2625, %v2617
    %v3370 = vpack.c.b16 %v2634, %v2626
    %v3371 = vpack.c.b16 %v2635, %v2627
    %v3372 = vpack.c.b16 %v2636, %v2628
    %v3373 = vpack.c.b16 %v2637, %v2629
    %v3374 = vpack.c.b16 %v2638, %v2630
    %v3375 = vpack.c.b16 %v2639, %v2631
    %v3376 = vpack.c.b16 %v2640, %v2632
    %v3377 = vpack.c.b16 %v2641, %v2633
    %v3378 = vpack.c.b16 %v2650, %v2642
    %v3379 = vpack.c.b16 %v2651, %v2643
    %v3380 = vpack.c.b16 %v2652, %v2644
    %v3381 = vpack.c.b16 %v2653, %v2645
    %v3382 = vpack.c.b16 %v2654, %v2646
    %v3383 = vpack.c.b16 %v2655, %v2647
    %v3384 = vpack.c.b16 %v2656, %v2648
    %v3385 = vpack.c.b16 %v2657, %v2649
    %v3386 = vpack.c.b16 %v2666, %v2658
    %v3387 = vpack.c.b16 %v2667, %v2659
    %v3388 = vpack.c.b16 %v2668, %v2660
    %v3389 = vpack.c.b16 %v2669, %v2661
    %v3390 = vpack.c.b16 %v2670, %v2662
    %v3391 = vpack.c.b16 %v2671, %v2663
    %v3392 = vpack.c.b16 %v2672, %v2664
    %v3393 = vpack.c.b16 %v2673, %v2665
    %v3394 = vpack.c.b16 %v2682, %v2674
    %v3395 = vpack.c.b16 %v2683, %v2675
    %v3396 = vpack.c.b16 %v2684, %v2676
    %v3397 = vpack.c.b16 %v2685, %v2677
    %v3398 = vpack.c.b16 %v2686, %v2678
    %v3399 = vpack.c.b16 %v2687, %v2679
    %v3400 = vpack.c.b16 %v2688, %v2680
    %v3401 = vpack.c.b16 %v2689, %v2681
    %v3402 = vpack.c.b16 %v2698, %v2690
    %v3403 = vpack.c.b16 %v2699, %v2691
    %v3404 = vpack.c.b16 %v2700, %v2692
    %v3405 = vpack.c.b16 %v2701, %v2693
    %v3406 = vpack.c.b16 %v2702, %v2694
    %v3407 = vpack.c.b16 %v2703, %v2695
    %v3408 = vpack.c.b16 %v2704, %v2696
    %v3409 = vpack.c.b16 %v2705, %v2697
    %v3410 = vpack.c.b16 %v2714, %v2706
    %v3411 = vpack.c.b16 %v2715, %v2707
    %v3412 = vpack.c.b16 %v2716, %v2708
    %v3413 = vpack.c.b16 %v2717, %v2709
    %v3414 = vpack.c.b16 %v2718, %v2710
    %v3415 = vpack.c.b16 %v2719, %v2711
    %v3416 = vpack.c.b16 %v2720, %v2712
    %v3417 = vpack.c.b16 %v2721, %v2713
    %v3418 = vpack.c.b16 %v2730, %v2722
    %v3419 = vpack.c.b16 %v2731, %v2723
    %v3420 = vpack.c.b16 %v2732, %v2724
    %v3421 = vpack.c.b16 %v2733, %v2725
    %v3422 = vpack.c.b16 %v2734, %v2726
    %v3423 = vpack.c.b16 %v2735, %v2727
    %v3424 = vpack.c.b16 %v2736, %v2728
    %v3425 = vpack.c.b16 %v2737, %v2729
    %v3426 = vpack.c.b16 %v2746, %v2738
    %v3427 = vpack.c.b16 %v2747, %v2739
    %v3428 = vpack.c.b16 %v2748, %v2740
    %v3429 = vpack.c.b16 %v2749, %v2741
    %v3430 = vpack.c.b16 %v2750, %v2742
    %v3431 = vpack.c.b16 %v2751, %v2743
    %v3432 = vpack.c.b16 %v2752, %v2744
    %v3433 = vpack.c.b16 %v2753, %v2745
    %v3434 = vpack.c.b16 %v2762, %v2754
    %v3435 = vpack.c.b16 %v2763, %v2755
    %v3436 = vpack.c.b16 %v2764, %v2756
    %v3437 = vpack.c.b16 %v2765, %v2757
    %v3438 = vpack.c.b16 %v2766, %v2758
    %v3439 = vpack.c.b16 %v2767, %v2759
    %v3440 = vpack.c.b16 %v2768, %v2760
    %v3441 = vpack.c.b16 %v2769, %v2761
    %v3442 = vpack.c.b16 %v2778, %v2770
    %v3443 = vpack.c.b16 %v2779, %v2771
    %v3444 = vpack.c.b16 %v2780, %v2772
    %v3445 = vpack.c.b16 %v2781, %v2773
    %v3446 = vpack.c.b16 %v2782, %v2774
    %v3447 = vpack.c.b16 %v2783, %v2775
    %v3448 = vpack.c.b16 %v2784, %v2776
    %v3449 = vpack.c.b16 %v2785, %v2777
    %v3450 = vpack.c.b16 %v2794, %v2786
    %v3451 = vpack.c.b16 %v2795, %v2787
    %v3452 = vpack.c.b16 %v2796, %v2788
    %v3453 = vpack.c.b16 %v2797, %v2789
    %v3454 = vpack.c.b16 %v2798, %v2790
    %v3455 = vpack.c.b16 %v2799, %v2791
    %v3456 = vpack.c.b16 %v2800, %v2792
    %v3457 = vpack.c.b16 %v2801, %v2793
    %v3458 = vpack.c.b16 %v2810, %v2802
    %v3459 = vpack.c.b16 %v2811, %v2803
    %v3460 = vpack.c.b16 %v2812, %v2804
    %v3461 = vpack.c.b16 %v2813, %v2805
    %v3462 = vpack.c.b16 %v2814, %v2806
    %v3463 = vpack.c.b16 %v2815, %v2807
    %v3464 = vpack.c.b16 %v2816, %v2808
    %v3465 = vpack.c.b16 %v2817, %v2809
    %v3466 = vpack.c.b16 %v2826, %v2818
    %v3467 = vpack.c.b16 %v2827, %v2819
    %v3468 = vpack.c.b16 %v2828, %v2820
    %v3469 = vpack.c.b16 %v2829, %v2821
    %v3470 = vpack.c.b16 %v2830, %v2822
    %v3471 = vpack.c.b16 %v2831, %v2823
    %v3472 = vpack.c.b16 %v2832, %v2824
    %v3473 = vpack.c.b16 %v2833, %v2825
    %4114 = vmatpush.bf16.msra.mxu0 %v2890
    %4115 = vmatpush.bf16.msra.mxu0 %v2882
    %4116 = vmatpush.bf16.msra.mxu0 %v2874
    %4117 = vmatpush.bf16.msra.mxu0 %v2866
    %4118 = vmatpush.bf16.msra.mxu0 %v2858
    %4119 = vmatpush.bf16.msra.mxu0 %v2850
    %4120 = vmatpush.bf16.msra.mxu0 %v2842
    %4121 = vmatpush.bf16.msra.mxu0 %v2834
    %4122 = vmatmul.bf16.gmra.mxu0 %v874
    %v4123 = vpop.f32.mrf.mxu0
    %v4124 = vadd.f32 %v798, %v4123
    %v4125 = vpop.f32.mrf.mxu0
    %v4126 = vadd.f32 %v798, %v4125
    %4127 = vmatmul.bf16.gmra.mxu0 %v884
    %v4128 = vpop.f32.mrf.mxu0
    %v4129 = vadd.f32 %v798, %v4128
    %v4130 = vpop.f32.mrf.mxu0
    %v4131 = vadd.f32 %v798, %v4130
    %4132 = vdwg.mxu0
    %4133 = vmatpush.bf16.msra.mxu0 %v2954
    %4134 = vmatpush.bf16.msra.mxu0 %v2946
    %4135 = vmatpush.bf16.msra.mxu0 %v2938
    %4136 = vmatpush.bf16.msra.mxu0 %v2930
    %4137 = vmatpush.bf16.msra.mxu0 %v2922
    %4138 = vmatpush.bf16.msra.mxu0 %v2914
    %4139 = vmatpush.bf16.msra.mxu0 %v2906
    %4140 = vmatpush.bf16.msra.mxu0 %v2898
    %4141 = vmatmul.bf16.gmra.mxu0 %v875
    %v4142 = vpop.f32.mrf.mxu0
    %v4143 = vadd.f32 %v4124, %v4142
    %v4144 = vpop.f32.mrf.mxu0
    %v4145 = vadd.f32 %v4126, %v4144
    %4146 = vmatmul.bf16.gmra.mxu0 %v885
    %v4147 = vpop.f32.mrf.mxu0
    %v4148 = vadd.f32 %v4129, %v4147
    %v4149 = vpop.f32.mrf.mxu0
    %v4150 = vadd.f32 %v4131, %v4149
    %4151 = vdwg.mxu0
    %4152 = vmatpush.bf16.msra.mxu0 %v3018
    %4153 = vmatpush.bf16.msra.mxu0 %v3010
    %4154 = vmatpush.bf16.msra.mxu0 %v3002
    %4155 = vmatpush.bf16.msra.mxu0 %v2994
    %4156 = vmatpush.bf16.msra.mxu0 %v2986
    %4157 = vmatpush.bf16.msra.mxu0 %v2978
    %4158 = vmatpush.bf16.msra.mxu0 %v2970
    %4159 = vmatpush.bf16.msra.mxu0 %v2962
    %4160 = vmatmul.bf16.gmra.mxu0 %v876
    %v4161 = vpop.f32.mrf.mxu0
    %v4162 = vadd.f32 %v4143, %v4161
    %v4163 = vpop.f32.mrf.mxu0
    %v4164 = vadd.f32 %v4145, %v4163
    %4165 = vmatmul.bf16.gmra.mxu0 %v886
    %v4166 = vpop.f32.mrf.mxu0
    %v4167 = vadd.f32 %v4148, %v4166
    %v4168 = vpop.f32.mrf.mxu0
    %v4169 = vadd.f32 %v4150, %v4168
    %4170 = vdwg.mxu0
    %4171 = vmatpush.bf16.msra.mxu0 %v3082
    %4172 = vmatpush.bf16.msra.mxu0 %v3074
    %4173 = vmatpush.bf16.msra.mxu0 %v3066
    %4174 = vmatpush.bf16.msra.mxu0 %v3058
    %4175 = vmatpush.bf16.msra.mxu0 %v3050
    %4176 = vmatpush.bf16.msra.mxu0 %v3042
    %4177 = vmatpush.bf16.msra.mxu0 %v3034
    %4178 = vmatpush.bf16.msra.mxu0 %v3026
    %4179 = vmatmul.bf16.gmra.mxu0 %v877
    %v4180 = vpop.f32.mrf.mxu0
    %v4181 = vadd.f32 %v4162, %v4180
    %v4182 = vpop.f32.mrf.mxu0
    %v4183 = vadd.f32 %v4164, %v4182
    %4184 = vmatmul.bf16.gmra.mxu0 %v887
    %v4185 = vpop.f32.mrf.mxu0
    %v4186 = vadd.f32 %v4167, %v4185
    %v4187 = vpop.f32.mrf.mxu0
    %v4188 = vadd.f32 %v4169, %v4187
    %4189 = vdwg.mxu0
    %4190 = vmatpush.bf16.msra.mxu0 %v3146
    %4191 = vmatpush.bf16.msra.mxu0 %v3138
    %4192 = vmatpush.bf16.msra.mxu0 %v3130
    %4193 = vmatpush.bf16.msra.mxu0 %v3122
    %4194 = vmatpush.bf16.msra.mxu0 %v3114
    %4195 = vmatpush.bf16.msra.mxu0 %v3106
    %4196 = vmatpush.bf16.msra.mxu0 %v3098
    %4197 = vmatpush.bf16.msra.mxu0 %v3090
    %4198 = vmatmul.bf16.gmra.mxu0 %v878
    %v4199 = vpop.f32.mrf.mxu0
    %v4200 = vadd.f32 %v4181, %v4199
    %v4201 = vpop.f32.mrf.mxu0
    %v4202 = vadd.f32 %v4183, %v4201
    %4203 = vmatmul.bf16.gmra.mxu0 %v888
    %v4204 = vpop.f32.mrf.mxu0
    %v4205 = vadd.f32 %v4186, %v4204
    %v4206 = vpop.f32.mrf.mxu0
    %v4207 = vadd.f32 %v4188, %v4206
    %4208 = vdwg.mxu0
    %4209 = vmatpush.bf16.msra.mxu0 %v3210
    %4210 = vmatpush.bf16.msra.mxu0 %v3202
    %4211 = vmatpush.bf16.msra.mxu0 %v3194
    %4212 = vmatpush.bf16.msra.mxu0 %v3186
    %4213 = vmatpush.bf16.msra.mxu0 %v3178
    %4214 = vmatpush.bf16.msra.mxu0 %v3170
    %4215 = vmatpush.bf16.msra.mxu0 %v3162
    %4216 = vmatpush.bf16.msra.mxu0 %v3154
    %4217 = vmatmul.bf16.gmra.mxu0 %v879
    %v4218 = vpop.f32.mrf.mxu0
    %v4219 = vadd.f32 %v4200, %v4218
    %v4220 = vpop.f32.mrf.mxu0
    %v4221 = vadd.f32 %v4202, %v4220
    %4222 = vmatmul.bf16.gmra.mxu0 %v889
    %v4223 = vpop.f32.mrf.mxu0
    %v4224 = vadd.f32 %v4205, %v4223
    %v4225 = vpop.f32.mrf.mxu0
    %v4226 = vadd.f32 %v4207, %v4225
    %4227 = vdwg.mxu0
    %4228 = vmatpush.bf16.msra.mxu0 %v3274
    %4229 = vmatpush.bf16.msra.mxu0 %v3266
    %4230 = vmatpush.bf16.msra.mxu0 %v3258
    %4231 = vmatpush.bf16.msra.mxu0 %v3250
    %4232 = vmatpush.bf16.msra.mxu0 %v3242
    %4233 = vmatpush.bf16.msra.mxu0 %v3234
    %4234 = vmatpush.bf16.msra.mxu0 %v3226
    %4235 = vmatpush.bf16.msra.mxu0 %v3218
    %4236 = vmatmul.bf16.gmra.mxu0 %v880
    %v4237 = vpop.f32.mrf.mxu0
    %v4238 = vadd.f32 %v4219, %v4237
    %v4239 = vpop.f32.mrf.mxu0
    %v4240 = vadd.f32 %v4221, %v4239
    %4241 = vmatmul.bf16.gmra.mxu0 %v890
    %v4242 = vpop.f32.mrf.mxu0
    %v4243 = vadd.f32 %v4224, %v4242
    %v4244 = vpop.f32.mrf.mxu0
    %v4245 = vadd.f32 %v4226, %v4244
    %4246 = vdwg.mxu0
    %4247 = vmatpush.bf16.msra.mxu0 %v3338
    %4248 = vmatpush.bf16.msra.mxu0 %v3330
    %4249 = vmatpush.bf16.msra.mxu0 %v3322
    %4250 = vmatpush.bf16.msra.mxu0 %v3314
    %4251 = vmatpush.bf16.msra.mxu0 %v3306
    %4252 = vmatpush.bf16.msra.mxu0 %v3298
    %4253 = vmatpush.bf16.msra.mxu0 %v3290
    %4254 = vmatpush.bf16.msra.mxu0 %v3282
    %4255 = vmatmul.bf16.gmra.mxu0 %v881
    %v4256 = vpop.f32.mrf.mxu0
    %v4257 = vadd.f32 %v4238, %v4256
    %v4258 = vpop.f32.mrf.mxu0
    %v4259 = vadd.f32 %v4240, %v4258
    %4260 = vmatmul.bf16.gmra.mxu0 %v891
    %v4261 = vpop.f32.mrf.mxu0
    %v4262 = vadd.f32 %v4243, %v4261
    %v4263 = vpop.f32.mrf.mxu0
    %v4264 = vadd.f32 %v4245, %v4263
    %4265 = vdwg.mxu0
    %4266 = vmatpush.bf16.msra.mxu0 %v3402
    %4267 = vmatpush.bf16.msra.mxu0 %v3394
    %4268 = vmatpush.bf16.msra.mxu0 %v3386
    %4269 = vmatpush.bf16.msra.mxu0 %v3378
    %4270 = vmatpush.bf16.msra.mxu0 %v3370
    %4271 = vmatpush.bf16.msra.mxu0 %v3362
    %4272 = vmatpush.bf16.msra.mxu0 %v3354
    %4273 = vmatpush.bf16.msra.mxu0 %v3346
    %4274 = vmatmul.bf16.gmra.mxu0 %v882
    %v4275 = vpop.f32.mrf.mxu0
    %v4276 = vadd.f32 %v4257, %v4275
    %v4277 = vpop.f32.mrf.mxu0
    %v4278 = vadd.f32 %v4259, %v4277
    %4279 = vmatmul.bf16.gmra.mxu0 %v892
    %v4280 = vpop.f32.mrf.mxu0
    %v4281 = vadd.f32 %v4262, %v4280
    %v4282 = vpop.f32.mrf.mxu0
    %v4283 = vadd.f32 %v4264, %v4282
    %4284 = vdwg.mxu0
    %4285 = vmatpush.bf16.msra.mxu0 %v3466
    %4286 = vmatpush.bf16.msra.mxu0 %v3458
    %4287 = vmatpush.bf16.msra.mxu0 %v3450
    %4288 = vmatpush.bf16.msra.mxu0 %v3442
    %4289 = vmatpush.bf16.msra.mxu0 %v3434
    %4290 = vmatpush.bf16.msra.mxu0 %v3426
    %4291 = vmatpush.bf16.msra.mxu0 %v3418
    %4292 = vmatpush.bf16.msra.mxu0 %v3410
    %4293 = vmatmul.bf16.gmra.mxu0 %v883
    %v4294 = vpop.f32.mrf.mxu0
    %v4295 = vadd.f32 %v4276, %v4294
    %v4296 = vpop.f32.mrf.mxu0
    %v4297 = vadd.f32 %v4278, %v4296
    %4298 = vmatmul.bf16.gmra.mxu0 %v893
    %v4299 = vpop.f32.mrf.mxu0
    %v4300 = vadd.f32 %v4281, %v4299
    %v4301 = vpop.f32.mrf.mxu0
    %v4302 = vadd.f32 %v4283, %v4301
    %4303 = vdwg.mxu0
    %4304 = vmatpush.bf16.msra.mxu0 %v2891
    %4305 = vmatpush.bf16.msra.mxu0 %v2883
    %4306 = vmatpush.bf16.msra.mxu0 %v2875
    %4307 = vmatpush.bf16.msra.mxu0 %v2867
    %4308 = vmatpush.bf16.msra.mxu0 %v2859
    %4309 = vmatpush.bf16.msra.mxu0 %v2851
    %4310 = vmatpush.bf16.msra.mxu0 %v2843
    %4311 = vmatpush.bf16.msra.mxu0 %v2835
    %4312 = vmatmul.bf16.gmra.mxu0 %v874
    %v4313 = vpop.f32.mrf.mxu0
    %v4314 = vadd.f32 %v799, %v4313
    %v4315 = vpop.f32.mrf.mxu0
    %v4316 = vadd.f32 %v799, %v4315
    %4317 = vmatmul.bf16.gmra.mxu0 %v884
    %v4318 = vpop.f32.mrf.mxu0
    %v4319 = vadd.f32 %v799, %v4318
    %v4320 = vpop.f32.mrf.mxu0
    %v4321 = vadd.f32 %v799, %v4320
    %4322 = vdwg.mxu0
    %4323 = vmatpush.bf16.msra.mxu0 %v2955
    %4324 = vmatpush.bf16.msra.mxu0 %v2947
    %4325 = vmatpush.bf16.msra.mxu0 %v2939
    %4326 = vmatpush.bf16.msra.mxu0 %v2931
    %4327 = vmatpush.bf16.msra.mxu0 %v2923
    %4328 = vmatpush.bf16.msra.mxu0 %v2915
    %4329 = vmatpush.bf16.msra.mxu0 %v2907
    %4330 = vmatpush.bf16.msra.mxu0 %v2899
    %4331 = vmatmul.bf16.gmra.mxu0 %v875
    %v4332 = vpop.f32.mrf.mxu0
    %v4333 = vadd.f32 %v4314, %v4332
    %v4334 = vpop.f32.mrf.mxu0
    %v4335 = vadd.f32 %v4316, %v4334
    %4336 = vmatmul.bf16.gmra.mxu0 %v885
    %v4337 = vpop.f32.mrf.mxu0
    %v4338 = vadd.f32 %v4319, %v4337
    %v4339 = vpop.f32.mrf.mxu0
    %v4340 = vadd.f32 %v4321, %v4339
    %4341 = vdwg.mxu0
    %4342 = vmatpush.bf16.msra.mxu0 %v3019
    %4343 = vmatpush.bf16.msra.mxu0 %v3011
    %4344 = vmatpush.bf16.msra.mxu0 %v3003
    %4345 = vmatpush.bf16.msra.mxu0 %v2995
    %4346 = vmatpush.bf16.msra.mxu0 %v2987
    %4347 = vmatpush.bf16.msra.mxu0 %v2979
    %4348 = vmatpush.bf16.msra.mxu0 %v2971
    %4349 = vmatpush.bf16.msra.mxu0 %v2963
    %4350 = vmatmul.bf16.gmra.mxu0 %v876
    %v4351 = vpop.f32.mrf.mxu0
    %v4352 = vadd.f32 %v4333, %v4351
    %v4353 = vpop.f32.mrf.mxu0
    %v4354 = vadd.f32 %v4335, %v4353
    %4355 = vmatmul.bf16.gmra.mxu0 %v886
    %v4356 = vpop.f32.mrf.mxu0
    %v4357 = vadd.f32 %v4338, %v4356
    %v4358 = vpop.f32.mrf.mxu0
    %v4359 = vadd.f32 %v4340, %v4358
    %4360 = vdwg.mxu0
    %4361 = vmatpush.bf16.msra.mxu0 %v3083
    %4362 = vmatpush.bf16.msra.mxu0 %v3075
    %4363 = vmatpush.bf16.msra.mxu0 %v3067
    %4364 = vmatpush.bf16.msra.mxu0 %v3059
    %4365 = vmatpush.bf16.msra.mxu0 %v3051
    %4366 = vmatpush.bf16.msra.mxu0 %v3043
    %4367 = vmatpush.bf16.msra.mxu0 %v3035
    %4368 = vmatpush.bf16.msra.mxu0 %v3027
    %4369 = vmatmul.bf16.gmra.mxu0 %v877
    %v4370 = vpop.f32.mrf.mxu0
    %v4371 = vadd.f32 %v4352, %v4370
    %v4372 = vpop.f32.mrf.mxu0
    %v4373 = vadd.f32 %v4354, %v4372
    %4374 = vmatmul.bf16.gmra.mxu0 %v887
    %v4375 = vpop.f32.mrf.mxu0
    %v4376 = vadd.f32 %v4357, %v4375
    %v4377 = vpop.f32.mrf.mxu0
    %v4378 = vadd.f32 %v4359, %v4377
    %4379 = vdwg.mxu0
    %4380 = vmatpush.bf16.msra.mxu0 %v3147
    %4381 = vmatpush.bf16.msra.mxu0 %v3139
    %4382 = vmatpush.bf16.msra.mxu0 %v3131
    %4383 = vmatpush.bf16.msra.mxu0 %v3123
    %4384 = vmatpush.bf16.msra.mxu0 %v3115
    %4385 = vmatpush.bf16.msra.mxu0 %v3107
    %4386 = vmatpush.bf16.msra.mxu0 %v3099
    %4387 = vmatpush.bf16.msra.mxu0 %v3091
    %4388 = vmatmul.bf16.gmra.mxu0 %v878
    %v4389 = vpop.f32.mrf.mxu0
    %v4390 = vadd.f32 %v4371, %v4389
    %v4391 = vpop.f32.mrf.mxu0
    %v4392 = vadd.f32 %v4373, %v4391
    %4393 = vmatmul.bf16.gmra.mxu0 %v888
    %v4394 = vpop.f32.mrf.mxu0
    %v4395 = vadd.f32 %v4376, %v4394
    %v4396 = vpop.f32.mrf.mxu0
    %v4397 = vadd.f32 %v4378, %v4396
    %4398 = vdwg.mxu0
    %4399 = vmatpush.bf16.msra.mxu0 %v3211
    %4400 = vmatpush.bf16.msra.mxu0 %v3203
    %4401 = vmatpush.bf16.msra.mxu0 %v3195
    %4402 = vmatpush.bf16.msra.mxu0 %v3187
    %4403 = vmatpush.bf16.msra.mxu0 %v3179
    %4404 = vmatpush.bf16.msra.mxu0 %v3171
    %4405 = vmatpush.bf16.msra.mxu0 %v3163
    %4406 = vmatpush.bf16.msra.mxu0 %v3155
    %4407 = vmatmul.bf16.gmra.mxu0 %v879
    %v4408 = vpop.f32.mrf.mxu0
    %v4409 = vadd.f32 %v4390, %v4408
    %v4410 = vpop.f32.mrf.mxu0
    %v4411 = vadd.f32 %v4392, %v4410
    %4412 = vmatmul.bf16.gmra.mxu0 %v889
    %v4413 = vpop.f32.mrf.mxu0
    %v4414 = vadd.f32 %v4395, %v4413
    %v4415 = vpop.f32.mrf.mxu0
    %v4416 = vadd.f32 %v4397, %v4415
    %4417 = vdwg.mxu0
    %4418 = vmatpush.bf16.msra.mxu0 %v3275
    %4419 = vmatpush.bf16.msra.mxu0 %v3267
    %4420 = vmatpush.bf16.msra.mxu0 %v3259
    %4421 = vmatpush.bf16.msra.mxu0 %v3251
    %4422 = vmatpush.bf16.msra.mxu0 %v3243
    %4423 = vmatpush.bf16.msra.mxu0 %v3235
    %4424 = vmatpush.bf16.msra.mxu0 %v3227
    %4425 = vmatpush.bf16.msra.mxu0 %v3219
    %4426 = vmatmul.bf16.gmra.mxu0 %v880
    %v4427 = vpop.f32.mrf.mxu0
    %v4428 = vadd.f32 %v4409, %v4427
    %v4429 = vpop.f32.mrf.mxu0
    %v4430 = vadd.f32 %v4411, %v4429
    %4431 = vmatmul.bf16.gmra.mxu0 %v890
    %v4432 = vpop.f32.mrf.mxu0
    %v4433 = vadd.f32 %v4414, %v4432
    %v4434 = vpop.f32.mrf.mxu0
    %v4435 = vadd.f32 %v4416, %v4434
    %4436 = vdwg.mxu0
    %4437 = vmatpush.bf16.msra.mxu0 %v3339
    %4438 = vmatpush.bf16.msra.mxu0 %v3331
    %4439 = vmatpush.bf16.msra.mxu0 %v3323
    %4440 = vmatpush.bf16.msra.mxu0 %v3315
    %4441 = vmatpush.bf16.msra.mxu0 %v3307
    %4442 = vmatpush.bf16.msra.mxu0 %v3299
    %4443 = vmatpush.bf16.msra.mxu0 %v3291
    %4444 = vmatpush.bf16.msra.mxu0 %v3283
    %4445 = vmatmul.bf16.gmra.mxu0 %v881
    %v4446 = vpop.f32.mrf.mxu0
    %v4447 = vadd.f32 %v4428, %v4446
    %v4448 = vpop.f32.mrf.mxu0
    %v4449 = vadd.f32 %v4430, %v4448
    %4450 = vmatmul.bf16.gmra.mxu0 %v891
    %v4451 = vpop.f32.mrf.mxu0
    %v4452 = vadd.f32 %v4433, %v4451
    %v4453 = vpop.f32.mrf.mxu0
    %v4454 = vadd.f32 %v4435, %v4453
    %4455 = vdwg.mxu0
    %4456 = vmatpush.bf16.msra.mxu0 %v3403
    %4457 = vmatpush.bf16.msra.mxu0 %v3395
    %4458 = vmatpush.bf16.msra.mxu0 %v3387
    %4459 = vmatpush.bf16.msra.mxu0 %v3379
    %4460 = vmatpush.bf16.msra.mxu0 %v3371
    %4461 = vmatpush.bf16.msra.mxu0 %v3363
    %4462 = vmatpush.bf16.msra.mxu0 %v3355
    %4463 = vmatpush.bf16.msra.mxu0 %v3347
    %4464 = vmatmul.bf16.gmra.mxu0 %v882
    %v4465 = vpop.f32.mrf.mxu0
    %v4466 = vadd.f32 %v4447, %v4465
    %v4467 = vpop.f32.mrf.mxu0
    %v4468 = vadd.f32 %v4449, %v4467
    %4469 = vmatmul.bf16.gmra.mxu0 %v892
    %v4470 = vpop.f32.mrf.mxu0
    %v4471 = vadd.f32 %v4452, %v4470
    %v4472 = vpop.f32.mrf.mxu0
    %v4473 = vadd.f32 %v4454, %v4472
    %4474 = vdwg.mxu0
    %4475 = vmatpush.bf16.msra.mxu0 %v3467
    %4476 = vmatpush.bf16.msra.mxu0 %v3459
    %4477 = vmatpush.bf16.msra.mxu0 %v3451
    %4478 = vmatpush.bf16.msra.mxu0 %v3443
    %4479 = vmatpush.bf16.msra.mxu0 %v3435
    %4480 = vmatpush.bf16.msra.mxu0 %v3427
    %4481 = vmatpush.bf16.msra.mxu0 %v3419
    %4482 = vmatpush.bf16.msra.mxu0 %v3411
    %4483 = vmatmul.bf16.gmra.mxu0 %v883
    %v4484 = vpop.f32.mrf.mxu0
    %v4485 = vadd.f32 %v4466, %v4484
    %v4486 = vpop.f32.mrf.mxu0
    %v4487 = vadd.f32 %v4468, %v4486
    %4488 = vmatmul.bf16.gmra.mxu0 %v893
    %v4489 = vpop.f32.mrf.mxu0
    %v4490 = vadd.f32 %v4471, %v4489
    %v4491 = vpop.f32.mrf.mxu0
    %v4492 = vadd.f32 %v4473, %v4491
    %4493 = vdwg.mxu0
    %4494 = vmatpush.bf16.msra.mxu0 %v2892
    %4495 = vmatpush.bf16.msra.mxu0 %v2884
    %4496 = vmatpush.bf16.msra.mxu0 %v2876
    %4497 = vmatpush.bf16.msra.mxu0 %v2868
    %4498 = vmatpush.bf16.msra.mxu0 %v2860
    %4499 = vmatpush.bf16.msra.mxu0 %v2852
    %4500 = vmatpush.bf16.msra.mxu0 %v2844
    %4501 = vmatpush.bf16.msra.mxu0 %v2836
    %4502 = vmatmul.bf16.gmra.mxu0 %v874
    %v4503 = vpop.f32.mrf.mxu0
    %v4504 = vadd.f32 %v800, %v4503
    %v4505 = vpop.f32.mrf.mxu0
    %v4506 = vadd.f32 %v800, %v4505
    %4507 = vmatmul.bf16.gmra.mxu0 %v884
    %v4508 = vpop.f32.mrf.mxu0
    %v4509 = vadd.f32 %v800, %v4508
    %v4510 = vpop.f32.mrf.mxu0
    %v4511 = vadd.f32 %v800, %v4510
    %4512 = vdwg.mxu0
    %4513 = vmatpush.bf16.msra.mxu0 %v2956
    %4514 = vmatpush.bf16.msra.mxu0 %v2948
    %4515 = vmatpush.bf16.msra.mxu0 %v2940
    %4516 = vmatpush.bf16.msra.mxu0 %v2932
    %4517 = vmatpush.bf16.msra.mxu0 %v2924
    %4518 = vmatpush.bf16.msra.mxu0 %v2916
    %4519 = vmatpush.bf16.msra.mxu0 %v2908
    %4520 = vmatpush.bf16.msra.mxu0 %v2900
    %4521 = vmatmul.bf16.gmra.mxu0 %v875
    %v4522 = vpop.f32.mrf.mxu0
    %v4523 = vadd.f32 %v4504, %v4522
    %v4524 = vpop.f32.mrf.mxu0
    %v4525 = vadd.f32 %v4506, %v4524
    %4526 = vmatmul.bf16.gmra.mxu0 %v885
    %v4527 = vpop.f32.mrf.mxu0
    %v4528 = vadd.f32 %v4509, %v4527
    %v4529 = vpop.f32.mrf.mxu0
    %v4530 = vadd.f32 %v4511, %v4529
    %4531 = vdwg.mxu0
    %4532 = vmatpush.bf16.msra.mxu0 %v3020
    %4533 = vmatpush.bf16.msra.mxu0 %v3012
    %4534 = vmatpush.bf16.msra.mxu0 %v3004
    %4535 = vmatpush.bf16.msra.mxu0 %v2996
    %4536 = vmatpush.bf16.msra.mxu0 %v2988
    %4537 = vmatpush.bf16.msra.mxu0 %v2980
    %4538 = vmatpush.bf16.msra.mxu0 %v2972
    %4539 = vmatpush.bf16.msra.mxu0 %v2964
    %4540 = vmatmul.bf16.gmra.mxu0 %v876
    %v4541 = vpop.f32.mrf.mxu0
    %v4542 = vadd.f32 %v4523, %v4541
    %v4543 = vpop.f32.mrf.mxu0
    %v4544 = vadd.f32 %v4525, %v4543
    %4545 = vmatmul.bf16.gmra.mxu0 %v886
    %v4546 = vpop.f32.mrf.mxu0
    %v4547 = vadd.f32 %v4528, %v4546
    %v4548 = vpop.f32.mrf.mxu0
    %v4549 = vadd.f32 %v4530, %v4548
    %4550 = vdwg.mxu0
    %4551 = vmatpush.bf16.msra.mxu0 %v3084
    %4552 = vmatpush.bf16.msra.mxu0 %v3076
    %4553 = vmatpush.bf16.msra.mxu0 %v3068
    %4554 = vmatpush.bf16.msra.mxu0 %v3060
    %4555 = vmatpush.bf16.msra.mxu0 %v3052
    %4556 = vmatpush.bf16.msra.mxu0 %v3044
    %4557 = vmatpush.bf16.msra.mxu0 %v3036
    %4558 = vmatpush.bf16.msra.mxu0 %v3028
    %4559 = vmatmul.bf16.gmra.mxu0 %v877
    %v4560 = vpop.f32.mrf.mxu0
    %v4561 = vadd.f32 %v4542, %v4560
    %v4562 = vpop.f32.mrf.mxu0
    %v4563 = vadd.f32 %v4544, %v4562
    %4564 = vmatmul.bf16.gmra.mxu0 %v887
    %v4565 = vpop.f32.mrf.mxu0
    %v4566 = vadd.f32 %v4547, %v4565
    %v4567 = vpop.f32.mrf.mxu0
    %v4568 = vadd.f32 %v4549, %v4567
    %4569 = vdwg.mxu0
    %4570 = vmatpush.bf16.msra.mxu0 %v3148
    %4571 = vmatpush.bf16.msra.mxu0 %v3140
    %4572 = vmatpush.bf16.msra.mxu0 %v3132
    %4573 = vmatpush.bf16.msra.mxu0 %v3124
    %4574 = vmatpush.bf16.msra.mxu0 %v3116
    %4575 = vmatpush.bf16.msra.mxu0 %v3108
    %4576 = vmatpush.bf16.msra.mxu0 %v3100
    %4577 = vmatpush.bf16.msra.mxu0 %v3092
    %4578 = vmatmul.bf16.gmra.mxu0 %v878
    %v4579 = vpop.f32.mrf.mxu0
    %v4580 = vadd.f32 %v4561, %v4579
    %v4581 = vpop.f32.mrf.mxu0
    %v4582 = vadd.f32 %v4563, %v4581
    %4583 = vmatmul.bf16.gmra.mxu0 %v888
    %v4584 = vpop.f32.mrf.mxu0
    %v4585 = vadd.f32 %v4566, %v4584
    %v4586 = vpop.f32.mrf.mxu0
    %v4587 = vadd.f32 %v4568, %v4586
    %4588 = vdwg.mxu0
    %4589 = vmatpush.bf16.msra.mxu0 %v3212
    %4590 = vmatpush.bf16.msra.mxu0 %v3204
    %4591 = vmatpush.bf16.msra.mxu0 %v3196
    %4592 = vmatpush.bf16.msra.mxu0 %v3188
    %4593 = vmatpush.bf16.msra.mxu0 %v3180
    %4594 = vmatpush.bf16.msra.mxu0 %v3172
    %4595 = vmatpush.bf16.msra.mxu0 %v3164
    %4596 = vmatpush.bf16.msra.mxu0 %v3156
    %4597 = vmatmul.bf16.gmra.mxu0 %v879
    %v4598 = vpop.f32.mrf.mxu0
    %v4599 = vadd.f32 %v4580, %v4598
    %v4600 = vpop.f32.mrf.mxu0
    %v4601 = vadd.f32 %v4582, %v4600
    %4602 = vmatmul.bf16.gmra.mxu0 %v889
    %v4603 = vpop.f32.mrf.mxu0
    %v4604 = vadd.f32 %v4585, %v4603
    %v4605 = vpop.f32.mrf.mxu0
    %v4606 = vadd.f32 %v4587, %v4605
    %4607 = vdwg.mxu0
    %4608 = vmatpush.bf16.msra.mxu0 %v3276
    %4609 = vmatpush.bf16.msra.mxu0 %v3268
    %4610 = vmatpush.bf16.msra.mxu0 %v3260
    %4611 = vmatpush.bf16.msra.mxu0 %v3252
    %4612 = vmatpush.bf16.msra.mxu0 %v3244
    %4613 = vmatpush.bf16.msra.mxu0 %v3236
    %4614 = vmatpush.bf16.msra.mxu0 %v3228
    %4615 = vmatpush.bf16.msra.mxu0 %v3220
    %4616 = vmatmul.bf16.gmra.mxu0 %v880
    %v4617 = vpop.f32.mrf.mxu0
    %v4618 = vadd.f32 %v4599, %v4617
    %v4619 = vpop.f32.mrf.mxu0
    %v4620 = vadd.f32 %v4601, %v4619
    %4621 = vmatmul.bf16.gmra.mxu0 %v890
    %v4622 = vpop.f32.mrf.mxu0
    %v4623 = vadd.f32 %v4604, %v4622
    %v4624 = vpop.f32.mrf.mxu0
    %v4625 = vadd.f32 %v4606, %v4624
    %4626 = vdwg.mxu0
    %4627 = vmatpush.bf16.msra.mxu0 %v3340
    %4628 = vmatpush.bf16.msra.mxu0 %v3332
    %4629 = vmatpush.bf16.msra.mxu0 %v3324
    %4630 = vmatpush.bf16.msra.mxu0 %v3316
    %4631 = vmatpush.bf16.msra.mxu0 %v3308
    %4632 = vmatpush.bf16.msra.mxu0 %v3300
    %4633 = vmatpush.bf16.msra.mxu0 %v3292
    %4634 = vmatpush.bf16.msra.mxu0 %v3284
    %4635 = vmatmul.bf16.gmra.mxu0 %v881
    %v4636 = vpop.f32.mrf.mxu0
    %v4637 = vadd.f32 %v4618, %v4636
    %v4638 = vpop.f32.mrf.mxu0
    %v4639 = vadd.f32 %v4620, %v4638
    %4640 = vmatmul.bf16.gmra.mxu0 %v891
    %v4641 = vpop.f32.mrf.mxu0
    %v4642 = vadd.f32 %v4623, %v4641
    %v4643 = vpop.f32.mrf.mxu0
    %v4644 = vadd.f32 %v4625, %v4643
    %4645 = vdwg.mxu0
    %4646 = vmatpush.bf16.msra.mxu0 %v3404
    %4647 = vmatpush.bf16.msra.mxu0 %v3396
    %4648 = vmatpush.bf16.msra.mxu0 %v3388
    %4649 = vmatpush.bf16.msra.mxu0 %v3380
    %4650 = vmatpush.bf16.msra.mxu0 %v3372
    %4651 = vmatpush.bf16.msra.mxu0 %v3364
    %4652 = vmatpush.bf16.msra.mxu0 %v3356
    %4653 = vmatpush.bf16.msra.mxu0 %v3348
    %4654 = vmatmul.bf16.gmra.mxu0 %v882
    %v4655 = vpop.f32.mrf.mxu0
    %v4656 = vadd.f32 %v4637, %v4655
    %v4657 = vpop.f32.mrf.mxu0
    %v4658 = vadd.f32 %v4639, %v4657
    %4659 = vmatmul.bf16.gmra.mxu0 %v892
    %v4660 = vpop.f32.mrf.mxu0
    %v4661 = vadd.f32 %v4642, %v4660
    %v4662 = vpop.f32.mrf.mxu0
    %v4663 = vadd.f32 %v4644, %v4662
    %4664 = vdwg.mxu0
    %4665 = vmatpush.bf16.msra.mxu0 %v3468
    %4666 = vmatpush.bf16.msra.mxu0 %v3460
    %4667 = vmatpush.bf16.msra.mxu0 %v3452
    %4668 = vmatpush.bf16.msra.mxu0 %v3444
    %4669 = vmatpush.bf16.msra.mxu0 %v3436
    %4670 = vmatpush.bf16.msra.mxu0 %v3428
    %4671 = vmatpush.bf16.msra.mxu0 %v3420
    %4672 = vmatpush.bf16.msra.mxu0 %v3412
    %4673 = vmatmul.bf16.gmra.mxu0 %v883
    %v4674 = vpop.f32.mrf.mxu0
    %v4675 = vadd.f32 %v4656, %v4674
    %v4676 = vpop.f32.mrf.mxu0
    %v4677 = vadd.f32 %v4658, %v4676
    %4678 = vmatmul.bf16.gmra.mxu0 %v893
    %v4679 = vpop.f32.mrf.mxu0
    %v4680 = vadd.f32 %v4661, %v4679
    %v4681 = vpop.f32.mrf.mxu0
    %v4682 = vadd.f32 %v4663, %v4681
    %4683 = vdwg.mxu0
    %4684 = vmatpush.bf16.msra.mxu0 %v2893
    %4685 = vmatpush.bf16.msra.mxu0 %v2885
    %4686 = vmatpush.bf16.msra.mxu0 %v2877
    %4687 = vmatpush.bf16.msra.mxu0 %v2869
    %4688 = vmatpush.bf16.msra.mxu0 %v2861
    %4689 = vmatpush.bf16.msra.mxu0 %v2853
    %4690 = vmatpush.bf16.msra.mxu0 %v2845
    %4691 = vmatpush.bf16.msra.mxu0 %v2837
    %4692 = vmatmul.bf16.gmra.mxu0 %v874
    %v4693 = vpop.f32.mrf.mxu0
    %v4694 = vadd.f32 %v801, %v4693
    %v4695 = vpop.f32.mrf.mxu0
    %v4696 = vadd.f32 %v801, %v4695
    %4697 = vmatmul.bf16.gmra.mxu0 %v884
    %v4698 = vpop.f32.mrf.mxu0
    %v4699 = vadd.f32 %v801, %v4698
    %v4700 = vpop.f32.mrf.mxu0
    %v4701 = vadd.f32 %v801, %v4700
    %4702 = vdwg.mxu0
    %4703 = vmatpush.bf16.msra.mxu0 %v2957
    %4704 = vmatpush.bf16.msra.mxu0 %v2949
    %4705 = vmatpush.bf16.msra.mxu0 %v2941
    %4706 = vmatpush.bf16.msra.mxu0 %v2933
    %4707 = vmatpush.bf16.msra.mxu0 %v2925
    %4708 = vmatpush.bf16.msra.mxu0 %v2917
    %4709 = vmatpush.bf16.msra.mxu0 %v2909
    %4710 = vmatpush.bf16.msra.mxu0 %v2901
    %4711 = vmatmul.bf16.gmra.mxu0 %v875
    %v4712 = vpop.f32.mrf.mxu0
    %v4713 = vadd.f32 %v4694, %v4712
    %v4714 = vpop.f32.mrf.mxu0
    %v4715 = vadd.f32 %v4696, %v4714
    %4716 = vmatmul.bf16.gmra.mxu0 %v885
    %v4717 = vpop.f32.mrf.mxu0
    %v4718 = vadd.f32 %v4699, %v4717
    %v4719 = vpop.f32.mrf.mxu0
    %v4720 = vadd.f32 %v4701, %v4719
    %4721 = vdwg.mxu0
    %4722 = vmatpush.bf16.msra.mxu0 %v3021
    %4723 = vmatpush.bf16.msra.mxu0 %v3013
    %4724 = vmatpush.bf16.msra.mxu0 %v3005
    %4725 = vmatpush.bf16.msra.mxu0 %v2997
    %4726 = vmatpush.bf16.msra.mxu0 %v2989
    %4727 = vmatpush.bf16.msra.mxu0 %v2981
    %4728 = vmatpush.bf16.msra.mxu0 %v2973
    %4729 = vmatpush.bf16.msra.mxu0 %v2965
    %4730 = vmatmul.bf16.gmra.mxu0 %v876
    %v4731 = vpop.f32.mrf.mxu0
    %v4732 = vadd.f32 %v4713, %v4731
    %v4733 = vpop.f32.mrf.mxu0
    %v4734 = vadd.f32 %v4715, %v4733
    %4735 = vmatmul.bf16.gmra.mxu0 %v886
    %v4736 = vpop.f32.mrf.mxu0
    %v4737 = vadd.f32 %v4718, %v4736
    %v4738 = vpop.f32.mrf.mxu0
    %v4739 = vadd.f32 %v4720, %v4738
    %4740 = vdwg.mxu0
    %4741 = vmatpush.bf16.msra.mxu0 %v3085
    %4742 = vmatpush.bf16.msra.mxu0 %v3077
    %4743 = vmatpush.bf16.msra.mxu0 %v3069
    %4744 = vmatpush.bf16.msra.mxu0 %v3061
    %4745 = vmatpush.bf16.msra.mxu0 %v3053
    %4746 = vmatpush.bf16.msra.mxu0 %v3045
    %4747 = vmatpush.bf16.msra.mxu0 %v3037
    %4748 = vmatpush.bf16.msra.mxu0 %v3029
    %4749 = vmatmul.bf16.gmra.mxu0 %v877
    %v4750 = vpop.f32.mrf.mxu0
    %v4751 = vadd.f32 %v4732, %v4750
    %v4752 = vpop.f32.mrf.mxu0
    %v4753 = vadd.f32 %v4734, %v4752
    %4754 = vmatmul.bf16.gmra.mxu0 %v887
    %v4755 = vpop.f32.mrf.mxu0
    %v4756 = vadd.f32 %v4737, %v4755
    %v4757 = vpop.f32.mrf.mxu0
    %v4758 = vadd.f32 %v4739, %v4757
    %4759 = vdwg.mxu0
    %4760 = vmatpush.bf16.msra.mxu0 %v3149
    %4761 = vmatpush.bf16.msra.mxu0 %v3141
    %4762 = vmatpush.bf16.msra.mxu0 %v3133
    %4763 = vmatpush.bf16.msra.mxu0 %v3125
    %4764 = vmatpush.bf16.msra.mxu0 %v3117
    %4765 = vmatpush.bf16.msra.mxu0 %v3109
    %4766 = vmatpush.bf16.msra.mxu0 %v3101
    %4767 = vmatpush.bf16.msra.mxu0 %v3093
    %4768 = vmatmul.bf16.gmra.mxu0 %v878
    %v4769 = vpop.f32.mrf.mxu0
    %v4770 = vadd.f32 %v4751, %v4769
    %v4771 = vpop.f32.mrf.mxu0
    %v4772 = vadd.f32 %v4753, %v4771
    %4773 = vmatmul.bf16.gmra.mxu0 %v888
    %v4774 = vpop.f32.mrf.mxu0
    %v4775 = vadd.f32 %v4756, %v4774
    %v4776 = vpop.f32.mrf.mxu0
    %v4777 = vadd.f32 %v4758, %v4776
    %4778 = vdwg.mxu0
    %4779 = vmatpush.bf16.msra.mxu0 %v3213
    %4780 = vmatpush.bf16.msra.mxu0 %v3205
    %4781 = vmatpush.bf16.msra.mxu0 %v3197
    %4782 = vmatpush.bf16.msra.mxu0 %v3189
    %4783 = vmatpush.bf16.msra.mxu0 %v3181
    %4784 = vmatpush.bf16.msra.mxu0 %v3173
    %4785 = vmatpush.bf16.msra.mxu0 %v3165
    %4786 = vmatpush.bf16.msra.mxu0 %v3157
    %4787 = vmatmul.bf16.gmra.mxu0 %v879
    %v4788 = vpop.f32.mrf.mxu0
    %v4789 = vadd.f32 %v4770, %v4788
    %v4790 = vpop.f32.mrf.mxu0
    %v4791 = vadd.f32 %v4772, %v4790
    %4792 = vmatmul.bf16.gmra.mxu0 %v889
    %v4793 = vpop.f32.mrf.mxu0
    %v4794 = vadd.f32 %v4775, %v4793
    %v4795 = vpop.f32.mrf.mxu0
    %v4796 = vadd.f32 %v4777, %v4795
    %4797 = vdwg.mxu0
    %4798 = vmatpush.bf16.msra.mxu0 %v3277
    %4799 = vmatpush.bf16.msra.mxu0 %v3269
    %4800 = vmatpush.bf16.msra.mxu0 %v3261
    %4801 = vmatpush.bf16.msra.mxu0 %v3253
    %4802 = vmatpush.bf16.msra.mxu0 %v3245
    %4803 = vmatpush.bf16.msra.mxu0 %v3237
    %4804 = vmatpush.bf16.msra.mxu0 %v3229
    %4805 = vmatpush.bf16.msra.mxu0 %v3221
    %4806 = vmatmul.bf16.gmra.mxu0 %v880
    %v4807 = vpop.f32.mrf.mxu0
    %v4808 = vadd.f32 %v4789, %v4807
    %v4809 = vpop.f32.mrf.mxu0
    %v4810 = vadd.f32 %v4791, %v4809
    %4811 = vmatmul.bf16.gmra.mxu0 %v890
    %v4812 = vpop.f32.mrf.mxu0
    %v4813 = vadd.f32 %v4794, %v4812
    %v4814 = vpop.f32.mrf.mxu0
    %v4815 = vadd.f32 %v4796, %v4814
    %4816 = vdwg.mxu0
    %4817 = vmatpush.bf16.msra.mxu0 %v3341
    %4818 = vmatpush.bf16.msra.mxu0 %v3333
    %4819 = vmatpush.bf16.msra.mxu0 %v3325
    %4820 = vmatpush.bf16.msra.mxu0 %v3317
    %4821 = vmatpush.bf16.msra.mxu0 %v3309
    %4822 = vmatpush.bf16.msra.mxu0 %v3301
    %4823 = vmatpush.bf16.msra.mxu0 %v3293
    %4824 = vmatpush.bf16.msra.mxu0 %v3285
    %4825 = vmatmul.bf16.gmra.mxu0 %v881
    %v4826 = vpop.f32.mrf.mxu0
    %v4827 = vadd.f32 %v4808, %v4826
    %v4828 = vpop.f32.mrf.mxu0
    %v4829 = vadd.f32 %v4810, %v4828
    %4830 = vmatmul.bf16.gmra.mxu0 %v891
    %v4831 = vpop.f32.mrf.mxu0
    %v4832 = vadd.f32 %v4813, %v4831
    %v4833 = vpop.f32.mrf.mxu0
    %v4834 = vadd.f32 %v4815, %v4833
    %4835 = vdwg.mxu0
    %4836 = vmatpush.bf16.msra.mxu0 %v3405
    %4837 = vmatpush.bf16.msra.mxu0 %v3397
    %4838 = vmatpush.bf16.msra.mxu0 %v3389
    %4839 = vmatpush.bf16.msra.mxu0 %v3381
    %4840 = vmatpush.bf16.msra.mxu0 %v3373
    %4841 = vmatpush.bf16.msra.mxu0 %v3365
    %4842 = vmatpush.bf16.msra.mxu0 %v3357
    %4843 = vmatpush.bf16.msra.mxu0 %v3349
    %4844 = vmatmul.bf16.gmra.mxu0 %v882
    %v4845 = vpop.f32.mrf.mxu0
    %v4846 = vadd.f32 %v4827, %v4845
    %v4847 = vpop.f32.mrf.mxu0
    %v4848 = vadd.f32 %v4829, %v4847
    %4849 = vmatmul.bf16.gmra.mxu0 %v892
    %v4850 = vpop.f32.mrf.mxu0
    %v4851 = vadd.f32 %v4832, %v4850
    %v4852 = vpop.f32.mrf.mxu0
    %v4853 = vadd.f32 %v4834, %v4852
    %4854 = vdwg.mxu0
    %4855 = vmatpush.bf16.msra.mxu0 %v3469
    %4856 = vmatpush.bf16.msra.mxu0 %v3461
    %4857 = vmatpush.bf16.msra.mxu0 %v3453
    %4858 = vmatpush.bf16.msra.mxu0 %v3445
    %4859 = vmatpush.bf16.msra.mxu0 %v3437
    %4860 = vmatpush.bf16.msra.mxu0 %v3429
    %4861 = vmatpush.bf16.msra.mxu0 %v3421
    %4862 = vmatpush.bf16.msra.mxu0 %v3413
    %4863 = vmatmul.bf16.gmra.mxu0 %v883
    %v4864 = vpop.f32.mrf.mxu0
    %v4865 = vadd.f32 %v4846, %v4864
    %v4866 = vpop.f32.mrf.mxu0
    %v4867 = vadd.f32 %v4848, %v4866
    %4868 = vmatmul.bf16.gmra.mxu0 %v893
    %v4869 = vpop.f32.mrf.mxu0
    %v4870 = vadd.f32 %v4851, %v4869
    %v4871 = vpop.f32.mrf.mxu0
    %v4872 = vadd.f32 %v4853, %v4871
    %4873 = vdwg.mxu0
    %4874 = vmatpush.bf16.msra.mxu0 %v2894
    %4875 = vmatpush.bf16.msra.mxu0 %v2886
    %4876 = vmatpush.bf16.msra.mxu0 %v2878
    %4877 = vmatpush.bf16.msra.mxu0 %v2870
    %4878 = vmatpush.bf16.msra.mxu0 %v2862
    %4879 = vmatpush.bf16.msra.mxu0 %v2854
    %4880 = vmatpush.bf16.msra.mxu0 %v2846
    %4881 = vmatpush.bf16.msra.mxu0 %v2838
    %4882 = vmatmul.bf16.gmra.mxu0 %v874
    %v4883 = vpop.f32.mrf.mxu0
    %v4884 = vadd.f32 %v802, %v4883
    %v4885 = vpop.f32.mrf.mxu0
    %v4886 = vadd.f32 %v802, %v4885
    %4887 = vmatmul.bf16.gmra.mxu0 %v884
    %v4888 = vpop.f32.mrf.mxu0
    %v4889 = vadd.f32 %v802, %v4888
    %v4890 = vpop.f32.mrf.mxu0
    %v4891 = vadd.f32 %v802, %v4890
    %4892 = vdwg.mxu0
    %4893 = vmatpush.bf16.msra.mxu0 %v2958
    %4894 = vmatpush.bf16.msra.mxu0 %v2950
    %4895 = vmatpush.bf16.msra.mxu0 %v2942
    %4896 = vmatpush.bf16.msra.mxu0 %v2934
    %4897 = vmatpush.bf16.msra.mxu0 %v2926
    %4898 = vmatpush.bf16.msra.mxu0 %v2918
    %4899 = vmatpush.bf16.msra.mxu0 %v2910
    %4900 = vmatpush.bf16.msra.mxu0 %v2902
    %4901 = vmatmul.bf16.gmra.mxu0 %v875
    %v4902 = vpop.f32.mrf.mxu0
    %v4903 = vadd.f32 %v4884, %v4902
    %v4904 = vpop.f32.mrf.mxu0
    %v4905 = vadd.f32 %v4886, %v4904
    %4906 = vmatmul.bf16.gmra.mxu0 %v885
    %v4907 = vpop.f32.mrf.mxu0
    %v4908 = vadd.f32 %v4889, %v4907
    %v4909 = vpop.f32.mrf.mxu0
    %v4910 = vadd.f32 %v4891, %v4909
    %4911 = vdwg.mxu0
    %4912 = vmatpush.bf16.msra.mxu0 %v3022
    %4913 = vmatpush.bf16.msra.mxu0 %v3014
    %4914 = vmatpush.bf16.msra.mxu0 %v3006
    %4915 = vmatpush.bf16.msra.mxu0 %v2998
    %4916 = vmatpush.bf16.msra.mxu0 %v2990
    %4917 = vmatpush.bf16.msra.mxu0 %v2982
    %4918 = vmatpush.bf16.msra.mxu0 %v2974
    %4919 = vmatpush.bf16.msra.mxu0 %v2966
    %4920 = vmatmul.bf16.gmra.mxu0 %v876
    %v4921 = vpop.f32.mrf.mxu0
    %v4922 = vadd.f32 %v4903, %v4921
    %v4923 = vpop.f32.mrf.mxu0
    %v4924 = vadd.f32 %v4905, %v4923
    %4925 = vmatmul.bf16.gmra.mxu0 %v886
    %v4926 = vpop.f32.mrf.mxu0
    %v4927 = vadd.f32 %v4908, %v4926
    %v4928 = vpop.f32.mrf.mxu0
    %v4929 = vadd.f32 %v4910, %v4928
    %4930 = vdwg.mxu0
    %4931 = vmatpush.bf16.msra.mxu0 %v3086
    %4932 = vmatpush.bf16.msra.mxu0 %v3078
    %4933 = vmatpush.bf16.msra.mxu0 %v3070
    %4934 = vmatpush.bf16.msra.mxu0 %v3062
    %4935 = vmatpush.bf16.msra.mxu0 %v3054
    %4936 = vmatpush.bf16.msra.mxu0 %v3046
    %4937 = vmatpush.bf16.msra.mxu0 %v3038
    %4938 = vmatpush.bf16.msra.mxu0 %v3030
    %4939 = vmatmul.bf16.gmra.mxu0 %v877
    %v4940 = vpop.f32.mrf.mxu0
    %v4941 = vadd.f32 %v4922, %v4940
    %v4942 = vpop.f32.mrf.mxu0
    %v4943 = vadd.f32 %v4924, %v4942
    %4944 = vmatmul.bf16.gmra.mxu0 %v887
    %v4945 = vpop.f32.mrf.mxu0
    %v4946 = vadd.f32 %v4927, %v4945
    %v4947 = vpop.f32.mrf.mxu0
    %v4948 = vadd.f32 %v4929, %v4947
    %4949 = vdwg.mxu0
    %4950 = vmatpush.bf16.msra.mxu0 %v3150
    %4951 = vmatpush.bf16.msra.mxu0 %v3142
    %4952 = vmatpush.bf16.msra.mxu0 %v3134
    %4953 = vmatpush.bf16.msra.mxu0 %v3126
    %4954 = vmatpush.bf16.msra.mxu0 %v3118
    %4955 = vmatpush.bf16.msra.mxu0 %v3110
    %4956 = vmatpush.bf16.msra.mxu0 %v3102
    %4957 = vmatpush.bf16.msra.mxu0 %v3094
    %4958 = vmatmul.bf16.gmra.mxu0 %v878
    %v4959 = vpop.f32.mrf.mxu0
    %v4960 = vadd.f32 %v4941, %v4959
    %v4961 = vpop.f32.mrf.mxu0
    %v4962 = vadd.f32 %v4943, %v4961
    %4963 = vmatmul.bf16.gmra.mxu0 %v888
    %v4964 = vpop.f32.mrf.mxu0
    %v4965 = vadd.f32 %v4946, %v4964
    %v4966 = vpop.f32.mrf.mxu0
    %v4967 = vadd.f32 %v4948, %v4966
    %4968 = vdwg.mxu0
    %4969 = vmatpush.bf16.msra.mxu0 %v3214
    %4970 = vmatpush.bf16.msra.mxu0 %v3206
    %4971 = vmatpush.bf16.msra.mxu0 %v3198
    %4972 = vmatpush.bf16.msra.mxu0 %v3190
    %4973 = vmatpush.bf16.msra.mxu0 %v3182
    %4974 = vmatpush.bf16.msra.mxu0 %v3174
    %4975 = vmatpush.bf16.msra.mxu0 %v3166
    %4976 = vmatpush.bf16.msra.mxu0 %v3158
    %4977 = vmatmul.bf16.gmra.mxu0 %v879
    %v4978 = vpop.f32.mrf.mxu0
    %v4979 = vadd.f32 %v4960, %v4978
    %v4980 = vpop.f32.mrf.mxu0
    %v4981 = vadd.f32 %v4962, %v4980
    %4982 = vmatmul.bf16.gmra.mxu0 %v889
    %v4983 = vpop.f32.mrf.mxu0
    %v4984 = vadd.f32 %v4965, %v4983
    %v4985 = vpop.f32.mrf.mxu0
    %v4986 = vadd.f32 %v4967, %v4985
    %4987 = vdwg.mxu0
    %4988 = vmatpush.bf16.msra.mxu0 %v3278
    %4989 = vmatpush.bf16.msra.mxu0 %v3270
    %4990 = vmatpush.bf16.msra.mxu0 %v3262
    %4991 = vmatpush.bf16.msra.mxu0 %v3254
    %4992 = vmatpush.bf16.msra.mxu0 %v3246
    %4993 = vmatpush.bf16.msra.mxu0 %v3238
    %4994 = vmatpush.bf16.msra.mxu0 %v3230
    %4995 = vmatpush.bf16.msra.mxu0 %v3222
    %4996 = vmatmul.bf16.gmra.mxu0 %v880
    %v4997 = vpop.f32.mrf.mxu0
    %v4998 = vadd.f32 %v4979, %v4997
    %v4999 = vpop.f32.mrf.mxu0
    %v5000 = vadd.f32 %v4981, %v4999
    %5001 = vmatmul.bf16.gmra.mxu0 %v890
    %v5002 = vpop.f32.mrf.mxu0
    %v5003 = vadd.f32 %v4984, %v5002
    %v5004 = vpop.f32.mrf.mxu0
    %v5005 = vadd.f32 %v4986, %v5004
    %5006 = vdwg.mxu0
    %5007 = vmatpush.bf16.msra.mxu0 %v3342
    %5008 = vmatpush.bf16.msra.mxu0 %v3334
    %5009 = vmatpush.bf16.msra.mxu0 %v3326
    %5010 = vmatpush.bf16.msra.mxu0 %v3318
    %5011 = vmatpush.bf16.msra.mxu0 %v3310
    %5012 = vmatpush.bf16.msra.mxu0 %v3302
    %5013 = vmatpush.bf16.msra.mxu0 %v3294
    %5014 = vmatpush.bf16.msra.mxu0 %v3286
    %5015 = vmatmul.bf16.gmra.mxu0 %v881
    %v5016 = vpop.f32.mrf.mxu0
    %v5017 = vadd.f32 %v4998, %v5016
    %v5018 = vpop.f32.mrf.mxu0
    %v5019 = vadd.f32 %v5000, %v5018
    %5020 = vmatmul.bf16.gmra.mxu0 %v891
    %v5021 = vpop.f32.mrf.mxu0
    %v5022 = vadd.f32 %v5003, %v5021
    %v5023 = vpop.f32.mrf.mxu0
    %v5024 = vadd.f32 %v5005, %v5023
    %5025 = vdwg.mxu0
    %5026 = vmatpush.bf16.msra.mxu0 %v3406
    %5027 = vmatpush.bf16.msra.mxu0 %v3398
    %5028 = vmatpush.bf16.msra.mxu0 %v3390
    %5029 = vmatpush.bf16.msra.mxu0 %v3382
    %5030 = vmatpush.bf16.msra.mxu0 %v3374
    %5031 = vmatpush.bf16.msra.mxu0 %v3366
    %5032 = vmatpush.bf16.msra.mxu0 %v3358
    %5033 = vmatpush.bf16.msra.mxu0 %v3350
    %5034 = vmatmul.bf16.gmra.mxu0 %v882
    %v5035 = vpop.f32.mrf.mxu0
    %v5036 = vadd.f32 %v5017, %v5035
    %v5037 = vpop.f32.mrf.mxu0
    %v5038 = vadd.f32 %v5019, %v5037
    %5039 = vmatmul.bf16.gmra.mxu0 %v892
    %v5040 = vpop.f32.mrf.mxu0
    %v5041 = vadd.f32 %v5022, %v5040
    %v5042 = vpop.f32.mrf.mxu0
    %v5043 = vadd.f32 %v5024, %v5042
    %5044 = vdwg.mxu0
    %5045 = vmatpush.bf16.msra.mxu0 %v3470
    %5046 = vmatpush.bf16.msra.mxu0 %v3462
    %5047 = vmatpush.bf16.msra.mxu0 %v3454
    %5048 = vmatpush.bf16.msra.mxu0 %v3446
    %5049 = vmatpush.bf16.msra.mxu0 %v3438
    %5050 = vmatpush.bf16.msra.mxu0 %v3430
    %5051 = vmatpush.bf16.msra.mxu0 %v3422
    %5052 = vmatpush.bf16.msra.mxu0 %v3414
    %5053 = vmatmul.bf16.gmra.mxu0 %v883
    %v5054 = vpop.f32.mrf.mxu0
    %v5055 = vadd.f32 %v5036, %v5054
    %v5056 = vpop.f32.mrf.mxu0
    %v5057 = vadd.f32 %v5038, %v5056
    %5058 = vmatmul.bf16.gmra.mxu0 %v893
    %v5059 = vpop.f32.mrf.mxu0
    %v5060 = vadd.f32 %v5041, %v5059
    %v5061 = vpop.f32.mrf.mxu0
    %v5062 = vadd.f32 %v5043, %v5061
    %5063 = vdwg.mxu0
    %5064 = vmatpush.bf16.msra.mxu0 %v2895
    %5065 = vmatpush.bf16.msra.mxu0 %v2887
    %5066 = vmatpush.bf16.msra.mxu0 %v2879
    %5067 = vmatpush.bf16.msra.mxu0 %v2871
    %5068 = vmatpush.bf16.msra.mxu0 %v2863
    %5069 = vmatpush.bf16.msra.mxu0 %v2855
    %5070 = vmatpush.bf16.msra.mxu0 %v2847
    %5071 = vmatpush.bf16.msra.mxu0 %v2839
    %5072 = vmatmul.bf16.gmra.mxu0 %v874
    %v5073 = vpop.f32.mrf.mxu0
    %v5074 = vadd.f32 %v803, %v5073
    %v5075 = vpop.f32.mrf.mxu0
    %v5076 = vadd.f32 %v803, %v5075
    %5077 = vmatmul.bf16.gmra.mxu0 %v884
    %v5078 = vpop.f32.mrf.mxu0
    %v5079 = vadd.f32 %v803, %v5078
    %v5080 = vpop.f32.mrf.mxu0
    %v5081 = vadd.f32 %v803, %v5080
    %5082 = vdwg.mxu0
    %5083 = vmatpush.bf16.msra.mxu0 %v2959
    %5084 = vmatpush.bf16.msra.mxu0 %v2951
    %5085 = vmatpush.bf16.msra.mxu0 %v2943
    %5086 = vmatpush.bf16.msra.mxu0 %v2935
    %5087 = vmatpush.bf16.msra.mxu0 %v2927
    %5088 = vmatpush.bf16.msra.mxu0 %v2919
    %5089 = vmatpush.bf16.msra.mxu0 %v2911
    %5090 = vmatpush.bf16.msra.mxu0 %v2903
    %5091 = vmatmul.bf16.gmra.mxu0 %v875
    %v5092 = vpop.f32.mrf.mxu0
    %v5093 = vadd.f32 %v5074, %v5092
    %v5094 = vpop.f32.mrf.mxu0
    %v5095 = vadd.f32 %v5076, %v5094
    %5096 = vmatmul.bf16.gmra.mxu0 %v885
    %v5097 = vpop.f32.mrf.mxu0
    %v5098 = vadd.f32 %v5079, %v5097
    %v5099 = vpop.f32.mrf.mxu0
    %v5100 = vadd.f32 %v5081, %v5099
    %5101 = vdwg.mxu0
    %5102 = vmatpush.bf16.msra.mxu0 %v3023
    %5103 = vmatpush.bf16.msra.mxu0 %v3015
    %5104 = vmatpush.bf16.msra.mxu0 %v3007
    %5105 = vmatpush.bf16.msra.mxu0 %v2999
    %5106 = vmatpush.bf16.msra.mxu0 %v2991
    %5107 = vmatpush.bf16.msra.mxu0 %v2983
    %5108 = vmatpush.bf16.msra.mxu0 %v2975
    %5109 = vmatpush.bf16.msra.mxu0 %v2967
    %5110 = vmatmul.bf16.gmra.mxu0 %v876
    %v5111 = vpop.f32.mrf.mxu0
    %v5112 = vadd.f32 %v5093, %v5111
    %v5113 = vpop.f32.mrf.mxu0
    %v5114 = vadd.f32 %v5095, %v5113
    %5115 = vmatmul.bf16.gmra.mxu0 %v886
    %v5116 = vpop.f32.mrf.mxu0
    %v5117 = vadd.f32 %v5098, %v5116
    %v5118 = vpop.f32.mrf.mxu0
    %v5119 = vadd.f32 %v5100, %v5118
    %5120 = vdwg.mxu0
    %5121 = vmatpush.bf16.msra.mxu0 %v3087
    %5122 = vmatpush.bf16.msra.mxu0 %v3079
    %5123 = vmatpush.bf16.msra.mxu0 %v3071
    %5124 = vmatpush.bf16.msra.mxu0 %v3063
    %5125 = vmatpush.bf16.msra.mxu0 %v3055
    %5126 = vmatpush.bf16.msra.mxu0 %v3047
    %5127 = vmatpush.bf16.msra.mxu0 %v3039
    %5128 = vmatpush.bf16.msra.mxu0 %v3031
    %5129 = vmatmul.bf16.gmra.mxu0 %v877
    %v5130 = vpop.f32.mrf.mxu0
    %v5131 = vadd.f32 %v5112, %v5130
    %v5132 = vpop.f32.mrf.mxu0
    %v5133 = vadd.f32 %v5114, %v5132
    %5134 = vmatmul.bf16.gmra.mxu0 %v887
    %v5135 = vpop.f32.mrf.mxu0
    %v5136 = vadd.f32 %v5117, %v5135
    %v5137 = vpop.f32.mrf.mxu0
    %v5138 = vadd.f32 %v5119, %v5137
    %5139 = vdwg.mxu0
    %5140 = vmatpush.bf16.msra.mxu0 %v3151
    %5141 = vmatpush.bf16.msra.mxu0 %v3143
    %5142 = vmatpush.bf16.msra.mxu0 %v3135
    %5143 = vmatpush.bf16.msra.mxu0 %v3127
    %5144 = vmatpush.bf16.msra.mxu0 %v3119
    %5145 = vmatpush.bf16.msra.mxu0 %v3111
    %5146 = vmatpush.bf16.msra.mxu0 %v3103
    %5147 = vmatpush.bf16.msra.mxu0 %v3095
    %5148 = vmatmul.bf16.gmra.mxu0 %v878
    %v5149 = vpop.f32.mrf.mxu0
    %v5150 = vadd.f32 %v5131, %v5149
    %v5151 = vpop.f32.mrf.mxu0
    %v5152 = vadd.f32 %v5133, %v5151
    %5153 = vmatmul.bf16.gmra.mxu0 %v888
    %v5154 = vpop.f32.mrf.mxu0
    %v5155 = vadd.f32 %v5136, %v5154
    %v5156 = vpop.f32.mrf.mxu0
    %v5157 = vadd.f32 %v5138, %v5156
    %5158 = vdwg.mxu0
    %5159 = vmatpush.bf16.msra.mxu0 %v3215
    %5160 = vmatpush.bf16.msra.mxu0 %v3207
    %5161 = vmatpush.bf16.msra.mxu0 %v3199
    %5162 = vmatpush.bf16.msra.mxu0 %v3191
    %5163 = vmatpush.bf16.msra.mxu0 %v3183
    %5164 = vmatpush.bf16.msra.mxu0 %v3175
    %5165 = vmatpush.bf16.msra.mxu0 %v3167
    %5166 = vmatpush.bf16.msra.mxu0 %v3159
    %5167 = vmatmul.bf16.gmra.mxu0 %v879
    %v5168 = vpop.f32.mrf.mxu0
    %v5169 = vadd.f32 %v5150, %v5168
    %v5170 = vpop.f32.mrf.mxu0
    %v5171 = vadd.f32 %v5152, %v5170
    %5172 = vmatmul.bf16.gmra.mxu0 %v889
    %v5173 = vpop.f32.mrf.mxu0
    %v5174 = vadd.f32 %v5155, %v5173
    %v5175 = vpop.f32.mrf.mxu0
    %v5176 = vadd.f32 %v5157, %v5175
    %5177 = vdwg.mxu0
    %5178 = vmatpush.bf16.msra.mxu0 %v3279
    %5179 = vmatpush.bf16.msra.mxu0 %v3271
    %5180 = vmatpush.bf16.msra.mxu0 %v3263
    %5181 = vmatpush.bf16.msra.mxu0 %v3255
    %5182 = vmatpush.bf16.msra.mxu0 %v3247
    %5183 = vmatpush.bf16.msra.mxu0 %v3239
    %5184 = vmatpush.bf16.msra.mxu0 %v3231
    %5185 = vmatpush.bf16.msra.mxu0 %v3223
    %5186 = vmatmul.bf16.gmra.mxu0 %v880
    %v5187 = vpop.f32.mrf.mxu0
    %v5188 = vadd.f32 %v5169, %v5187
    %v5189 = vpop.f32.mrf.mxu0
    %v5190 = vadd.f32 %v5171, %v5189
    %5191 = vmatmul.bf16.gmra.mxu0 %v890
    %v5192 = vpop.f32.mrf.mxu0
    %v5193 = vadd.f32 %v5174, %v5192
    %v5194 = vpop.f32.mrf.mxu0
    %v5195 = vadd.f32 %v5176, %v5194
    %5196 = vdwg.mxu0
    %5197 = vmatpush.bf16.msra.mxu0 %v3343
    %5198 = vmatpush.bf16.msra.mxu0 %v3335
    %5199 = vmatpush.bf16.msra.mxu0 %v3327
    %5200 = vmatpush.bf16.msra.mxu0 %v3319
    %5201 = vmatpush.bf16.msra.mxu0 %v3311
    %5202 = vmatpush.bf16.msra.mxu0 %v3303
    %5203 = vmatpush.bf16.msra.mxu0 %v3295
    %5204 = vmatpush.bf16.msra.mxu0 %v3287
    %5205 = vmatmul.bf16.gmra.mxu0 %v881
    %v5206 = vpop.f32.mrf.mxu0
    %v5207 = vadd.f32 %v5188, %v5206
    %v5208 = vpop.f32.mrf.mxu0
    %v5209 = vadd.f32 %v5190, %v5208
    %5210 = vmatmul.bf16.gmra.mxu0 %v891
    %v5211 = vpop.f32.mrf.mxu0
    %v5212 = vadd.f32 %v5193, %v5211
    %v5213 = vpop.f32.mrf.mxu0
    %v5214 = vadd.f32 %v5195, %v5213
    %5215 = vdwg.mxu0
    %5216 = vmatpush.bf16.msra.mxu0 %v3407
    %5217 = vmatpush.bf16.msra.mxu0 %v3399
    %5218 = vmatpush.bf16.msra.mxu0 %v3391
    %5219 = vmatpush.bf16.msra.mxu0 %v3383
    %5220 = vmatpush.bf16.msra.mxu0 %v3375
    %5221 = vmatpush.bf16.msra.mxu0 %v3367
    %5222 = vmatpush.bf16.msra.mxu0 %v3359
    %5223 = vmatpush.bf16.msra.mxu0 %v3351
    %5224 = vmatmul.bf16.gmra.mxu0 %v882
    %v5225 = vpop.f32.mrf.mxu0
    %v5226 = vadd.f32 %v5207, %v5225
    %v5227 = vpop.f32.mrf.mxu0
    %v5228 = vadd.f32 %v5209, %v5227
    %5229 = vmatmul.bf16.gmra.mxu0 %v892
    %v5230 = vpop.f32.mrf.mxu0
    %v5231 = vadd.f32 %v5212, %v5230
    %v5232 = vpop.f32.mrf.mxu0
    %v5233 = vadd.f32 %v5214, %v5232
    %5234 = vdwg.mxu0
    %5235 = vmatpush.bf16.msra.mxu0 %v3471
    %5236 = vmatpush.bf16.msra.mxu0 %v3463
    %5237 = vmatpush.bf16.msra.mxu0 %v3455
    %5238 = vmatpush.bf16.msra.mxu0 %v3447
    %5239 = vmatpush.bf16.msra.mxu0 %v3439
    %5240 = vmatpush.bf16.msra.mxu0 %v3431
    %5241 = vmatpush.bf16.msra.mxu0 %v3423
    %5242 = vmatpush.bf16.msra.mxu0 %v3415
    %5243 = vmatmul.bf16.gmra.mxu0 %v883
    %v5244 = vpop.f32.mrf.mxu0
    %v5245 = vadd.f32 %v5226, %v5244
    %v5246 = vpop.f32.mrf.mxu0
    %v5247 = vadd.f32 %v5228, %v5246
    %5248 = vmatmul.bf16.gmra.mxu0 %v893
    %v5249 = vpop.f32.mrf.mxu0
    %v5250 = vadd.f32 %v5231, %v5249
    %v5251 = vpop.f32.mrf.mxu0
    %v5252 = vadd.f32 %v5233, %v5251
    %5253 = vdwg.mxu0
    %5254 = vmatpush.bf16.msra.mxu0 %v2896
    %5255 = vmatpush.bf16.msra.mxu0 %v2888
    %5256 = vmatpush.bf16.msra.mxu0 %v2880
    %5257 = vmatpush.bf16.msra.mxu0 %v2872
    %5258 = vmatpush.bf16.msra.mxu0 %v2864
    %5259 = vmatpush.bf16.msra.mxu0 %v2856
    %5260 = vmatpush.bf16.msra.mxu0 %v2848
    %5261 = vmatpush.bf16.msra.mxu0 %v2840
    %5262 = vmatmul.bf16.gmra.mxu0 %v874
    %v5263 = vpop.f32.mrf.mxu0
    %v5264 = vadd.f32 %v804, %v5263
    %v5265 = vpop.f32.mrf.mxu0
    %v5266 = vadd.f32 %v804, %v5265
    %5267 = vmatmul.bf16.gmra.mxu0 %v884
    %v5268 = vpop.f32.mrf.mxu0
    %v5269 = vadd.f32 %v804, %v5268
    %v5270 = vpop.f32.mrf.mxu0
    %v5271 = vadd.f32 %v804, %v5270
    %5272 = vdwg.mxu0
    %5273 = vmatpush.bf16.msra.mxu0 %v2960
    %5274 = vmatpush.bf16.msra.mxu0 %v2952
    %5275 = vmatpush.bf16.msra.mxu0 %v2944
    %5276 = vmatpush.bf16.msra.mxu0 %v2936
    %5277 = vmatpush.bf16.msra.mxu0 %v2928
    %5278 = vmatpush.bf16.msra.mxu0 %v2920
    %5279 = vmatpush.bf16.msra.mxu0 %v2912
    %5280 = vmatpush.bf16.msra.mxu0 %v2904
    %5281 = vmatmul.bf16.gmra.mxu0 %v875
    %v5282 = vpop.f32.mrf.mxu0
    %v5283 = vadd.f32 %v5264, %v5282
    %v5284 = vpop.f32.mrf.mxu0
    %v5285 = vadd.f32 %v5266, %v5284
    %5286 = vmatmul.bf16.gmra.mxu0 %v885
    %v5287 = vpop.f32.mrf.mxu0
    %v5288 = vadd.f32 %v5269, %v5287
    %v5289 = vpop.f32.mrf.mxu0
    %v5290 = vadd.f32 %v5271, %v5289
    %5291 = vdwg.mxu0
    %5292 = vmatpush.bf16.msra.mxu0 %v3024
    %5293 = vmatpush.bf16.msra.mxu0 %v3016
    %5294 = vmatpush.bf16.msra.mxu0 %v3008
    %5295 = vmatpush.bf16.msra.mxu0 %v3000
    %5296 = vmatpush.bf16.msra.mxu0 %v2992
    %5297 = vmatpush.bf16.msra.mxu0 %v2984
    %5298 = vmatpush.bf16.msra.mxu0 %v2976
    %5299 = vmatpush.bf16.msra.mxu0 %v2968
    %5300 = vmatmul.bf16.gmra.mxu0 %v876
    %v5301 = vpop.f32.mrf.mxu0
    %v5302 = vadd.f32 %v5283, %v5301
    %v5303 = vpop.f32.mrf.mxu0
    %v5304 = vadd.f32 %v5285, %v5303
    %5305 = vmatmul.bf16.gmra.mxu0 %v886
    %v5306 = vpop.f32.mrf.mxu0
    %v5307 = vadd.f32 %v5288, %v5306
    %v5308 = vpop.f32.mrf.mxu0
    %v5309 = vadd.f32 %v5290, %v5308
    %5310 = vdwg.mxu0
    %5311 = vmatpush.bf16.msra.mxu0 %v3088
    %5312 = vmatpush.bf16.msra.mxu0 %v3080
    %5313 = vmatpush.bf16.msra.mxu0 %v3072
    %5314 = vmatpush.bf16.msra.mxu0 %v3064
    %5315 = vmatpush.bf16.msra.mxu0 %v3056
    %5316 = vmatpush.bf16.msra.mxu0 %v3048
    %5317 = vmatpush.bf16.msra.mxu0 %v3040
    %5318 = vmatpush.bf16.msra.mxu0 %v3032
    %5319 = vmatmul.bf16.gmra.mxu0 %v877
    %v5320 = vpop.f32.mrf.mxu0
    %v5321 = vadd.f32 %v5302, %v5320
    %v5322 = vpop.f32.mrf.mxu0
    %v5323 = vadd.f32 %v5304, %v5322
    %5324 = vmatmul.bf16.gmra.mxu0 %v887
    %v5325 = vpop.f32.mrf.mxu0
    %v5326 = vadd.f32 %v5307, %v5325
    %v5327 = vpop.f32.mrf.mxu0
    %v5328 = vadd.f32 %v5309, %v5327
    %5329 = vdwg.mxu0
    %5330 = vmatpush.bf16.msra.mxu0 %v3152
    %5331 = vmatpush.bf16.msra.mxu0 %v3144
    %5332 = vmatpush.bf16.msra.mxu0 %v3136
    %5333 = vmatpush.bf16.msra.mxu0 %v3128
    %5334 = vmatpush.bf16.msra.mxu0 %v3120
    %5335 = vmatpush.bf16.msra.mxu0 %v3112
    %5336 = vmatpush.bf16.msra.mxu0 %v3104
    %5337 = vmatpush.bf16.msra.mxu0 %v3096
    %5338 = vmatmul.bf16.gmra.mxu0 %v878
    %v5339 = vpop.f32.mrf.mxu0
    %v5340 = vadd.f32 %v5321, %v5339
    %v5341 = vpop.f32.mrf.mxu0
    %v5342 = vadd.f32 %v5323, %v5341
    %5343 = vmatmul.bf16.gmra.mxu0 %v888
    %v5344 = vpop.f32.mrf.mxu0
    %v5345 = vadd.f32 %v5326, %v5344
    %v5346 = vpop.f32.mrf.mxu0
    %v5347 = vadd.f32 %v5328, %v5346
    %5348 = vdwg.mxu0
    %5349 = vmatpush.bf16.msra.mxu0 %v3216
    %5350 = vmatpush.bf16.msra.mxu0 %v3208
    %5351 = vmatpush.bf16.msra.mxu0 %v3200
    %5352 = vmatpush.bf16.msra.mxu0 %v3192
    %5353 = vmatpush.bf16.msra.mxu0 %v3184
    %5354 = vmatpush.bf16.msra.mxu0 %v3176
    %5355 = vmatpush.bf16.msra.mxu0 %v3168
    %5356 = vmatpush.bf16.msra.mxu0 %v3160
    %5357 = vmatmul.bf16.gmra.mxu0 %v879
    %v5358 = vpop.f32.mrf.mxu0
    %v5359 = vadd.f32 %v5340, %v5358
    %v5360 = vpop.f32.mrf.mxu0
    %v5361 = vadd.f32 %v5342, %v5360
    %5362 = vmatmul.bf16.gmra.mxu0 %v889
    %v5363 = vpop.f32.mrf.mxu0
    %v5364 = vadd.f32 %v5345, %v5363
    %v5365 = vpop.f32.mrf.mxu0
    %v5366 = vadd.f32 %v5347, %v5365
    %5367 = vdwg.mxu0
    %5368 = vmatpush.bf16.msra.mxu0 %v3280
    %5369 = vmatpush.bf16.msra.mxu0 %v3272
    %5370 = vmatpush.bf16.msra.mxu0 %v3264
    %5371 = vmatpush.bf16.msra.mxu0 %v3256
    %5372 = vmatpush.bf16.msra.mxu0 %v3248
    %5373 = vmatpush.bf16.msra.mxu0 %v3240
    %5374 = vmatpush.bf16.msra.mxu0 %v3232
    %5375 = vmatpush.bf16.msra.mxu0 %v3224
    %5376 = vmatmul.bf16.gmra.mxu0 %v880
    %v5377 = vpop.f32.mrf.mxu0
    %v5378 = vadd.f32 %v5359, %v5377
    %v5379 = vpop.f32.mrf.mxu0
    %v5380 = vadd.f32 %v5361, %v5379
    %5381 = vmatmul.bf16.gmra.mxu0 %v890
    %v5382 = vpop.f32.mrf.mxu0
    %v5383 = vadd.f32 %v5364, %v5382
    %v5384 = vpop.f32.mrf.mxu0
    %v5385 = vadd.f32 %v5366, %v5384
    %5386 = vdwg.mxu0
    %5387 = vmatpush.bf16.msra.mxu0 %v3344
    %5388 = vmatpush.bf16.msra.mxu0 %v3336
    %5389 = vmatpush.bf16.msra.mxu0 %v3328
    %5390 = vmatpush.bf16.msra.mxu0 %v3320
    %5391 = vmatpush.bf16.msra.mxu0 %v3312
    %5392 = vmatpush.bf16.msra.mxu0 %v3304
    %5393 = vmatpush.bf16.msra.mxu0 %v3296
    %5394 = vmatpush.bf16.msra.mxu0 %v3288
    %5395 = vmatmul.bf16.gmra.mxu0 %v881
    %v5396 = vpop.f32.mrf.mxu0
    %v5397 = vadd.f32 %v5378, %v5396
    %v5398 = vpop.f32.mrf.mxu0
    %v5399 = vadd.f32 %v5380, %v5398
    %5400 = vmatmul.bf16.gmra.mxu0 %v891
    %v5401 = vpop.f32.mrf.mxu0
    %v5402 = vadd.f32 %v5383, %v5401
    %v5403 = vpop.f32.mrf.mxu0
    %v5404 = vadd.f32 %v5385, %v5403
    %5405 = vdwg.mxu0
    %5406 = vmatpush.bf16.msra.mxu0 %v3408
    %5407 = vmatpush.bf16.msra.mxu0 %v3400
    %5408 = vmatpush.bf16.msra.mxu0 %v3392
    %5409 = vmatpush.bf16.msra.mxu0 %v3384
    %5410 = vmatpush.bf16.msra.mxu0 %v3376
    %5411 = vmatpush.bf16.msra.mxu0 %v3368
    %5412 = vmatpush.bf16.msra.mxu0 %v3360
    %5413 = vmatpush.bf16.msra.mxu0 %v3352
    %5414 = vmatmul.bf16.gmra.mxu0 %v882
    %v5415 = vpop.f32.mrf.mxu0
    %v5416 = vadd.f32 %v5397, %v5415
    %v5417 = vpop.f32.mrf.mxu0
    %v5418 = vadd.f32 %v5399, %v5417
    %5419 = vmatmul.bf16.gmra.mxu0 %v892
    %v5420 = vpop.f32.mrf.mxu0
    %v5421 = vadd.f32 %v5402, %v5420
    %v5422 = vpop.f32.mrf.mxu0
    %v5423 = vadd.f32 %v5404, %v5422
    %5424 = vdwg.mxu0
    %5425 = vmatpush.bf16.msra.mxu0 %v3472
    %5426 = vmatpush.bf16.msra.mxu0 %v3464
    %5427 = vmatpush.bf16.msra.mxu0 %v3456
    %5428 = vmatpush.bf16.msra.mxu0 %v3448
    %5429 = vmatpush.bf16.msra.mxu0 %v3440
    %5430 = vmatpush.bf16.msra.mxu0 %v3432
    %5431 = vmatpush.bf16.msra.mxu0 %v3424
    %5432 = vmatpush.bf16.msra.mxu0 %v3416
    %5433 = vmatmul.bf16.gmra.mxu0 %v883
    %v5434 = vpop.f32.mrf.mxu0
    %v5435 = vadd.f32 %v5416, %v5434
    %v5436 = vpop.f32.mrf.mxu0
    %v5437 = vadd.f32 %v5418, %v5436
    %5438 = vmatmul.bf16.gmra.mxu0 %v893
    %v5439 = vpop.f32.mrf.mxu0
    %v5440 = vadd.f32 %v5421, %v5439
    %v5441 = vpop.f32.mrf.mxu0
    %v5442 = vadd.f32 %v5423, %v5441
    %5443 = vdwg.mxu0
    %5444 = vmatpush.bf16.msra.mxu0 %v2897
    %5445 = vmatpush.bf16.msra.mxu0 %v2889
    %5446 = vmatpush.bf16.msra.mxu0 %v2881
    %5447 = vmatpush.bf16.msra.mxu0 %v2873
    %5448 = vmatpush.bf16.msra.mxu0 %v2865
    %5449 = vmatpush.bf16.msra.mxu0 %v2857
    %5450 = vmatpush.bf16.msra.mxu0 %v2849
    %5451 = vmatpush.bf16.msra.mxu0 %v2841
    %5452 = vmatmul.bf16.gmra.mxu0 %v874
    %v5453 = vpop.f32.mrf.mxu0
    %v5454 = vadd.f32 %v805, %v5453
    %v5455 = vpop.f32.mrf.mxu0
    %v5456 = vadd.f32 %v805, %v5455
    %5457 = vmatmul.bf16.gmra.mxu0 %v884
    %v5458 = vpop.f32.mrf.mxu0
    %v5459 = vadd.f32 %v805, %v5458
    %v5460 = vpop.f32.mrf.mxu0
    %v5461 = vadd.f32 %v805, %v5460
    %5462 = vdwg.mxu0
    %5463 = vmatpush.bf16.msra.mxu0 %v2961
    %5464 = vmatpush.bf16.msra.mxu0 %v2953
    %5465 = vmatpush.bf16.msra.mxu0 %v2945
    %5466 = vmatpush.bf16.msra.mxu0 %v2937
    %5467 = vmatpush.bf16.msra.mxu0 %v2929
    %5468 = vmatpush.bf16.msra.mxu0 %v2921
    %5469 = vmatpush.bf16.msra.mxu0 %v2913
    %5470 = vmatpush.bf16.msra.mxu0 %v2905
    %5471 = vmatmul.bf16.gmra.mxu0 %v875
    %v5472 = vpop.f32.mrf.mxu0
    %v5473 = vadd.f32 %v5454, %v5472
    %v5474 = vpop.f32.mrf.mxu0
    %v5475 = vadd.f32 %v5456, %v5474
    %5476 = vmatmul.bf16.gmra.mxu0 %v885
    %v5477 = vpop.f32.mrf.mxu0
    %v5478 = vadd.f32 %v5459, %v5477
    %v5479 = vpop.f32.mrf.mxu0
    %v5480 = vadd.f32 %v5461, %v5479
    %5481 = vdwg.mxu0
    %5482 = vmatpush.bf16.msra.mxu0 %v3025
    %5483 = vmatpush.bf16.msra.mxu0 %v3017
    %5484 = vmatpush.bf16.msra.mxu0 %v3009
    %5485 = vmatpush.bf16.msra.mxu0 %v3001
    %5486 = vmatpush.bf16.msra.mxu0 %v2993
    %5487 = vmatpush.bf16.msra.mxu0 %v2985
    %5488 = vmatpush.bf16.msra.mxu0 %v2977
    %5489 = vmatpush.bf16.msra.mxu0 %v2969
    %5490 = vmatmul.bf16.gmra.mxu0 %v876
    %v5491 = vpop.f32.mrf.mxu0
    %v5492 = vadd.f32 %v5473, %v5491
    %v5493 = vpop.f32.mrf.mxu0
    %v5494 = vadd.f32 %v5475, %v5493
    %5495 = vmatmul.bf16.gmra.mxu0 %v886
    %v5496 = vpop.f32.mrf.mxu0
    %v5497 = vadd.f32 %v5478, %v5496
    %v5498 = vpop.f32.mrf.mxu0
    %v5499 = vadd.f32 %v5480, %v5498
    %5500 = vdwg.mxu0
    %5501 = vmatpush.bf16.msra.mxu0 %v3089
    %5502 = vmatpush.bf16.msra.mxu0 %v3081
    %5503 = vmatpush.bf16.msra.mxu0 %v3073
    %5504 = vmatpush.bf16.msra.mxu0 %v3065
    %5505 = vmatpush.bf16.msra.mxu0 %v3057
    %5506 = vmatpush.bf16.msra.mxu0 %v3049
    %5507 = vmatpush.bf16.msra.mxu0 %v3041
    %5508 = vmatpush.bf16.msra.mxu0 %v3033
    %5509 = vmatmul.bf16.gmra.mxu0 %v877
    %v5510 = vpop.f32.mrf.mxu0
    %v5511 = vadd.f32 %v5492, %v5510
    %v5512 = vpop.f32.mrf.mxu0
    %v5513 = vadd.f32 %v5494, %v5512
    %5514 = vmatmul.bf16.gmra.mxu0 %v887
    %v5515 = vpop.f32.mrf.mxu0
    %v5516 = vadd.f32 %v5497, %v5515
    %v5517 = vpop.f32.mrf.mxu0
    %v5518 = vadd.f32 %v5499, %v5517
    %5519 = vdwg.mxu0
    %5520 = vmatpush.bf16.msra.mxu0 %v3153
    %5521 = vmatpush.bf16.msra.mxu0 %v3145
    %5522 = vmatpush.bf16.msra.mxu0 %v3137
    %5523 = vmatpush.bf16.msra.mxu0 %v3129
    %5524 = vmatpush.bf16.msra.mxu0 %v3121
    %5525 = vmatpush.bf16.msra.mxu0 %v3113
    %5526 = vmatpush.bf16.msra.mxu0 %v3105
    %5527 = vmatpush.bf16.msra.mxu0 %v3097
    %5528 = vmatmul.bf16.gmra.mxu0 %v878
    %v5529 = vpop.f32.mrf.mxu0
    %v5530 = vadd.f32 %v5511, %v5529
    %v5531 = vpop.f32.mrf.mxu0
    %v5532 = vadd.f32 %v5513, %v5531
    %5533 = vmatmul.bf16.gmra.mxu0 %v888
    %v5534 = vpop.f32.mrf.mxu0
    %v5535 = vadd.f32 %v5516, %v5534
    %v5536 = vpop.f32.mrf.mxu0
    %v5537 = vadd.f32 %v5518, %v5536
    %5538 = vdwg.mxu0
    %5539 = vmatpush.bf16.msra.mxu0 %v3217
    %5540 = vmatpush.bf16.msra.mxu0 %v3209
    %5541 = vmatpush.bf16.msra.mxu0 %v3201
    %5542 = vmatpush.bf16.msra.mxu0 %v3193
    %5543 = vmatpush.bf16.msra.mxu0 %v3185
    %5544 = vmatpush.bf16.msra.mxu0 %v3177
    %5545 = vmatpush.bf16.msra.mxu0 %v3169
    %5546 = vmatpush.bf16.msra.mxu0 %v3161
    %5547 = vmatmul.bf16.gmra.mxu0 %v879
    %v5548 = vpop.f32.mrf.mxu0
    %v5549 = vadd.f32 %v5530, %v5548
    %v5550 = vpop.f32.mrf.mxu0
    %v5551 = vadd.f32 %v5532, %v5550
    %5552 = vmatmul.bf16.gmra.mxu0 %v889
    %v5553 = vpop.f32.mrf.mxu0
    %v5554 = vadd.f32 %v5535, %v5553
    %v5555 = vpop.f32.mrf.mxu0
    %v5556 = vadd.f32 %v5537, %v5555
    %5557 = vdwg.mxu0
    %5558 = vmatpush.bf16.msra.mxu0 %v3281
    %5559 = vmatpush.bf16.msra.mxu0 %v3273
    %5560 = vmatpush.bf16.msra.mxu0 %v3265
    %5561 = vmatpush.bf16.msra.mxu0 %v3257
    %5562 = vmatpush.bf16.msra.mxu0 %v3249
    %5563 = vmatpush.bf16.msra.mxu0 %v3241
    %5564 = vmatpush.bf16.msra.mxu0 %v3233
    %5565 = vmatpush.bf16.msra.mxu0 %v3225
    %5566 = vmatmul.bf16.gmra.mxu0 %v880
    %v5567 = vpop.f32.mrf.mxu0
    %v5568 = vadd.f32 %v5549, %v5567
    %v5569 = vpop.f32.mrf.mxu0
    %v5570 = vadd.f32 %v5551, %v5569
    %5571 = vmatmul.bf16.gmra.mxu0 %v890
    %v5572 = vpop.f32.mrf.mxu0
    %v5573 = vadd.f32 %v5554, %v5572
    %v5574 = vpop.f32.mrf.mxu0
    %v5575 = vadd.f32 %v5556, %v5574
    %5576 = vdwg.mxu0
    %5577 = vmatpush.bf16.msra.mxu0 %v3345
    %5578 = vmatpush.bf16.msra.mxu0 %v3337
    %5579 = vmatpush.bf16.msra.mxu0 %v3329
    %5580 = vmatpush.bf16.msra.mxu0 %v3321
    %5581 = vmatpush.bf16.msra.mxu0 %v3313
    %5582 = vmatpush.bf16.msra.mxu0 %v3305
    %5583 = vmatpush.bf16.msra.mxu0 %v3297
    %5584 = vmatpush.bf16.msra.mxu0 %v3289
    %5585 = vmatmul.bf16.gmra.mxu0 %v881
    %v5586 = vpop.f32.mrf.mxu0
    %v5587 = vadd.f32 %v5568, %v5586
    %v5588 = vpop.f32.mrf.mxu0
    %v5589 = vadd.f32 %v5570, %v5588
    %5590 = vmatmul.bf16.gmra.mxu0 %v891
    %v5591 = vpop.f32.mrf.mxu0
    %v5592 = vadd.f32 %v5573, %v5591
    %v5593 = vpop.f32.mrf.mxu0
    %v5594 = vadd.f32 %v5575, %v5593
    %5595 = vdwg.mxu0
    %5596 = vmatpush.bf16.msra.mxu0 %v3409
    %5597 = vmatpush.bf16.msra.mxu0 %v3401
    %5598 = vmatpush.bf16.msra.mxu0 %v3393
    %5599 = vmatpush.bf16.msra.mxu0 %v3385
    %5600 = vmatpush.bf16.msra.mxu0 %v3377
    %5601 = vmatpush.bf16.msra.mxu0 %v3369
    %5602 = vmatpush.bf16.msra.mxu0 %v3361
    %5603 = vmatpush.bf16.msra.mxu0 %v3353
    %5604 = vmatmul.bf16.gmra.mxu0 %v882
    %v5605 = vpop.f32.mrf.mxu0
    %v5606 = vadd.f32 %v5587, %v5605
    %v5607 = vpop.f32.mrf.mxu0
    %v5608 = vadd.f32 %v5589, %v5607
    %5609 = vmatmul.bf16.gmra.mxu0 %v892
    %v5610 = vpop.f32.mrf.mxu0
    %v5611 = vadd.f32 %v5592, %v5610
    %v5612 = vpop.f32.mrf.mxu0
    %v5613 = vadd.f32 %v5594, %v5612
    %5614 = vdwg.mxu0
    %5615 = vmatpush.bf16.msra.mxu0 %v3473
    %5616 = vmatpush.bf16.msra.mxu0 %v3465
    %5617 = vmatpush.bf16.msra.mxu0 %v3457
    %5618 = vmatpush.bf16.msra.mxu0 %v3449
    %5619 = vmatpush.bf16.msra.mxu0 %v3441
    %5620 = vmatpush.bf16.msra.mxu0 %v3433
    %5621 = vmatpush.bf16.msra.mxu0 %v3425
    %5622 = vmatpush.bf16.msra.mxu0 %v3417
    %5623 = vmatmul.bf16.gmra.mxu0 %v883
    %v5624 = vpop.f32.mrf.mxu0
    %v5625 = vadd.f32 %v5606, %v5624
    %v5626 = vpop.f32.mrf.mxu0
    %v5627 = vadd.f32 %v5608, %v5626
    %5628 = vmatmul.bf16.gmra.mxu0 %v893
    %v5629 = vpop.f32.mrf.mxu0
    %v5630 = vadd.f32 %v5611, %v5629
    %v5631 = vpop.f32.mrf.mxu0
    %v5632 = vadd.f32 %v5613, %v5631
    %5633 = vdwg.mxu0
    %v5634 = vmax.f32 %v4295, 0.0
    %v5635 = vmax.f32 %v4485, 0.0
    %v5636 = vmax.f32 %v4675, 0.0
    %v5637 = vmax.f32 %v4865, 0.0
    %v5638 = vmax.f32 %v5055, 0.0
    %v5639 = vmax.f32 %v5245, 0.0
    %v5640 = vmax.f32 %v5435, 0.0
    %v5641 = vmax.f32 %v5625, 0.0
    %v5642 = vmax.f32 %v4297, 0.0
    %v5643 = vmax.f32 %v4487, 0.0
    %v5644 = vmax.f32 %v4677, 0.0
    %v5645 = vmax.f32 %v4867, 0.0
    %v5646 = vmax.f32 %v5057, 0.0
    %v5647 = vmax.f32 %v5247, 0.0
    %v5648 = vmax.f32 %v5437, 0.0
    %v5649 = vmax.f32 %v5627, 0.0
    %v5650 = vmax.f32 %v4300, 0.0
    %v5651 = vmax.f32 %v4490, 0.0
    %v5652 = vmax.f32 %v4680, 0.0
    %v5653 = vmax.f32 %v4870, 0.0
    %v5654 = vmax.f32 %v5060, 0.0
    %v5655 = vmax.f32 %v5250, 0.0
    %v5656 = vmax.f32 %v5440, 0.0
    %v5657 = vmax.f32 %v5630, 0.0
    %v5658 = vmax.f32 %v4302, 0.0
    %v5659 = vmax.f32 %v4492, 0.0
    %v5660 = vmax.f32 %v4682, 0.0
    %v5661 = vmax.f32 %v4872, 0.0
    %v5662 = vmax.f32 %v5062, 0.0
    %v5663 = vmax.f32 %v5252, 0.0
    %v5664 = vmax.f32 %v5442, 0.0
    %v5665 = vmax.f32 %v5632, 0.0
    %v5666 = vpack.c.bf16 %v5642, %v5634
    %v5667 = vpack.c.bf16 %v5643, %v5635
    %v5668 = vpack.c.bf16 %v5644, %v5636
    %v5669 = vpack.c.bf16 %v5645, %v5637
    %v5670 = vpack.c.bf16 %v5646, %v5638
    %v5671 = vpack.c.bf16 %v5647, %v5639
    %v5672 = vpack.c.bf16 %v5648, %v5640
    %v5673 = vpack.c.bf16 %v5649, %v5641
    %v5674 = vpack.c.bf16 %v5658, %v5650
    %v5675 = vpack.c.bf16 %v5659, %v5651
    %v5676 = vpack.c.bf16 %v5660, %v5652
    %v5677 = vpack.c.bf16 %v5661, %v5653
    %v5678 = vpack.c.bf16 %v5662, %v5654
    %v5679 = vpack.c.bf16 %v5663, %v5655
    %v5680 = vpack.c.bf16 %v5664, %v5656
    %v5681 = vpack.c.bf16 %v5665, %v5657
    %v5682 = vld [vmem:[#allocation8] sm:$0xff]
    %v5683 = vld [vmem:[#allocation8 + $0x8] sm:$0xff]
    %v5684 = vld [vmem:[#allocation8 + $0x10] sm:$0xff]
    %v5685 = vld [vmem:[#allocation8 + $0x18] sm:$0xff]
    %v5686 = vld [vmem:[#allocation8 + $0x20] sm:$0xff]
    %v5687 = vld [vmem:[#allocation8 + $0x28] sm:$0xff]
    %v5688 = vld [vmem:[#allocation8 + $0x30] sm:$0xff]
    %v5689 = vld [vmem:[#allocation8 + $0x38] sm:$0xff]
    %v5690 = vld [vmem:[#allocation8 + $0x40] sm:$0xff]
    %v5691 = vld [vmem:[#allocation8 + $0x48] sm:$0xff]
    %v5692 = vld [vmem:[#allocation8 + $0x50] sm:$0xff]
    %v5693 = vld [vmem:[#allocation8 + $0x58] sm:$0xff]
    %v5694 = vld [vmem:[#allocation8 + $0x60] sm:$0xff]
    %v5695 = vld [vmem:[#allocation8 + $0x68] sm:$0xff]
    %v5696 = vld [vmem:[#allocation8 + $0x70] sm:$0xff]
    %v5697 = vld [vmem:[#allocation8 + $0x78] sm:$0xff]
    %v5698 = vld [vmem:[#allocation8 + $0x80] sm:$0xff]
    %v5699 = vld [vmem:[#allocation8 + $0x88] sm:$0xff]
    %v5700 = vld [vmem:[#allocation8 + $0x90] sm:$0xff]
    %v5701 = vld [vmem:[#allocation8 + $0x98] sm:$0xff]
    %v5702 = vld [vmem:[#allocation8 + $0xa0] sm:$0xff]
    %v5703 = vld [vmem:[#allocation8 + $0xa8] sm:$0xff]
    %v5704 = vld [vmem:[#allocation8 + $0xb0] sm:$0xff]
    %v5705 = vld [vmem:[#allocation8 + $0xb8] sm:$0xff]
    %v5706 = vld [vmem:[#allocation8 + $0xc0] sm:$0xff]
    %v5707 = vld [vmem:[#allocation8 + $0xc8] sm:$0xff]
    %v5708 = vld [vmem:[#allocation8 + $0xd0] sm:$0xff]
    %v5709 = vld [vmem:[#allocation8 + $0xd8] sm:$0xff]
    %v5710 = vld [vmem:[#allocation8 + $0xe0] sm:$0xff]
    %v5711 = vld [vmem:[#allocation8 + $0xe8] sm:$0xff]
    %v5712 = vld [vmem:[#allocation8 + $0xf0] sm:$0xff]
    %v5713 = vld [vmem:[#allocation8 + $0xf8] sm:$0xff]
    %v5714 = vld [vmem:[#allocation8 + $0x100] sm:$0xff]
    %v5715 = vld [vmem:[#allocation8 + $0x108] sm:$0xff]
    %v5716 = vld [vmem:[#allocation8 + $0x110] sm:$0xff]
    %v5717 = vld [vmem:[#allocation8 + $0x118] sm:$0xff]
    %v5718 = vld [vmem:[#allocation8 + $0x120] sm:$0xff]
    %v5719 = vld [vmem:[#allocation8 + $0x128] sm:$0xff]
    %v5720 = vld [vmem:[#allocation8 + $0x130] sm:$0xff]
    %v5721 = vld [vmem:[#allocation8 + $0x138] sm:$0xff]
    %v5722 = vld [vmem:[#allocation8 + $0x140] sm:$0xff]
    %v5723 = vld [vmem:[#allocation8 + $0x148] sm:$0xff]
    %v5724 = vld [vmem:[#allocation8 + $0x150] sm:$0xff]
    %v5725 = vld [vmem:[#allocation8 + $0x158] sm:$0xff]
    %v5726 = vld [vmem:[#allocation8 + $0x160] sm:$0xff]
    %v5727 = vld [vmem:[#allocation8 + $0x168] sm:$0xff]
    %v5728 = vld [vmem:[#allocation8 + $0x170] sm:$0xff]
    %v5729 = vld [vmem:[#allocation8 + $0x178] sm:$0xff]
    %v5730 = vld [vmem:[#allocation8 + $0x180] sm:$0xff]
    %v5731 = vld [vmem:[#allocation8 + $0x188] sm:$0xff]
    %v5732 = vld [vmem:[#allocation8 + $0x190] sm:$0xff]
    %v5733 = vld [vmem:[#allocation8 + $0x198] sm:$0xff]
    %v5734 = vld [vmem:[#allocation8 + $0x1a0] sm:$0xff]
    %v5735 = vld [vmem:[#allocation8 + $0x1a8] sm:$0xff]
    %v5736 = vld [vmem:[#allocation8 + $0x1b0] sm:$0xff]
    %v5737 = vld [vmem:[#allocation8 + $0x1b8] sm:$0xff]
    %v5738 = vld [vmem:[#allocation8 + $0x1c0] sm:$0xff]
    %v5739 = vld [vmem:[#allocation8 + $0x1c8] sm:$0xff]
    %v5740 = vld [vmem:[#allocation8 + $0x1d0] sm:$0xff]
    %v5741 = vld [vmem:[#allocation8 + $0x1d8] sm:$0xff]
    %v5742 = vld [vmem:[#allocation8 + $0x1e0] sm:$0xff]
    %v5743 = vld [vmem:[#allocation8 + $0x1e8] sm:$0xff]
    %v5744 = vld [vmem:[#allocation8 + $0x1f0] sm:$0xff]
    %v5745 = vld [vmem:[#allocation8 + $0x1f8] sm:$0xff]
    %v5746 = vld [vmem:[#allocation8 + $0x200] sm:$0xff]
    %v5747 = vld [vmem:[#allocation8 + $0x208] sm:$0xff]
    %v5748 = vld [vmem:[#allocation8 + $0x210] sm:$0xff]
    %v5749 = vld [vmem:[#allocation8 + $0x218] sm:$0xff]
    %v5750 = vld [vmem:[#allocation8 + $0x220] sm:$0xff]
    %v5751 = vld [vmem:[#allocation8 + $0x228] sm:$0xff]
    %v5752 = vld [vmem:[#allocation8 + $0x230] sm:$0xff]
    %v5753 = vld [vmem:[#allocation8 + $0x238] sm:$0xff]
    %v5754 = vld [vmem:[#allocation8 + $0x240] sm:$0xff]
    %v5755 = vld [vmem:[#allocation8 + $0x248] sm:$0xff]
    %v5756 = vld [vmem:[#allocation8 + $0x250] sm:$0xff]
    %v5757 = vld [vmem:[#allocation8 + $0x258] sm:$0xff]
    %v5758 = vld [vmem:[#allocation8 + $0x260] sm:$0xff]
    %v5759 = vld [vmem:[#allocation8 + $0x268] sm:$0xff]
    %v5760 = vld [vmem:[#allocation8 + $0x270] sm:$0xff]
    %v5761 = vld [vmem:[#allocation8 + $0x278] sm:$0xff]
    %v5762 = vld [vmem:[#allocation8 + $0x280] sm:$0xff]
    %v5763 = vld [vmem:[#allocation8 + $0x288] sm:$0xff]
    %v5764 = vld [vmem:[#allocation8 + $0x290] sm:$0xff]
    %v5765 = vld [vmem:[#allocation8 + $0x298] sm:$0xff]
    %v5766 = vld [vmem:[#allocation8 + $0x2a0] sm:$0xff]
    %v5767 = vld [vmem:[#allocation8 + $0x2a8] sm:$0xff]
    %v5768 = vld [vmem:[#allocation8 + $0x2b0] sm:$0xff]
    %v5769 = vld [vmem:[#allocation8 + $0x2b8] sm:$0xff]
    %v5770 = vld [vmem:[#allocation8 + $0x2c0] sm:$0xff]
    %v5771 = vld [vmem:[#allocation8 + $0x2c8] sm:$0xff]
    %v5772 = vld [vmem:[#allocation8 + $0x2d0] sm:$0xff]
    %v5773 = vld [vmem:[#allocation8 + $0x2d8] sm:$0xff]
    %v5774 = vld [vmem:[#allocation8 + $0x2e0] sm:$0xff]
    %v5775 = vld [vmem:[#allocation8 + $0x2e8] sm:$0xff]
    %v5776 = vld [vmem:[#allocation8 + $0x2f0] sm:$0xff]
    %v5777 = vld [vmem:[#allocation8 + $0x2f8] sm:$0xff]
    %v5778 = vld [vmem:[#allocation8 + $0x300] sm:$0xff]
    %v5779 = vld [vmem:[#allocation8 + $0x308] sm:$0xff]
    %v5780 = vld [vmem:[#allocation8 + $0x310] sm:$0xff]
    %v5781 = vld [vmem:[#allocation8 + $0x318] sm:$0xff]
    %v5782 = vld [vmem:[#allocation8 + $0x320] sm:$0xff]
    %v5783 = vld [vmem:[#allocation8 + $0x328] sm:$0xff]
    %v5784 = vld [vmem:[#allocation8 + $0x330] sm:$0xff]
    %v5785 = vld [vmem:[#allocation8 + $0x338] sm:$0xff]
    %v5786 = vld [vmem:[#allocation8 + $0x340] sm:$0xff]
    %v5787 = vld [vmem:[#allocation8 + $0x348] sm:$0xff]
    %v5788 = vld [vmem:[#allocation8 + $0x350] sm:$0xff]
    %v5789 = vld [vmem:[#allocation8 + $0x358] sm:$0xff]
    %v5790 = vld [vmem:[#allocation8 + $0x360] sm:$0xff]
    %v5791 = vld [vmem:[#allocation8 + $0x368] sm:$0xff]
    %v5792 = vld [vmem:[#allocation8 + $0x370] sm:$0xff]
    %v5793 = vld [vmem:[#allocation8 + $0x378] sm:$0xff]
    %v5794 = vld [vmem:[#allocation8 + $0x380] sm:$0xff]
    %v5795 = vld [vmem:[#allocation8 + $0x388] sm:$0xff]
    %v5796 = vld [vmem:[#allocation8 + $0x390] sm:$0xff]
    %v5797 = vld [vmem:[#allocation8 + $0x398] sm:$0xff]
    %v5798 = vld [vmem:[#allocation8 + $0x3a0] sm:$0xff]
    %v5799 = vld [vmem:[#allocation8 + $0x3a8] sm:$0xff]
    %v5800 = vld [vmem:[#allocation8 + $0x3b0] sm:$0xff]
    %v5801 = vld [vmem:[#allocation8 + $0x3b8] sm:$0xff]
    %v5802 = vld [vmem:[#allocation8 + $0x3c0] sm:$0xff]
    %v5803 = vld [vmem:[#allocation8 + $0x3c8] sm:$0xff]
    %v5804 = vld [vmem:[#allocation8 + $0x3d0] sm:$0xff]
    %v5805 = vld [vmem:[#allocation8 + $0x3d8] sm:$0xff]
    %v5806 = vld [vmem:[#allocation8 + $0x3e0] sm:$0xff]
    %v5807 = vld [vmem:[#allocation8 + $0x3e8] sm:$0xff]
    %v5808 = vld [vmem:[#allocation8 + $0x3f0] sm:$0xff]
    %v5809 = vld [vmem:[#allocation8 + $0x3f8] sm:$0xff]
    %v5810 = vld [vmem:[#allocation8 + $0x400] sm:$0xff]
    %v5811 = vld [vmem:[#allocation8 + $0x408] sm:$0xff]
    %v5812 = vld [vmem:[#allocation8 + $0x410] sm:$0xff]
    %v5813 = vld [vmem:[#allocation8 + $0x418] sm:$0xff]
    %v5814 = vld [vmem:[#allocation8 + $0x420] sm:$0xff]
    %v5815 = vld [vmem:[#allocation8 + $0x428] sm:$0xff]
    %v5816 = vld [vmem:[#allocation8 + $0x430] sm:$0xff]
    %v5817 = vld [vmem:[#allocation8 + $0x438] sm:$0xff]
    %v5818 = vld [vmem:[#allocation8 + $0x440] sm:$0xff]
    %v5819 = vld [vmem:[#allocation8 + $0x448] sm:$0xff]
    %v5820 = vld [vmem:[#allocation8 + $0x450] sm:$0xff]
    %v5821 = vld [vmem:[#allocation8 + $0x458] sm:$0xff]
    %v5822 = vld [vmem:[#allocation8 + $0x460] sm:$0xff]
    %v5823 = vld [vmem:[#allocation8 + $0x468] sm:$0xff]
    %v5824 = vld [vmem:[#allocation8 + $0x470] sm:$0xff]
    %v5825 = vld [vmem:[#allocation8 + $0x478] sm:$0xff]
    %v5826 = vld [vmem:[#allocation8 + $0x480] sm:$0xff]
    %v5827 = vld [vmem:[#allocation8 + $0x488] sm:$0xff]
    %v5828 = vld [vmem:[#allocation8 + $0x490] sm:$0xff]
    %v5829 = vld [vmem:[#allocation8 + $0x498] sm:$0xff]
    %v5830 = vld [vmem:[#allocation8 + $0x4a0] sm:$0xff]
    %v5831 = vld [vmem:[#allocation8 + $0x4a8] sm:$0xff]
    %v5832 = vld [vmem:[#allocation8 + $0x4b0] sm:$0xff]
    %v5833 = vld [vmem:[#allocation8 + $0x4b8] sm:$0xff]
    %v5834 = vld [vmem:[#allocation8 + $0x4c0] sm:$0xff]
    %v5835 = vld [vmem:[#allocation8 + $0x4c8] sm:$0xff]
    %v5836 = vld [vmem:[#allocation8 + $0x4d0] sm:$0xff]
    %v5837 = vld [vmem:[#allocation8 + $0x4d8] sm:$0xff]
    %v5838 = vld [vmem:[#allocation8 + $0x4e0] sm:$0xff]
    %v5839 = vld [vmem:[#allocation8 + $0x4e8] sm:$0xff]
    %v5840 = vld [vmem:[#allocation8 + $0x4f0] sm:$0xff]
    %v5841 = vld [vmem:[#allocation8 + $0x4f8] sm:$0xff]
    %v5842 = vld [vmem:[#allocation8 + $0x500] sm:$0xff]
    %v5843 = vld [vmem:[#allocation8 + $0x508] sm:$0xff]
    %v5844 = vld [vmem:[#allocation8 + $0x510] sm:$0xff]
    %v5845 = vld [vmem:[#allocation8 + $0x518] sm:$0xff]
    %v5846 = vld [vmem:[#allocation8 + $0x520] sm:$0xff]
    %v5847 = vld [vmem:[#allocation8 + $0x528] sm:$0xff]
    %v5848 = vld [vmem:[#allocation8 + $0x530] sm:$0xff]
    %v5849 = vld [vmem:[#allocation8 + $0x538] sm:$0xff]
    %v5850 = vld [vmem:[#allocation8 + $0x540] sm:$0xff]
    %v5851 = vld [vmem:[#allocation8 + $0x548] sm:$0xff]
    %v5852 = vld [vmem:[#allocation8 + $0x550] sm:$0xff]
    %v5853 = vld [vmem:[#allocation8 + $0x558] sm:$0xff]
    %v5854 = vld [vmem:[#allocation8 + $0x560] sm:$0xff]
    %v5855 = vld [vmem:[#allocation8 + $0x568] sm:$0xff]
    %v5856 = vld [vmem:[#allocation8 + $0x570] sm:$0xff]
    %v5857 = vld [vmem:[#allocation8 + $0x578] sm:$0xff]
    %v5858 = vld [vmem:[#allocation8 + $0x580] sm:$0xff]
    %v5859 = vld [vmem:[#allocation8 + $0x588] sm:$0xff]
    %v5860 = vld [vmem:[#allocation8 + $0x590] sm:$0xff]
    %v5861 = vld [vmem:[#allocation8 + $0x598] sm:$0xff]
    %v5862 = vld [vmem:[#allocation8 + $0x5a0] sm:$0xff]
    %v5863 = vld [vmem:[#allocation8 + $0x5a8] sm:$0xff]
    %v5864 = vld [vmem:[#allocation8 + $0x5b0] sm:$0xff]
    %v5865 = vld [vmem:[#allocation8 + $0x5b8] sm:$0xff]
    %v5866 = vld [vmem:[#allocation8 + $0x5c0] sm:$0xff]
    %v5867 = vld [vmem:[#allocation8 + $0x5c8] sm:$0xff]
    %v5868 = vld [vmem:[#allocation8 + $0x5d0] sm:$0xff]
    %v5869 = vld [vmem:[#allocation8 + $0x5d8] sm:$0xff]
    %v5870 = vld [vmem:[#allocation8 + $0x5e0] sm:$0xff]
    %v5871 = vld [vmem:[#allocation8 + $0x5e8] sm:$0xff]
    %v5872 = vld [vmem:[#allocation8 + $0x5f0] sm:$0xff]
    %v5873 = vld [vmem:[#allocation8 + $0x5f8] sm:$0xff]
    %v5874 = vld [vmem:[#allocation8 + $0x600] sm:$0xff]
    %v5875 = vld [vmem:[#allocation8 + $0x608] sm:$0xff]
    %v5876 = vld [vmem:[#allocation8 + $0x610] sm:$0xff]
    %v5877 = vld [vmem:[#allocation8 + $0x618] sm:$0xff]
    %v5878 = vld [vmem:[#allocation8 + $0x620] sm:$0xff]
    %v5879 = vld [vmem:[#allocation8 + $0x628] sm:$0xff]
    %v5880 = vld [vmem:[#allocation8 + $0x630] sm:$0xff]
    %v5881 = vld [vmem:[#allocation8 + $0x638] sm:$0xff]
    %v5882 = vld [vmem:[#allocation8 + $0x640] sm:$0xff]
    %v5883 = vld [vmem:[#allocation8 + $0x648] sm:$0xff]
    %v5884 = vld [vmem:[#allocation8 + $0x650] sm:$0xff]
    %v5885 = vld [vmem:[#allocation8 + $0x658] sm:$0xff]
    %v5886 = vld [vmem:[#allocation8 + $0x660] sm:$0xff]
    %v5887 = vld [vmem:[#allocation8 + $0x668] sm:$0xff]
    %v5888 = vld [vmem:[#allocation8 + $0x670] sm:$0xff]
    %v5889 = vld [vmem:[#allocation8 + $0x678] sm:$0xff]
    %v5890 = vld [vmem:[#allocation8 + $0x680] sm:$0xff]
    %v5891 = vld [vmem:[#allocation8 + $0x688] sm:$0xff]
    %v5892 = vld [vmem:[#allocation8 + $0x690] sm:$0xff]
    %v5893 = vld [vmem:[#allocation8 + $0x698] sm:$0xff]
    %v5894 = vld [vmem:[#allocation8 + $0x6a0] sm:$0xff]
    %v5895 = vld [vmem:[#allocation8 + $0x6a8] sm:$0xff]
    %v5896 = vld [vmem:[#allocation8 + $0x6b0] sm:$0xff]
    %v5897 = vld [vmem:[#allocation8 + $0x6b8] sm:$0xff]
    %v5898 = vld [vmem:[#allocation8 + $0x6c0] sm:$0xff]
    %v5899 = vld [vmem:[#allocation8 + $0x6c8] sm:$0xff]
    %v5900 = vld [vmem:[#allocation8 + $0x6d0] sm:$0xff]
    %v5901 = vld [vmem:[#allocation8 + $0x6d8] sm:$0xff]
    %v5902 = vld [vmem:[#allocation8 + $0x6e0] sm:$0xff]
    %v5903 = vld [vmem:[#allocation8 + $0x6e8] sm:$0xff]
    %v5904 = vld [vmem:[#allocation8 + $0x6f0] sm:$0xff]
    %v5905 = vld [vmem:[#allocation8 + $0x6f8] sm:$0xff]
    %v5906 = vld [vmem:[#allocation8 + $0x700] sm:$0xff]
    %v5907 = vld [vmem:[#allocation8 + $0x708] sm:$0xff]
    %v5908 = vld [vmem:[#allocation8 + $0x710] sm:$0xff]
    %v5909 = vld [vmem:[#allocation8 + $0x718] sm:$0xff]
    %v5910 = vld [vmem:[#allocation8 + $0x720] sm:$0xff]
    %v5911 = vld [vmem:[#allocation8 + $0x728] sm:$0xff]
    %v5912 = vld [vmem:[#allocation8 + $0x730] sm:$0xff]
    %v5913 = vld [vmem:[#allocation8 + $0x738] sm:$0xff]
    %v5914 = vld [vmem:[#allocation8 + $0x740] sm:$0xff]
    %v5915 = vld [vmem:[#allocation8 + $0x748] sm:$0xff]
    %v5916 = vld [vmem:[#allocation8 + $0x750] sm:$0xff]
    %v5917 = vld [vmem:[#allocation8 + $0x758] sm:$0xff]
    %v5918 = vld [vmem:[#allocation8 + $0x760] sm:$0xff]
    %v5919 = vld [vmem:[#allocation8 + $0x768] sm:$0xff]
    %v5920 = vld [vmem:[#allocation8 + $0x770] sm:$0xff]
    %v5921 = vld [vmem:[#allocation8 + $0x778] sm:$0xff]
    %v5922 = vld [vmem:[#allocation8 + $0x780] sm:$0xff]
    %v5923 = vld [vmem:[#allocation8 + $0x788] sm:$0xff]
    %v5924 = vld [vmem:[#allocation8 + $0x790] sm:$0xff]
    %v5925 = vld [vmem:[#allocation8 + $0x798] sm:$0xff]
    %v5926 = vld [vmem:[#allocation8 + $0x7a0] sm:$0xff]
    %v5927 = vld [vmem:[#allocation8 + $0x7a8] sm:$0xff]
    %v5928 = vld [vmem:[#allocation8 + $0x7b0] sm:$0xff]
    %v5929 = vld [vmem:[#allocation8 + $0x7b8] sm:$0xff]
    %v5930 = vld [vmem:[#allocation8 + $0x7c0] sm:$0xff]
    %v5931 = vld [vmem:[#allocation8 + $0x7c8] sm:$0xff]
    %v5932 = vld [vmem:[#allocation8 + $0x7d0] sm:$0xff]
    %v5933 = vld [vmem:[#allocation8 + $0x7d8] sm:$0xff]
    %v5934 = vld [vmem:[#allocation8 + $0x7e0] sm:$0xff]
    %v5935 = vld [vmem:[#allocation8 + $0x7e8] sm:$0xff]
    %v5936 = vld [vmem:[#allocation8 + $0x7f0] sm:$0xff]
    %v5937 = vld [vmem:[#allocation8 + $0x7f8] sm:$0xff]
    %v5938 = vld [vmem:[#allocation9] sm:$0xf]
    %v5940 = vperm.slane %v5938, 0
    %v5941 = vperm.slane %v5938, 1
    %v5942 = vperm.slane %v5938, 2
    %v5943 = vperm.slane %v5938, 3
    %v6204 = vunpack.c.l.b16 %v5682
    %v6205 = vunpack.c.h.b16 %v5682
    %v6206 = vunpack.c.l.b16 %v5683
    %v6207 = vunpack.c.h.b16 %v5683
    %v6208 = vunpack.c.l.b16 %v5684
    %v6209 = vunpack.c.h.b16 %v5684
    %v6210 = vunpack.c.l.b16 %v5685
    %v6211 = vunpack.c.h.b16 %v5685
    %v6212 = vunpack.c.l.b16 %v5686
    %v6213 = vunpack.c.h.b16 %v5686
    %v6214 = vunpack.c.l.b16 %v5687
    %v6215 = vunpack.c.h.b16 %v5687
    %v6216 = vunpack.c.l.b16 %v5688
    %v6217 = vunpack.c.h.b16 %v5688
    %v6218 = vunpack.c.l.b16 %v5689
    %v6219 = vunpack.c.h.b16 %v5689
    %v6220 = vunpack.c.l.b16 %v5690
    %v6221 = vunpack.c.h.b16 %v5690
    %v6222 = vunpack.c.l.b16 %v5691
    %v6223 = vunpack.c.h.b16 %v5691
    %v6224 = vunpack.c.l.b16 %v5692
    %v6225 = vunpack.c.h.b16 %v5692
    %v6226 = vunpack.c.l.b16 %v5693
    %v6227 = vunpack.c.h.b16 %v5693
    %v6228 = vunpack.c.l.b16 %v5694
    %v6229 = vunpack.c.h.b16 %v5694
    %v6230 = vunpack.c.l.b16 %v5695
    %v6231 = vunpack.c.h.b16 %v5695
    %v6232 = vunpack.c.l.b16 %v5696
    %v6233 = vunpack.c.h.b16 %v5696
    %v6234 = vunpack.c.l.b16 %v5697
    %v6235 = vunpack.c.h.b16 %v5697
    %v6236 = vunpack.c.l.b16 %v5698
    %v6237 = vunpack.c.h.b16 %v5698
    %v6238 = vunpack.c.l.b16 %v5699
    %v6239 = vunpack.c.h.b16 %v5699
    %v6240 = vunpack.c.l.b16 %v5700
    %v6241 = vunpack.c.h.b16 %v5700
    %v6242 = vunpack.c.l.b16 %v5701
    %v6243 = vunpack.c.h.b16 %v5701
    %v6244 = vunpack.c.l.b16 %v5702
    %v6245 = vunpack.c.h.b16 %v5702
    %v6246 = vunpack.c.l.b16 %v5703
    %v6247 = vunpack.c.h.b16 %v5703
    %v6248 = vunpack.c.l.b16 %v5704
    %v6249 = vunpack.c.h.b16 %v5704
    %v6250 = vunpack.c.l.b16 %v5705
    %v6251 = vunpack.c.h.b16 %v5705
    %v6252 = vunpack.c.l.b16 %v5706
    %v6253 = vunpack.c.h.b16 %v5706
    %v6254 = vunpack.c.l.b16 %v5707
    %v6255 = vunpack.c.h.b16 %v5707
    %v6256 = vunpack.c.l.b16 %v5708
    %v6257 = vunpack.c.h.b16 %v5708
    %v6258 = vunpack.c.l.b16 %v5709
    %v6259 = vunpack.c.h.b16 %v5709
    %v6260 = vunpack.c.l.b16 %v5710
    %v6261 = vunpack.c.h.b16 %v5710
    %v6262 = vunpack.c.l.b16 %v5711
    %v6263 = vunpack.c.h.b16 %v5711
    %v6264 = vunpack.c.l.b16 %v5712
    %v6265 = vunpack.c.h.b16 %v5712
    %v6266 = vunpack.c.l.b16 %v5713
    %v6267 = vunpack.c.h.b16 %v5713
    %v6268 = vunpack.c.l.b16 %v5714
    %v6269 = vunpack.c.h.b16 %v5714
    %v6270 = vunpack.c.l.b16 %v5715
    %v6271 = vunpack.c.h.b16 %v5715
    %v6272 = vunpack.c.l.b16 %v5716
    %v6273 = vunpack.c.h.b16 %v5716
    %v6274 = vunpack.c.l.b16 %v5717
    %v6275 = vunpack.c.h.b16 %v5717
    %v6276 = vunpack.c.l.b16 %v5718
    %v6277 = vunpack.c.h.b16 %v5718
    %v6278 = vunpack.c.l.b16 %v5719
    %v6279 = vunpack.c.h.b16 %v5719
    %v6280 = vunpack.c.l.b16 %v5720
    %v6281 = vunpack.c.h.b16 %v5720
    %v6282 = vunpack.c.l.b16 %v5721
    %v6283 = vunpack.c.h.b16 %v5721
    %v6284 = vunpack.c.l.b16 %v5722
    %v6285 = vunpack.c.h.b16 %v5722
    %v6286 = vunpack.c.l.b16 %v5723
    %v6287 = vunpack.c.h.b16 %v5723
    %v6288 = vunpack.c.l.b16 %v5724
    %v6289 = vunpack.c.h.b16 %v5724
    %v6290 = vunpack.c.l.b16 %v5725
    %v6291 = vunpack.c.h.b16 %v5725
    %v6292 = vunpack.c.l.b16 %v5726
    %v6293 = vunpack.c.h.b16 %v5726
    %v6294 = vunpack.c.l.b16 %v5727
    %v6295 = vunpack.c.h.b16 %v5727
    %v6296 = vunpack.c.l.b16 %v5728
    %v6297 = vunpack.c.h.b16 %v5728
    %v6298 = vunpack.c.l.b16 %v5729
    %v6299 = vunpack.c.h.b16 %v5729
    %v6300 = vunpack.c.l.b16 %v5730
    %v6301 = vunpack.c.h.b16 %v5730
    %v6302 = vunpack.c.l.b16 %v5731
    %v6303 = vunpack.c.h.b16 %v5731
    %v6304 = vunpack.c.l.b16 %v5732
    %v6305 = vunpack.c.h.b16 %v5732
    %v6306 = vunpack.c.l.b16 %v5733
    %v6307 = vunpack.c.h.b16 %v5733
    %v6308 = vunpack.c.l.b16 %v5734
    %v6309 = vunpack.c.h.b16 %v5734
    %v6310 = vunpack.c.l.b16 %v5735
    %v6311 = vunpack.c.h.b16 %v5735
    %v6312 = vunpack.c.l.b16 %v5736
    %v6313 = vunpack.c.h.b16 %v5736
    %v6314 = vunpack.c.l.b16 %v5737
    %v6315 = vunpack.c.h.b16 %v5737
    %v6316 = vunpack.c.l.b16 %v5738
    %v6317 = vunpack.c.h.b16 %v5738
    %v6318 = vunpack.c.l.b16 %v5739
    %v6319 = vunpack.c.h.b16 %v5739
    %v6320 = vunpack.c.l.b16 %v5740
    %v6321 = vunpack.c.h.b16 %v5740
    %v6322 = vunpack.c.l.b16 %v5741
    %v6323 = vunpack.c.h.b16 %v5741
    %v6324 = vunpack.c.l.b16 %v5742
    %v6325 = vunpack.c.h.b16 %v5742
    %v6326 = vunpack.c.l.b16 %v5743
    %v6327 = vunpack.c.h.b16 %v5743
    %v6328 = vunpack.c.l.b16 %v5744
    %v6329 = vunpack.c.h.b16 %v5744
    %v6330 = vunpack.c.l.b16 %v5745
    %v6331 = vunpack.c.h.b16 %v5745
    %v6332 = vunpack.c.l.b16 %v5746
    %v6333 = vunpack.c.h.b16 %v5746
    %v6334 = vunpack.c.l.b16 %v5747
    %v6335 = vunpack.c.h.b16 %v5747
    %v6336 = vunpack.c.l.b16 %v5748
    %v6337 = vunpack.c.h.b16 %v5748
    %v6338 = vunpack.c.l.b16 %v5749
    %v6339 = vunpack.c.h.b16 %v5749
    %v6340 = vunpack.c.l.b16 %v5750
    %v6341 = vunpack.c.h.b16 %v5750
    %v6342 = vunpack.c.l.b16 %v5751
    %v6343 = vunpack.c.h.b16 %v5751
    %v6344 = vunpack.c.l.b16 %v5752
    %v6345 = vunpack.c.h.b16 %v5752
    %v6346 = vunpack.c.l.b16 %v5753
    %v6347 = vunpack.c.h.b16 %v5753
    %v6348 = vunpack.c.l.b16 %v5754
    %v6349 = vunpack.c.h.b16 %v5754
    %v6350 = vunpack.c.l.b16 %v5755
    %v6351 = vunpack.c.h.b16 %v5755
    %v6352 = vunpack.c.l.b16 %v5756
    %v6353 = vunpack.c.h.b16 %v5756
    %v6354 = vunpack.c.l.b16 %v5757
    %v6355 = vunpack.c.h.b16 %v5757
    %v6356 = vunpack.c.l.b16 %v5758
    %v6357 = vunpack.c.h.b16 %v5758
    %v6358 = vunpack.c.l.b16 %v5759
    %v6359 = vunpack.c.h.b16 %v5759
    %v6360 = vunpack.c.l.b16 %v5760
    %v6361 = vunpack.c.h.b16 %v5760
    %v6362 = vunpack.c.l.b16 %v5761
    %v6363 = vunpack.c.h.b16 %v5761
    %v6364 = vunpack.c.l.b16 %v5762
    %v6365 = vunpack.c.h.b16 %v5762
    %v6366 = vunpack.c.l.b16 %v5763
    %v6367 = vunpack.c.h.b16 %v5763
    %v6368 = vunpack.c.l.b16 %v5764
    %v6369 = vunpack.c.h.b16 %v5764
    %v6370 = vunpack.c.l.b16 %v5765
    %v6371 = vunpack.c.h.b16 %v5765
    %v6372 = vunpack.c.l.b16 %v5766
    %v6373 = vunpack.c.h.b16 %v5766
    %v6374 = vunpack.c.l.b16 %v5767
    %v6375 = vunpack.c.h.b16 %v5767
    %v6376 = vunpack.c.l.b16 %v5768
    %v6377 = vunpack.c.h.b16 %v5768
    %v6378 = vunpack.c.l.b16 %v5769
    %v6379 = vunpack.c.h.b16 %v5769
    %v6380 = vunpack.c.l.b16 %v5770
    %v6381 = vunpack.c.h.b16 %v5770
    %v6382 = vunpack.c.l.b16 %v5771
    %v6383 = vunpack.c.h.b16 %v5771
    %v6384 = vunpack.c.l.b16 %v5772
    %v6385 = vunpack.c.h.b16 %v5772
    %v6386 = vunpack.c.l.b16 %v5773
    %v6387 = vunpack.c.h.b16 %v5773
    %v6388 = vunpack.c.l.b16 %v5774
    %v6389 = vunpack.c.h.b16 %v5774
    %v6390 = vunpack.c.l.b16 %v5775
    %v6391 = vunpack.c.h.b16 %v5775
    %v6392 = vunpack.c.l.b16 %v5776
    %v6393 = vunpack.c.h.b16 %v5776
    %v6394 = vunpack.c.l.b16 %v5777
    %v6395 = vunpack.c.h.b16 %v5777
    %v6396 = vunpack.c.l.b16 %v5778
    %v6397 = vunpack.c.h.b16 %v5778
    %v6398 = vunpack.c.l.b16 %v5779
    %v6399 = vunpack.c.h.b16 %v5779
    %v6400 = vunpack.c.l.b16 %v5780
    %v6401 = vunpack.c.h.b16 %v5780
    %v6402 = vunpack.c.l.b16 %v5781
    %v6403 = vunpack.c.h.b16 %v5781
    %v6404 = vunpack.c.l.b16 %v5782
    %v6405 = vunpack.c.h.b16 %v5782
    %v6406 = vunpack.c.l.b16 %v5783
    %v6407 = vunpack.c.h.b16 %v5783
    %v6408 = vunpack.c.l.b16 %v5784
    %v6409 = vunpack.c.h.b16 %v5784
    %v6410 = vunpack.c.l.b16 %v5785
    %v6411 = vunpack.c.h.b16 %v5785
    %v6412 = vunpack.c.l.b16 %v5786
    %v6413 = vunpack.c.h.b16 %v5786
    %v6414 = vunpack.c.l.b16 %v5787
    %v6415 = vunpack.c.h.b16 %v5787
    %v6416 = vunpack.c.l.b16 %v5788
    %v6417 = vunpack.c.h.b16 %v5788
    %v6418 = vunpack.c.l.b16 %v5789
    %v6419 = vunpack.c.h.b16 %v5789
    %v6420 = vunpack.c.l.b16 %v5790
    %v6421 = vunpack.c.h.b16 %v5790
    %v6422 = vunpack.c.l.b16 %v5791
    %v6423 = vunpack.c.h.b16 %v5791
    %v6424 = vunpack.c.l.b16 %v5792
    %v6425 = vunpack.c.h.b16 %v5792
    %v6426 = vunpack.c.l.b16 %v5793
    %v6427 = vunpack.c.h.b16 %v5793
    %v6428 = vunpack.c.l.b16 %v5794
    %v6429 = vunpack.c.h.b16 %v5794
    %v6430 = vunpack.c.l.b16 %v5795
    %v6431 = vunpack.c.h.b16 %v5795
    %v6432 = vunpack.c.l.b16 %v5796
    %v6433 = vunpack.c.h.b16 %v5796
    %v6434 = vunpack.c.l.b16 %v5797
    %v6435 = vunpack.c.h.b16 %v5797
    %v6436 = vunpack.c.l.b16 %v5798
    %v6437 = vunpack.c.h.b16 %v5798
    %v6438 = vunpack.c.l.b16 %v5799
    %v6439 = vunpack.c.h.b16 %v5799
    %v6440 = vunpack.c.l.b16 %v5800
    %v6441 = vunpack.c.h.b16 %v5800
    %v6442 = vunpack.c.l.b16 %v5801
    %v6443 = vunpack.c.h.b16 %v5801
    %v6444 = vunpack.c.l.b16 %v5802
    %v6445 = vunpack.c.h.b16 %v5802
    %v6446 = vunpack.c.l.b16 %v5803
    %v6447 = vunpack.c.h.b16 %v5803
    %v6448 = vunpack.c.l.b16 %v5804
    %v6449 = vunpack.c.h.b16 %v5804
    %v6450 = vunpack.c.l.b16 %v5805
    %v6451 = vunpack.c.h.b16 %v5805
    %v6452 = vunpack.c.l.b16 %v5806
    %v6453 = vunpack.c.h.b16 %v5806
    %v6454 = vunpack.c.l.b16 %v5807
    %v6455 = vunpack.c.h.b16 %v5807
    %v6456 = vunpack.c.l.b16 %v5808
    %v6457 = vunpack.c.h.b16 %v5808
    %v6458 = vunpack.c.l.b16 %v5809
    %v6459 = vunpack.c.h.b16 %v5809
    %v6460 = vunpack.c.l.b16 %v5810
    %v6461 = vunpack.c.h.b16 %v5810
    %v6462 = vunpack.c.l.b16 %v5811
    %v6463 = vunpack.c.h.b16 %v5811
    %v6464 = vunpack.c.l.b16 %v5812
    %v6465 = vunpack.c.h.b16 %v5812
    %v6466 = vunpack.c.l.b16 %v5813
    %v6467 = vunpack.c.h.b16 %v5813
    %v6468 = vunpack.c.l.b16 %v5814
    %v6469 = vunpack.c.h.b16 %v5814
    %v6470 = vunpack.c.l.b16 %v5815
    %v6471 = vunpack.c.h.b16 %v5815
    %v6472 = vunpack.c.l.b16 %v5816
    %v6473 = vunpack.c.h.b16 %v5816
    %v6474 = vunpack.c.l.b16 %v5817
    %v6475 = vunpack.c.h.b16 %v5817
    %v6476 = vunpack.c.l.b16 %v5818
    %v6477 = vunpack.c.h.b16 %v5818
    %v6478 = vunpack.c.l.b16 %v5819
    %v6479 = vunpack.c.h.b16 %v5819
    %v6480 = vunpack.c.l.b16 %v5820
    %v6481 = vunpack.c.h.b16 %v5820
    %v6482 = vunpack.c.l.b16 %v5821
    %v6483 = vunpack.c.h.b16 %v5821
    %v6484 = vunpack.c.l.b16 %v5822
    %v6485 = vunpack.c.h.b16 %v5822
    %v6486 = vunpack.c.l.b16 %v5823
    %v6487 = vunpack.c.h.b16 %v5823
    %v6488 = vunpack.c.l.b16 %v5824
    %v6489 = vunpack.c.h.b16 %v5824
    %v6490 = vunpack.c.l.b16 %v5825
    %v6491 = vunpack.c.h.b16 %v5825
    %v6492 = vunpack.c.l.b16 %v5826
    %v6493 = vunpack.c.h.b16 %v5826
    %v6494 = vunpack.c.l.b16 %v5827
    %v6495 = vunpack.c.h.b16 %v5827
    %v6496 = vunpack.c.l.b16 %v5828
    %v6497 = vunpack.c.h.b16 %v5828
    %v6498 = vunpack.c.l.b16 %v5829
    %v6499 = vunpack.c.h.b16 %v5829
    %v6500 = vunpack.c.l.b16 %v5830
    %v6501 = vunpack.c.h.b16 %v5830
    %v6502 = vunpack.c.l.b16 %v5831
    %v6503 = vunpack.c.h.b16 %v5831
    %v6504 = vunpack.c.l.b16 %v5832
    %v6505 = vunpack.c.h.b16 %v5832
    %v6506 = vunpack.c.l.b16 %v5833
    %v6507 = vunpack.c.h.b16 %v5833
    %v6508 = vunpack.c.l.b16 %v5834
    %v6509 = vunpack.c.h.b16 %v5834
    %v6510 = vunpack.c.l.b16 %v5835
    %v6511 = vunpack.c.h.b16 %v5835
    %v6512 = vunpack.c.l.b16 %v5836
    %v6513 = vunpack.c.h.b16 %v5836
    %v6514 = vunpack.c.l.b16 %v5837
    %v6515 = vunpack.c.h.b16 %v5837
    %v6516 = vunpack.c.l.b16 %v5838
    %v6517 = vunpack.c.h.b16 %v5838
    %v6518 = vunpack.c.l.b16 %v5839
    %v6519 = vunpack.c.h.b16 %v5839
    %v6520 = vunpack.c.l.b16 %v5840
    %v6521 = vunpack.c.h.b16 %v5840
    %v6522 = vunpack.c.l.b16 %v5841
    %v6523 = vunpack.c.h.b16 %v5841
    %v6524 = vunpack.c.l.b16 %v5842
    %v6525 = vunpack.c.h.b16 %v5842
    %v6526 = vunpack.c.l.b16 %v5843
    %v6527 = vunpack.c.h.b16 %v5843
    %v6528 = vunpack.c.l.b16 %v5844
    %v6529 = vunpack.c.h.b16 %v5844
    %v6530 = vunpack.c.l.b16 %v5845
    %v6531 = vunpack.c.h.b16 %v5845
    %v6532 = vunpack.c.l.b16 %v5846
    %v6533 = vunpack.c.h.b16 %v5846
    %v6534 = vunpack.c.l.b16 %v5847
    %v6535 = vunpack.c.h.b16 %v5847
    %v6536 = vunpack.c.l.b16 %v5848
    %v6537 = vunpack.c.h.b16 %v5848
    %v6538 = vunpack.c.l.b16 %v5849
    %v6539 = vunpack.c.h.b16 %v5849
    %v6540 = vunpack.c.l.b16 %v5850
    %v6541 = vunpack.c.h.b16 %v5850
    %v6542 = vunpack.c.l.b16 %v5851
    %v6543 = vunpack.c.h.b16 %v5851
    %v6544 = vunpack.c.l.b16 %v5852
    %v6545 = vunpack.c.h.b16 %v5852
    %v6546 = vunpack.c.l.b16 %v5853
    %v6547 = vunpack.c.h.b16 %v5853
    %v6548 = vunpack.c.l.b16 %v5854
    %v6549 = vunpack.c.h.b16 %v5854
    %v6550 = vunpack.c.l.b16 %v5855
    %v6551 = vunpack.c.h.b16 %v5855
    %v6552 = vunpack.c.l.b16 %v5856
    %v6553 = vunpack.c.h.b16 %v5856
    %v6554 = vunpack.c.l.b16 %v5857
    %v6555 = vunpack.c.h.b16 %v5857
    %v6556 = vunpack.c.l.b16 %v5858
    %v6557 = vunpack.c.h.b16 %v5858
    %v6558 = vunpack.c.l.b16 %v5859
    %v6559 = vunpack.c.h.b16 %v5859
    %v6560 = vunpack.c.l.b16 %v5860
    %v6561 = vunpack.c.h.b16 %v5860
    %v6562 = vunpack.c.l.b16 %v5861
    %v6563 = vunpack.c.h.b16 %v5861
    %v6564 = vunpack.c.l.b16 %v5862
    %v6565 = vunpack.c.h.b16 %v5862
    %v6566 = vunpack.c.l.b16 %v5863
    %v6567 = vunpack.c.h.b16 %v5863
    %v6568 = vunpack.c.l.b16 %v5864
    %v6569 = vunpack.c.h.b16 %v5864
    %v6570 = vunpack.c.l.b16 %v5865
    %v6571 = vunpack.c.h.b16 %v5865
    %v6572 = vunpack.c.l.b16 %v5866
    %v6573 = vunpack.c.h.b16 %v5866
    %v6574 = vunpack.c.l.b16 %v5867
    %v6575 = vunpack.c.h.b16 %v5867
    %v6576 = vunpack.c.l.b16 %v5868
    %v6577 = vunpack.c.h.b16 %v5868
    %v6578 = vunpack.c.l.b16 %v5869
    %v6579 = vunpack.c.h.b16 %v5869
    %v6580 = vunpack.c.l.b16 %v5870
    %v6581 = vunpack.c.h.b16 %v5870
    %v6582 = vunpack.c.l.b16 %v5871
    %v6583 = vunpack.c.h.b16 %v5871
    %v6584 = vunpack.c.l.b16 %v5872
    %v6585 = vunpack.c.h.b16 %v5872
    %v6586 = vunpack.c.l.b16 %v5873
    %v6587 = vunpack.c.h.b16 %v5873
    %v6588 = vunpack.c.l.b16 %v5874
    %v6589 = vunpack.c.h.b16 %v5874
    %v6590 = vunpack.c.l.b16 %v5875
    %v6591 = vunpack.c.h.b16 %v5875
    %v6592 = vunpack.c.l.b16 %v5876
    %v6593 = vunpack.c.h.b16 %v5876
    %v6594 = vunpack.c.l.b16 %v5877
    %v6595 = vunpack.c.h.b16 %v5877
    %v6596 = vunpack.c.l.b16 %v5878
    %v6597 = vunpack.c.h.b16 %v5878
    %v6598 = vunpack.c.l.b16 %v5879
    %v6599 = vunpack.c.h.b16 %v5879
    %v6600 = vunpack.c.l.b16 %v5880
    %v6601 = vunpack.c.h.b16 %v5880
    %v6602 = vunpack.c.l.b16 %v5881
    %v6603 = vunpack.c.h.b16 %v5881
    %v6604 = vunpack.c.l.b16 %v5882
    %v6605 = vunpack.c.h.b16 %v5882
    %v6606 = vunpack.c.l.b16 %v5883
    %v6607 = vunpack.c.h.b16 %v5883
    %v6608 = vunpack.c.l.b16 %v5884
    %v6609 = vunpack.c.h.b16 %v5884
    %v6610 = vunpack.c.l.b16 %v5885
    %v6611 = vunpack.c.h.b16 %v5885
    %v6612 = vunpack.c.l.b16 %v5886
    %v6613 = vunpack.c.h.b16 %v5886
    %v6614 = vunpack.c.l.b16 %v5887
    %v6615 = vunpack.c.h.b16 %v5887
    %v6616 = vunpack.c.l.b16 %v5888
    %v6617 = vunpack.c.h.b16 %v5888
    %v6618 = vunpack.c.l.b16 %v5889
    %v6619 = vunpack.c.h.b16 %v5889
    %v6620 = vunpack.c.l.b16 %v5890
    %v6621 = vunpack.c.h.b16 %v5890
    %v6622 = vunpack.c.l.b16 %v5891
    %v6623 = vunpack.c.h.b16 %v5891
    %v6624 = vunpack.c.l.b16 %v5892
    %v6625 = vunpack.c.h.b16 %v5892
    %v6626 = vunpack.c.l.b16 %v5893
    %v6627 = vunpack.c.h.b16 %v5893
    %v6628 = vunpack.c.l.b16 %v5894
    %v6629 = vunpack.c.h.b16 %v5894
    %v6630 = vunpack.c.l.b16 %v5895
    %v6631 = vunpack.c.h.b16 %v5895
    %v6632 = vunpack.c.l.b16 %v5896
    %v6633 = vunpack.c.h.b16 %v5896
    %v6634 = vunpack.c.l.b16 %v5897
    %v6635 = vunpack.c.h.b16 %v5897
    %v6636 = vunpack.c.l.b16 %v5898
    %v6637 = vunpack.c.h.b16 %v5898
    %v6638 = vunpack.c.l.b16 %v5899
    %v6639 = vunpack.c.h.b16 %v5899
    %v6640 = vunpack.c.l.b16 %v5900
    %v6641 = vunpack.c.h.b16 %v5900
    %v6642 = vunpack.c.l.b16 %v5901
    %v6643 = vunpack.c.h.b16 %v5901
    %v6644 = vunpack.c.l.b16 %v5902
    %v6645 = vunpack.c.h.b16 %v5902
    %v6646 = vunpack.c.l.b16 %v5903
    %v6647 = vunpack.c.h.b16 %v5903
    %v6648 = vunpack.c.l.b16 %v5904
    %v6649 = vunpack.c.h.b16 %v5904
    %v6650 = vunpack.c.l.b16 %v5905
    %v6651 = vunpack.c.h.b16 %v5905
    %v6652 = vunpack.c.l.b16 %v5906
    %v6653 = vunpack.c.h.b16 %v5906
    %v6654 = vunpack.c.l.b16 %v5907
    %v6655 = vunpack.c.h.b16 %v5907
    %v6656 = vunpack.c.l.b16 %v5908
    %v6657 = vunpack.c.h.b16 %v5908
    %v6658 = vunpack.c.l.b16 %v5909
    %v6659 = vunpack.c.h.b16 %v5909
    %v6660 = vunpack.c.l.b16 %v5910
    %v6661 = vunpack.c.h.b16 %v5910
    %v6662 = vunpack.c.l.b16 %v5911
    %v6663 = vunpack.c.h.b16 %v5911
    %v6664 = vunpack.c.l.b16 %v5912
    %v6665 = vunpack.c.h.b16 %v5912
    %v6666 = vunpack.c.l.b16 %v5913
    %v6667 = vunpack.c.h.b16 %v5913
    %v6668 = vunpack.c.l.b16 %v5914
    %v6669 = vunpack.c.h.b16 %v5914
    %v6670 = vunpack.c.l.b16 %v5915
    %v6671 = vunpack.c.h.b16 %v5915
    %v6672 = vunpack.c.l.b16 %v5916
    %v6673 = vunpack.c.h.b16 %v5916
    %v6674 = vunpack.c.l.b16 %v5917
    %v6675 = vunpack.c.h.b16 %v5917
    %v6676 = vunpack.c.l.b16 %v5918
    %v6677 = vunpack.c.h.b16 %v5918
    %v6678 = vunpack.c.l.b16 %v5919
    %v6679 = vunpack.c.h.b16 %v5919
    %v6680 = vunpack.c.l.b16 %v5920
    %v6681 = vunpack.c.h.b16 %v5920
    %v6682 = vunpack.c.l.b16 %v5921
    %v6683 = vunpack.c.h.b16 %v5921
    %v6684 = vunpack.c.l.b16 %v5922
    %v6685 = vunpack.c.h.b16 %v5922
    %v6686 = vunpack.c.l.b16 %v5923
    %v6687 = vunpack.c.h.b16 %v5923
    %v6688 = vunpack.c.l.b16 %v5924
    %v6689 = vunpack.c.h.b16 %v5924
    %v6690 = vunpack.c.l.b16 %v5925
    %v6691 = vunpack.c.h.b16 %v5925
    %v6692 = vunpack.c.l.b16 %v5926
    %v6693 = vunpack.c.h.b16 %v5926
    %v6694 = vunpack.c.l.b16 %v5927
    %v6695 = vunpack.c.h.b16 %v5927
    %v6696 = vunpack.c.l.b16 %v5928
    %v6697 = vunpack.c.h.b16 %v5928
    %v6698 = vunpack.c.l.b16 %v5929
    %v6699 = vunpack.c.h.b16 %v5929
    %v6700 = vunpack.c.l.b16 %v5930
    %v6701 = vunpack.c.h.b16 %v5930
    %v6702 = vunpack.c.l.b16 %v5931
    %v6703 = vunpack.c.h.b16 %v5931
    %v6704 = vunpack.c.l.b16 %v5932
    %v6705 = vunpack.c.h.b16 %v5932
    %v6706 = vunpack.c.l.b16 %v5933
    %v6707 = vunpack.c.h.b16 %v5933
    %v6708 = vunpack.c.l.b16 %v5934
    %v6709 = vunpack.c.h.b16 %v5934
    %v6710 = vunpack.c.l.b16 %v5935
    %v6711 = vunpack.c.h.b16 %v5935
    %v6712 = vunpack.c.l.b16 %v5936
    %v6713 = vunpack.c.h.b16 %v5936
    %v6714 = vunpack.c.l.b16 %v5937
    %v6715 = vunpack.c.h.b16 %v5937
    %v6716 = vpack.c.b16 %v6208, %v6204
    %v6717 = vpack.c.b16 %v6209, %v6205
    %v6718 = vpack.c.b16 %v6210, %v6206
    %v6719 = vpack.c.b16 %v6211, %v6207
    %v6720 = vpack.c.b16 %v6216, %v6212
    %v6721 = vpack.c.b16 %v6217, %v6213
    %v6722 = vpack.c.b16 %v6218, %v6214
    %v6723 = vpack.c.b16 %v6219, %v6215
    %v6724 = vpack.c.b16 %v6224, %v6220
    %v6725 = vpack.c.b16 %v6225, %v6221
    %v6726 = vpack.c.b16 %v6226, %v6222
    %v6727 = vpack.c.b16 %v6227, %v6223
    %v6728 = vpack.c.b16 %v6232, %v6228
    %v6729 = vpack.c.b16 %v6233, %v6229
    %v6730 = vpack.c.b16 %v6234, %v6230
    %v6731 = vpack.c.b16 %v6235, %v6231
    %v6732 = vpack.c.b16 %v6240, %v6236
    %v6733 = vpack.c.b16 %v6241, %v6237
    %v6734 = vpack.c.b16 %v6242, %v6238
    %v6735 = vpack.c.b16 %v6243, %v6239
    %v6736 = vpack.c.b16 %v6248, %v6244
    %v6737 = vpack.c.b16 %v6249, %v6245
    %v6738 = vpack.c.b16 %v6250, %v6246
    %v6739 = vpack.c.b16 %v6251, %v6247
    %v6740 = vpack.c.b16 %v6256, %v6252
    %v6741 = vpack.c.b16 %v6257, %v6253
    %v6742 = vpack.c.b16 %v6258, %v6254
    %v6743 = vpack.c.b16 %v6259, %v6255
    %v6744 = vpack.c.b16 %v6264, %v6260
    %v6745 = vpack.c.b16 %v6265, %v6261
    %v6746 = vpack.c.b16 %v6266, %v6262
    %v6747 = vpack.c.b16 %v6267, %v6263
    %v6748 = vpack.c.b16 %v6272, %v6268
    %v6749 = vpack.c.b16 %v6273, %v6269
    %v6750 = vpack.c.b16 %v6274, %v6270
    %v6751 = vpack.c.b16 %v6275, %v6271
    %v6752 = vpack.c.b16 %v6280, %v6276
    %v6753 = vpack.c.b16 %v6281, %v6277
    %v6754 = vpack.c.b16 %v6282, %v6278
    %v6755 = vpack.c.b16 %v6283, %v6279
    %v6756 = vpack.c.b16 %v6288, %v6284
    %v6757 = vpack.c.b16 %v6289, %v6285
    %v6758 = vpack.c.b16 %v6290, %v6286
    %v6759 = vpack.c.b16 %v6291, %v6287
    %v6760 = vpack.c.b16 %v6296, %v6292
    %v6761 = vpack.c.b16 %v6297, %v6293
    %v6762 = vpack.c.b16 %v6298, %v6294
    %v6763 = vpack.c.b16 %v6299, %v6295
    %v6764 = vpack.c.b16 %v6304, %v6300
    %v6765 = vpack.c.b16 %v6305, %v6301
    %v6766 = vpack.c.b16 %v6306, %v6302
    %v6767 = vpack.c.b16 %v6307, %v6303
    %v6768 = vpack.c.b16 %v6312, %v6308
    %v6769 = vpack.c.b16 %v6313, %v6309
    %v6770 = vpack.c.b16 %v6314, %v6310
    %v6771 = vpack.c.b16 %v6315, %v6311
    %v6772 = vpack.c.b16 %v6320, %v6316
    %v6773 = vpack.c.b16 %v6321, %v6317
    %v6774 = vpack.c.b16 %v6322, %v6318
    %v6775 = vpack.c.b16 %v6323, %v6319
    %v6776 = vpack.c.b16 %v6328, %v6324
    %v6777 = vpack.c.b16 %v6329, %v6325
    %v6778 = vpack.c.b16 %v6330, %v6326
    %v6779 = vpack.c.b16 %v6331, %v6327
    %v6780 = vpack.c.b16 %v6336, %v6332
    %v6781 = vpack.c.b16 %v6337, %v6333
    %v6782 = vpack.c.b16 %v6338, %v6334
    %v6783 = vpack.c.b16 %v6339, %v6335
    %v6784 = vpack.c.b16 %v6344, %v6340
    %v6785 = vpack.c.b16 %v6345, %v6341
    %v6786 = vpack.c.b16 %v6346, %v6342
    %v6787 = vpack.c.b16 %v6347, %v6343
    %v6788 = vpack.c.b16 %v6352, %v6348
    %v6789 = vpack.c.b16 %v6353, %v6349
    %v6790 = vpack.c.b16 %v6354, %v6350
    %v6791 = vpack.c.b16 %v6355, %v6351
    %v6792 = vpack.c.b16 %v6360, %v6356
    %v6793 = vpack.c.b16 %v6361, %v6357
    %v6794 = vpack.c.b16 %v6362, %v6358
    %v6795 = vpack.c.b16 %v6363, %v6359
    %v6796 = vpack.c.b16 %v6368, %v6364
    %v6797 = vpack.c.b16 %v6369, %v6365
    %v6798 = vpack.c.b16 %v6370, %v6366
    %v6799 = vpack.c.b16 %v6371, %v6367
    %v6800 = vpack.c.b16 %v6376, %v6372
    %v6801 = vpack.c.b16 %v6377, %v6373
    %v6802 = vpack.c.b16 %v6378, %v6374
    %v6803 = vpack.c.b16 %v6379, %v6375
    %v6804 = vpack.c.b16 %v6384, %v6380
    %v6805 = vpack.c.b16 %v6385, %v6381
    %v6806 = vpack.c.b16 %v6386, %v6382
    %v6807 = vpack.c.b16 %v6387, %v6383
    %v6808 = vpack.c.b16 %v6392, %v6388
    %v6809 = vpack.c.b16 %v6393, %v6389
    %v6810 = vpack.c.b16 %v6394, %v6390
    %v6811 = vpack.c.b16 %v6395, %v6391
    %v6812 = vpack.c.b16 %v6400, %v6396
    %v6813 = vpack.c.b16 %v6401, %v6397
    %v6814 = vpack.c.b16 %v6402, %v6398
    %v6815 = vpack.c.b16 %v6403, %v6399
    %v6816 = vpack.c.b16 %v6408, %v6404
    %v6817 = vpack.c.b16 %v6409, %v6405
    %v6818 = vpack.c.b16 %v6410, %v6406
    %v6819 = vpack.c.b16 %v6411, %v6407
    %v6820 = vpack.c.b16 %v6416, %v6412
    %v6821 = vpack.c.b16 %v6417, %v6413
    %v6822 = vpack.c.b16 %v6418, %v6414
    %v6823 = vpack.c.b16 %v6419, %v6415
    %v6824 = vpack.c.b16 %v6424, %v6420
    %v6825 = vpack.c.b16 %v6425, %v6421
    %v6826 = vpack.c.b16 %v6426, %v6422
    %v6827 = vpack.c.b16 %v6427, %v6423
    %v6828 = vpack.c.b16 %v6432, %v6428
    %v6829 = vpack.c.b16 %v6433, %v6429
    %v6830 = vpack.c.b16 %v6434, %v6430
    %v6831 = vpack.c.b16 %v6435, %v6431
    %v6832 = vpack.c.b16 %v6440, %v6436
    %v6833 = vpack.c.b16 %v6441, %v6437
    %v6834 = vpack.c.b16 %v6442, %v6438
    %v6835 = vpack.c.b16 %v6443, %v6439
    %v6836 = vpack.c.b16 %v6448, %v6444
    %v6837 = vpack.c.b16 %v6449, %v6445
    %v6838 = vpack.c.b16 %v6450, %v6446
    %v6839 = vpack.c.b16 %v6451, %v6447
    %v6840 = vpack.c.b16 %v6456, %v6452
    %v6841 = vpack.c.b16 %v6457, %v6453
    %v6842 = vpack.c.b16 %v6458, %v6454
    %v6843 = vpack.c.b16 %v6459, %v6455
    %v6844 = vpack.c.b16 %v6464, %v6460
    %v6845 = vpack.c.b16 %v6465, %v6461
    %v6846 = vpack.c.b16 %v6466, %v6462
    %v6847 = vpack.c.b16 %v6467, %v6463
    %v6848 = vpack.c.b16 %v6472, %v6468
    %v6849 = vpack.c.b16 %v6473, %v6469
    %v6850 = vpack.c.b16 %v6474, %v6470
    %v6851 = vpack.c.b16 %v6475, %v6471
    %v6852 = vpack.c.b16 %v6480, %v6476
    %v6853 = vpack.c.b16 %v6481, %v6477
    %v6854 = vpack.c.b16 %v6482, %v6478
    %v6855 = vpack.c.b16 %v6483, %v6479
    %v6856 = vpack.c.b16 %v6488, %v6484
    %v6857 = vpack.c.b16 %v6489, %v6485
    %v6858 = vpack.c.b16 %v6490, %v6486
    %v6859 = vpack.c.b16 %v6491, %v6487
    %v6860 = vpack.c.b16 %v6496, %v6492
    %v6861 = vpack.c.b16 %v6497, %v6493
    %v6862 = vpack.c.b16 %v6498, %v6494
    %v6863 = vpack.c.b16 %v6499, %v6495
    %v6864 = vpack.c.b16 %v6504, %v6500
    %v6865 = vpack.c.b16 %v6505, %v6501
    %v6866 = vpack.c.b16 %v6506, %v6502
    %v6867 = vpack.c.b16 %v6507, %v6503
    %v6868 = vpack.c.b16 %v6512, %v6508
    %v6869 = vpack.c.b16 %v6513, %v6509
    %v6870 = vpack.c.b16 %v6514, %v6510
    %v6871 = vpack.c.b16 %v6515, %v6511
    %v6872 = vpack.c.b16 %v6520, %v6516
    %v6873 = vpack.c.b16 %v6521, %v6517
    %v6874 = vpack.c.b16 %v6522, %v6518
    %v6875 = vpack.c.b16 %v6523, %v6519
    %v6876 = vpack.c.b16 %v6528, %v6524
    %v6877 = vpack.c.b16 %v6529, %v6525
    %v6878 = vpack.c.b16 %v6530, %v6526
    %v6879 = vpack.c.b16 %v6531, %v6527
    %v6880 = vpack.c.b16 %v6536, %v6532
    %v6881 = vpack.c.b16 %v6537, %v6533
    %v6882 = vpack.c.b16 %v6538, %v6534
    %v6883 = vpack.c.b16 %v6539, %v6535
    %v6884 = vpack.c.b16 %v6544, %v6540
    %v6885 = vpack.c.b16 %v6545, %v6541
    %v6886 = vpack.c.b16 %v6546, %v6542
    %v6887 = vpack.c.b16 %v6547, %v6543
    %v6888 = vpack.c.b16 %v6552, %v6548
    %v6889 = vpack.c.b16 %v6553, %v6549
    %v6890 = vpack.c.b16 %v6554, %v6550
    %v6891 = vpack.c.b16 %v6555, %v6551
    %v6892 = vpack.c.b16 %v6560, %v6556
    %v6893 = vpack.c.b16 %v6561, %v6557
    %v6894 = vpack.c.b16 %v6562, %v6558
    %v6895 = vpack.c.b16 %v6563, %v6559
    %v6896 = vpack.c.b16 %v6568, %v6564
    %v6897 = vpack.c.b16 %v6569, %v6565
    %v6898 = vpack.c.b16 %v6570, %v6566
    %v6899 = vpack.c.b16 %v6571, %v6567
    %v6900 = vpack.c.b16 %v6576, %v6572
    %v6901 = vpack.c.b16 %v6577, %v6573
    %v6902 = vpack.c.b16 %v6578, %v6574
    %v6903 = vpack.c.b16 %v6579, %v6575
    %v6904 = vpack.c.b16 %v6584, %v6580
    %v6905 = vpack.c.b16 %v6585, %v6581
    %v6906 = vpack.c.b16 %v6586, %v6582
    %v6907 = vpack.c.b16 %v6587, %v6583
    %v6908 = vpack.c.b16 %v6592, %v6588
    %v6909 = vpack.c.b16 %v6593, %v6589
    %v6910 = vpack.c.b16 %v6594, %v6590
    %v6911 = vpack.c.b16 %v6595, %v6591
    %v6912 = vpack.c.b16 %v6600, %v6596
    %v6913 = vpack.c.b16 %v6601, %v6597
    %v6914 = vpack.c.b16 %v6602, %v6598
    %v6915 = vpack.c.b16 %v6603, %v6599
    %v6916 = vpack.c.b16 %v6608, %v6604
    %v6917 = vpack.c.b16 %v6609, %v6605
    %v6918 = vpack.c.b16 %v6610, %v6606
    %v6919 = vpack.c.b16 %v6611, %v6607
    %v6920 = vpack.c.b16 %v6616, %v6612
    %v6921 = vpack.c.b16 %v6617, %v6613
    %v6922 = vpack.c.b16 %v6618, %v6614
    %v6923 = vpack.c.b16 %v6619, %v6615
    %v6924 = vpack.c.b16 %v6624, %v6620
    %v6925 = vpack.c.b16 %v6625, %v6621
    %v6926 = vpack.c.b16 %v6626, %v6622
    %v6927 = vpack.c.b16 %v6627, %v6623
    %v6928 = vpack.c.b16 %v6632, %v6628
    %v6929 = vpack.c.b16 %v6633, %v6629
    %v6930 = vpack.c.b16 %v6634, %v6630
    %v6931 = vpack.c.b16 %v6635, %v6631
    %v6932 = vpack.c.b16 %v6640, %v6636
    %v6933 = vpack.c.b16 %v6641, %v6637
    %v6934 = vpack.c.b16 %v6642, %v6638
    %v6935 = vpack.c.b16 %v6643, %v6639
    %v6936 = vpack.c.b16 %v6648, %v6644
    %v6937 = vpack.c.b16 %v6649, %v6645
    %v6938 = vpack.c.b16 %v6650, %v6646
    %v6939 = vpack.c.b16 %v6651, %v6647
    %v6940 = vpack.c.b16 %v6656, %v6652
    %v6941 = vpack.c.b16 %v6657, %v6653
    %v6942 = vpack.c.b16 %v6658, %v6654
    %v6943 = vpack.c.b16 %v6659, %v6655
    %v6944 = vpack.c.b16 %v6664, %v6660
    %v6945 = vpack.c.b16 %v6665, %v6661
    %v6946 = vpack.c.b16 %v6666, %v6662
    %v6947 = vpack.c.b16 %v6667, %v6663
    %v6948 = vpack.c.b16 %v6672, %v6668
    %v6949 = vpack.c.b16 %v6673, %v6669
    %v6950 = vpack.c.b16 %v6674, %v6670
    %v6951 = vpack.c.b16 %v6675, %v6671
    %v6952 = vpack.c.b16 %v6680, %v6676
    %v6953 = vpack.c.b16 %v6681, %v6677
    %v6954 = vpack.c.b16 %v6682, %v6678
    %v6955 = vpack.c.b16 %v6683, %v6679
    %v6956 = vpack.c.b16 %v6688, %v6684
    %v6957 = vpack.c.b16 %v6689, %v6685
    %v6958 = vpack.c.b16 %v6690, %v6686
    %v6959 = vpack.c.b16 %v6691, %v6687
    %v6960 = vpack.c.b16 %v6696, %v6692
    %v6961 = vpack.c.b16 %v6697, %v6693
    %v6962 = vpack.c.b16 %v6698, %v6694
    %v6963 = vpack.c.b16 %v6699, %v6695
    %v6964 = vpack.c.b16 %v6704, %v6700
    %v6965 = vpack.c.b16 %v6705, %v6701
    %v6966 = vpack.c.b16 %v6706, %v6702
    %v6967 = vpack.c.b16 %v6707, %v6703
    %v6968 = vpack.c.b16 %v6712, %v6708
    %v6969 = vpack.c.b16 %v6713, %v6709
    %v6970 = vpack.c.b16 %v6714, %v6710
    %v6971 = vpack.c.b16 %v6715, %v6711
    %7228 = vmatpush.bf16.msra.mxu0 %v6744
    %7229 = vmatpush.bf16.msra.mxu0 %v6740
    %7230 = vmatpush.bf16.msra.mxu0 %v6736
    %7231 = vmatpush.bf16.msra.mxu0 %v6732
    %7232 = vmatpush.bf16.msra.mxu0 %v6728
    %7233 = vmatpush.bf16.msra.mxu0 %v6724
    %7234 = vmatpush.bf16.msra.mxu0 %v6720
    %7235 = vmatpush.bf16.msra.mxu0 %v6716
    %7236 = vmatmul.bf16.gmra.mxu0 %v5666
    %v7237 = vpop.f32.mrf.mxu0
    %v7238 = vadd.f32 %v5940, %v7237
    %v7239 = vpop.f32.mrf.mxu0
    %v7240 = vadd.f32 %v5940, %v7239
    %7241 = vmatmul.bf16.gmra.mxu0 %v5674
    %v7242 = vpop.f32.mrf.mxu0
    %v7243 = vadd.f32 %v5940, %v7242
    %v7244 = vpop.f32.mrf.mxu0
    %v7245 = vadd.f32 %v5940, %v7244
    %7246 = vdwg.mxu0
    %7247 = vmatpush.bf16.msra.mxu0 %v6776
    %7248 = vmatpush.bf16.msra.mxu0 %v6772
    %7249 = vmatpush.bf16.msra.mxu0 %v6768
    %7250 = vmatpush.bf16.msra.mxu0 %v6764
    %7251 = vmatpush.bf16.msra.mxu0 %v6760
    %7252 = vmatpush.bf16.msra.mxu0 %v6756
    %7253 = vmatpush.bf16.msra.mxu0 %v6752
    %7254 = vmatpush.bf16.msra.mxu0 %v6748
    %7255 = vmatmul.bf16.gmra.mxu0 %v5667
    %v7256 = vpop.f32.mrf.mxu0
    %v7257 = vadd.f32 %v7238, %v7256
    %v7258 = vpop.f32.mrf.mxu0
    %v7259 = vadd.f32 %v7240, %v7258
    %7260 = vmatmul.bf16.gmra.mxu0 %v5675
    %v7261 = vpop.f32.mrf.mxu0
    %v7262 = vadd.f32 %v7243, %v7261
    %v7263 = vpop.f32.mrf.mxu0
    %v7264 = vadd.f32 %v7245, %v7263
    %7265 = vdwg.mxu0
    %7266 = vmatpush.bf16.msra.mxu0 %v6808
    %7267 = vmatpush.bf16.msra.mxu0 %v6804
    %7268 = vmatpush.bf16.msra.mxu0 %v6800
    %7269 = vmatpush.bf16.msra.mxu0 %v6796
    %7270 = vmatpush.bf16.msra.mxu0 %v6792
    %7271 = vmatpush.bf16.msra.mxu0 %v6788
    %7272 = vmatpush.bf16.msra.mxu0 %v6784
    %7273 = vmatpush.bf16.msra.mxu0 %v6780
    %7274 = vmatmul.bf16.gmra.mxu0 %v5668
    %v7275 = vpop.f32.mrf.mxu0
    %v7276 = vadd.f32 %v7257, %v7275
    %v7277 = vpop.f32.mrf.mxu0
    %v7278 = vadd.f32 %v7259, %v7277
    %7279 = vmatmul.bf16.gmra.mxu0 %v5676
    %v7280 = vpop.f32.mrf.mxu0
    %v7281 = vadd.f32 %v7262, %v7280
    %v7282 = vpop.f32.mrf.mxu0
    %v7283 = vadd.f32 %v7264, %v7282
    %7284 = vdwg.mxu0
    %7285 = vmatpush.bf16.msra.mxu0 %v6840
    %7286 = vmatpush.bf16.msra.mxu0 %v6836
    %7287 = vmatpush.bf16.msra.mxu0 %v6832
    %7288 = vmatpush.bf16.msra.mxu0 %v6828
    %7289 = vmatpush.bf16.msra.mxu0 %v6824
    %7290 = vmatpush.bf16.msra.mxu0 %v6820
    %7291 = vmatpush.bf16.msra.mxu0 %v6816
    %7292 = vmatpush.bf16.msra.mxu0 %v6812
    %7293 = vmatmul.bf16.gmra.mxu0 %v5669
    %v7294 = vpop.f32.mrf.mxu0
    %v7295 = vadd.f32 %v7276, %v7294
    %v7296 = vpop.f32.mrf.mxu0
    %v7297 = vadd.f32 %v7278, %v7296
    %7298 = vmatmul.bf16.gmra.mxu0 %v5677
    %v7299 = vpop.f32.mrf.mxu0
    %v7300 = vadd.f32 %v7281, %v7299
    %v7301 = vpop.f32.mrf.mxu0
    %v7302 = vadd.f32 %v7283, %v7301
    %7303 = vdwg.mxu0
    %7304 = vmatpush.bf16.msra.mxu0 %v6872
    %7305 = vmatpush.bf16.msra.mxu0 %v6868
    %7306 = vmatpush.bf16.msra.mxu0 %v6864
    %7307 = vmatpush.bf16.msra.mxu0 %v6860
    %7308 = vmatpush.bf16.msra.mxu0 %v6856
    %7309 = vmatpush.bf16.msra.mxu0 %v6852
    %7310 = vmatpush.bf16.msra.mxu0 %v6848
    %7311 = vmatpush.bf16.msra.mxu0 %v6844
    %7312 = vmatmul.bf16.gmra.mxu0 %v5670
    %v7313 = vpop.f32.mrf.mxu0
    %v7314 = vadd.f32 %v7295, %v7313
    %v7315 = vpop.f32.mrf.mxu0
    %v7316 = vadd.f32 %v7297, %v7315
    %7317 = vmatmul.bf16.gmra.mxu0 %v5678
    %v7318 = vpop.f32.mrf.mxu0
    %v7319 = vadd.f32 %v7300, %v7318
    %v7320 = vpop.f32.mrf.mxu0
    %v7321 = vadd.f32 %v7302, %v7320
    %7322 = vdwg.mxu0
    %7323 = vmatpush.bf16.msra.mxu0 %v6904
    %7324 = vmatpush.bf16.msra.mxu0 %v6900
    %7325 = vmatpush.bf16.msra.mxu0 %v6896
    %7326 = vmatpush.bf16.msra.mxu0 %v6892
    %7327 = vmatpush.bf16.msra.mxu0 %v6888
    %7328 = vmatpush.bf16.msra.mxu0 %v6884
    %7329 = vmatpush.bf16.msra.mxu0 %v6880
    %7330 = vmatpush.bf16.msra.mxu0 %v6876
    %7331 = vmatmul.bf16.gmra.mxu0 %v5671
    %v7332 = vpop.f32.mrf.mxu0
    %v7333 = vadd.f32 %v7314, %v7332
    %v7334 = vpop.f32.mrf.mxu0
    %v7335 = vadd.f32 %v7316, %v7334
    %7336 = vmatmul.bf16.gmra.mxu0 %v5679
    %v7337 = vpop.f32.mrf.mxu0
    %v7338 = vadd.f32 %v7319, %v7337
    %v7339 = vpop.f32.mrf.mxu0
    %v7340 = vadd.f32 %v7321, %v7339
    %7341 = vdwg.mxu0
    %7342 = vmatpush.bf16.msra.mxu0 %v6936
    %7343 = vmatpush.bf16.msra.mxu0 %v6932
    %7344 = vmatpush.bf16.msra.mxu0 %v6928
    %7345 = vmatpush.bf16.msra.mxu0 %v6924
    %7346 = vmatpush.bf16.msra.mxu0 %v6920
    %7347 = vmatpush.bf16.msra.mxu0 %v6916
    %7348 = vmatpush.bf16.msra.mxu0 %v6912
    %7349 = vmatpush.bf16.msra.mxu0 %v6908
    %7350 = vmatmul.bf16.gmra.mxu0 %v5672
    %v7351 = vpop.f32.mrf.mxu0
    %v7352 = vadd.f32 %v7333, %v7351
    %v7353 = vpop.f32.mrf.mxu0
    %v7354 = vadd.f32 %v7335, %v7353
    %7355 = vmatmul.bf16.gmra.mxu0 %v5680
    %v7356 = vpop.f32.mrf.mxu0
    %v7357 = vadd.f32 %v7338, %v7356
    %v7358 = vpop.f32.mrf.mxu0
    %v7359 = vadd.f32 %v7340, %v7358
    %7360 = vdwg.mxu0
    %7361 = vmatpush.bf16.msra.mxu0 %v6968
    %7362 = vmatpush.bf16.msra.mxu0 %v6964
    %7363 = vmatpush.bf16.msra.mxu0 %v6960
    %7364 = vmatpush.bf16.msra.mxu0 %v6956
    %7365 = vmatpush.bf16.msra.mxu0 %v6952
    %7366 = vmatpush.bf16.msra.mxu0 %v6948
    %7367 = vmatpush.bf16.msra.mxu0 %v6944
    %7368 = vmatpush.bf16.msra.mxu0 %v6940
    %7369 = vmatmul.bf16.gmra.mxu0 %v5673
    %v7370 = vpop.f32.mrf.mxu0
    %v7371 = vadd.f32 %v7352, %v7370
    %v7372 = vpop.f32.mrf.mxu0
    %v7373 = vadd.f32 %v7354, %v7372
    %7374 = vmatmul.bf16.gmra.mxu0 %v5681
    %v7375 = vpop.f32.mrf.mxu0
    %v7376 = vadd.f32 %v7357, %v7375
    %v7377 = vpop.f32.mrf.mxu0
    %v7378 = vadd.f32 %v7359, %v7377
    %7379 = vdwg.mxu0
    %7380 = vmatpush.bf16.msra.mxu0 %v6745
    %7381 = vmatpush.bf16.msra.mxu0 %v6741
    %7382 = vmatpush.bf16.msra.mxu0 %v6737
    %7383 = vmatpush.bf16.msra.mxu0 %v6733
    %7384 = vmatpush.bf16.msra.mxu0 %v6729
    %7385 = vmatpush.bf16.msra.mxu0 %v6725
    %7386 = vmatpush.bf16.msra.mxu0 %v6721
    %7387 = vmatpush.bf16.msra.mxu0 %v6717
    %7388 = vmatmul.bf16.gmra.mxu0 %v5666
    %v7389 = vpop.f32.mrf.mxu0
    %v7390 = vadd.f32 %v5941, %v7389
    %v7391 = vpop.f32.mrf.mxu0
    %v7392 = vadd.f32 %v5941, %v7391
    %7393 = vmatmul.bf16.gmra.mxu0 %v5674
    %v7394 = vpop.f32.mrf.mxu0
    %v7395 = vadd.f32 %v5941, %v7394
    %v7396 = vpop.f32.mrf.mxu0
    %v7397 = vadd.f32 %v5941, %v7396
    %7398 = vdwg.mxu0
    %7399 = vmatpush.bf16.msra.mxu0 %v6777
    %7400 = vmatpush.bf16.msra.mxu0 %v6773
    %7401 = vmatpush.bf16.msra.mxu0 %v6769
    %7402 = vmatpush.bf16.msra.mxu0 %v6765
    %7403 = vmatpush.bf16.msra.mxu0 %v6761
    %7404 = vmatpush.bf16.msra.mxu0 %v6757
    %7405 = vmatpush.bf16.msra.mxu0 %v6753
    %7406 = vmatpush.bf16.msra.mxu0 %v6749
    %7407 = vmatmul.bf16.gmra.mxu0 %v5667
    %v7408 = vpop.f32.mrf.mxu0
    %v7409 = vadd.f32 %v7390, %v7408
    %v7410 = vpop.f32.mrf.mxu0
    %v7411 = vadd.f32 %v7392, %v7410
    %7412 = vmatmul.bf16.gmra.mxu0 %v5675
    %v7413 = vpop.f32.mrf.mxu0
    %v7414 = vadd.f32 %v7395, %v7413
    %v7415 = vpop.f32.mrf.mxu0
    %v7416 = vadd.f32 %v7397, %v7415
    %7417 = vdwg.mxu0
    %7418 = vmatpush.bf16.msra.mxu0 %v6809
    %7419 = vmatpush.bf16.msra.mxu0 %v6805
    %7420 = vmatpush.bf16.msra.mxu0 %v6801
    %7421 = vmatpush.bf16.msra.mxu0 %v6797
    %7422 = vmatpush.bf16.msra.mxu0 %v6793
    %7423 = vmatpush.bf16.msra.mxu0 %v6789
    %7424 = vmatpush.bf16.msra.mxu0 %v6785
    %7425 = vmatpush.bf16.msra.mxu0 %v6781
    %7426 = vmatmul.bf16.gmra.mxu0 %v5668
    %v7427 = vpop.f32.mrf.mxu0
    %v7428 = vadd.f32 %v7409, %v7427
    %v7429 = vpop.f32.mrf.mxu0
    %v7430 = vadd.f32 %v7411, %v7429
    %7431 = vmatmul.bf16.gmra.mxu0 %v5676
    %v7432 = vpop.f32.mrf.mxu0
    %v7433 = vadd.f32 %v7414, %v7432
    %v7434 = vpop.f32.mrf.mxu0
    %v7435 = vadd.f32 %v7416, %v7434
    %7436 = vdwg.mxu0
    %7437 = vmatpush.bf16.msra.mxu0 %v6841
    %7438 = vmatpush.bf16.msra.mxu0 %v6837
    %7439 = vmatpush.bf16.msra.mxu0 %v6833
    %7440 = vmatpush.bf16.msra.mxu0 %v6829
    %7441 = vmatpush.bf16.msra.mxu0 %v6825
    %7442 = vmatpush.bf16.msra.mxu0 %v6821
    %7443 = vmatpush.bf16.msra.mxu0 %v6817
    %7444 = vmatpush.bf16.msra.mxu0 %v6813
    %7445 = vmatmul.bf16.gmra.mxu0 %v5669
    %v7446 = vpop.f32.mrf.mxu0
    %v7447 = vadd.f32 %v7428, %v7446
    %v7448 = vpop.f32.mrf.mxu0
    %v7449 = vadd.f32 %v7430, %v7448
    %7450 = vmatmul.bf16.gmra.mxu0 %v5677
    %v7451 = vpop.f32.mrf.mxu0
    %v7452 = vadd.f32 %v7433, %v7451
    %v7453 = vpop.f32.mrf.mxu0
    %v7454 = vadd.f32 %v7435, %v7453
    %7455 = vdwg.mxu0
    %7456 = vmatpush.bf16.msra.mxu0 %v6873
    %7457 = vmatpush.bf16.msra.mxu0 %v6869
    %7458 = vmatpush.bf16.msra.mxu0 %v6865
    %7459 = vmatpush.bf16.msra.mxu0 %v6861
    %7460 = vmatpush.bf16.msra.mxu0 %v6857
    %7461 = vmatpush.bf16.msra.mxu0 %v6853
    %7462 = vmatpush.bf16.msra.mxu0 %v6849
    %7463 = vmatpush.bf16.msra.mxu0 %v6845
    %7464 = vmatmul.bf16.gmra.mxu0 %v5670
    %v7465 = vpop.f32.mrf.mxu0
    %v7466 = vadd.f32 %v7447, %v7465
    %v7467 = vpop.f32.mrf.mxu0
    %v7468 = vadd.f32 %v7449, %v7467
    %7469 = vmatmul.bf16.gmra.mxu0 %v5678
    %v7470 = vpop.f32.mrf.mxu0
    %v7471 = vadd.f32 %v7452, %v7470
    %v7472 = vpop.f32.mrf.mxu0
    %v7473 = vadd.f32 %v7454, %v7472
    %7474 = vdwg.mxu0
    %7475 = vmatpush.bf16.msra.mxu0 %v6905
    %7476 = vmatpush.bf16.msra.mxu0 %v6901
    %7477 = vmatpush.bf16.msra.mxu0 %v6897
    %7478 = vmatpush.bf16.msra.mxu0 %v6893
    %7479 = vmatpush.bf16.msra.mxu0 %v6889
    %7480 = vmatpush.bf16.msra.mxu0 %v6885
    %7481 = vmatpush.bf16.msra.mxu0 %v6881
    %7482 = vmatpush.bf16.msra.mxu0 %v6877
    %7483 = vmatmul.bf16.gmra.mxu0 %v5671
    %v7484 = vpop.f32.mrf.mxu0
    %v7485 = vadd.f32 %v7466, %v7484
    %v7486 = vpop.f32.mrf.mxu0
    %v7487 = vadd.f32 %v7468, %v7486
    %7488 = vmatmul.bf16.gmra.mxu0 %v5679
    %v7489 = vpop.f32.mrf.mxu0
    %v7490 = vadd.f32 %v7471, %v7489
    %v7491 = vpop.f32.mrf.mxu0
    %v7492 = vadd.f32 %v7473, %v7491
    %7493 = vdwg.mxu0
    %7494 = vmatpush.bf16.msra.mxu0 %v6937
    %7495 = vmatpush.bf16.msra.mxu0 %v6933
    %7496 = vmatpush.bf16.msra.mxu0 %v6929
    %7497 = vmatpush.bf16.msra.mxu0 %v6925
    %7498 = vmatpush.bf16.msra.mxu0 %v6921
    %7499 = vmatpush.bf16.msra.mxu0 %v6917
    %7500 = vmatpush.bf16.msra.mxu0 %v6913
    %7501 = vmatpush.bf16.msra.mxu0 %v6909
    %7502 = vmatmul.bf16.gmra.mxu0 %v5672
    %v7503 = vpop.f32.mrf.mxu0
    %v7504 = vadd.f32 %v7485, %v7503
    %v7505 = vpop.f32.mrf.mxu0
    %v7506 = vadd.f32 %v7487, %v7505
    %7507 = vmatmul.bf16.gmra.mxu0 %v5680
    %v7508 = vpop.f32.mrf.mxu0
    %v7509 = vadd.f32 %v7490, %v7508
    %v7510 = vpop.f32.mrf.mxu0
    %v7511 = vadd.f32 %v7492, %v7510
    %7512 = vdwg.mxu0
    %7513 = vmatpush.bf16.msra.mxu0 %v6969
    %7514 = vmatpush.bf16.msra.mxu0 %v6965
    %7515 = vmatpush.bf16.msra.mxu0 %v6961
    %7516 = vmatpush.bf16.msra.mxu0 %v6957
    %7517 = vmatpush.bf16.msra.mxu0 %v6953
    %7518 = vmatpush.bf16.msra.mxu0 %v6949
    %7519 = vmatpush.bf16.msra.mxu0 %v6945
    %7520 = vmatpush.bf16.msra.mxu0 %v6941
    %7521 = vmatmul.bf16.gmra.mxu0 %v5673
    %v7522 = vpop.f32.mrf.mxu0
    %v7523 = vadd.f32 %v7504, %v7522
    %v7524 = vpop.f32.mrf.mxu0
    %v7525 = vadd.f32 %v7506, %v7524
    %7526 = vmatmul.bf16.gmra.mxu0 %v5681
    %v7527 = vpop.f32.mrf.mxu0
    %v7528 = vadd.f32 %v7509, %v7527
    %v7529 = vpop.f32.mrf.mxu0
    %v7530 = vadd.f32 %v7511, %v7529
    %7531 = vdwg.mxu0
    %7532 = vmatpush.bf16.msra.mxu0 %v6746
    %7533 = vmatpush.bf16.msra.mxu0 %v6742
    %7534 = vmatpush.bf16.msra.mxu0 %v6738
    %7535 = vmatpush.bf16.msra.mxu0 %v6734
    %7536 = vmatpush.bf16.msra.mxu0 %v6730
    %7537 = vmatpush.bf16.msra.mxu0 %v6726
    %7538 = vmatpush.bf16.msra.mxu0 %v6722
    %7539 = vmatpush.bf16.msra.mxu0 %v6718
    %7540 = vmatmul.bf16.gmra.mxu0 %v5666
    %v7541 = vpop.f32.mrf.mxu0
    %v7542 = vadd.f32 %v5942, %v7541
    %v7543 = vpop.f32.mrf.mxu0
    %v7544 = vadd.f32 %v5942, %v7543
    %7545 = vmatmul.bf16.gmra.mxu0 %v5674
    %v7546 = vpop.f32.mrf.mxu0
    %v7547 = vadd.f32 %v5942, %v7546
    %v7548 = vpop.f32.mrf.mxu0
    %v7549 = vadd.f32 %v5942, %v7548
    %7550 = vdwg.mxu0
    %7551 = vmatpush.bf16.msra.mxu0 %v6778
    %7552 = vmatpush.bf16.msra.mxu0 %v6774
    %7553 = vmatpush.bf16.msra.mxu0 %v6770
    %7554 = vmatpush.bf16.msra.mxu0 %v6766
    %7555 = vmatpush.bf16.msra.mxu0 %v6762
    %7556 = vmatpush.bf16.msra.mxu0 %v6758
    %7557 = vmatpush.bf16.msra.mxu0 %v6754
    %7558 = vmatpush.bf16.msra.mxu0 %v6750
    %7559 = vmatmul.bf16.gmra.mxu0 %v5667
    %v7560 = vpop.f32.mrf.mxu0
    %v7561 = vadd.f32 %v7542, %v7560
    %v7562 = vpop.f32.mrf.mxu0
    %v7563 = vadd.f32 %v7544, %v7562
    %7564 = vmatmul.bf16.gmra.mxu0 %v5675
    %v7565 = vpop.f32.mrf.mxu0
    %v7566 = vadd.f32 %v7547, %v7565
    %v7567 = vpop.f32.mrf.mxu0
    %v7568 = vadd.f32 %v7549, %v7567
    %7569 = vdwg.mxu0
    %7570 = vmatpush.bf16.msra.mxu0 %v6810
    %7571 = vmatpush.bf16.msra.mxu0 %v6806
    %7572 = vmatpush.bf16.msra.mxu0 %v6802
    %7573 = vmatpush.bf16.msra.mxu0 %v6798
    %7574 = vmatpush.bf16.msra.mxu0 %v6794
    %7575 = vmatpush.bf16.msra.mxu0 %v6790
    %7576 = vmatpush.bf16.msra.mxu0 %v6786
    %7577 = vmatpush.bf16.msra.mxu0 %v6782
    %7578 = vmatmul.bf16.gmra.mxu0 %v5668
    %v7579 = vpop.f32.mrf.mxu0
    %v7580 = vadd.f32 %v7561, %v7579
    %v7581 = vpop.f32.mrf.mxu0
    %v7582 = vadd.f32 %v7563, %v7581
    %7583 = vmatmul.bf16.gmra.mxu0 %v5676
    %v7584 = vpop.f32.mrf.mxu0
    %v7585 = vadd.f32 %v7566, %v7584
    %v7586 = vpop.f32.mrf.mxu0
    %v7587 = vadd.f32 %v7568, %v7586
    %7588 = vdwg.mxu0
    %7589 = vmatpush.bf16.msra.mxu0 %v6842
    %7590 = vmatpush.bf16.msra.mxu0 %v6838
    %7591 = vmatpush.bf16.msra.mxu0 %v6834
    %7592 = vmatpush.bf16.msra.mxu0 %v6830
    %7593 = vmatpush.bf16.msra.mxu0 %v6826
    %7594 = vmatpush.bf16.msra.mxu0 %v6822
    %7595 = vmatpush.bf16.msra.mxu0 %v6818
    %7596 = vmatpush.bf16.msra.mxu0 %v6814
    %7597 = vmatmul.bf16.gmra.mxu0 %v5669
    %v7598 = vpop.f32.mrf.mxu0
    %v7599 = vadd.f32 %v7580, %v7598
    %v7600 = vpop.f32.mrf.mxu0
    %v7601 = vadd.f32 %v7582, %v7600
    %7602 = vmatmul.bf16.gmra.mxu0 %v5677
    %v7603 = vpop.f32.mrf.mxu0
    %v7604 = vadd.f32 %v7585, %v7603
    %v7605 = vpop.f32.mrf.mxu0
    %v7606 = vadd.f32 %v7587, %v7605
    %7607 = vdwg.mxu0
    %7608 = vmatpush.bf16.msra.mxu0 %v6874
    %7609 = vmatpush.bf16.msra.mxu0 %v6870
    %7610 = vmatpush.bf16.msra.mxu0 %v6866
    %7611 = vmatpush.bf16.msra.mxu0 %v6862
    %7612 = vmatpush.bf16.msra.mxu0 %v6858
    %7613 = vmatpush.bf16.msra.mxu0 %v6854
    %7614 = vmatpush.bf16.msra.mxu0 %v6850
    %7615 = vmatpush.bf16.msra.mxu0 %v6846
    %7616 = vmatmul.bf16.gmra.mxu0 %v5670
    %v7617 = vpop.f32.mrf.mxu0
    %v7618 = vadd.f32 %v7599, %v7617
    %v7619 = vpop.f32.mrf.mxu0
    %v7620 = vadd.f32 %v7601, %v7619
    %7621 = vmatmul.bf16.gmra.mxu0 %v5678
    %v7622 = vpop.f32.mrf.mxu0
    %v7623 = vadd.f32 %v7604, %v7622
    %v7624 = vpop.f32.mrf.mxu0
    %v7625 = vadd.f32 %v7606, %v7624
    %7626 = vdwg.mxu0
    %7627 = vmatpush.bf16.msra.mxu0 %v6906
    %7628 = vmatpush.bf16.msra.mxu0 %v6902
    %7629 = vmatpush.bf16.msra.mxu0 %v6898
    %7630 = vmatpush.bf16.msra.mxu0 %v6894
    %7631 = vmatpush.bf16.msra.mxu0 %v6890
    %7632 = vmatpush.bf16.msra.mxu0 %v6886
    %7633 = vmatpush.bf16.msra.mxu0 %v6882
    %7634 = vmatpush.bf16.msra.mxu0 %v6878
    %7635 = vmatmul.bf16.gmra.mxu0 %v5671
    %v7636 = vpop.f32.mrf.mxu0
    %v7637 = vadd.f32 %v7618, %v7636
    %v7638 = vpop.f32.mrf.mxu0
    %v7639 = vadd.f32 %v7620, %v7638
    %7640 = vmatmul.bf16.gmra.mxu0 %v5679
    %v7641 = vpop.f32.mrf.mxu0
    %v7642 = vadd.f32 %v7623, %v7641
    %v7643 = vpop.f32.mrf.mxu0
    %v7644 = vadd.f32 %v7625, %v7643
    %7645 = vdwg.mxu0
    %7646 = vmatpush.bf16.msra.mxu0 %v6938
    %7647 = vmatpush.bf16.msra.mxu0 %v6934
    %7648 = vmatpush.bf16.msra.mxu0 %v6930
    %7649 = vmatpush.bf16.msra.mxu0 %v6926
    %7650 = vmatpush.bf16.msra.mxu0 %v6922
    %7651 = vmatpush.bf16.msra.mxu0 %v6918
    %7652 = vmatpush.bf16.msra.mxu0 %v6914
    %7653 = vmatpush.bf16.msra.mxu0 %v6910
    %7654 = vmatmul.bf16.gmra.mxu0 %v5672
    %v7655 = vpop.f32.mrf.mxu0
    %v7656 = vadd.f32 %v7637, %v7655
    %v7657 = vpop.f32.mrf.mxu0
    %v7658 = vadd.f32 %v7639, %v7657
    %7659 = vmatmul.bf16.gmra.mxu0 %v5680
    %v7660 = vpop.f32.mrf.mxu0
    %v7661 = vadd.f32 %v7642, %v7660
    %v7662 = vpop.f32.mrf.mxu0
    %v7663 = vadd.f32 %v7644, %v7662
    %7664 = vdwg.mxu0
    %7665 = vmatpush.bf16.msra.mxu0 %v6970
    %7666 = vmatpush.bf16.msra.mxu0 %v6966
    %7667 = vmatpush.bf16.msra.mxu0 %v6962
    %7668 = vmatpush.bf16.msra.mxu0 %v6958
    %7669 = vmatpush.bf16.msra.mxu0 %v6954
    %7670 = vmatpush.bf16.msra.mxu0 %v6950
    %7671 = vmatpush.bf16.msra.mxu0 %v6946
    %7672 = vmatpush.bf16.msra.mxu0 %v6942
    %7673 = vmatmul.bf16.gmra.mxu0 %v5673
    %v7674 = vpop.f32.mrf.mxu0
    %v7675 = vadd.f32 %v7656, %v7674
    %v7676 = vpop.f32.mrf.mxu0
    %v7677 = vadd.f32 %v7658, %v7676
    %7678 = vmatmul.bf16.gmra.mxu0 %v5681
    %v7679 = vpop.f32.mrf.mxu0
    %v7680 = vadd.f32 %v7661, %v7679
    %v7681 = vpop.f32.mrf.mxu0
    %v7682 = vadd.f32 %v7663, %v7681
    %7683 = vdwg.mxu0
    %7684 = vmatpush.bf16.msra.mxu0 %v6747
    %7685 = vmatpush.bf16.msra.mxu0 %v6743
    %7686 = vmatpush.bf16.msra.mxu0 %v6739
    %7687 = vmatpush.bf16.msra.mxu0 %v6735
    %7688 = vmatpush.bf16.msra.mxu0 %v6731
    %7689 = vmatpush.bf16.msra.mxu0 %v6727
    %7690 = vmatpush.bf16.msra.mxu0 %v6723
    %7691 = vmatpush.bf16.msra.mxu0 %v6719
    %7692 = vmatmul.bf16.gmra.mxu0 %v5666
    %v7693 = vpop.f32.mrf.mxu0
    %v7694 = vadd.f32 %v5943, %v7693
    %v7695 = vpop.f32.mrf.mxu0
    %v7696 = vadd.f32 %v5943, %v7695
    %7697 = vmatmul.bf16.gmra.mxu0 %v5674
    %v7698 = vpop.f32.mrf.mxu0
    %v7699 = vadd.f32 %v5943, %v7698
    %v7700 = vpop.f32.mrf.mxu0
    %v7701 = vadd.f32 %v5943, %v7700
    %7702 = vdwg.mxu0
    %7703 = vmatpush.bf16.msra.mxu0 %v6779
    %7704 = vmatpush.bf16.msra.mxu0 %v6775
    %7705 = vmatpush.bf16.msra.mxu0 %v6771
    %7706 = vmatpush.bf16.msra.mxu0 %v6767
    %7707 = vmatpush.bf16.msra.mxu0 %v6763
    %7708 = vmatpush.bf16.msra.mxu0 %v6759
    %7709 = vmatpush.bf16.msra.mxu0 %v6755
    %7710 = vmatpush.bf16.msra.mxu0 %v6751
    %7711 = vmatmul.bf16.gmra.mxu0 %v5667
    %v7712 = vpop.f32.mrf.mxu0
    %v7713 = vadd.f32 %v7694, %v7712
    %v7714 = vpop.f32.mrf.mxu0
    %v7715 = vadd.f32 %v7696, %v7714
    %7716 = vmatmul.bf16.gmra.mxu0 %v5675
    %v7717 = vpop.f32.mrf.mxu0
    %v7718 = vadd.f32 %v7699, %v7717
    %v7719 = vpop.f32.mrf.mxu0
    %v7720 = vadd.f32 %v7701, %v7719
    %7721 = vdwg.mxu0
    %7722 = vmatpush.bf16.msra.mxu0 %v6811
    %7723 = vmatpush.bf16.msra.mxu0 %v6807
    %7724 = vmatpush.bf16.msra.mxu0 %v6803
    %7725 = vmatpush.bf16.msra.mxu0 %v6799
    %7726 = vmatpush.bf16.msra.mxu0 %v6795
    %7727 = vmatpush.bf16.msra.mxu0 %v6791
    %7728 = vmatpush.bf16.msra.mxu0 %v6787
    %7729 = vmatpush.bf16.msra.mxu0 %v6783
    %7730 = vmatmul.bf16.gmra.mxu0 %v5668
    %v7731 = vpop.f32.mrf.mxu0
    %v7732 = vadd.f32 %v7713, %v7731
    %v7733 = vpop.f32.mrf.mxu0
    %v7734 = vadd.f32 %v7715, %v7733
    %7735 = vmatmul.bf16.gmra.mxu0 %v5676
    %v7736 = vpop.f32.mrf.mxu0
    %v7737 = vadd.f32 %v7718, %v7736
    %v7738 = vpop.f32.mrf.mxu0
    %v7739 = vadd.f32 %v7720, %v7738
    %7740 = vdwg.mxu0
    %7741 = vmatpush.bf16.msra.mxu0 %v6843
    %7742 = vmatpush.bf16.msra.mxu0 %v6839
    %7743 = vmatpush.bf16.msra.mxu0 %v6835
    %7744 = vmatpush.bf16.msra.mxu0 %v6831
    %7745 = vmatpush.bf16.msra.mxu0 %v6827
    %7746 = vmatpush.bf16.msra.mxu0 %v6823
    %7747 = vmatpush.bf16.msra.mxu0 %v6819
    %7748 = vmatpush.bf16.msra.mxu0 %v6815
    %7749 = vmatmul.bf16.gmra.mxu0 %v5669
    %v7750 = vpop.f32.mrf.mxu0
    %v7751 = vadd.f32 %v7732, %v7750
    %v7752 = vpop.f32.mrf.mxu0
    %v7753 = vadd.f32 %v7734, %v7752
    %7754 = vmatmul.bf16.gmra.mxu0 %v5677
    %v7755 = vpop.f32.mrf.mxu0
    %v7756 = vadd.f32 %v7737, %v7755
    %v7757 = vpop.f32.mrf.mxu0
    %v7758 = vadd.f32 %v7739, %v7757
    %7759 = vdwg.mxu0
    %7760 = vmatpush.bf16.msra.mxu0 %v6875
    %7761 = vmatpush.bf16.msra.mxu0 %v6871
    %7762 = vmatpush.bf16.msra.mxu0 %v6867
    %7763 = vmatpush.bf16.msra.mxu0 %v6863
    %7764 = vmatpush.bf16.msra.mxu0 %v6859
    %7765 = vmatpush.bf16.msra.mxu0 %v6855
    %7766 = vmatpush.bf16.msra.mxu0 %v6851
    %7767 = vmatpush.bf16.msra.mxu0 %v6847
    %7768 = vmatmul.bf16.gmra.mxu0 %v5670
    %v7769 = vpop.f32.mrf.mxu0
    %v7770 = vadd.f32 %v7751, %v7769
    %v7771 = vpop.f32.mrf.mxu0
    %v7772 = vadd.f32 %v7753, %v7771
    %7773 = vmatmul.bf16.gmra.mxu0 %v5678
    %v7774 = vpop.f32.mrf.mxu0
    %v7775 = vadd.f32 %v7756, %v7774
    %v7776 = vpop.f32.mrf.mxu0
    %v7777 = vadd.f32 %v7758, %v7776
    %7778 = vdwg.mxu0
    %7779 = vmatpush.bf16.msra.mxu0 %v6907
    %7780 = vmatpush.bf16.msra.mxu0 %v6903
    %7781 = vmatpush.bf16.msra.mxu0 %v6899
    %7782 = vmatpush.bf16.msra.mxu0 %v6895
    %7783 = vmatpush.bf16.msra.mxu0 %v6891
    %7784 = vmatpush.bf16.msra.mxu0 %v6887
    %7785 = vmatpush.bf16.msra.mxu0 %v6883
    %7786 = vmatpush.bf16.msra.mxu0 %v6879
    %7787 = vmatmul.bf16.gmra.mxu0 %v5671
    %v7788 = vpop.f32.mrf.mxu0
    %v7789 = vadd.f32 %v7770, %v7788
    %v7790 = vpop.f32.mrf.mxu0
    %v7791 = vadd.f32 %v7772, %v7790
    %7792 = vmatmul.bf16.gmra.mxu0 %v5679
    %v7793 = vpop.f32.mrf.mxu0
    %v7794 = vadd.f32 %v7775, %v7793
    %v7795 = vpop.f32.mrf.mxu0
    %v7796 = vadd.f32 %v7777, %v7795
    %7797 = vdwg.mxu0
    %7798 = vmatpush.bf16.msra.mxu0 %v6939
    %7799 = vmatpush.bf16.msra.mxu0 %v6935
    %7800 = vmatpush.bf16.msra.mxu0 %v6931
    %7801 = vmatpush.bf16.msra.mxu0 %v6927
    %7802 = vmatpush.bf16.msra.mxu0 %v6923
    %7803 = vmatpush.bf16.msra.mxu0 %v6919
    %7804 = vmatpush.bf16.msra.mxu0 %v6915
    %7805 = vmatpush.bf16.msra.mxu0 %v6911
    %7806 = vmatmul.bf16.gmra.mxu0 %v5672
    %v7807 = vpop.f32.mrf.mxu0
    %v7808 = vadd.f32 %v7789, %v7807
    %v7809 = vpop.f32.mrf.mxu0
    %v7810 = vadd.f32 %v7791, %v7809
    %7811 = vmatmul.bf16.gmra.mxu0 %v5680
    %v7812 = vpop.f32.mrf.mxu0
    %v7813 = vadd.f32 %v7794, %v7812
    %v7814 = vpop.f32.mrf.mxu0
    %v7815 = vadd.f32 %v7796, %v7814
    %7816 = vdwg.mxu0
    %7817 = vmatpush.bf16.msra.mxu0 %v6971
    %7818 = vmatpush.bf16.msra.mxu0 %v6967
    %7819 = vmatpush.bf16.msra.mxu0 %v6963
    %7820 = vmatpush.bf16.msra.mxu0 %v6959
    %7821 = vmatpush.bf16.msra.mxu0 %v6955
    %7822 = vmatpush.bf16.msra.mxu0 %v6951
    %7823 = vmatpush.bf16.msra.mxu0 %v6947
    %7824 = vmatpush.bf16.msra.mxu0 %v6943
    %7825 = vmatmul.bf16.gmra.mxu0 %v5673
    %v7826 = vpop.f32.mrf.mxu0
    %v7827 = vadd.f32 %v7808, %v7826
    %v7828 = vpop.f32.mrf.mxu0
    %v7829 = vadd.f32 %v7810, %v7828
    %7830 = vmatmul.bf16.gmra.mxu0 %v5681
    %v7831 = vpop.f32.mrf.mxu0
    %v7832 = vadd.f32 %v7813, %v7831
    %v7833 = vpop.f32.mrf.mxu0
    %v7834 = vadd.f32 %v7815, %v7833
    %7835 = vdwg.mxu0
    %v7836 = vmax.f32 %v7371, 0.0
    %v7837 = vmax.f32 %v7523, 0.0
    %v7838 = vmax.f32 %v7675, 0.0
    %v7839 = vmax.f32 %v7827, 0.0
    %v7840 = vmax.f32 %v7373, 0.0
    %v7841 = vmax.f32 %v7525, 0.0
    %v7842 = vmax.f32 %v7677, 0.0
    %v7843 = vmax.f32 %v7829, 0.0
    %v7844 = vmax.f32 %v7376, 0.0
    %v7845 = vmax.f32 %v7528, 0.0
    %v7846 = vmax.f32 %v7680, 0.0
    %v7847 = vmax.f32 %v7832, 0.0
    %v7848 = vmax.f32 %v7378, 0.0
    %v7849 = vmax.f32 %v7530, 0.0
    %v7850 = vmax.f32 %v7682, 0.0
    %v7851 = vmax.f32 %v7834, 0.0
    %v7852 = vpack.c.bf16 %v7840, %v7836
    %v7853 = vpack.c.bf16 %v7841, %v7837
    %v7854 = vpack.c.bf16 %v7842, %v7838
    %v7855 = vpack.c.bf16 %v7843, %v7839
    %v7856 = vpack.c.bf16 %v7848, %v7844
    %v7857 = vpack.c.bf16 %v7849, %v7845
    %v7858 = vpack.c.bf16 %v7850, %v7846
    %v7859 = vpack.c.bf16 %v7851, %v7847
    %v7860 = vld [vmem:[#allocation11] sm:$0xff]
    %v7861 = vld [vmem:[#allocation11 + $0x8] sm:$0xff]
    %v7862 = vld [vmem:[#allocation11 + $0x10] sm:$0xff]
    %v7863 = vld [vmem:[#allocation11 + $0x18] sm:$0xff]
    %v7864 = vld [vmem:[#allocation11 + $0x20] sm:$0xff]
    %v7865 = vld [vmem:[#allocation11 + $0x28] sm:$0xff]
    %v7866 = vld [vmem:[#allocation11 + $0x30] sm:$0xff]
    %v7867 = vld [vmem:[#allocation11 + $0x38] sm:$0xff]
    %v7868 = vld [vmem:[#allocation11 + $0x40] sm:$0xff]
    %v7869 = vld [vmem:[#allocation11 + $0x48] sm:$0xff]
    %v7870 = vld [vmem:[#allocation11 + $0x50] sm:$0xff]
    %v7871 = vld [vmem:[#allocation11 + $0x58] sm:$0xff]
    %v7872 = vld [vmem:[#allocation11 + $0x60] sm:$0xff]
    %v7873 = vld [vmem:[#allocation11 + $0x68] sm:$0xff]
    %v7874 = vld [vmem:[#allocation11 + $0x70] sm:$0xff]
    %v7875 = vld [vmem:[#allocation11 + $0x78] sm:$0xff]
    %v7876 = vld [vmem:[#allocation11 + $0x80] sm:$0xff]
    %v7877 = vld [vmem:[#allocation11 + $0x88] sm:$0xff]
    %v7878 = vld [vmem:[#allocation11 + $0x90] sm:$0xff]
    %v7879 = vld [vmem:[#allocation11 + $0x98] sm:$0xff]
    %v7880 = vld [vmem:[#allocation11 + $0xa0] sm:$0xff]
    %v7881 = vld [vmem:[#allocation11 + $0xa8] sm:$0xff]
    %v7882 = vld [vmem:[#allocation11 + $0xb0] sm:$0xff]
    %v7883 = vld [vmem:[#allocation11 + $0xb8] sm:$0xff]
    %v7884 = vld [vmem:[#allocation11 + $0xc0] sm:$0xff]
    %v7885 = vld [vmem:[#allocation11 + $0xc8] sm:$0xff]
    %v7886 = vld [vmem:[#allocation11 + $0xd0] sm:$0xff]
    %v7887 = vld [vmem:[#allocation11 + $0xd8] sm:$0xff]
    %v7888 = vld [vmem:[#allocation11 + $0xe0] sm:$0xff]
    %v7889 = vld [vmem:[#allocation11 + $0xe8] sm:$0xff]
    %v7890 = vld [vmem:[#allocation11 + $0xf0] sm:$0xff]
    %v7891 = vld [vmem:[#allocation11 + $0xf8] sm:$0xff]
    %v7892 = vld [vmem:[#allocation11 + $0x100] sm:$0xff]
    %v7893 = vld [vmem:[#allocation11 + $0x108] sm:$0xff]
    %v7894 = vld [vmem:[#allocation11 + $0x110] sm:$0xff]
    %v7895 = vld [vmem:[#allocation11 + $0x118] sm:$0xff]
    %v7896 = vld [vmem:[#allocation11 + $0x120] sm:$0xff]
    %v7897 = vld [vmem:[#allocation11 + $0x128] sm:$0xff]
    %v7898 = vld [vmem:[#allocation11 + $0x130] sm:$0xff]
    %v7899 = vld [vmem:[#allocation11 + $0x138] sm:$0xff]
    %v7900 = vld [vmem:[#allocation11 + $0x140] sm:$0xff]
    %v7901 = vld [vmem:[#allocation11 + $0x148] sm:$0xff]
    %v7902 = vld [vmem:[#allocation11 + $0x150] sm:$0xff]
    %v7903 = vld [vmem:[#allocation11 + $0x158] sm:$0xff]
    %v7904 = vld [vmem:[#allocation11 + $0x160] sm:$0xff]
    %v7905 = vld [vmem:[#allocation11 + $0x168] sm:$0xff]
    %v7906 = vld [vmem:[#allocation11 + $0x170] sm:$0xff]
    %v7907 = vld [vmem:[#allocation11 + $0x178] sm:$0xff]
    %v7908 = vld [vmem:[#allocation11 + $0x180] sm:$0xff]
    %v7909 = vld [vmem:[#allocation11 + $0x188] sm:$0xff]
    %v7910 = vld [vmem:[#allocation11 + $0x190] sm:$0xff]
    %v7911 = vld [vmem:[#allocation11 + $0x198] sm:$0xff]
    %v7912 = vld [vmem:[#allocation11 + $0x1a0] sm:$0xff]
    %v7913 = vld [vmem:[#allocation11 + $0x1a8] sm:$0xff]
    %v7914 = vld [vmem:[#allocation11 + $0x1b0] sm:$0xff]
    %v7915 = vld [vmem:[#allocation11 + $0x1b8] sm:$0xff]
    %v7916 = vld [vmem:[#allocation11 + $0x1c0] sm:$0xff]
    %v7917 = vld [vmem:[#allocation11 + $0x1c8] sm:$0xff]
    %v7918 = vld [vmem:[#allocation11 + $0x1d0] sm:$0xff]
    %v7919 = vld [vmem:[#allocation11 + $0x1d8] sm:$0xff]
    %v7920 = vld [vmem:[#allocation11 + $0x1e0] sm:$0xff]
    %v7921 = vld [vmem:[#allocation11 + $0x1e8] sm:$0xff]
    %v7922 = vld [vmem:[#allocation11 + $0x1f0] sm:$0xff]
    %v7923 = vld [vmem:[#allocation11 + $0x1f8] sm:$0xff]
    %v7924 = vld [vmem:[#allocation12] sm:$0x3]
    %v7926 = vperm.slane %v7924, 0
    %v7927 = vperm.slane %v7924, 1
    %v7994 = vunpack.c.l.b16 %v7860
    %v7995 = vunpack.c.h.b16 %v7860
    %v7996 = vunpack.c.l.b16 %v7861
    %v7997 = vunpack.c.h.b16 %v7861
    %v7998 = vunpack.c.l.b16 %v7862
    %v7999 = vunpack.c.h.b16 %v7862
    %v8000 = vunpack.c.l.b16 %v7863
    %v8001 = vunpack.c.h.b16 %v7863
    %v8002 = vunpack.c.l.b16 %v7864
    %v8003 = vunpack.c.h.b16 %v7864
    %v8004 = vunpack.c.l.b16 %v7865
    %v8005 = vunpack.c.h.b16 %v7865
    %v8006 = vunpack.c.l.b16 %v7866
    %v8007 = vunpack.c.h.b16 %v7866
    %v8008 = vunpack.c.l.b16 %v7867
    %v8009 = vunpack.c.h.b16 %v7867
    %v8010 = vunpack.c.l.b16 %v7868
    %v8011 = vunpack.c.h.b16 %v7868
    %v8012 = vunpack.c.l.b16 %v7869
    %v8013 = vunpack.c.h.b16 %v7869
    %v8014 = vunpack.c.l.b16 %v7870
    %v8015 = vunpack.c.h.b16 %v7870
    %v8016 = vunpack.c.l.b16 %v7871
    %v8017 = vunpack.c.h.b16 %v7871
    %v8018 = vunpack.c.l.b16 %v7872
    %v8019 = vunpack.c.h.b16 %v7872
    %v8020 = vunpack.c.l.b16 %v7873
    %v8021 = vunpack.c.h.b16 %v7873
    %v8022 = vunpack.c.l.b16 %v7874
    %v8023 = vunpack.c.h.b16 %v7874
    %v8024 = vunpack.c.l.b16 %v7875
    %v8025 = vunpack.c.h.b16 %v7875
    %v8026 = vunpack.c.l.b16 %v7876
    %v8027 = vunpack.c.h.b16 %v7876
    %v8028 = vunpack.c.l.b16 %v7877
    %v8029 = vunpack.c.h.b16 %v7877
    %v8030 = vunpack.c.l.b16 %v7878
    %v8031 = vunpack.c.h.b16 %v7878
    %v8032 = vunpack.c.l.b16 %v7879
    %v8033 = vunpack.c.h.b16 %v7879
    %v8034 = vunpack.c.l.b16 %v7880
    %v8035 = vunpack.c.h.b16 %v7880
    %v8036 = vunpack.c.l.b16 %v7881
    %v8037 = vunpack.c.h.b16 %v7881
    %v8038 = vunpack.c.l.b16 %v7882
    %v8039 = vunpack.c.h.b16 %v7882
    %v8040 = vunpack.c.l.b16 %v7883
    %v8041 = vunpack.c.h.b16 %v7883
    %v8042 = vunpack.c.l.b16 %v7884
    %v8043 = vunpack.c.h.b16 %v7884
    %v8044 = vunpack.c.l.b16 %v7885
    %v8045 = vunpack.c.h.b16 %v7885
    %v8046 = vunpack.c.l.b16 %v7886
    %v8047 = vunpack.c.h.b16 %v7886
    %v8048 = vunpack.c.l.b16 %v7887
    %v8049 = vunpack.c.h.b16 %v7887
    %v8050 = vunpack.c.l.b16 %v7888
    %v8051 = vunpack.c.h.b16 %v7888
    %v8052 = vunpack.c.l.b16 %v7889
    %v8053 = vunpack.c.h.b16 %v7889
    %v8054 = vunpack.c.l.b16 %v7890
    %v8055 = vunpack.c.h.b16 %v7890
    %v8056 = vunpack.c.l.b16 %v7891
    %v8057 = vunpack.c.h.b16 %v7891
    %v8058 = vunpack.c.l.b16 %v7892
    %v8059 = vunpack.c.h.b16 %v7892
    %v8060 = vunpack.c.l.b16 %v7893
    %v8061 = vunpack.c.h.b16 %v7893
    %v8062 = vunpack.c.l.b16 %v7894
    %v8063 = vunpack.c.h.b16 %v7894
    %v8064 = vunpack.c.l.b16 %v7895
    %v8065 = vunpack.c.h.b16 %v7895
    %v8066 = vunpack.c.l.b16 %v7896
    %v8067 = vunpack.c.h.b16 %v7896
    %v8068 = vunpack.c.l.b16 %v7897
    %v8069 = vunpack.c.h.b16 %v7897
    %v8070 = vunpack.c.l.b16 %v7898
    %v8071 = vunpack.c.h.b16 %v7898
    %v8072 = vunpack.c.l.b16 %v7899
    %v8073 = vunpack.c.h.b16 %v7899
    %v8074 = vunpack.c.l.b16 %v7900
    %v8075 = vunpack.c.h.b16 %v7900
    %v8076 = vunpack.c.l.b16 %v7901
    %v8077 = vunpack.c.h.b16 %v7901
    %v8078 = vunpack.c.l.b16 %v7902
    %v8079 = vunpack.c.h.b16 %v7902
    %v8080 = vunpack.c.l.b16 %v7903
    %v8081 = vunpack.c.h.b16 %v7903
    %v8082 = vunpack.c.l.b16 %v7904
    %v8083 = vunpack.c.h.b16 %v7904
    %v8084 = vunpack.c.l.b16 %v7905
    %v8085 = vunpack.c.h.b16 %v7905
    %v8086 = vunpack.c.l.b16 %v7906
    %v8087 = vunpack.c.h.b16 %v7906
    %v8088 = vunpack.c.l.b16 %v7907
    %v8089 = vunpack.c.h.b16 %v7907
    %v8090 = vunpack.c.l.b16 %v7908
    %v8091 = vunpack.c.h.b16 %v7908
    %v8092 = vunpack.c.l.b16 %v7909
    %v8093 = vunpack.c.h.b16 %v7909
    %v8094 = vunpack.c.l.b16 %v7910
    %v8095 = vunpack.c.h.b16 %v7910
    %v8096 = vunpack.c.l.b16 %v7911
    %v8097 = vunpack.c.h.b16 %v7911
    %v8098 = vunpack.c.l.b16 %v7912
    %v8099 = vunpack.c.h.b16 %v7912
    %v8100 = vunpack.c.l.b16 %v7913
    %v8101 = vunpack.c.h.b16 %v7913
    %v8102 = vunpack.c.l.b16 %v7914
    %v8103 = vunpack.c.h.b16 %v7914
    %v8104 = vunpack.c.l.b16 %v7915
    %v8105 = vunpack.c.h.b16 %v7915
    %v8106 = vunpack.c.l.b16 %v7916
    %v8107 = vunpack.c.h.b16 %v7916
    %v8108 = vunpack.c.l.b16 %v7917
    %v8109 = vunpack.c.h.b16 %v7917
    %v8110 = vunpack.c.l.b16 %v7918
    %v8111 = vunpack.c.h.b16 %v7918
    %v8112 = vunpack.c.l.b16 %v7919
    %v8113 = vunpack.c.h.b16 %v7919
    %v8114 = vunpack.c.l.b16 %v7920
    %v8115 = vunpack.c.h.b16 %v7920
    %v8116 = vunpack.c.l.b16 %v7921
    %v8117 = vunpack.c.h.b16 %v7921
    %v8118 = vunpack.c.l.b16 %v7922
    %v8119 = vunpack.c.h.b16 %v7922
    %v8120 = vunpack.c.l.b16 %v7923
    %v8121 = vunpack.c.h.b16 %v7923
    %v8122 = vpack.c.b16 %v7996, %v7994
    %v8123 = vpack.c.b16 %v7997, %v7995
    %v8124 = vpack.c.b16 %v8000, %v7998
    %v8125 = vpack.c.b16 %v8001, %v7999
    %v8126 = vpack.c.b16 %v8004, %v8002
    %v8127 = vpack.c.b16 %v8005, %v8003
    %v8128 = vpack.c.b16 %v8008, %v8006
    %v8129 = vpack.c.b16 %v8009, %v8007
    %v8130 = vpack.c.b16 %v8012, %v8010
    %v8131 = vpack.c.b16 %v8013, %v8011
    %v8132 = vpack.c.b16 %v8016, %v8014
    %v8133 = vpack.c.b16 %v8017, %v8015
    %v8134 = vpack.c.b16 %v8020, %v8018
    %v8135 = vpack.c.b16 %v8021, %v8019
    %v8136 = vpack.c.b16 %v8024, %v8022
    %v8137 = vpack.c.b16 %v8025, %v8023
    %v8138 = vpack.c.b16 %v8028, %v8026
    %v8139 = vpack.c.b16 %v8029, %v8027
    %v8140 = vpack.c.b16 %v8032, %v8030
    %v8141 = vpack.c.b16 %v8033, %v8031
    %v8142 = vpack.c.b16 %v8036, %v8034
    %v8143 = vpack.c.b16 %v8037, %v8035
    %v8144 = vpack.c.b16 %v8040, %v8038
    %v8145 = vpack.c.b16 %v8041, %v8039
    %v8146 = vpack.c.b16 %v8044, %v8042
    %v8147 = vpack.c.b16 %v8045, %v8043
    %v8148 = vpack.c.b16 %v8048, %v8046
    %v8149 = vpack.c.b16 %v8049, %v8047
    %v8150 = vpack.c.b16 %v8052, %v8050
    %v8151 = vpack.c.b16 %v8053, %v8051
    %v8152 = vpack.c.b16 %v8056, %v8054
    %v8153 = vpack.c.b16 %v8057, %v8055
    %v8154 = vpack.c.b16 %v8060, %v8058
    %v8155 = vpack.c.b16 %v8061, %v8059
    %v8156 = vpack.c.b16 %v8064, %v8062
    %v8157 = vpack.c.b16 %v8065, %v8063
    %v8158 = vpack.c.b16 %v8068, %v8066
    %v8159 = vpack.c.b16 %v8069, %v8067
    %v8160 = vpack.c.b16 %v8072, %v8070
    %v8161 = vpack.c.b16 %v8073, %v8071
    %v8162 = vpack.c.b16 %v8076, %v8074
    %v8163 = vpack.c.b16 %v8077, %v8075
    %v8164 = vpack.c.b16 %v8080, %v8078
    %v8165 = vpack.c.b16 %v8081, %v8079
    %v8166 = vpack.c.b16 %v8084, %v8082
    %v8167 = vpack.c.b16 %v8085, %v8083
    %v8168 = vpack.c.b16 %v8088, %v8086
    %v8169 = vpack.c.b16 %v8089, %v8087
    %v8170 = vpack.c.b16 %v8092, %v8090
    %v8171 = vpack.c.b16 %v8093, %v8091
    %v8172 = vpack.c.b16 %v8096, %v8094
    %v8173 = vpack.c.b16 %v8097, %v8095
    %v8174 = vpack.c.b16 %v8100, %v8098
    %v8175 = vpack.c.b16 %v8101, %v8099
    %v8176 = vpack.c.b16 %v8104, %v8102
    %v8177 = vpack.c.b16 %v8105, %v8103
    %v8178 = vpack.c.b16 %v8108, %v8106
    %v8179 = vpack.c.b16 %v8109, %v8107
    %v8180 = vpack.c.b16 %v8112, %v8110
    %v8181 = vpack.c.b16 %v8113, %v8111
    %v8182 = vpack.c.b16 %v8116, %v8114
    %v8183 = vpack.c.b16 %v8117, %v8115
    %v8184 = vpack.c.b16 %v8120, %v8118
    %v8185 = vpack.c.b16 %v8121, %v8119
    %8250 = vmatpush.bf16.msra.mxu0 %v8136
    %8251 = vmatpush.bf16.msra.mxu0 %v8134
    %8252 = vmatpush.bf16.msra.mxu0 %v8132
    %8253 = vmatpush.bf16.msra.mxu0 %v8130
    %8254 = vmatpush.bf16.msra.mxu0 %v8128
    %8255 = vmatpush.bf16.msra.mxu0 %v8126
    %8256 = vmatpush.bf16.msra.mxu0 %v8124
    %8257 = vmatpush.bf16.msra.mxu0 %v8122
    %8258 = vmatmul.bf16.gmra.mxu0 %v7852
    %v8259 = vpop.f32.mrf.mxu0
    %v8260 = vadd.f32 %v7926, %v8259
    %v8261 = vpop.f32.mrf.mxu0
    %v8262 = vadd.f32 %v7926, %v8261
    %8263 = vmatmul.bf16.gmra.mxu0 %v7856
    %v8264 = vpop.f32.mrf.mxu0
    %v8265 = vadd.f32 %v7926, %v8264
    %v8266 = vpop.f32.mrf.mxu0
    %v8267 = vadd.f32 %v7926, %v8266
    %8268 = vdwg.mxu0
    %8269 = vmatpush.bf16.msra.mxu0 %v8152
    %8270 = vmatpush.bf16.msra.mxu0 %v8150
    %8271 = vmatpush.bf16.msra.mxu0 %v8148
    %8272 = vmatpush.bf16.msra.mxu0 %v8146
    %8273 = vmatpush.bf16.msra.mxu0 %v8144
    %8274 = vmatpush.bf16.msra.mxu0 %v8142
    %8275 = vmatpush.bf16.msra.mxu0 %v8140
    %8276 = vmatpush.bf16.msra.mxu0 %v8138
    %8277 = vmatmul.bf16.gmra.mxu0 %v7853
    %v8278 = vpop.f32.mrf.mxu0
    %v8279 = vadd.f32 %v8260, %v8278
    %v8280 = vpop.f32.mrf.mxu0
    %v8281 = vadd.f32 %v8262, %v8280
    %8282 = vmatmul.bf16.gmra.mxu0 %v7857
    %v8283 = vpop.f32.mrf.mxu0
    %v8284 = vadd.f32 %v8265, %v8283
    %v8285 = vpop.f32.mrf.mxu0
    %v8286 = vadd.f32 %v8267, %v8285
    %8287 = vdwg.mxu0
    %8288 = vmatpush.bf16.msra.mxu0 %v8168
    %8289 = vmatpush.bf16.msra.mxu0 %v8166
    %8290 = vmatpush.bf16.msra.mxu0 %v8164
    %8291 = vmatpush.bf16.msra.mxu0 %v8162
    %8292 = vmatpush.bf16.msra.mxu0 %v8160
    %8293 = vmatpush.bf16.msra.mxu0 %v8158
    %8294 = vmatpush.bf16.msra.mxu0 %v8156
    %8295 = vmatpush.bf16.msra.mxu0 %v8154
    %8296 = vmatmul.bf16.gmra.mxu0 %v7854
    %v8297 = vpop.f32.mrf.mxu0
    %v8298 = vadd.f32 %v8279, %v8297
    %v8299 = vpop.f32.mrf.mxu0
    %v8300 = vadd.f32 %v8281, %v8299
    %8301 = vmatmul.bf16.gmra.mxu0 %v7858
    %v8302 = vpop.f32.mrf.mxu0
    %v8303 = vadd.f32 %v8284, %v8302
    %v8304 = vpop.f32.mrf.mxu0
    %v8305 = vadd.f32 %v8286, %v8304
    %8306 = vdwg.mxu0
    %8307 = vmatpush.bf16.msra.mxu0 %v8184
    %8308 = vmatpush.bf16.msra.mxu0 %v8182
    %8309 = vmatpush.bf16.msra.mxu0 %v8180
    %8310 = vmatpush.bf16.msra.mxu0 %v8178
    %8311 = vmatpush.bf16.msra.mxu0 %v8176
    %8312 = vmatpush.bf16.msra.mxu0 %v8174
    %8313 = vmatpush.bf16.msra.mxu0 %v8172
    %8314 = vmatpush.bf16.msra.mxu0 %v8170
    %8315 = vmatmul.bf16.gmra.mxu0 %v7855
    %v8316 = vpop.f32.mrf.mxu0
    %v8317 = vadd.f32 %v8298, %v8316
    %v8318 = vpop.f32.mrf.mxu0
    %v8319 = vadd.f32 %v8300, %v8318
    %8320 = vmatmul.bf16.gmra.mxu0 %v7859
    %v8321 = vpop.f32.mrf.mxu0
    %v8322 = vadd.f32 %v8303, %v8321
    %v8323 = vpop.f32.mrf.mxu0
    %v8324 = vadd.f32 %v8305, %v8323
    %8325 = vdwg.mxu0
    %8326 = vmatpush.bf16.msra.mxu0 %v8137
    %8327 = vmatpush.bf16.msra.mxu0 %v8135
    %8328 = vmatpush.bf16.msra.mxu0 %v8133
    %8329 = vmatpush.bf16.msra.mxu0 %v8131
    %8330 = vmatpush.bf16.msra.mxu0 %v8129
    %8331 = vmatpush.bf16.msra.mxu0 %v8127
    %8332 = vmatpush.bf16.msra.mxu0 %v8125
    %8333 = vmatpush.bf16.msra.mxu0 %v8123
    %8334 = vmatmul.bf16.gmra.mxu0 %v7852
    %v8335 = vpop.f32.mrf.mxu0
    %v8336 = vadd.f32 %v7927, %v8335
    %v8337 = vpop.f32.mrf.mxu0
    %v8338 = vadd.f32 %v7927, %v8337
    %8339 = vmatmul.bf16.gmra.mxu0 %v7856
    %v8340 = vpop.f32.mrf.mxu0
    %v8341 = vadd.f32 %v7927, %v8340
    %v8342 = vpop.f32.mrf.mxu0
    %v8343 = vadd.f32 %v7927, %v8342
    %8344 = vdwg.mxu0
    %8345 = vmatpush.bf16.msra.mxu0 %v8153
    %8346 = vmatpush.bf16.msra.mxu0 %v8151
    %8347 = vmatpush.bf16.msra.mxu0 %v8149
    %8348 = vmatpush.bf16.msra.mxu0 %v8147
    %8349 = vmatpush.bf16.msra.mxu0 %v8145
    %8350 = vmatpush.bf16.msra.mxu0 %v8143
    %8351 = vmatpush.bf16.msra.mxu0 %v8141
    %8352 = vmatpush.bf16.msra.mxu0 %v8139
    %8353 = vmatmul.bf16.gmra.mxu0 %v7853
    %v8354 = vpop.f32.mrf.mxu0
    %v8355 = vadd.f32 %v8336, %v8354
    %v8356 = vpop.f32.mrf.mxu0
    %v8357 = vadd.f32 %v8338, %v8356
    %8358 = vmatmul.bf16.gmra.mxu0 %v7857
    %v8359 = vpop.f32.mrf.mxu0
    %v8360 = vadd.f32 %v8341, %v8359
    %v8361 = vpop.f32.mrf.mxu0
    %v8362 = vadd.f32 %v8343, %v8361
    %8363 = vdwg.mxu0
    %8364 = vmatpush.bf16.msra.mxu0 %v8169
    %8365 = vmatpush.bf16.msra.mxu0 %v8167
    %8366 = vmatpush.bf16.msra.mxu0 %v8165
    %8367 = vmatpush.bf16.msra.mxu0 %v8163
    %8368 = vmatpush.bf16.msra.mxu0 %v8161
    %8369 = vmatpush.bf16.msra.mxu0 %v8159
    %8370 = vmatpush.bf16.msra.mxu0 %v8157
    %8371 = vmatpush.bf16.msra.mxu0 %v8155
    %8372 = vmatmul.bf16.gmra.mxu0 %v7854
    %v8373 = vpop.f32.mrf.mxu0
    %v8374 = vadd.f32 %v8355, %v8373
    %v8375 = vpop.f32.mrf.mxu0
    %v8376 = vadd.f32 %v8357, %v8375
    %8377 = vmatmul.bf16.gmra.mxu0 %v7858
    %v8378 = vpop.f32.mrf.mxu0
    %v8379 = vadd.f32 %v8360, %v8378
    %v8380 = vpop.f32.mrf.mxu0
    %v8381 = vadd.f32 %v8362, %v8380
    %8382 = vdwg.mxu0
    %8383 = vmatpush.bf16.msra.mxu0 %v8185
    %8384 = vmatpush.bf16.msra.mxu0 %v8183
    %8385 = vmatpush.bf16.msra.mxu0 %v8181
    %8386 = vmatpush.bf16.msra.mxu0 %v8179
    %8387 = vmatpush.bf16.msra.mxu0 %v8177
    %8388 = vmatpush.bf16.msra.mxu0 %v8175
    %8389 = vmatpush.bf16.msra.mxu0 %v8173
    %8390 = vmatpush.bf16.msra.mxu0 %v8171
    %8391 = vmatmul.bf16.gmra.mxu0 %v7855
    %v8392 = vpop.f32.mrf.mxu0
    %v8393 = vadd.f32 %v8374, %v8392
    %v8394 = vpop.f32.mrf.mxu0
    %v8395 = vadd.f32 %v8376, %v8394
    %8396 = vmatmul.bf16.gmra.mxu0 %v7859
    %v8397 = vpop.f32.mrf.mxu0
    %v8398 = vadd.f32 %v8379, %v8397
    %v8399 = vpop.f32.mrf.mxu0
    %v8400 = vadd.f32 %v8381, %v8399
    %8401 = vdwg.mxu0
    %v8402 = vmax.f32 %v8317, 0.0
    %v8403 = vmax.f32 %v8393, 0.0
    %v8404 = vmax.f32 %v8319, 0.0
    %v8405 = vmax.f32 %v8395, 0.0
    %v8406 = vmax.f32 %v8322, 0.0
    %v8407 = vmax.f32 %v8398, 0.0
    %v8408 = vmax.f32 %v8324, 0.0
    %v8409 = vmax.f32 %v8400, 0.0
    %v8410 = vld [vmem:[#allocation14] sm:$0x3]
    %v8411 = vld [vmem:[#allocation2] sm:$0x1]
    %8413 = vset.pattern.permute.xlu0 0
    %8414 = vperm.xlu0 %8413, %v8411
    %v8415 = vpop.permute.xlu0 %8414
    %v8417 = vperm.slane %v8415, 0
    %v8419 = vperm.slane %v8410, 0
    %v8420 = vperm.slane %v8410, 1
    %8423 = vmatpush.xpose.msra.mxu0 0.0
    %8424 = vmatpush.xpose.msra.mxu0 0.0
    %8425 = vmatpush.xpose.msra.mxu0 0.0
    %8426 = vmatpush.xpose.msra.mxu0 0.0
    %8427 = vmatpush.xpose.msra.mxu0 0.0
    %8428 = vmatpush.xpose.msra.mxu0 0.0
    %8429 = vmatpush.xpose.msra.mxu0 0.0
    %8430 = vmatpush.xpose.msra.mxu0 0.0
    %8431 = vmatpush.xpose.msra.mxu0 0.0
    %8432 = vmatpush.xpose.msra.mxu0 0.0
    %8433 = vmatpush.xpose.msra.mxu0 0.0
    %8434 = vmatpush.xpose.msra.mxu0 0.0
    %8435 = vmatpush.xpose.msra.mxu0 %v8408
    %8436 = vmatpush.xpose.msra.mxu0 %v8406
    %8437 = vmatpush.xpose.msra.mxu0 %v8404
    %8438 = vmatpush.xpose.msra.mxu0 %v8402
    %8439 = vmatmul.f32.gmra.mxu0 %v8419
    %v8440 = vpop.f32.mrf.mxu0
    %v8441 = vadd.f32 %v8417, %v8440
    %8442 = vdwg.mxu0
    %8443 = vmatpush.xpose.msra.mxu0 0.0
    %8444 = vmatpush.xpose.msra.mxu0 0.0
    %8445 = vmatpush.xpose.msra.mxu0 0.0
    %8446 = vmatpush.xpose.msra.mxu0 0.0
    %8447 = vmatpush.xpose.msra.mxu0 0.0
    %8448 = vmatpush.xpose.msra.mxu0 0.0
    %8449 = vmatpush.xpose.msra.mxu0 0.0
    %8450 = vmatpush.xpose.msra.mxu0 0.0
    %8451 = vmatpush.xpose.msra.mxu0 0.0
    %8452 = vmatpush.xpose.msra.mxu0 0.0
    %8453 = vmatpush.xpose.msra.mxu0 0.0
    %8454 = vmatpush.xpose.msra.mxu0 0.0
    %8455 = vmatpush.xpose.msra.mxu0 %v8409
    %8456 = vmatpush.xpose.msra.mxu0 %v8407
    %8457 = vmatpush.xpose.msra.mxu0 %v8405
    %8458 = vmatpush.xpose.msra.mxu0 %v8403
    %8459 = vmatmul.f32.gmra.mxu0 %v8420
    %v8460 = vpop.f32.mrf.mxu0
    %v8461 = vadd.f32 %v8441, %v8460
    %8462 = vdwg.mxu0
    %vm8463 = vcmask 253952
    %8464 = vst.msk [vmem:[#allocation15] sm:$0x1] %vm8463, %v8461
    // Predicated region
    $region66: #{mlp_forward.1} parent=1 // pred_check
      _
    $region67: #{mlp_forward.1} parent=1 // pred_check_branch
      %8466 = sbr.rel (0) target = $region69
    $region68: #{mlp_forward.1} parent=1 // pred_region
      %8468 = vsyncadd [#allocation5], 0
      %s8470 = sshll.u32 [#allocation15], 4
      %s8471 = int_to_ptr.vmem [resolvable:$true] %s8470
      %s8472 = sshll.u32 %s9, 4
      %s8473 = int_to_ptr.hbm [resolvable:$true] %s8472
      %8475 = dma.vmem_to_hbm [thread:$0]  %s8471, 16, %s8473, [#allocation5]
    $region69: #{mlp_forward.1} parent=1 // pred_fallthru
      _
    // Predicated region
    $region70: #{mlp_forward.1} parent=1 // pred_check
      _
    $region71: #{mlp_forward.1} parent=1 // pred_check_branch
      %8477 = sbr.rel (0) target = $region73
    $region72: #{mlp_forward.1} parent=1 // pred_region
      %8479 = dma.done [#allocation5], 16
    $region73: #{mlp_forward.1} parent=1 // pred_fallthru
      _
    %8480 = vsyncpa [#allocation4], 1
    %8481 = vsyncpa [#allocation7], 1
    %8482 = vsyncpa [#allocation10], 1
    %8483 = vsyncpa [#allocation13], 1
    %8484 = vsyncpa [#allocation5], 1

</llo_original>
